<compile_context>
chip_gen: v7x
topology: tpu7x:2x2x1
jax: 0.10.0
libtpu: 0.0.40
codegen_flags: <defaults>
</compile_context>

<pallas_src>
import functools

import jax
import jax.numpy as jnp
from jax.experimental import pallas as pl
from jax.experimental.pallas import tpu as pltpu


# ----------------------------------------------------------------------------
# Kernel 1: 3x3 / stride-2 / pad-1 conv + bias + ReLU, in-kernel patch assembly
# ----------------------------------------------------------------------------
def _conv3x3_s2_relu_kernel(*refs, th, wo):
    """refs = (row_0 .. row_{2*th}, w_ref, b_ref, o_ref).

    row_r : (2, Wh, Cin) bf16  -- padded input row (2*TH*tile + r), even/odd cols
    w_ref : (9, Cin, Cout) bf16 (tap-major, resident)
    b_ref : (1, Cout) f32      (resident)
    o_ref : (TH, Wo, Cout) bf16 output tile
    """
    n_rows = 2 * th + 1
    row_refs = refs[:n_rows]
    w_ref, b_ref, o_ref = refs[n_rows:]

    w = w_ref[...]                         # (9, Cin, Cout) bf16, stays in VMEM/vregs
    b = b_ref[...]                         # (1, Cout) f32
    cout = b.shape[-1]
    rows = [r[...] for r in row_refs]      # each (2, Wh, Cin) bf16

    for t in range(th):                    # static unroll over output rows of tile
        acc = jnp.zeros((wo, cout), jnp.float32)
        for i in range(3):
            xi = rows[2 * t + i]           # padded input row 2*oh + i, col-split
            for j in range(3):
                # tap (i, j): column 2*ow + j  ->  parity j%2, half-index ow + j//2
                sl = xi[j % 2, (j // 2):(j // 2) + wo, :]           # (Wo, Cin)
                acc = acc + jnp.dot(sl, w[3 * i + j],
                                    preferred_element_type=jnp.float32)
        o_ref[t] = jnp.maximum(acc + b, 0.0).astype(o_ref.dtype)


def conv3x3_s2_relu(x, w9, b, *, rows_per_step=4):
    """3x3, stride-2, pad-1 conv + bias + ReLU on an NHWC bf16 activation.

    Host-side prep is only zero padding + an even/odd column split (one cheap
    pass, same bytes as the input); all patch assembly happens inside the kernel.
    """
    n, h, wdt, cin = x.shape
    assert h % 2 == 0 and wdt % 2 == 0, "even spatial dims assumed"
    cout = w9.shape[-1]
    ho, wo = h // 2, wdt // 2
    th = max(1, min(rows_per_step, ho))
    n_t = pl.cdiv(ho, th)

    # pad: 1 top/left, 1 right (makes padded width even), bottom enough so the
    # halo row of every row-tile (incl. the ragged last one) is in-bounds.
    pad_bot = max(0, 2 * n_t * th - h)
    xpad = jnp.pad(x, ((0, 0), (1, pad_bot), (1, 1), (0, 0)))
    # even/odd column split -> (N, Hp, 2, Wh, Cin); taps become unit-stride slices.
    xs = jnp.stack([xpad[:, :, 0::2, :], xpad[:, :, 1::2, :]], axis=2)
    wh = xs.shape[3]

    n_rows = 2 * th + 1

    def row_spec(r):
        return pl.BlockSpec((None, None, 2, wh, cin),
                            lambda nn, t, r=r: (nn, 2 * th * t + r, 0, 0, 0))

    kernel = functools.partial(_conv3x3_s2_relu_kernel, th=th, wo=wo)
    return pl.pallas_call(
        kernel,
        out_shape=jax.ShapeDtypeStruct((n, ho, wo, cout), jnp.bfloat16),
        grid=(n, n_t),
        in_specs=[row_spec(r) for r in range(n_rows)] + [
            pl.BlockSpec((9, cin, cout), lambda nn, t: (0, 0, 0)),   # resident W
            pl.BlockSpec((1, cout), lambda nn, t: (0, 0)),           # resident b
        ],
        out_specs=pl.BlockSpec((None, th, wo, cout), lambda nn, t: (nn, t, 0, 0)),
        compiler_params=pltpu.CompilerParams(
            dimension_semantics=("parallel", "parallel")),
    )(*([xs] * n_rows), w9, b)


# ----------------------------------------------------------------------------
# Kernel 2: fused decoder
#   lat = 1x1(f2) ; up = nearest2x(lat) ; fused = relu(up + f1) ; depth = 1x1(fused)
# all inside one kernel -- intermediates never leave VMEM.
# ----------------------------------------------------------------------------
def _decoder_fused_kernel(f2_ref, f1_ref, wl_ref, bl_ref, wh_ref, bh_ref, o_ref, *, tr):
    """f2_ref : (TR,   W2, C2) bf16   coarse rows
    f1_ref : (2*TR, 2, W2, C1) bf16   fine rows, even/odd col split
    wl_ref : (C2, C1) bf16 ; bl_ref : (1, C1) f32   lateral 1x1 conv
    wh_ref : (1, C1) f32   ; bh_ref : (1, 1) f32    head 1x1 conv (Cout = 1)
    o_ref  : (TR, 2, 2, W2) f32   depth[t, a, p, c2] = depth(2*r2+a, 2*c2+p)
    """
    wl = wl_ref[...]
    bl = bl_ref[...]
    whead = wh_ref[...]
    bh = bh_ref[...]                                               # (1, 1)
    for t in range(tr):
        lat = jnp.dot(f2_ref[t], wl,
                      preferred_element_type=jnp.float32) + bl     # (W2, C1) f32
        for a in range(2):                                         # vertical 2x upsample
            f1r = f1_ref[2 * t + a]                                # (2, W2, C1)
            fused = jnp.maximum(f1r.astype(jnp.float32) + lat, 0.0)
            # head conv (Cout=1) as a channel reduction -> lane-dense (2, W2) store
            d = jnp.sum(fused * whead, axis=-1) + bh               # (2, W2)
            o_ref[t, a] = d.astype(o_ref.dtype)


def decoder_fused(f1, f2, wl, bl, whead, bhead, *, rows_per_step=4):
    n, h1, w1, c1 = f1.shape
    _, h2, w2, c2 = f2.shape
    assert h1 == 2 * h2 and w1 == 2 * w2
    tr = max(1, min(rows_per_step, h2))
    n_t = pl.cdiv(h2, tr)

    # even/odd column split of the skip feature -> unit-stride access in-kernel.
    f1s = jnp.stack([f1[:, :, 0::2, :], f1[:, :, 1::2, :]], axis=2)  # (N, H1, 2, W2, C1)

    out = pl.pallas_call(
        functools.partial(_decoder_fused_kernel, tr=tr),
        out_shape=jax.ShapeDtypeStruct((n, h2, 2, 2, w2), jnp.float32),
        grid=(n, n_t),
        in_specs=[
            pl.BlockSpec((None, tr, w2, c2), lambda nn, t: (nn, t, 0, 0)),
            pl.BlockSpec((None, 2 * tr, 2, w2, c1), lambda nn, t: (nn, t, 0, 0, 0)),
            pl.BlockSpec((c2, c1), lambda nn, t: (0, 0)),
            pl.BlockSpec((1, c1), lambda nn, t: (0, 0)),
            pl.BlockSpec((1, c1), lambda nn, t: (0, 0)),
            pl.BlockSpec((1, 1), lambda nn, t: (0, 0)),
        ],
        out_specs=pl.BlockSpec((None, tr, 2, 2, w2), lambda nn, t: (nn, t, 0, 0, 0)),
        compiler_params=pltpu.CompilerParams(
            dimension_semantics=("parallel", "parallel")),
    )(f2, f1s, wl, bl, whead, bhead)

    # (N, H2, 2, 2, W2) -> (N, H1, W1): depth[n, 2r+a, 2c+p] = out[n, r, a, p, c]
    depth = out.transpose(0, 1, 2, 4, 3).reshape(n, h1, w1)
    return depth


# ----------------------------------------------------------------------------
# Deterministic parameter init -- pre-packed into kernel-ready layouts (bf16
# weights, f32 biases) so the forward pass is pure pallas_calls + light glue.
# ----------------------------------------------------------------------------
def init_params(key, cin=3, c1=16, c2=32):
    ks = jax.random.split(key, 4)

    def w(k, shape, fan_in):
        return jax.random.normal(k, shape, jnp.float32) / jnp.sqrt(float(fan_in))

    return {
        "enc1_w": w(ks[0], (3, 3, cin, c1), 9 * cin).reshape(9, cin, c1).astype(jnp.bfloat16),
        "enc1_b": jnp.zeros((1, c1), jnp.float32),
        "enc2_w": w(ks[1], (3, 3, c1, c2), 9 * c1).reshape(9, c1, c2).astype(jnp.bfloat16),
        "enc2_b": jnp.zeros((1, c2), jnp.float32),
        "lat_w": w(ks[2], (1, 1, c2, c1), c2).reshape(c2, c1).astype(jnp.bfloat16),
        "lat_b": jnp.zeros((1, c1), jnp.float32),
        "head_w": w(ks[3], (1, 1, c1, 1), c1).reshape(1, c1).astype(jnp.float32),
        "head_b": jnp.zeros((1, 1), jnp.float32),
    }


# ----------------------------------------------------------------------------
# DensePredModel: out = decoder(encoder(input))
# ----------------------------------------------------------------------------
class DensePredModel:
    def __init__(self, params):
        self.p = params

    def encoder(self, x_nhwc):
        f1 = conv3x3_s2_relu(x_nhwc, self.p["enc1_w"], self.p["enc1_b"])
        f2 = conv3x3_s2_relu(f1, self.p["enc2_w"], self.p["enc2_b"])
        return [f1, f2]

    def decoder(self, features):
        f1, f2 = features
        depth = decoder_fused(f1, f2, self.p["lat_w"], self.p["lat_b"],
                              self.p["head_w"], self.p["head_b"])
        # final nearest-2x upsample of the 1-channel map back to input resolution:
        # a single cheap broadcast pass, left to XLA.
        depth = jnp.repeat(jnp.repeat(depth, 2, axis=1), 2, axis=2)
        return depth                                        # (N, H, W) f32

    def __call__(self, x_nchw, **kwargs):
        assert x_nchw.shape[2] % 4 == 0 and x_nchw.shape[3] % 4 == 0
        x = jnp.transpose(x_nchw, (0, 2, 3, 1)).astype(jnp.bfloat16)   # NCHW -> NHWC bf16
        features = self.encoder(x)
        depth = self.decoder(features)
        return depth[:, None, :, :]                         # NHWC-free 1-ch -> NCHW (N,1,H,W)


if __name__ == "__main__":
    key = jax.random.PRNGKey(0)
    k_x, k_p = jax.random.split(key)
    x = jax.random.normal(k_x, (2, 3, 16, 16), jnp.float32)   # NCHW like PyTorch

    model = DensePredModel(init_params(k_p))
    fwd = jax.jit(model.__call__)
    out = jax.block_until_ready(fwd(x))

    assert out.shape == (2, 1, 16, 16), out.shape
    assert out.dtype == jnp.float32
    assert bool(jnp.all(jnp.isfinite(out)))
    print("KERNEL_OK")
</pallas_src>

<mosaic_0001>
module attributes {stable_mosaic.version = 11 : i64} {
  func.func @_conv3x3_s2_relu_kernel(%arg0: i32, %arg1: i32, %arg2: memref<1x1x2x9x3xbf16, #tpu.memory_space<vmem>>, %arg3: memref<1x1x2x9x3xbf16, #tpu.memory_space<vmem>>, %arg4: memref<1x1x2x9x3xbf16, #tpu.memory_space<vmem>>, %arg5: memref<1x1x2x9x3xbf16, #tpu.memory_space<vmem>>, %arg6: memref<1x1x2x9x3xbf16, #tpu.memory_space<vmem>>, %arg7: memref<1x1x2x9x3xbf16, #tpu.memory_space<vmem>>, %arg8: memref<1x1x2x9x3xbf16, #tpu.memory_space<vmem>>, %arg9: memref<1x1x2x9x3xbf16, #tpu.memory_space<vmem>>, %arg10: memref<1x1x2x9x3xbf16, #tpu.memory_space<vmem>>, %arg11: memref<9x3x16xbf16, #tpu.memory_space<vmem>>, %arg12: memref<1x16xf32, #tpu.memory_space<vmem>>, %arg13: memref<1x4x8x16xbf16, #tpu.memory_space<vmem>>) attributes {dimension_semantics = [#tpu.dimension_semantics<parallel>, #tpu.dimension_semantics<parallel>], iteration_bounds = array<i64: 2, 2>, scalar_prefetch = 0 : i64, scratch_operands = 0 : i64, tpu.core_type = #tpu.core_type<tc>, window_params = [{transform_indices = @transform_0, window_bounds = array<i64: 1, 1, 2, 9, 3>}, {transform_indices = @transform_1, window_bounds = array<i64: 1, 1, 2, 9, 3>}, {transform_indices = @transform_2, window_bounds = array<i64: 1, 1, 2, 9, 3>}, {transform_indices = @transform_3, window_bounds = array<i64: 1, 1, 2, 9, 3>}, {transform_indices = @transform_4, window_bounds = array<i64: 1, 1, 2, 9, 3>}, {transform_indices = @transform_5, window_bounds = array<i64: 1, 1, 2, 9, 3>}, {transform_indices = @transform_6, window_bounds = array<i64: 1, 1, 2, 9, 3>}, {transform_indices = @transform_7, window_bounds = array<i64: 1, 1, 2, 9, 3>}, {transform_indices = @transform_8, window_bounds = array<i64: 1, 1, 2, 9, 3>}, {pipeline_mode = #tpu.pipeline_mode<synchronous>, transform_indices = @transform_9, window_bounds = array<i64: 9, 3, 16>}, {pipeline_mode = #tpu.pipeline_mode<synchronous>, transform_indices = @transform_10, window_bounds = array<i64: 1, 16>}, {transform_indices = @transform_11, window_bounds = array<i64: 1, 4, 8, 16>}]} {
    %c0 = arith.constant 0 : index
    %c0_0 = arith.constant 0 : index
    %c0_1 = arith.constant 0 : index
    %0 = vector.load %arg11[%c0, %c0_0, %c0_1] : memref<9x3x16xbf16, #tpu.memory_space<vmem>>, vector<9x3x16xbf16>
    %c0_2 = arith.constant 0 : index
    %c0_3 = arith.constant 0 : index
    %1 = vector.load %arg12[%c0_2, %c0_3] : memref<1x16xf32, #tpu.memory_space<vmem>>, vector<1x16xf32>
    %c0_4 = arith.constant 0 : index
    %c0_5 = arith.constant 0 : index
    %c0_6 = arith.constant 0 : index
    %c0_7 = arith.constant 0 : index
    %c0_8 = arith.constant 0 : index
    %2 = vector.load %arg2[%c0_4, %c0_5, %c0_6, %c0_7, %c0_8] : memref<1x1x2x9x3xbf16, #tpu.memory_space<vmem>>, vector<1x1x2x9x3xbf16>
    %3 = vector.shape_cast %2 : vector<1x1x2x9x3xbf16> to vector<2x9x3xbf16>
    %c0_9 = arith.constant 0 : index
    %c0_10 = arith.constant 0 : index
    %c0_11 = arith.constant 0 : index
    %c0_12 = arith.constant 0 : index
    %c0_13 = arith.constant 0 : index
    %4 = vector.load %arg3[%c0_9, %c0_10, %c0_11, %c0_12, %c0_13] : memref<1x1x2x9x3xbf16, #tpu.memory_space<vmem>>, vector<1x1x2x9x3xbf16>
    %5 = vector.shape_cast %4 : vector<1x1x2x9x3xbf16> to vector<2x9x3xbf16>
    %c0_14 = arith.constant 0 : index
    %c0_15 = arith.constant 0 : index
    %c0_16 = arith.constant 0 : index
    %c0_17 = arith.constant 0 : index
    %c0_18 = arith.constant 0 : index
    %6 = vector.load %arg4[%c0_14, %c0_15, %c0_16, %c0_17, %c0_18] : memref<1x1x2x9x3xbf16, #tpu.memory_space<vmem>>, vector<1x1x2x9x3xbf16>
    %7 = vector.shape_cast %6 : vector<1x1x2x9x3xbf16> to vector<2x9x3xbf16>
    %c0_19 = arith.constant 0 : index
    %c0_20 = arith.constant 0 : index
    %c0_21 = arith.constant 0 : index
    %c0_22 = arith.constant 0 : index
    %c0_23 = arith.constant 0 : index
    %8 = vector.load %arg5[%c0_19, %c0_20, %c0_21, %c0_22, %c0_23] : memref<1x1x2x9x3xbf16, #tpu.memory_space<vmem>>, vector<1x1x2x9x3xbf16>
    %9 = vector.shape_cast %8 : vector<1x1x2x9x3xbf16> to vector<2x9x3xbf16>
    %c0_24 = arith.constant 0 : index
    %c0_25 = arith.constant 0 : index
    %c0_26 = arith.constant 0 : index
    %c0_27 = arith.constant 0 : index
    %c0_28 = arith.constant 0 : index
    %10 = vector.load %arg6[%c0_24, %c0_25, %c0_26, %c0_27, %c0_28] : memref<1x1x2x9x3xbf16, #tpu.memory_space<vmem>>, vector<1x1x2x9x3xbf16>
    %11 = vector.shape_cast %10 : vector<1x1x2x9x3xbf16> to vector<2x9x3xbf16>
    %c0_29 = arith.constant 0 : index
    %c0_30 = arith.constant 0 : index
    %c0_31 = arith.constant 0 : index
    %c0_32 = arith.constant 0 : index
    %c0_33 = arith.constant 0 : index
    %12 = vector.load %arg7[%c0_29, %c0_30, %c0_31, %c0_32, %c0_33] : memref<1x1x2x9x3xbf16, #tpu.memory_space<vmem>>, vector<1x1x2x9x3xbf16>
    %13 = vector.shape_cast %12 : vector<1x1x2x9x3xbf16> to vector<2x9x3xbf16>
    %c0_34 = arith.constant 0 : index
    %c0_35 = arith.constant 0 : index
    %c0_36 = arith.constant 0 : index
    %c0_37 = arith.constant 0 : index
    %c0_38 = arith.constant 0 : index
    %14 = vector.load %arg8[%c0_34, %c0_35, %c0_36, %c0_37, %c0_38] : memref<1x1x2x9x3xbf16, #tpu.memory_space<vmem>>, vector<1x1x2x9x3xbf16>
    %15 = vector.shape_cast %14 : vector<1x1x2x9x3xbf16> to vector<2x9x3xbf16>
    %c0_39 = arith.constant 0 : index
    %c0_40 = arith.constant 0 : index
    %c0_41 = arith.constant 0 : index
    %c0_42 = arith.constant 0 : index
    %c0_43 = arith.constant 0 : index
    %16 = vector.load %arg9[%c0_39, %c0_40, %c0_41, %c0_42, %c0_43] : memref<1x1x2x9x3xbf16, #tpu.memory_space<vmem>>, vector<1x1x2x9x3xbf16>
    %17 = vector.shape_cast %16 : vector<1x1x2x9x3xbf16> to vector<2x9x3xbf16>
    %c0_44 = arith.constant 0 : index
    %c0_45 = arith.constant 0 : index
    %c0_46 = arith.constant 0 : index
    %c0_47 = arith.constant 0 : index
    %c0_48 = arith.constant 0 : index
    %18 = vector.load %arg10[%c0_44, %c0_45, %c0_46, %c0_47, %c0_48] : memref<1x1x2x9x3xbf16, #tpu.memory_space<vmem>>, vector<1x1x2x9x3xbf16>
    %19 = vector.shape_cast %18 : vector<1x1x2x9x3xbf16> to vector<2x9x3xbf16>
    %cst = arith.constant 0.000000e+00 : f32
    %20 = vector.broadcast %cst : f32 to vector<8x16xf32>
    %21 = vector.extract_strided_slice %3 {offsets = [0, 0, 0], sizes = [1, 8, 3], strides = [1, 1, 1]} : vector<2x9x3xbf16> to vector<1x8x3xbf16>
    %22 = vector.shape_cast %21 : vector<1x8x3xbf16> to vector<8x3xbf16>
    %23 = vector.extract_strided_slice %0 {offsets = [0, 0, 0], sizes = [1, 3, 16], strides = [1, 1, 1]} : vector<9x3x16xbf16> to vector<1x3x16xbf16>
    %24 = vector.shape_cast %23 : vector<1x3x16xbf16> to vector<3x16xbf16>
    %cst_49 = arith.constant dense<0.000000e+00> : vector<8x16xf32>
    %25 = tpu.matmul %22, %24, %cst_49 {dimension_numbers = #tpu.dot_dimension_numbers<[1], [0], [0], [1], [0, 0, 1, 1], [], []>} : vector<8x3xbf16>, vector<3x16xbf16>, vector<8x16xf32> -> vector<8x16xf32>
    %26 = arith.addf %20, %25 : vector<8x16xf32>
    %27 = vector.extract_strided_slice %3 {offsets = [1, 0, 0], sizes = [1, 8, 3], strides = [1, 1, 1]} : vector<2x9x3xbf16> to vector<1x8x3xbf16>
    %28 = vector.shape_cast %27 : vector<1x8x3xbf16> to vector<8x3xbf16>
    %29 = vector.extract_strided_slice %0 {offsets = [1, 0, 0], sizes = [1, 3, 16], strides = [1, 1, 1]} : vector<9x3x16xbf16> to vector<1x3x16xbf16>
    %30 = vector.shape_cast %29 : vector<1x3x16xbf16> to vector<3x16xbf16>
    %cst_50 = arith.constant dense<0.000000e+00> : vector<8x16xf32>
    %31 = tpu.matmul %28, %30, %cst_50 {dimension_numbers = #tpu.dot_dimension_numbers<[1], [0], [0], [1], [0, 0, 1, 1], [], []>} : vector<8x3xbf16>, vector<3x16xbf16>, vector<8x16xf32> -> vector<8x16xf32>
    %32 = arith.addf %26, %31 : vector<8x16xf32>
    %33 = vector.extract_strided_slice %3 {offsets = [0, 1, 0], sizes = [1, 8, 3], strides = [1, 1, 1]} : vector<2x9x3xbf16> to vector<1x8x3xbf16>
    %34 = vector.shape_cast %33 : vector<1x8x3xbf16> to vector<8x3xbf16>
    %35 = vector.extract_strided_slice %0 {offsets = [2, 0, 0], sizes = [1, 3, 16], strides = [1, 1, 1]} : vector<9x3x16xbf16> to vector<1x3x16xbf16>
    %36 = vector.shape_cast %35 : vector<1x3x16xbf16> to vector<3x16xbf16>
    %cst_51 = arith.constant dense<0.000000e+00> : vector<8x16xf32>
    %37 = tpu.matmul %34, %36, %cst_51 {dimension_numbers = #tpu.dot_dimension_numbers<[1], [0], [0], [1], [0, 0, 1, 1], [], []>} : vector<8x3xbf16>, vector<3x16xbf16>, vector<8x16xf32> -> vector<8x16xf32>
    %38 = arith.addf %32, %37 : vector<8x16xf32>
    %39 = vector.extract_strided_slice %5 {offsets = [0, 0, 0], sizes = [1, 8, 3], strides = [1, 1, 1]} : vector<2x9x3xbf16> to vector<1x8x3xbf16>
    %40 = vector.shape_cast %39 : vector<1x8x3xbf16> to vector<8x3xbf16>
    %41 = vector.extract_strided_slice %0 {offsets = [3, 0, 0], sizes = [1, 3, 16], strides = [1, 1, 1]} : vector<9x3x16xbf16> to vector<1x3x16xbf16>
    %42 = vector.shape_cast %41 : vector<1x3x16xbf16> to vector<3x16xbf16>
    %cst_52 = arith.constant dense<0.000000e+00> : vector<8x16xf32>
    %43 = tpu.matmul %40, %42, %cst_52 {dimension_numbers = #tpu.dot_dimension_numbers<[1], [0], [0], [1], [0, 0, 1, 1], [], []>} : vector<8x3xbf16>, vector<3x16xbf16>, vector<8x16xf32> -> vector<8x16xf32>
    %44 = arith.addf %38, %43 : vector<8x16xf32>
    %45 = vector.extract_strided_slice %5 {offsets = [1, 0, 0], sizes = [1, 8, 3], strides = [1, 1, 1]} : vector<2x9x3xbf16> to vector<1x8x3xbf16>
    %46 = vector.shape_cast %45 : vector<1x8x3xbf16> to vector<8x3xbf16>
    %47 = vector.extract_strided_slice %0 {offsets = [4, 0, 0], sizes = [1, 3, 16], strides = [1, 1, 1]} : vector<9x3x16xbf16> to vector<1x3x16xbf16>
    %48 = vector.shape_cast %47 : vector<1x3x16xbf16> to vector<3x16xbf16>
    %cst_53 = arith.constant dense<0.000000e+00> : vector<8x16xf32>
    %49 = tpu.matmul %46, %48, %cst_53 {dimension_numbers = #tpu.dot_dimension_numbers<[1], [0], [0], [1], [0, 0, 1, 1], [], []>} : vector<8x3xbf16>, vector<3x16xbf16>, vector<8x16xf32> -> vector<8x16xf32>
    %50 = arith.addf %44, %49 : vector<8x16xf32>
    %51 = vector.extract_strided_slice %5 {offsets = [0, 1, 0], sizes = [1, 8, 3], strides = [1, 1, 1]} : vector<2x9x3xbf16> to vector<1x8x3xbf16>
    %52 = vector.shape_cast %51 : vector<1x8x3xbf16> to vector<8x3xbf16>
    %53 = vector.extract_strided_slice %0 {offsets = [5, 0, 0], sizes = [1, 3, 16], strides = [1, 1, 1]} : vector<9x3x16xbf16> to vector<1x3x16xbf16>
    %54 = vector.shape_cast %53 : vector<1x3x16xbf16> to vector<3x16xbf16>
    %cst_54 = arith.constant dense<0.000000e+00> : vector<8x16xf32>
    %55 = tpu.matmul %52, %54, %cst_54 {dimension_numbers = #tpu.dot_dimension_numbers<[1], [0], [0], [1], [0, 0, 1, 1], [], []>} : vector<8x3xbf16>, vector<3x16xbf16>, vector<8x16xf32> -> vector<8x16xf32>
    %56 = arith.addf %50, %55 : vector<8x16xf32>
    %57 = vector.extract_strided_slice %7 {offsets = [0, 0, 0], sizes = [1, 8, 3], strides = [1, 1, 1]} : vector<2x9x3xbf16> to vector<1x8x3xbf16>
    %58 = vector.shape_cast %57 : vector<1x8x3xbf16> to vector<8x3xbf16>
    %59 = vector.extract_strided_slice %0 {offsets = [6, 0, 0], sizes = [1, 3, 16], strides = [1, 1, 1]} : vector<9x3x16xbf16> to vector<1x3x16xbf16>
    %60 = vector.shape_cast %59 : vector<1x3x16xbf16> to vector<3x16xbf16>
    %cst_55 = arith.constant dense<0.000000e+00> : vector<8x16xf32>
    %61 = tpu.matmul %58, %60, %cst_55 {dimension_numbers = #tpu.dot_dimension_numbers<[1], [0], [0], [1], [0, 0, 1, 1], [], []>} : vector<8x3xbf16>, vector<3x16xbf16>, vector<8x16xf32> -> vector<8x16xf32>
    %62 = arith.addf %56, %61 : vector<8x16xf32>
    %63 = vector.extract_strided_slice %7 {offsets = [1, 0, 0], sizes = [1, 8, 3], strides = [1, 1, 1]} : vector<2x9x3xbf16> to vector<1x8x3xbf16>
    %64 = vector.shape_cast %63 : vector<1x8x3xbf16> to vector<8x3xbf16>
    %65 = vector.extract_strided_slice %0 {offsets = [7, 0, 0], sizes = [1, 3, 16], strides = [1, 1, 1]} : vector<9x3x16xbf16> to vector<1x3x16xbf16>
    %66 = vector.shape_cast %65 : vector<1x3x16xbf16> to vector<3x16xbf16>
    %cst_56 = arith.constant dense<0.000000e+00> : vector<8x16xf32>
    %67 = tpu.matmul %64, %66, %cst_56 {dimension_numbers = #tpu.dot_dimension_numbers<[1], [0], [0], [1], [0, 0, 1, 1], [], []>} : vector<8x3xbf16>, vector<3x16xbf16>, vector<8x16xf32> -> vector<8x16xf32>
    %68 = arith.addf %62, %67 : vector<8x16xf32>
    %69 = vector.extract_strided_slice %7 {offsets = [0, 1, 0], sizes = [1, 8, 3], strides = [1, 1, 1]} : vector<2x9x3xbf16> to vector<1x8x3xbf16>
    %70 = vector.shape_cast %69 : vector<1x8x3xbf16> to vector<8x3xbf16>
    %71 = vector.extract_strided_slice %0 {offsets = [8, 0, 0], sizes = [1, 3, 16], strides = [1, 1, 1]} : vector<9x3x16xbf16> to vector<1x3x16xbf16>
    %72 = vector.shape_cast %71 : vector<1x3x16xbf16> to vector<3x16xbf16>
    %cst_57 = arith.constant dense<0.000000e+00> : vector<8x16xf32>
    %73 = tpu.matmul %70, %72, %cst_57 {dimension_numbers = #tpu.dot_dimension_numbers<[1], [0], [0], [1], [0, 0, 1, 1], [], []>} : vector<8x3xbf16>, vector<3x16xbf16>, vector<8x16xf32> -> vector<8x16xf32>
    %74 = arith.addf %68, %73 : vector<8x16xf32>
    %75 = vector.broadcast %1 : vector<1x16xf32> to vector<8x16xf32>
    %76 = arith.addf %74, %75 : vector<8x16xf32>
    %cst_58 = arith.constant 0.000000e+00 : f32
    %77 = vector.broadcast %cst_58 : f32 to vector<8x16xf32>
    %78 = arith.maximumf %76, %77 : vector<8x16xf32>
    %79 = arith.truncf %78 : vector<8x16xf32> to vector<8x16xbf16>
    %c0_59 = arith.constant 0 : index
    %c0_60 = arith.constant 0 : index
    %c0_61 = arith.constant 0 : index
    %c0_62 = arith.constant 0 : index
    %80 = vector.load %arg13[%c0_59, %c0_60, %c0_61, %c0_62] : memref<1x4x8x16xbf16, #tpu.memory_space<vmem>>, vector<1x1x8x16xbf16>
    %81 = vector.shape_cast %80 : vector<1x1x8x16xbf16> to vector<8x16xbf16>
    %82 = vector.shape_cast %79 : vector<8x16xbf16> to vector<1x1x8x16xbf16>
    tpu.vector_store %arg13[%c0_59, %c0_60, %c0_61, %c0_62], %82 {strides = array<i32>} : memref<1x4x8x16xbf16, #tpu.memory_space<vmem>>, vector<1x1x8x16xbf16>,
    %cst_63 = arith.constant 0.000000e+00 : f32
    %83 = vector.broadcast %cst_63 : f32 to vector<8x16xf32>
    %84 = vector.extract_strided_slice %7 {offsets = [0, 0, 0], sizes = [1, 8, 3], strides = [1, 1, 1]} : vector<2x9x3xbf16> to vector<1x8x3xbf16>
    %85 = vector.shape_cast %84 : vector<1x8x3xbf16> to vector<8x3xbf16>
    %86 = vector.extract_strided_slice %0 {offsets = [0, 0, 0], sizes = [1, 3, 16], strides = [1, 1, 1]} : vector<9x3x16xbf16> to vector<1x3x16xbf16>
    %87 = vector.shape_cast %86 : vector<1x3x16xbf16> to vector<3x16xbf16>
    %cst_64 = arith.constant dense<0.000000e+00> : vector<8x16xf32>
    %88 = tpu.matmul %85, %87, %cst_64 {dimension_numbers = #tpu.dot_dimension_numbers<[1], [0], [0], [1], [0, 0, 1, 1], [], []>} : vector<8x3xbf16>, vector<3x16xbf16>, vector<8x16xf32> -> vector<8x16xf32>
    %89 = arith.addf %83, %88 : vector<8x16xf32>
    %90 = vector.extract_strided_slice %7 {offsets = [1, 0, 0], sizes = [1, 8, 3], strides = [1, 1, 1]} : vector<2x9x3xbf16> to vector<1x8x3xbf16>
    %91 = vector.shape_cast %90 : vector<1x8x3xbf16> to vector<8x3xbf16>
    %92 = vector.extract_strided_slice %0 {offsets = [1, 0, 0], sizes = [1, 3, 16], strides = [1, 1, 1]} : vector<9x3x16xbf16> to vector<1x3x16xbf16>
    %93 = vector.shape_cast %92 : vector<1x3x16xbf16> to vector<3x16xbf16>
    %cst_65 = arith.constant dense<0.000000e+00> : vector<8x16xf32>
    %94 = tpu.matmul %91, %93, %cst_65 {dimension_numbers = #tpu.dot_dimension_numbers<[1], [0], [0], [1], [0, 0, 1, 1], [], []>} : vector<8x3xbf16>, vector<3x16xbf16>, vector<8x16xf32> -> vector<8x16xf32>
    %95 = arith.addf %89, %94 : vector<8x16xf32>
    %96 = vector.extract_strided_slice %7 {offsets = [0, 1, 0], sizes = [1, 8, 3], strides = [1, 1, 1]} : vector<2x9x3xbf16> to vector<1x8x3xbf16>
    %97 = vector.shape_cast %96 : vector<1x8x3xbf16> to vector<8x3xbf16>
    %98 = vector.extract_strided_slice %0 {offsets = [2, 0, 0], sizes = [1, 3, 16], strides = [1, 1, 1]} : vector<9x3x16xbf16> to vector<1x3x16xbf16>
    %99 = vector.shape_cast %98 : vector<1x3x16xbf16> to vector<3x16xbf16>
    %cst_66 = arith.constant dense<0.000000e+00> : vector<8x16xf32>
    %100 = tpu.matmul %97, %99, %cst_66 {dimension_numbers = #tpu.dot_dimension_numbers<[1], [0], [0], [1], [0, 0, 1, 1], [], []>} : vector<8x3xbf16>, vector<3x16xbf16>, vector<8x16xf32> -> vector<8x16xf32>
    %101 = arith.addf %95, %100 : vector<8x16xf32>
    %102 = vector.extract_strided_slice %9 {offsets = [0, 0, 0], sizes = [1, 8, 3], strides = [1, 1, 1]} : vector<2x9x3xbf16> to vector<1x8x3xbf16>
    %103 = vector.shape_cast %102 : vector<1x8x3xbf16> to vector<8x3xbf16>
    %104 = vector.extract_strided_slice %0 {offsets = [3, 0, 0], sizes = [1, 3, 16], strides = [1, 1, 1]} : vector<9x3x16xbf16> to vector<1x3x16xbf16>
    %105 = vector.shape_cast %104 : vector<1x3x16xbf16> to vector<3x16xbf16>
    %cst_67 = arith.constant dense<0.000000e+00> : vector<8x16xf32>
    %106 = tpu.matmul %103, %105, %cst_67 {dimension_numbers = #tpu.dot_dimension_numbers<[1], [0], [0], [1], [0, 0, 1, 1], [], []>} : vector<8x3xbf16>, vector<3x16xbf16>, vector<8x16xf32> -> vector<8x16xf32>
    %107 = arith.addf %101, %106 : vector<8x16xf32>
    %108 = vector.extract_strided_slice %9 {offsets = [1, 0, 0], sizes = [1, 8, 3], strides = [1, 1, 1]} : vector<2x9x3xbf16> to vector<1x8x3xbf16>
    %109 = vector.shape_cast %108 : vector<1x8x3xbf16> to vector<8x3xbf16>
    %110 = vector.extract_strided_slice %0 {offsets = [4, 0, 0], sizes = [1, 3, 16], strides = [1, 1, 1]} : vector<9x3x16xbf16> to vector<1x3x16xbf16>
    %111 = vector.shape_cast %110 : vector<1x3x16xbf16> to vector<3x16xbf16>
    %cst_68 = arith.constant dense<0.000000e+00> : vector<8x16xf32>
    %112 = tpu.matmul %109, %111, %cst_68 {dimension_numbers = #tpu.dot_dimension_numbers<[1], [0], [0], [1], [0, 0, 1, 1], [], []>} : vector<8x3xbf16>, vector<3x16xbf16>, vector<8x16xf32> -> vector<8x16xf32>
    %113 = arith.addf %107, %112 : vector<8x16xf32>
    %114 = vector.extract_strided_slice %9 {offsets = [0, 1, 0], sizes = [1, 8, 3], strides = [1, 1, 1]} : vector<2x9x3xbf16> to vector<1x8x3xbf16>
    %115 = vector.shape_cast %114 : vector<1x8x3xbf16> to vector<8x3xbf16>
    %116 = vector.extract_strided_slice %0 {offsets = [5, 0, 0], sizes = [1, 3, 16], strides = [1, 1, 1]} : vector<9x3x16xbf16> to vector<1x3x16xbf16>
    %117 = vector.shape_cast %116 : vector<1x3x16xbf16> to vector<3x16xbf16>
    %cst_69 = arith.constant dense<0.000000e+00> : vector<8x16xf32>
    %118 = tpu.matmul %115, %117, %cst_69 {dimension_numbers = #tpu.dot_dimension_numbers<[1], [0], [0], [1], [0, 0, 1, 1], [], []>} : vector<8x3xbf16>, vector<3x16xbf16>, vector<8x16xf32> -> vector<8x16xf32>
    %119 = arith.addf %113, %118 : vector<8x16xf32>
    %120 = vector.extract_strided_slice %11 {offsets = [0, 0, 0], sizes = [1, 8, 3], strides = [1, 1, 1]} : vector<2x9x3xbf16> to vector<1x8x3xbf16>
    %121 = vector.shape_cast %120 : vector<1x8x3xbf16> to vector<8x3xbf16>
    %122 = vector.extract_strided_slice %0 {offsets = [6, 0, 0], sizes = [1, 3, 16], strides = [1, 1, 1]} : vector<9x3x16xbf16> to vector<1x3x16xbf16>
    %123 = vector.shape_cast %122 : vector<1x3x16xbf16> to vector<3x16xbf16>
    %cst_70 = arith.constant dense<0.000000e+00> : vector<8x16xf32>
    %124 = tpu.matmul %121, %123, %cst_70 {dimension_numbers = #tpu.dot_dimension_numbers<[1], [0], [0], [1], [0, 0, 1, 1], [], []>} : vector<8x3xbf16>, vector<3x16xbf16>, vector<8x16xf32> -> vector<8x16xf32>
    %125 = arith.addf %119, %124 : vector<8x16xf32>
    %126 = vector.extract_strided_slice %11 {offsets = [1, 0, 0], sizes = [1, 8, 3], strides = [1, 1, 1]} : vector<2x9x3xbf16> to vector<1x8x3xbf16>
    %127 = vector.shape_cast %126 : vector<1x8x3xbf16> to vector<8x3xbf16>
    %128 = vector.extract_strided_slice %0 {offsets = [7, 0, 0], sizes = [1, 3, 16], strides = [1, 1, 1]} : vector<9x3x16xbf16> to vector<1x3x16xbf16>
    %129 = vector.shape_cast %128 : vector<1x3x16xbf16> to vector<3x16xbf16>
    %cst_71 = arith.constant dense<0.000000e+00> : vector<8x16xf32>
    %130 = tpu.matmul %127, %129, %cst_71 {dimension_numbers = #tpu.dot_dimension_numbers<[1], [0], [0], [1], [0, 0, 1, 1], [], []>} : vector<8x3xbf16>, vector<3x16xbf16>, vector<8x16xf32> -> vector<8x16xf32>
    %131 = arith.addf %125, %130 : vector<8x16xf32>
    %132 = vector.extract_strided_slice %11 {offsets = [0, 1, 0], sizes = [1, 8, 3], strides = [1, 1, 1]} : vector<2x9x3xbf16> to vector<1x8x3xbf16>
    %133 = vector.shape_cast %132 : vector<1x8x3xbf16> to vector<8x3xbf16>
    %134 = vector.extract_strided_slice %0 {offsets = [8, 0, 0], sizes = [1, 3, 16], strides = [1, 1, 1]} : vector<9x3x16xbf16> to vector<1x3x16xbf16>
    %135 = vector.shape_cast %134 : vector<1x3x16xbf16> to vector<3x16xbf16>
    %cst_72 = arith.constant dense<0.000000e+00> : vector<8x16xf32>
    %136 = tpu.matmul %133, %135, %cst_72 {dimension_numbers = #tpu.dot_dimension_numbers<[1], [0], [0], [1], [0, 0, 1, 1], [], []>} : vector<8x3xbf16>, vector<3x16xbf16>, vector<8x16xf32> -> vector<8x16xf32>
    %137 = arith.addf %131, %136 : vector<8x16xf32>
    %138 = vector.broadcast %1 : vector<1x16xf32> to vector<8x16xf32>
    %139 = arith.addf %137, %138 : vector<8x16xf32>
    %cst_73 = arith.constant 0.000000e+00 : f32
    %140 = vector.broadcast %cst_73 : f32 to vector<8x16xf32>
    %141 = arith.maximumf %139, %140 : vector<8x16xf32>
    %142 = arith.truncf %141 : vector<8x16xf32> to vector<8x16xbf16>
    %c0_74 = arith.constant 0 : index
    %c1 = arith.constant 1 : index
    %c0_75 = arith.constant 0 : index
    %c0_76 = arith.constant 0 : index
    %143 = vector.load %arg13[%c0_74, %c1, %c0_75, %c0_76] : memref<1x4x8x16xbf16, #tpu.memory_space<vmem>>, vector<1x1x8x16xbf16>
    %144 = vector.shape_cast %143 : vector<1x1x8x16xbf16> to vector<8x16xbf16>
    %145 = vector.shape_cast %142 : vector<8x16xbf16> to vector<1x1x8x16xbf16>
    tpu.vector_store %arg13[%c0_74, %c1, %c0_75, %c0_76], %145 {strides = array<i32>} : memref<1x4x8x16xbf16, #tpu.memory_space<vmem>>, vector<1x1x8x16xbf16>,
    %cst_77 = arith.constant 0.000000e+00 : f32
    %146 = vector.broadcast %cst_77 : f32 to vector<8x16xf32>
    %147 = vector.extract_strided_slice %11 {offsets = [0, 0, 0], sizes = [1, 8, 3], strides = [1, 1, 1]} : vector<2x9x3xbf16> to vector<1x8x3xbf16>
    %148 = vector.shape_cast %147 : vector<1x8x3xbf16> to vector<8x3xbf16>
    %149 = vector.extract_strided_slice %0 {offsets = [0, 0, 0], sizes = [1, 3, 16], strides = [1, 1, 1]} : vector<9x3x16xbf16> to vector<1x3x16xbf16>
    %150 = vector.shape_cast %149 : vector<1x3x16xbf16> to vector<3x16xbf16>
    %cst_78 = arith.constant dense<0.000000e+00> : vector<8x16xf32>
    %151 = tpu.matmul %148, %150, %cst_78 {dimension_numbers = #tpu.dot_dimension_numbers<[1], [0], [0], [1], [0, 0, 1, 1], [], []>} : vector<8x3xbf16>, vector<3x16xbf16>, vector<8x16xf32> -> vector<8x16xf32>
    %152 = arith.addf %146, %151 : vector<8x16xf32>
    %153 = vector.extract_strided_slice %11 {offsets = [1, 0, 0], sizes = [1, 8, 3], strides = [1, 1, 1]} : vector<2x9x3xbf16> to vector<1x8x3xbf16>
    %154 = vector.shape_cast %153 : vector<1x8x3xbf16> to vector<8x3xbf16>
    %155 = vector.extract_strided_slice %0 {offsets = [1, 0, 0], sizes = [1, 3, 16], strides = [1, 1, 1]} : vector<9x3x16xbf16> to vector<1x3x16xbf16>
    %156 = vector.shape_cast %155 : vector<1x3x16xbf16> to vector<3x16xbf16>
    %cst_79 = arith.constant dense<0.000000e+00> : vector<8x16xf32>
    %157 = tpu.matmul %154, %156, %cst_79 {dimension_numbers = #tpu.dot_dimension_numbers<[1], [0], [0], [1], [0, 0, 1, 1], [], []>} : vector<8x3xbf16>, vector<3x16xbf16>, vector<8x16xf32> -> vector<8x16xf32>
    %158 = arith.addf %152, %157 : vector<8x16xf32>
    %159 = vector.extract_strided_slice %11 {offsets = [0, 1, 0], sizes = [1, 8, 3], strides = [1, 1, 1]} : vector<2x9x3xbf16> to vector<1x8x3xbf16>
    %160 = vector.shape_cast %159 : vector<1x8x3xbf16> to vector<8x3xbf16>
    %161 = vector.extract_strided_slice %0 {offsets = [2, 0, 0], sizes = [1, 3, 16], strides = [1, 1, 1]} : vector<9x3x16xbf16> to vector<1x3x16xbf16>
    %162 = vector.shape_cast %161 : vector<1x3x16xbf16> to vector<3x16xbf16>
    %cst_80 = arith.constant dense<0.000000e+00> : vector<8x16xf32>
    %163 = tpu.matmul %160, %162, %cst_80 {dimension_numbers = #tpu.dot_dimension_numbers<[1], [0], [0], [1], [0, 0, 1, 1], [], []>} : vector<8x3xbf16>, vector<3x16xbf16>, vector<8x16xf32> -> vector<8x16xf32>
    %164 = arith.addf %158, %163 : vector<8x16xf32>
    %165 = vector.extract_strided_slice %13 {offsets = [0, 0, 0], sizes = [1, 8, 3], strides = [1, 1, 1]} : vector<2x9x3xbf16> to vector<1x8x3xbf16>
    %166 = vector.shape_cast %165 : vector<1x8x3xbf16> to vector<8x3xbf16>
    %167 = vector.extract_strided_slice %0 {offsets = [3, 0, 0], sizes = [1, 3, 16], strides = [1, 1, 1]} : vector<9x3x16xbf16> to vector<1x3x16xbf16>
    %168 = vector.shape_cast %167 : vector<1x3x16xbf16> to vector<3x16xbf16>
    %cst_81 = arith.constant dense<0.000000e+00> : vector<8x16xf32>
    %169 = tpu.matmul %166, %168, %cst_81 {dimension_numbers = #tpu.dot_dimension_numbers<[1], [0], [0], [1], [0, 0, 1, 1], [], []>} : vector<8x3xbf16>, vector<3x16xbf16>, vector<8x16xf32> -> vector<8x16xf32>
    %170 = arith.addf %164, %169 : vector<8x16xf32>
    %171 = vector.extract_strided_slice %13 {offsets = [1, 0, 0], sizes = [1, 8, 3], strides = [1, 1, 1]} : vector<2x9x3xbf16> to vector<1x8x3xbf16>
    %172 = vector.shape_cast %171 : vector<1x8x3xbf16> to vector<8x3xbf16>
    %173 = vector.extract_strided_slice %0 {offsets = [4, 0, 0], sizes = [1, 3, 16], strides = [1, 1, 1]} : vector<9x3x16xbf16> to vector<1x3x16xbf16>
    %174 = vector.shape_cast %173 : vector<1x3x16xbf16> to vector<3x16xbf16>
    %cst_82 = arith.constant dense<0.000000e+00> : vector<8x16xf32>
    %175 = tpu.matmul %172, %174, %cst_82 {dimension_numbers = #tpu.dot_dimension_numbers<[1], [0], [0], [1], [0, 0, 1, 1], [], []>} : vector<8x3xbf16>, vector<3x16xbf16>, vector<8x16xf32> -> vector<8x16xf32>
    %176 = arith.addf %170, %175 : vector<8x16xf32>
    %177 = vector.extract_strided_slice %13 {offsets = [0, 1, 0], sizes = [1, 8, 3], strides = [1, 1, 1]} : vector<2x9x3xbf16> to vector<1x8x3xbf16>
    %178 = vector.shape_cast %177 : vector<1x8x3xbf16> to vector<8x3xbf16>
    %179 = vector.extract_strided_slice %0 {offsets = [5, 0, 0], sizes = [1, 3, 16], strides = [1, 1, 1]} : vector<9x3x16xbf16> to vector<1x3x16xbf16>
    %180 = vector.shape_cast %179 : vector<1x3x16xbf16> to vector<3x16xbf16>
    %cst_83 = arith.constant dense<0.000000e+00> : vector<8x16xf32>
    %181 = tpu.matmul %178, %180, %cst_83 {dimension_numbers = #tpu.dot_dimension_numbers<[1], [0], [0], [1], [0, 0, 1, 1], [], []>} : vector<8x3xbf16>, vector<3x16xbf16>, vector<8x16xf32> -> vector<8x16xf32>
    %182 = arith.addf %176, %181 : vector<8x16xf32>
    %183 = vector.extract_strided_slice %15 {offsets = [0, 0, 0], sizes = [1, 8, 3], strides = [1, 1, 1]} : vector<2x9x3xbf16> to vector<1x8x3xbf16>
    %184 = vector.shape_cast %183 : vector<1x8x3xbf16> to vector<8x3xbf16>
    %185 = vector.extract_strided_slice %0 {offsets = [6, 0, 0], sizes = [1, 3, 16], strides = [1, 1, 1]} : vector<9x3x16xbf16> to vector<1x3x16xbf16>
    %186 = vector.shape_cast %185 : vector<1x3x16xbf16> to vector<3x16xbf16>
    %cst_84 = arith.constant dense<0.000000e+00> : vector<8x16xf32>
    %187 = tpu.matmul %184, %186, %cst_84 {dimension_numbers = #tpu.dot_dimension_numbers<[1], [0], [0], [1], [0, 0, 1, 1], [], []>} : vector<8x3xbf16>, vector<3x16xbf16>, vector<8x16xf32> -> vector<8x16xf32>
    %188 = arith.addf %182, %187 : vector<8x16xf32>
    %189 = vector.extract_strided_slice %15 {offsets = [1, 0, 0], sizes = [1, 8, 3], strides = [1, 1, 1]} : vector<2x9x3xbf16> to vector<1x8x3xbf16>
    %190 = vector.shape_cast %189 : vector<1x8x3xbf16> to vector<8x3xbf16>
    %191 = vector.extract_strided_slice %0 {offsets = [7, 0, 0], sizes = [1, 3, 16], strides = [1, 1, 1]} : vector<9x3x16xbf16> to vector<1x3x16xbf16>
    %192 = vector.shape_cast %191 : vector<1x3x16xbf16> to vector<3x16xbf16>
    %cst_85 = arith.constant dense<0.000000e+00> : vector<8x16xf32>
    %193 = tpu.matmul %190, %192, %cst_85 {dimension_numbers = #tpu.dot_dimension_numbers<[1], [0], [0], [1], [0, 0, 1, 1], [], []>} : vector<8x3xbf16>, vector<3x16xbf16>, vector<8x16xf32> -> vector<8x16xf32>
    %194 = arith.addf %188, %193 : vector<8x16xf32>
    %195 = vector.extract_strided_slice %15 {offsets = [0, 1, 0], sizes = [1, 8, 3], strides = [1, 1, 1]} : vector<2x9x3xbf16> to vector<1x8x3xbf16>
    %196 = vector.shape_cast %195 : vector<1x8x3xbf16> to vector<8x3xbf16>
    %197 = vector.extract_strided_slice %0 {offsets = [8, 0, 0], sizes = [1, 3, 16], strides = [1, 1, 1]} : vector<9x3x16xbf16> to vector<1x3x16xbf16>
    %198 = vector.shape_cast %197 : vector<1x3x16xbf16> to vector<3x16xbf16>
    %cst_86 = arith.constant dense<0.000000e+00> : vector<8x16xf32>
    %199 = tpu.matmul %196, %198, %cst_86 {dimension_numbers = #tpu.dot_dimension_numbers<[1], [0], [0], [1], [0, 0, 1, 1], [], []>} : vector<8x3xbf16>, vector<3x16xbf16>, vector<8x16xf32> -> vector<8x16xf32>
    %200 = arith.addf %194, %199 : vector<8x16xf32>
    %201 = vector.broadcast %1 : vector<1x16xf32> to vector<8x16xf32>
    %202 = arith.addf %200, %201 : vector<8x16xf32>
    %cst_87 = arith.constant 0.000000e+00 : f32
    %203 = vector.broadcast %cst_87 : f32 to vector<8x16xf32>
    %204 = arith.maximumf %202, %203 : vector<8x16xf32>
    %205 = arith.truncf %204 : vector<8x16xf32> to vector<8x16xbf16>
    %c0_88 = arith.constant 0 : index
    %c2 = arith.constant 2 : index
    %c0_89 = arith.constant 0 : index
    %c0_90 = arith.constant 0 : index
    %206 = vector.load %arg13[%c0_88, %c2, %c0_89, %c0_90] : memref<1x4x8x16xbf16, #tpu.memory_space<vmem>>, vector<1x1x8x16xbf16>
    %207 = vector.shape_cast %206 : vector<1x1x8x16xbf16> to vector<8x16xbf16>
    %208 = vector.shape_cast %205 : vector<8x16xbf16> to vector<1x1x8x16xbf16>
    tpu.vector_store %arg13[%c0_88, %c2, %c0_89, %c0_90], %208 {strides = array<i32>} : memref<1x4x8x16xbf16, #tpu.memory_space<vmem>>, vector<1x1x8x16xbf16>,
    %cst_91 = arith.constant 0.000000e+00 : f32
    %209 = vector.broadcast %cst_91 : f32 to vector<8x16xf32>
    %210 = vector.extract_strided_slice %15 {offsets = [0, 0, 0], sizes = [1, 8, 3], strides = [1, 1, 1]} : vector<2x9x3xbf16> to vector<1x8x3xbf16>
    %211 = vector.shape_cast %210 : vector<1x8x3xbf16> to vector<8x3xbf16>
    %212 = vector.extract_strided_slice %0 {offsets = [0, 0, 0], sizes = [1, 3, 16], strides = [1, 1, 1]} : vector<9x3x16xbf16> to vector<1x3x16xbf16>
    %213 = vector.shape_cast %212 : vector<1x3x16xbf16> to vector<3x16xbf16>
    %cst_92 = arith.constant dense<0.000000e+00> : vector<8x16xf32>
    %214 = tpu.matmul %211, %213, %cst_92 {dimension_numbers = #tpu.dot_dimension_numbers<[1], [0], [0], [1], [0, 0, 1, 1], [], []>} : vector<8x3xbf16>, vector<3x16xbf16>, vector<8x16xf32> -> vector<8x16xf32>
    %215 = arith.addf %209, %214 : vector<8x16xf32>
    %216 = vector.extract_strided_slice %15 {offsets = [1, 0, 0], sizes = [1, 8, 3], strides = [1, 1, 1]} : vector<2x9x3xbf16> to vector<1x8x3xbf16>
    %217 = vector.shape_cast %216 : vector<1x8x3xbf16> to vector<8x3xbf16>
    %218 = vector.extract_strided_slice %0 {offsets = [1, 0, 0], sizes = [1, 3, 16], strides = [1, 1, 1]} : vector<9x3x16xbf16> to vector<1x3x16xbf16>
    %219 = vector.shape_cast %218 : vector<1x3x16xbf16> to vector<3x16xbf16>
    %cst_93 = arith.constant dense<0.000000e+00> : vector<8x16xf32>
    %220 = tpu.matmul %217, %219, %cst_93 {dimension_numbers = #tpu.dot_dimension_numbers<[1], [0], [0], [1], [0, 0, 1, 1], [], []>} : vector<8x3xbf16>, vector<3x16xbf16>, vector<8x16xf32> -> vector<8x16xf32>
    %221 = arith.addf %215, %220 : vector<8x16xf32>
    %222 = vector.extract_strided_slice %15 {offsets = [0, 1, 0], sizes = [1, 8, 3], strides = [1, 1, 1]} : vector<2x9x3xbf16> to vector<1x8x3xbf16>
    %223 = vector.shape_cast %222 : vector<1x8x3xbf16> to vector<8x3xbf16>
    %224 = vector.extract_strided_slice %0 {offsets = [2, 0, 0], sizes = [1, 3, 16], strides = [1, 1, 1]} : vector<9x3x16xbf16> to vector<1x3x16xbf16>
    %225 = vector.shape_cast %224 : vector<1x3x16xbf16> to vector<3x16xbf16>
    %cst_94 = arith.constant dense<0.000000e+00> : vector<8x16xf32>
    %226 = tpu.matmul %223, %225, %cst_94 {dimension_numbers = #tpu.dot_dimension_numbers<[1], [0], [0], [1], [0, 0, 1, 1], [], []>} : vector<8x3xbf16>, vector<3x16xbf16>, vector<8x16xf32> -> vector<8x16xf32>
    %227 = arith.addf %221, %226 : vector<8x16xf32>
    %228 = vector.extract_strided_slice %17 {offsets = [0, 0, 0], sizes = [1, 8, 3], strides = [1, 1, 1]} : vector<2x9x3xbf16> to vector<1x8x3xbf16>
    %229 = vector.shape_cast %228 : vector<1x8x3xbf16> to vector<8x3xbf16>
    %230 = vector.extract_strided_slice %0 {offsets = [3, 0, 0], sizes = [1, 3, 16], strides = [1, 1, 1]} : vector<9x3x16xbf16> to vector<1x3x16xbf16>
    %231 = vector.shape_cast %230 : vector<1x3x16xbf16> to vector<3x16xbf16>
    %cst_95 = arith.constant dense<0.000000e+00> : vector<8x16xf32>
    %232 = tpu.matmul %229, %231, %cst_95 {dimension_numbers = #tpu.dot_dimension_numbers<[1], [0], [0], [1], [0, 0, 1, 1], [], []>} : vector<8x3xbf16>, vector<3x16xbf16>, vector<8x16xf32> -> vector<8x16xf32>
    %233 = arith.addf %227, %232 : vector<8x16xf32>
    %234 = vector.extract_strided_slice %17 {offsets = [1, 0, 0], sizes = [1, 8, 3], strides = [1, 1, 1]} : vector<2x9x3xbf16> to vector<1x8x3xbf16>
    %235 = vector.shape_cast %234 : vector<1x8x3xbf16> to vector<8x3xbf16>
    %236 = vector.extract_strided_slice %0 {offsets = [4, 0, 0], sizes = [1, 3, 16], strides = [1, 1, 1]} : vector<9x3x16xbf16> to vector<1x3x16xbf16>
    %237 = vector.shape_cast %236 : vector<1x3x16xbf16> to vector<3x16xbf16>
    %cst_96 = arith.constant dense<0.000000e+00> : vector<8x16xf32>
    %238 = tpu.matmul %235, %237, %cst_96 {dimension_numbers = #tpu.dot_dimension_numbers<[1], [0], [0], [1], [0, 0, 1, 1], [], []>} : vector<8x3xbf16>, vector<3x16xbf16>, vector<8x16xf32> -> vector<8x16xf32>
    %239 = arith.addf %233, %238 : vector<8x16xf32>
    %240 = vector.extract_strided_slice %17 {offsets = [0, 1, 0], sizes = [1, 8, 3], strides = [1, 1, 1]} : vector<2x9x3xbf16> to vector<1x8x3xbf16>
    %241 = vector.shape_cast %240 : vector<1x8x3xbf16> to vector<8x3xbf16>
    %242 = vector.extract_strided_slice %0 {offsets = [5, 0, 0], sizes = [1, 3, 16], strides = [1, 1, 1]} : vector<9x3x16xbf16> to vector<1x3x16xbf16>
    %243 = vector.shape_cast %242 : vector<1x3x16xbf16> to vector<3x16xbf16>
    %cst_97 = arith.constant dense<0.000000e+00> : vector<8x16xf32>
    %244 = tpu.matmul %241, %243, %cst_97 {dimension_numbers = #tpu.dot_dimension_numbers<[1], [0], [0], [1], [0, 0, 1, 1], [], []>} : vector<8x3xbf16>, vector<3x16xbf16>, vector<8x16xf32> -> vector<8x16xf32>
    %245 = arith.addf %239, %244 : vector<8x16xf32>
    %246 = vector.extract_strided_slice %19 {offsets = [0, 0, 0], sizes = [1, 8, 3], strides = [1, 1, 1]} : vector<2x9x3xbf16> to vector<1x8x3xbf16>
    %247 = vector.shape_cast %246 : vector<1x8x3xbf16> to vector<8x3xbf16>
    %248 = vector.extract_strided_slice %0 {offsets = [6, 0, 0], sizes = [1, 3, 16], strides = [1, 1, 1]} : vector<9x3x16xbf16> to vector<1x3x16xbf16>
    %249 = vector.shape_cast %248 : vector<1x3x16xbf16> to vector<3x16xbf16>
    %cst_98 = arith.constant dense<0.000000e+00> : vector<8x16xf32>
    %250 = tpu.matmul %247, %249, %cst_98 {dimension_numbers = #tpu.dot_dimension_numbers<[1], [0], [0], [1], [0, 0, 1, 1], [], []>} : vector<8x3xbf16>, vector<3x16xbf16>, vector<8x16xf32> -> vector<8x16xf32>
    %251 = arith.addf %245, %250 : vector<8x16xf32>
    %252 = vector.extract_strided_slice %19 {offsets = [1, 0, 0], sizes = [1, 8, 3], strides = [1, 1, 1]} : vector<2x9x3xbf16> to vector<1x8x3xbf16>
    %253 = vector.shape_cast %252 : vector<1x8x3xbf16> to vector<8x3xbf16>
    %254 = vector.extract_strided_slice %0 {offsets = [7, 0, 0], sizes = [1, 3, 16], strides = [1, 1, 1]} : vector<9x3x16xbf16> to vector<1x3x16xbf16>
    %255 = vector.shape_cast %254 : vector<1x3x16xbf16> to vector<3x16xbf16>
    %cst_99 = arith.constant dense<0.000000e+00> : vector<8x16xf32>
    %256 = tpu.matmul %253, %255, %cst_99 {dimension_numbers = #tpu.dot_dimension_numbers<[1], [0], [0], [1], [0, 0, 1, 1], [], []>} : vector<8x3xbf16>, vector<3x16xbf16>, vector<8x16xf32> -> vector<8x16xf32>
    %257 = arith.addf %251, %256 : vector<8x16xf32>
    %258 = vector.extract_strided_slice %19 {offsets = [0, 1, 0], sizes = [1, 8, 3], strides = [1, 1, 1]} : vector<2x9x3xbf16> to vector<1x8x3xbf16>
    %259 = vector.shape_cast %258 : vector<1x8x3xbf16> to vector<8x3xbf16>
    %260 = vector.extract_strided_slice %0 {offsets = [8, 0, 0], sizes = [1, 3, 16], strides = [1, 1, 1]} : vector<9x3x16xbf16> to vector<1x3x16xbf16>
    %261 = vector.shape_cast %260 : vector<1x3x16xbf16> to vector<3x16xbf16>
    %cst_100 = arith.constant dense<0.000000e+00> : vector<8x16xf32>
    %262 = tpu.matmul %259, %261, %cst_100 {dimension_numbers = #tpu.dot_dimension_numbers<[1], [0], [0], [1], [0, 0, 1, 1], [], []>} : vector<8x3xbf16>, vector<3x16xbf16>, vector<8x16xf32> -> vector<8x16xf32>
    %263 = arith.addf %257, %262 : vector<8x16xf32>
    %264 = vector.broadcast %1 : vector<1x16xf32> to vector<8x16xf32>
    %265 = arith.addf %263, %264 : vector<8x16xf32>
    %cst_101 = arith.constant 0.000000e+00 : f32
    %266 = vector.broadcast %cst_101 : f32 to vector<8x16xf32>
    %267 = arith.maximumf %265, %266 : vector<8x16xf32>
    %268 = arith.truncf %267 : vector<8x16xf32> to vector<8x16xbf16>
    %c0_102 = arith.constant 0 : index
    %c3 = arith.constant 3 : index
    %c0_103 = arith.constant 0 : index
    %c0_104 = arith.constant 0 : index
    %269 = vector.load %arg13[%c0_102, %c3, %c0_103, %c0_104] : memref<1x4x8x16xbf16, #tpu.memory_space<vmem>>, vector<1x1x8x16xbf16>
    %270 = vector.shape_cast %269 : vector<1x1x8x16xbf16> to vector<8x16xbf16>
    %271 = vector.shape_cast %268 : vector<8x16xbf16> to vector<1x1x8x16xbf16>
    tpu.vector_store %arg13[%c0_102, %c3, %c0_103, %c0_104], %271 {strides = array<i32>} : memref<1x4x8x16xbf16, #tpu.memory_space<vmem>>, vector<1x1x8x16xbf16>,
    return
  }
  func.func @transform_0(%arg0: i32, %arg1: i32) -> (i32, i32, i32, i32, i32) {
    %c8_i32 = arith.constant 8 : i32
    %0 = arith.muli %c8_i32, %arg1 : i32
    %c0_i32 = arith.constant 0 : i32
    %1 = arith.addi %0, %c0_i32 : i32
    %c0_i32_0 = arith.constant 0 : i32
    %c0_i32_1 = arith.constant 0 : i32
    %c0_i32_2 = arith.constant 0 : i32
    %c0_i32_3 = arith.constant 0 : i32
    return %arg0, %1, %c0_i32_0, %c0_i32_1, %c0_i32_2 : i32, i32, i32, i32, i32
  }
  func.func @transform_1(%arg0: i32, %arg1: i32) -> (i32, i32, i32, i32, i32) {
    %c8_i32 = arith.constant 8 : i32
    %0 = arith.muli %c8_i32, %arg1 : i32
    %c1_i32 = arith.constant 1 : i32
    %1 = arith.addi %0, %c1_i32 : i32
    %c0_i32 = arith.constant 0 : i32
    %c0_i32_0 = arith.constant 0 : i32
    %c0_i32_1 = arith.constant 0 : i32
    %c0_i32_2 = arith.constant 0 : i32
    return %arg0, %1, %c0_i32, %c0_i32_0, %c0_i32_1 : i32, i32, i32, i32, i32
  }
  func.func @transform_2(%arg0: i32, %arg1: i32) -> (i32, i32, i32, i32, i32) {
    %c8_i32 = arith.constant 8 : i32
    %0 = arith.muli %c8_i32, %arg1 : i32
    %c2_i32 = arith.constant 2 : i32
    %1 = arith.addi %0, %c2_i32 : i32
    %c0_i32 = arith.constant 0 : i32
    %c0_i32_0 = arith.constant 0 : i32
    %c0_i32_1 = arith.constant 0 : i32
    %c0_i32_2 = arith.constant 0 : i32
    return %arg0, %1, %c0_i32, %c0_i32_0, %c0_i32_1 : i32, i32, i32, i32, i32
  }
  func.func @transform_3(%arg0: i32, %arg1: i32) -> (i32, i32, i32, i32, i32) {
    %c8_i32 = arith.constant 8 : i32
    %0 = arith.muli %c8_i32, %arg1 : i32
    %c3_i32 = arith.constant 3 : i32
    %1 = arith.addi %0, %c3_i32 : i32
    %c0_i32 = arith.constant 0 : i32
    %c0_i32_0 = arith.constant 0 : i32
    %c0_i32_1 = arith.constant 0 : i32
    %c0_i32_2 = arith.constant 0 : i32
    return %arg0, %1, %c0_i32, %c0_i32_0, %c0_i32_1 : i32, i32, i32, i32, i32
  }
  func.func @transform_4(%arg0: i32, %arg1: i32) -> (i32, i32, i32, i32, i32) {
    %c8_i32 = arith.constant 8 : i32
    %0 = arith.muli %c8_i32, %arg1 : i32
    %c4_i32 = arith.constant 4 : i32
    %1 = arith.addi %0, %c4_i32 : i32
    %c0_i32 = arith.constant 0 : i32
    %c0_i32_0 = arith.constant 0 : i32
    %c0_i32_1 = arith.constant 0 : i32
    %c0_i32_2 = arith.constant 0 : i32
    return %arg0, %1, %c0_i32, %c0_i32_0, %c0_i32_1 : i32, i32, i32, i32, i32
  }
  func.func @transform_5(%arg0: i32, %arg1: i32) -> (i32, i32, i32, i32, i32) {
    %c8_i32 = arith.constant 8 : i32
    %0 = arith.muli %c8_i32, %arg1 : i32
    %c5_i32 = arith.constant 5 : i32
    %1 = arith.addi %0, %c5_i32 : i32
    %c0_i32 = arith.constant 0 : i32
    %c0_i32_0 = arith.constant 0 : i32
    %c0_i32_1 = arith.constant 0 : i32
    %c0_i32_2 = arith.constant 0 : i32
    return %arg0, %1, %c0_i32, %c0_i32_0, %c0_i32_1 : i32, i32, i32, i32, i32
  }
  func.func @transform_6(%arg0: i32, %arg1: i32) -> (i32, i32, i32, i32, i32) {
    %c8_i32 = arith.constant 8 : i32
    %0 = arith.muli %c8_i32, %arg1 : i32
    %c6_i32 = arith.constant 6 : i32
    %1 = arith.addi %0, %c6_i32 : i32
    %c0_i32 = arith.constant 0 : i32
    %c0_i32_0 = arith.constant 0 : i32
    %c0_i32_1 = arith.constant 0 : i32
    %c0_i32_2 = arith.constant 0 : i32
    return %arg0, %1, %c0_i32, %c0_i32_0, %c0_i32_1 : i32, i32, i32, i32, i32
  }
  func.func @transform_7(%arg0: i32, %arg1: i32) -> (i32, i32, i32, i32, i32) {
    %c8_i32 = arith.constant 8 : i32
    %0 = arith.muli %c8_i32, %arg1 : i32
    %c7_i32 = arith.constant 7 : i32
    %1 = arith.addi %0, %c7_i32 : i32
    %c0_i32 = arith.constant 0 : i32
    %c0_i32_0 = arith.constant 0 : i32
    %c0_i32_1 = arith.constant 0 : i32
    %c0_i32_2 = arith.constant 0 : i32
    return %arg0, %1, %c0_i32, %c0_i32_0, %c0_i32_1 : i32, i32, i32, i32, i32
  }
  func.func @transform_8(%arg0: i32, %arg1: i32) -> (i32, i32, i32, i32, i32) {
    %c8_i32 = arith.constant 8 : i32
    %0 = arith.muli %c8_i32, %arg1 : i32
    %c8_i32_0 = arith.constant 8 : i32
    %1 = arith.addi %0, %c8_i32_0 : i32
    %c0_i32 = arith.constant 0 : i32
    %c0_i32_1 = arith.constant 0 : i32
    %c0_i32_2 = arith.constant 0 : i32
    %c0_i32_3 = arith.constant 0 : i32
    return %arg0, %1, %c0_i32, %c0_i32_1, %c0_i32_2 : i32, i32, i32, i32, i32
  }
  func.func @transform_9(%arg0: i32, %arg1: i32) -> (i32, i32, i32) {
    %c0_i32 = arith.constant 0 : i32
    %c0_i32_0 = arith.constant 0 : i32
    %c0_i32_1 = arith.constant 0 : i32
    %c0_i32_2 = arith.constant 0 : i32
    return %c0_i32, %c0_i32_0, %c0_i32_1 : i32, i32, i32
  }
  func.func @transform_10(%arg0: i32, %arg1: i32) -> (i32, i32) {
    %c0_i32 = arith.constant 0 : i32
    %c0_i32_0 = arith.constant 0 : i32
    %c0_i32_1 = arith.constant 0 : i32
    return %c0_i32, %c0_i32_0 : i32, i32
  }
  func.func @transform_11(%arg0: i32, %arg1: i32) -> (i32, i32, i32, i32) {
    %c0_i32 = arith.constant 0 : i32
    %c0_i32_0 = arith.constant 0 : i32
    %c0_i32_1 = arith.constant 0 : i32
    return %arg0, %arg1, %c0_i32, %c0_i32_0 : i32, i32, i32, i32
  }
}

module attributes {stable_mosaic.version = 11 : i64} {
  func.func @_conv3x3_s2_relu_kernel(%arg0: i32, %arg1: i32, %arg2: memref<1x1x2x5x16xbf16, #tpu.memory_space<vmem>>, %arg3: memref<1x1x2x5x16xbf16, #tpu.memory_space<vmem>>, %arg4: memref<1x1x2x5x16xbf16, #tpu.memory_space<vmem>>, %arg5: memref<1x1x2x5x16xbf16, #tpu.memory_space<vmem>>, %arg6: memref<1x1x2x5x16xbf16, #tpu.memory_space<vmem>>, %arg7: memref<1x1x2x5x16xbf16, #tpu.memory_space<vmem>>, %arg8: memref<1x1x2x5x16xbf16, #tpu.memory_space<vmem>>, %arg9: memref<1x1x2x5x16xbf16, #tpu.memory_space<vmem>>, %arg10: memref<1x1x2x5x16xbf16, #tpu.memory_space<vmem>>, %arg11: memref<9x16x32xbf16, #tpu.memory_space<vmem>>, %arg12: memref<1x32xf32, #tpu.memory_space<vmem>>, %arg13: memref<1x4x4x32xbf16, #tpu.memory_space<vmem>>) attributes {dimension_semantics = [#tpu.dimension_semantics<parallel>, #tpu.dimension_semantics<parallel>], iteration_bounds = array<i64: 2, 1>, scalar_prefetch = 0 : i64, scratch_operands = 0 : i64, tpu.core_type = #tpu.core_type<tc>, window_params = [{transform_indices = @transform_0, window_bounds = array<i64: 1, 1, 2, 5, 16>}, {transform_indices = @transform_1, window_bounds = array<i64: 1, 1, 2, 5, 16>}, {transform_indices = @transform_2, window_bounds = array<i64: 1, 1, 2, 5, 16>}, {transform_indices = @transform_3, window_bounds = array<i64: 1, 1, 2, 5, 16>}, {transform_indices = @transform_4, window_bounds = array<i64: 1, 1, 2, 5, 16>}, {transform_indices = @transform_5, window_bounds = array<i64: 1, 1, 2, 5, 16>}, {transform_indices = @transform_6, window_bounds = array<i64: 1, 1, 2, 5, 16>}, {transform_indices = @transform_7, window_bounds = array<i64: 1, 1, 2, 5, 16>}, {transform_indices = @transform_8, window_bounds = array<i64: 1, 1, 2, 5, 16>}, {pipeline_mode = #tpu.pipeline_mode<synchronous>, transform_indices = @transform_9, window_bounds = array<i64: 9, 16, 32>}, {pipeline_mode = #tpu.pipeline_mode<synchronous>, transform_indices = @transform_10, window_bounds = array<i64: 1, 32>}, {transform_indices = @transform_11, window_bounds = array<i64: 1, 4, 4, 32>}]} {
    %c0 = arith.constant 0 : index
    %c0_0 = arith.constant 0 : index
    %c0_1 = arith.constant 0 : index
    %0 = vector.load %arg11[%c0, %c0_0, %c0_1] : memref<9x16x32xbf16, #tpu.memory_space<vmem>>, vector<9x16x32xbf16>
    %c0_2 = arith.constant 0 : index
    %c0_3 = arith.constant 0 : index
    %1 = vector.load %arg12[%c0_2, %c0_3] : memref<1x32xf32, #tpu.memory_space<vmem>>, vector<1x32xf32>
    %c0_4 = arith.constant 0 : index
    %c0_5 = arith.constant 0 : index
    %c0_6 = arith.constant 0 : index
    %c0_7 = arith.constant 0 : index
    %c0_8 = arith.constant 0 : index
    %2 = vector.load %arg2[%c0_4, %c0_5, %c0_6, %c0_7, %c0_8] : memref<1x1x2x5x16xbf16, #tpu.memory_space<vmem>>, vector<1x1x2x5x16xbf16>
    %3 = vector.shape_cast %2 : vector<1x1x2x5x16xbf16> to vector<2x5x16xbf16>
    %c0_9 = arith.constant 0 : index
    %c0_10 = arith.constant 0 : index
    %c0_11 = arith.constant 0 : index
    %c0_12 = arith.constant 0 : index
    %c0_13 = arith.constant 0 : index
    %4 = vector.load %arg3[%c0_9, %c0_10, %c0_11, %c0_12, %c0_13] : memref<1x1x2x5x16xbf16, #tpu.memory_space<vmem>>, vector<1x1x2x5x16xbf16>
    %5 = vector.shape_cast %4 : vector<1x1x2x5x16xbf16> to vector<2x5x16xbf16>
    %c0_14 = arith.constant 0 : index
    %c0_15 = arith.constant 0 : index
    %c0_16 = arith.constant 0 : index
    %c0_17 = arith.constant 0 : index
    %c0_18 = arith.constant 0 : index
    %6 = vector.load %arg4[%c0_14, %c0_15, %c0_16, %c0_17, %c0_18] : memref<1x1x2x5x16xbf16, #tpu.memory_space<vmem>>, vector<1x1x2x5x16xbf16>
    %7 = vector.shape_cast %6 : vector<1x1x2x5x16xbf16> to vector<2x5x16xbf16>
    %c0_19 = arith.constant 0 : index
    %c0_20 = arith.constant 0 : index
    %c0_21 = arith.constant 0 : index
    %c0_22 = arith.constant 0 : index
    %c0_23 = arith.constant 0 : index
    %8 = vector.load %arg5[%c0_19, %c0_20, %c0_21, %c0_22, %c0_23] : memref<1x1x2x5x16xbf16, #tpu.memory_space<vmem>>, vector<1x1x2x5x16xbf16>
    %9 = vector.shape_cast %8 : vector<1x1x2x5x16xbf16> to vector<2x5x16xbf16>
    %c0_24 = arith.constant 0 : index
    %c0_25 = arith.constant 0 : index
    %c0_26 = arith.constant 0 : index
    %c0_27 = arith.constant 0 : index
    %c0_28 = arith.constant 0 : index
    %10 = vector.load %arg6[%c0_24, %c0_25, %c0_26, %c0_27, %c0_28] : memref<1x1x2x5x16xbf16, #tpu.memory_space<vmem>>, vector<1x1x2x5x16xbf16>
    %11 = vector.shape_cast %10 : vector<1x1x2x5x16xbf16> to vector<2x5x16xbf16>
    %c0_29 = arith.constant 0 : index
    %c0_30 = arith.constant 0 : index
    %c0_31 = arith.constant 0 : index
    %c0_32 = arith.constant 0 : index
    %c0_33 = arith.constant 0 : index
    %12 = vector.load %arg7[%c0_29, %c0_30, %c0_31, %c0_32, %c0_33] : memref<1x1x2x5x16xbf16, #tpu.memory_space<vmem>>, vector<1x1x2x5x16xbf16>
    %13 = vector.shape_cast %12 : vector<1x1x2x5x16xbf16> to vector<2x5x16xbf16>
    %c0_34 = arith.constant 0 : index
    %c0_35 = arith.constant 0 : index
    %c0_36 = arith.constant 0 : index
    %c0_37 = arith.constant 0 : index
    %c0_38 = arith.constant 0 : index
    %14 = vector.load %arg8[%c0_34, %c0_35, %c0_36, %c0_37, %c0_38] : memref<1x1x2x5x16xbf16, #tpu.memory_space<vmem>>, vector<1x1x2x5x16xbf16>
    %15 = vector.shape_cast %14 : vector<1x1x2x5x16xbf16> to vector<2x5x16xbf16>
    %c0_39 = arith.constant 0 : index
    %c0_40 = arith.constant 0 : index
    %c0_41 = arith.constant 0 : index
    %c0_42 = arith.constant 0 : index
    %c0_43 = arith.constant 0 : index
    %16 = vector.load %arg9[%c0_39, %c0_40, %c0_41, %c0_42, %c0_43] : memref<1x1x2x5x16xbf16, #tpu.memory_space<vmem>>, vector<1x1x2x5x16xbf16>
    %17 = vector.shape_cast %16 : vector<1x1x2x5x16xbf16> to vector<2x5x16xbf16>
    %c0_44 = arith.constant 0 : index
    %c0_45 = arith.constant 0 : index
    %c0_46 = arith.constant 0 : index
    %c0_47 = arith.constant 0 : index
    %c0_48 = arith.constant 0 : index
    %18 = vector.load %arg10[%c0_44, %c0_45, %c0_46, %c0_47, %c0_48] : memref<1x1x2x5x16xbf16, #tpu.memory_space<vmem>>, vector<1x1x2x5x16xbf16>
    %19 = vector.shape_cast %18 : vector<1x1x2x5x16xbf16> to vector<2x5x16xbf16>
    %cst = arith.constant 0.000000e+00 : f32
    %20 = vector.broadcast %cst : f32 to vector<4x32xf32>
    %21 = vector.extract_strided_slice %3 {offsets = [0, 0, 0], sizes = [1, 4, 16], strides = [1, 1, 1]} : vector<2x5x16xbf16> to vector<1x4x16xbf16>
    %22 = vector.shape_cast %21 : vector<1x4x16xbf16> to vector<4x16xbf16>
    %23 = vector.extract_strided_slice %0 {offsets = [0, 0, 0], sizes = [1, 16, 32], strides = [1, 1, 1]} : vector<9x16x32xbf16> to vector<1x16x32xbf16>
    %24 = vector.shape_cast %23 : vector<1x16x32xbf16> to vector<16x32xbf16>
    %cst_49 = arith.constant dense<0.000000e+00> : vector<4x32xf32>
    %25 = tpu.matmul %22, %24, %cst_49 {dimension_numbers = #tpu.dot_dimension_numbers<[1], [0], [0], [1], [0, 0, 1, 1], [], []>} : vector<4x16xbf16>, vector<16x32xbf16>, vector<4x32xf32> -> vector<4x32xf32>
    %26 = arith.addf %20, %25 : vector<4x32xf32>
    %27 = vector.extract_strided_slice %3 {offsets = [1, 0, 0], sizes = [1, 4, 16], strides = [1, 1, 1]} : vector<2x5x16xbf16> to vector<1x4x16xbf16>
    %28 = vector.shape_cast %27 : vector<1x4x16xbf16> to vector<4x16xbf16>
    %29 = vector.extract_strided_slice %0 {offsets = [1, 0, 0], sizes = [1, 16, 32], strides = [1, 1, 1]} : vector<9x16x32xbf16> to vector<1x16x32xbf16>
    %30 = vector.shape_cast %29 : vector<1x16x32xbf16> to vector<16x32xbf16>
    %cst_50 = arith.constant dense<0.000000e+00> : vector<4x32xf32>
    %31 = tpu.matmul %28, %30, %cst_50 {dimension_numbers = #tpu.dot_dimension_numbers<[1], [0], [0], [1], [0, 0, 1, 1], [], []>} : vector<4x16xbf16>, vector<16x32xbf16>, vector<4x32xf32> -> vector<4x32xf32>
    %32 = arith.addf %26, %31 : vector<4x32xf32>
    %33 = vector.extract_strided_slice %3 {offsets = [0, 1, 0], sizes = [1, 4, 16], strides = [1, 1, 1]} : vector<2x5x16xbf16> to vector<1x4x16xbf16>
    %34 = vector.shape_cast %33 : vector<1x4x16xbf16> to vector<4x16xbf16>
    %35 = vector.extract_strided_slice %0 {offsets = [2, 0, 0], sizes = [1, 16, 32], strides = [1, 1, 1]} : vector<9x16x32xbf16> to vector<1x16x32xbf16>
    %36 = vector.shape_cast %35 : vector<1x16x32xbf16> to vector<16x32xbf16>
    %cst_51 = arith.constant dense<0.000000e+00> : vector<4x32xf32>
    %37 = tpu.matmul %34, %36, %cst_51 {dimension_numbers = #tpu.dot_dimension_numbers<[1], [0], [0], [1], [0, 0, 1, 1], [], []>} : vector<4x16xbf16>, vector<16x32xbf16>, vector<4x32xf32> -> vector<4x32xf32>
    %38 = arith.addf %32, %37 : vector<4x32xf32>
    %39 = vector.extract_strided_slice %5 {offsets = [0, 0, 0], sizes = [1, 4, 16], strides = [1, 1, 1]} : vector<2x5x16xbf16> to vector<1x4x16xbf16>
    %40 = vector.shape_cast %39 : vector<1x4x16xbf16> to vector<4x16xbf16>
    %41 = vector.extract_strided_slice %0 {offsets = [3, 0, 0], sizes = [1, 16, 32], strides = [1, 1, 1]} : vector<9x16x32xbf16> to vector<1x16x32xbf16>
    %42 = vector.shape_cast %41 : vector<1x16x32xbf16> to vector<16x32xbf16>
    %cst_52 = arith.constant dense<0.000000e+00> : vector<4x32xf32>
    %43 = tpu.matmul %40, %42, %cst_52 {dimension_numbers = #tpu.dot_dimension_numbers<[1], [0], [0], [1], [0, 0, 1, 1], [], []>} : vector<4x16xbf16>, vector<16x32xbf16>, vector<4x32xf32> -> vector<4x32xf32>
    %44 = arith.addf %38, %43 : vector<4x32xf32>
    %45 = vector.extract_strided_slice %5 {offsets = [1, 0, 0], sizes = [1, 4, 16], strides = [1, 1, 1]} : vector<2x5x16xbf16> to vector<1x4x16xbf16>
    %46 = vector.shape_cast %45 : vector<1x4x16xbf16> to vector<4x16xbf16>
    %47 = vector.extract_strided_slice %0 {offsets = [4, 0, 0], sizes = [1, 16, 32], strides = [1, 1, 1]} : vector<9x16x32xbf16> to vector<1x16x32xbf16>
    %48 = vector.shape_cast %47 : vector<1x16x32xbf16> to vector<16x32xbf16>
    %cst_53 = arith.constant dense<0.000000e+00> : vector<4x32xf32>
    %49 = tpu.matmul %46, %48, %cst_53 {dimension_numbers = #tpu.dot_dimension_numbers<[1], [0], [0], [1], [0, 0, 1, 1], [], []>} : vector<4x16xbf16>, vector<16x32xbf16>, vector<4x32xf32> -> vector<4x32xf32>
    %50 = arith.addf %44, %49 : vector<4x32xf32>
    %51 = vector.extract_strided_slice %5 {offsets = [0, 1, 0], sizes = [1, 4, 16], strides = [1, 1, 1]} : vector<2x5x16xbf16> to vector<1x4x16xbf16>
    %52 = vector.shape_cast %51 : vector<1x4x16xbf16> to vector<4x16xbf16>
    %53 = vector.extract_strided_slice %0 {offsets = [5, 0, 0], sizes = [1, 16, 32], strides = [1, 1, 1]} : vector<9x16x32xbf16> to vector<1x16x32xbf16>
    %54 = vector.shape_cast %53 : vector<1x16x32xbf16> to vector<16x32xbf16>
    %cst_54 = arith.constant dense<0.000000e+00> : vector<4x32xf32>
    %55 = tpu.matmul %52, %54, %cst_54 {dimension_numbers = #tpu.dot_dimension_numbers<[1], [0], [0], [1], [0, 0, 1, 1], [], []>} : vector<4x16xbf16>, vector<16x32xbf16>, vector<4x32xf32> -> vector<4x32xf32>
    %56 = arith.addf %50, %55 : vector<4x32xf32>
    %57 = vector.extract_strided_slice %7 {offsets = [0, 0, 0], sizes = [1, 4, 16], strides = [1, 1, 1]} : vector<2x5x16xbf16> to vector<1x4x16xbf16>
    %58 = vector.shape_cast %57 : vector<1x4x16xbf16> to vector<4x16xbf16>
    %59 = vector.extract_strided_slice %0 {offsets = [6, 0, 0], sizes = [1, 16, 32], strides = [1, 1, 1]} : vector<9x16x32xbf16> to vector<1x16x32xbf16>
    %60 = vector.shape_cast %59 : vector<1x16x32xbf16> to vector<16x32xbf16>
    %cst_55 = arith.constant dense<0.000000e+00> : vector<4x32xf32>
    %61 = tpu.matmul %58, %60, %cst_55 {dimension_numbers = #tpu.dot_dimension_numbers<[1], [0], [0], [1], [0, 0, 1, 1], [], []>} : vector<4x16xbf16>, vector<16x32xbf16>, vector<4x32xf32> -> vector<4x32xf32>
    %62 = arith.addf %56, %61 : vector<4x32xf32>
    %63 = vector.extract_strided_slice %7 {offsets = [1, 0, 0], sizes = [1, 4, 16], strides = [1, 1, 1]} : vector<2x5x16xbf16> to vector<1x4x16xbf16>
    %64 = vector.shape_cast %63 : vector<1x4x16xbf16> to vector<4x16xbf16>
    %65 = vector.extract_strided_slice %0 {offsets = [7, 0, 0], sizes = [1, 16, 32], strides = [1, 1, 1]} : vector<9x16x32xbf16> to vector<1x16x32xbf16>
    %66 = vector.shape_cast %65 : vector<1x16x32xbf16> to vector<16x32xbf16>
    %cst_56 = arith.constant dense<0.000000e+00> : vector<4x32xf32>
    %67 = tpu.matmul %64, %66, %cst_56 {dimension_numbers = #tpu.dot_dimension_numbers<[1], [0], [0], [1], [0, 0, 1, 1], [], []>} : vector<4x16xbf16>, vector<16x32xbf16>, vector<4x32xf32> -> vector<4x32xf32>
    %68 = arith.addf %62, %67 : vector<4x32xf32>
    %69 = vector.extract_strided_slice %7 {offsets = [0, 1, 0], sizes = [1, 4, 16], strides = [1, 1, 1]} : vector<2x5x16xbf16> to vector<1x4x16xbf16>
    %70 = vector.shape_cast %69 : vector<1x4x16xbf16> to vector<4x16xbf16>
    %71 = vector.extract_strided_slice %0 {offsets = [8, 0, 0], sizes = [1, 16, 32], strides = [1, 1, 1]} : vector<9x16x32xbf16> to vector<1x16x32xbf16>
    %72 = vector.shape_cast %71 : vector<1x16x32xbf16> to vector<16x32xbf16>
    %cst_57 = arith.constant dense<0.000000e+00> : vector<4x32xf32>
    %73 = tpu.matmul %70, %72, %cst_57 {dimension_numbers = #tpu.dot_dimension_numbers<[1], [0], [0], [1], [0, 0, 1, 1], [], []>} : vector<4x16xbf16>, vector<16x32xbf16>, vector<4x32xf32> -> vector<4x32xf32>
    %74 = arith.addf %68, %73 : vector<4x32xf32>
    %75 = vector.broadcast %1 : vector<1x32xf32> to vector<4x32xf32>
    %76 = arith.addf %74, %75 : vector<4x32xf32>
    %cst_58 = arith.constant 0.000000e+00 : f32
    %77 = vector.broadcast %cst_58 : f32 to vector<4x32xf32>
    %78 = arith.maximumf %76, %77 : vector<4x32xf32>
    %79 = arith.truncf %78 : vector<4x32xf32> to vector<4x32xbf16>
    %c0_59 = arith.constant 0 : index
    %c0_60 = arith.constant 0 : index
    %c0_61 = arith.constant 0 : index
    %c0_62 = arith.constant 0 : index
    %80 = vector.load %arg13[%c0_59, %c0_60, %c0_61, %c0_62] : memref<1x4x4x32xbf16, #tpu.memory_space<vmem>>, vector<1x1x4x32xbf16>
    %81 = vector.shape_cast %80 : vector<1x1x4x32xbf16> to vector<4x32xbf16>
    %82 = vector.shape_cast %79 : vector<4x32xbf16> to vector<1x1x4x32xbf16>
    tpu.vector_store %arg13[%c0_59, %c0_60, %c0_61, %c0_62], %82 {strides = array<i32>} : memref<1x4x4x32xbf16, #tpu.memory_space<vmem>>, vector<1x1x4x32xbf16>,
    %cst_63 = arith.constant 0.000000e+00 : f32
    %83 = vector.broadcast %cst_63 : f32 to vector<4x32xf32>
    %84 = vector.extract_strided_slice %7 {offsets = [0, 0, 0], sizes = [1, 4, 16], strides = [1, 1, 1]} : vector<2x5x16xbf16> to vector<1x4x16xbf16>
    %85 = vector.shape_cast %84 : vector<1x4x16xbf16> to vector<4x16xbf16>
    %86 = vector.extract_strided_slice %0 {offsets = [0, 0, 0], sizes = [1, 16, 32], strides = [1, 1, 1]} : vector<9x16x32xbf16> to vector<1x16x32xbf16>
    %87 = vector.shape_cast %86 : vector<1x16x32xbf16> to vector<16x32xbf16>
    %cst_64 = arith.constant dense<0.000000e+00> : vector<4x32xf32>
    %88 = tpu.matmul %85, %87, %cst_64 {dimension_numbers = #tpu.dot_dimension_numbers<[1], [0], [0], [1], [0, 0, 1, 1], [], []>} : vector<4x16xbf16>, vector<16x32xbf16>, vector<4x32xf32> -> vector<4x32xf32>
    %89 = arith.addf %83, %88 : vector<4x32xf32>
    %90 = vector.extract_strided_slice %7 {offsets = [1, 0, 0], sizes = [1, 4, 16], strides = [1, 1, 1]} : vector<2x5x16xbf16> to vector<1x4x16xbf16>
    %91 = vector.shape_cast %90 : vector<1x4x16xbf16> to vector<4x16xbf16>
    %92 = vector.extract_strided_slice %0 {offsets = [1, 0, 0], sizes = [1, 16, 32], strides = [1, 1, 1]} : vector<9x16x32xbf16> to vector<1x16x32xbf16>
    %93 = vector.shape_cast %92 : vector<1x16x32xbf16> to vector<16x32xbf16>
    %cst_65 = arith.constant dense<0.000000e+00> : vector<4x32xf32>
    %94 = tpu.matmul %91, %93, %cst_65 {dimension_numbers = #tpu.dot_dimension_numbers<[1], [0], [0], [1], [0, 0, 1, 1], [], []>} : vector<4x16xbf16>, vector<16x32xbf16>, vector<4x32xf32> -> vector<4x32xf32>
    %95 = arith.addf %89, %94 : vector<4x32xf32>
    %96 = vector.extract_strided_slice %7 {offsets = [0, 1, 0], sizes = [1, 4, 16], strides = [1, 1, 1]} : vector<2x5x16xbf16> to vector<1x4x16xbf16>
    %97 = vector.shape_cast %96 : vector<1x4x16xbf16> to vector<4x16xbf16>
    %98 = vector.extract_strided_slice %0 {offsets = [2, 0, 0], sizes = [1, 16, 32], strides = [1, 1, 1]} : vector<9x16x32xbf16> to vector<1x16x32xbf16>
    %99 = vector.shape_cast %98 : vector<1x16x32xbf16> to vector<16x32xbf16>
    %cst_66 = arith.constant dense<0.000000e+00> : vector<4x32xf32>
    %100 = tpu.matmul %97, %99, %cst_66 {dimension_numbers = #tpu.dot_dimension_numbers<[1], [0], [0], [1], [0, 0, 1, 1], [], []>} : vector<4x16xbf16>, vector<16x32xbf16>, vector<4x32xf32> -> vector<4x32xf32>
    %101 = arith.addf %95, %100 : vector<4x32xf32>
    %102 = vector.extract_strided_slice %9 {offsets = [0, 0, 0], sizes = [1, 4, 16], strides = [1, 1, 1]} : vector<2x5x16xbf16> to vector<1x4x16xbf16>
    %103 = vector.shape_cast %102 : vector<1x4x16xbf16> to vector<4x16xbf16>
    %104 = vector.extract_strided_slice %0 {offsets = [3, 0, 0], sizes = [1, 16, 32], strides = [1, 1, 1]} : vector<9x16x32xbf16> to vector<1x16x32xbf16>
    %105 = vector.shape_cast %104 : vector<1x16x32xbf16> to vector<16x32xbf16>
    %cst_67 = arith.constant dense<0.000000e+00> : vector<4x32xf32>
    %106 = tpu.matmul %103, %105, %cst_67 {dimension_numbers = #tpu.dot_dimension_numbers<[1], [0], [0], [1], [0, 0, 1, 1], [], []>} : vector<4x16xbf16>, vector<16x32xbf16>, vector<4x32xf32> -> vector<4x32xf32>
    %107 = arith.addf %101, %106 : vector<4x32xf32>
    %108 = vector.extract_strided_slice %9 {offsets = [1, 0, 0], sizes = [1, 4, 16], strides = [1, 1, 1]} : vector<2x5x16xbf16> to vector<1x4x16xbf16>
    %109 = vector.shape_cast %108 : vector<1x4x16xbf16> to vector<4x16xbf16>
    %110 = vector.extract_strided_slice %0 {offsets = [4, 0, 0], sizes = [1, 16, 32], strides = [1, 1, 1]} : vector<9x16x32xbf16> to vector<1x16x32xbf16>
    %111 = vector.shape_cast %110 : vector<1x16x32xbf16> to vector<16x32xbf16>
    %cst_68 = arith.constant dense<0.000000e+00> : vector<4x32xf32>
    %112 = tpu.matmul %109, %111, %cst_68 {dimension_numbers = #tpu.dot_dimension_numbers<[1], [0], [0], [1], [0, 0, 1, 1], [], []>} : vector<4x16xbf16>, vector<16x32xbf16>, vector<4x32xf32> -> vector<4x32xf32>
    %113 = arith.addf %107, %112 : vector<4x32xf32>
    %114 = vector.extract_strided_slice %9 {offsets = [0, 1, 0], sizes = [1, 4, 16], strides = [1, 1, 1]} : vector<2x5x16xbf16> to vector<1x4x16xbf16>
    %115 = vector.shape_cast %114 : vector<1x4x16xbf16> to vector<4x16xbf16>
    %116 = vector.extract_strided_slice %0 {offsets = [5, 0, 0], sizes = [1, 16, 32], strides = [1, 1, 1]} : vector<9x16x32xbf16> to vector<1x16x32xbf16>
    %117 = vector.shape_cast %116 : vector<1x16x32xbf16> to vector<16x32xbf16>
    %cst_69 = arith.constant dense<0.000000e+00> : vector<4x32xf32>
    %118 = tpu.matmul %115, %117, %cst_69 {dimension_numbers = #tpu.dot_dimension_numbers<[1], [0], [0], [1], [0, 0, 1, 1], [], []>} : vector<4x16xbf16>, vector<16x32xbf16>, vector<4x32xf32> -> vector<4x32xf32>
    %119 = arith.addf %113, %118 : vector<4x32xf32>
    %120 = vector.extract_strided_slice %11 {offsets = [0, 0, 0], sizes = [1, 4, 16], strides = [1, 1, 1]} : vector<2x5x16xbf16> to vector<1x4x16xbf16>
    %121 = vector.shape_cast %120 : vector<1x4x16xbf16> to vector<4x16xbf16>
    %122 = vector.extract_strided_slice %0 {offsets = [6, 0, 0], sizes = [1, 16, 32], strides = [1, 1, 1]} : vector<9x16x32xbf16> to vector<1x16x32xbf16>
    %123 = vector.shape_cast %122 : vector<1x16x32xbf16> to vector<16x32xbf16>
    %cst_70 = arith.constant dense<0.000000e+00> : vector<4x32xf32>
    %124 = tpu.matmul %121, %123, %cst_70 {dimension_numbers = #tpu.dot_dimension_numbers<[1], [0], [0], [1], [0, 0, 1, 1], [], []>} : vector<4x16xbf16>, vector<16x32xbf16>, vector<4x32xf32> -> vector<4x32xf32>
    %125 = arith.addf %119, %124 : vector<4x32xf32>
    %126 = vector.extract_strided_slice %11 {offsets = [1, 0, 0], sizes = [1, 4, 16], strides = [1, 1, 1]} : vector<2x5x16xbf16> to vector<1x4x16xbf16>
    %127 = vector.shape_cast %126 : vector<1x4x16xbf16> to vector<4x16xbf16>
    %128 = vector.extract_strided_slice %0 {offsets = [7, 0, 0], sizes = [1, 16, 32], strides = [1, 1, 1]} : vector<9x16x32xbf16> to vector<1x16x32xbf16>
    %129 = vector.shape_cast %128 : vector<1x16x32xbf16> to vector<16x32xbf16>
    %cst_71 = arith.constant dense<0.000000e+00> : vector<4x32xf32>
    %130 = tpu.matmul %127, %129, %cst_71 {dimension_numbers = #tpu.dot_dimension_numbers<[1], [0], [0], [1], [0, 0, 1, 1], [], []>} : vector<4x16xbf16>, vector<16x32xbf16>, vector<4x32xf32> -> vector<4x32xf32>
    %131 = arith.addf %125, %130 : vector<4x32xf32>
    %132 = vector.extract_strided_slice %11 {offsets = [0, 1, 0], sizes = [1, 4, 16], strides = [1, 1, 1]} : vector<2x5x16xbf16> to vector<1x4x16xbf16>
    %133 = vector.shape_cast %132 : vector<1x4x16xbf16> to vector<4x16xbf16>
    %134 = vector.extract_strided_slice %0 {offsets = [8, 0, 0], sizes = [1, 16, 32], strides = [1, 1, 1]} : vector<9x16x32xbf16> to vector<1x16x32xbf16>
    %135 = vector.shape_cast %134 : vector<1x16x32xbf16> to vector<16x32xbf16>
    %cst_72 = arith.constant dense<0.000000e+00> : vector<4x32xf32>
    %136 = tpu.matmul %133, %135, %cst_72 {dimension_numbers = #tpu.dot_dimension_numbers<[1], [0], [0], [1], [0, 0, 1, 1], [], []>} : vector<4x16xbf16>, vector<16x32xbf16>, vector<4x32xf32> -> vector<4x32xf32>
    %137 = arith.addf %131, %136 : vector<4x32xf32>
    %138 = vector.broadcast %1 : vector<1x32xf32> to vector<4x32xf32>
    %139 = arith.addf %137, %138 : vector<4x32xf32>
    %cst_73 = arith.constant 0.000000e+00 : f32
    %140 = vector.broadcast %cst_73 : f32 to vector<4x32xf32>
    %141 = arith.maximumf %139, %140 : vector<4x32xf32>
    %142 = arith.truncf %141 : vector<4x32xf32> to vector<4x32xbf16>
    %c0_74 = arith.constant 0 : index
    %c1 = arith.constant 1 : index
    %c0_75 = arith.constant 0 : index
    %c0_76 = arith.constant 0 : index
    %143 = vector.load %arg13[%c0_74, %c1, %c0_75, %c0_76] : memref<1x4x4x32xbf16, #tpu.memory_space<vmem>>, vector<1x1x4x32xbf16>
    %144 = vector.shape_cast %143 : vector<1x1x4x32xbf16> to vector<4x32xbf16>
    %145 = vector.shape_cast %142 : vector<4x32xbf16> to vector<1x1x4x32xbf16>
    tpu.vector_store %arg13[%c0_74, %c1, %c0_75, %c0_76], %145 {strides = array<i32>} : memref<1x4x4x32xbf16, #tpu.memory_space<vmem>>, vector<1x1x4x32xbf16>,
    %cst_77 = arith.constant 0.000000e+00 : f32
    %146 = vector.broadcast %cst_77 : f32 to vector<4x32xf32>
    %147 = vector.extract_strided_slice %11 {offsets = [0, 0, 0], sizes = [1, 4, 16], strides = [1, 1, 1]} : vector<2x5x16xbf16> to vector<1x4x16xbf16>
    %148 = vector.shape_cast %147 : vector<1x4x16xbf16> to vector<4x16xbf16>
    %149 = vector.extract_strided_slice %0 {offsets = [0, 0, 0], sizes = [1, 16, 32], strides = [1, 1, 1]} : vector<9x16x32xbf16> to vector<1x16x32xbf16>
    %150 = vector.shape_cast %149 : vector<1x16x32xbf16> to vector<16x32xbf16>
    %cst_78 = arith.constant dense<0.000000e+00> : vector<4x32xf32>
    %151 = tpu.matmul %148, %150, %cst_78 {dimension_numbers = #tpu.dot_dimension_numbers<[1], [0], [0], [1], [0, 0, 1, 1], [], []>} : vector<4x16xbf16>, vector<16x32xbf16>, vector<4x32xf32> -> vector<4x32xf32>
    %152 = arith.addf %146, %151 : vector<4x32xf32>
    %153 = vector.extract_strided_slice %11 {offsets = [1, 0, 0], sizes = [1, 4, 16], strides = [1, 1, 1]} : vector<2x5x16xbf16> to vector<1x4x16xbf16>
    %154 = vector.shape_cast %153 : vector<1x4x16xbf16> to vector<4x16xbf16>
    %155 = vector.extract_strided_slice %0 {offsets = [1, 0, 0], sizes = [1, 16, 32], strides = [1, 1, 1]} : vector<9x16x32xbf16> to vector<1x16x32xbf16>
    %156 = vector.shape_cast %155 : vector<1x16x32xbf16> to vector<16x32xbf16>
    %cst_79 = arith.constant dense<0.000000e+00> : vector<4x32xf32>
    %157 = tpu.matmul %154, %156, %cst_79 {dimension_numbers = #tpu.dot_dimension_numbers<[1], [0], [0], [1], [0, 0, 1, 1], [], []>} : vector<4x16xbf16>, vector<16x32xbf16>, vector<4x32xf32> -> vector<4x32xf32>
    %158 = arith.addf %152, %157 : vector<4x32xf32>
    %159 = vector.extract_strided_slice %11 {offsets = [0, 1, 0], sizes = [1, 4, 16], strides = [1, 1, 1]} : vector<2x5x16xbf16> to vector<1x4x16xbf16>
    %160 = vector.shape_cast %159 : vector<1x4x16xbf16> to vector<4x16xbf16>
    %161 = vector.extract_strided_slice %0 {offsets = [2, 0, 0], sizes = [1, 16, 32], strides = [1, 1, 1]} : vector<9x16x32xbf16> to vector<1x16x32xbf16>
    %162 = vector.shape_cast %161 : vector<1x16x32xbf16> to vector<16x32xbf16>
    %cst_80 = arith.constant dense<0.000000e+00> : vector<4x32xf32>
    %163 = tpu.matmul %160, %162, %cst_80 {dimension_numbers = #tpu.dot_dimension_numbers<[1], [0], [0], [1], [0, 0, 1, 1], [], []>} : vector<4x16xbf16>, vector<16x32xbf16>, vector<4x32xf32> -> vector<4x32xf32>
    %164 = arith.addf %158, %163 : vector<4x32xf32>
    %165 = vector.extract_strided_slice %13 {offsets = [0, 0, 0], sizes = [1, 4, 16], strides = [1, 1, 1]} : vector<2x5x16xbf16> to vector<1x4x16xbf16>
    %166 = vector.shape_cast %165 : vector<1x4x16xbf16> to vector<4x16xbf16>
    %167 = vector.extract_strided_slice %0 {offsets = [3, 0, 0], sizes = [1, 16, 32], strides = [1, 1, 1]} : vector<9x16x32xbf16> to vector<1x16x32xbf16>
    %168 = vector.shape_cast %167 : vector<1x16x32xbf16> to vector<16x32xbf16>
    %cst_81 = arith.constant dense<0.000000e+00> : vector<4x32xf32>
    %169 = tpu.matmul %166, %168, %cst_81 {dimension_numbers = #tpu.dot_dimension_numbers<[1], [0], [0], [1], [0, 0, 1, 1], [], []>} : vector<4x16xbf16>, vector<16x32xbf16>, vector<4x32xf32> -> vector<4x32xf32>
    %170 = arith.addf %164, %169 : vector<4x32xf32>
    %171 = vector.extract_strided_slice %13 {offsets = [1, 0, 0], sizes = [1, 4, 16], strides = [1, 1, 1]} : vector<2x5x16xbf16> to vector<1x4x16xbf16>
    %172 = vector.shape_cast %171 : vector<1x4x16xbf16> to vector<4x16xbf16>
    %173 = vector.extract_strided_slice %0 {offsets = [4, 0, 0], sizes = [1, 16, 32], strides = [1, 1, 1]} : vector<9x16x32xbf16> to vector<1x16x32xbf16>
    %174 = vector.shape_cast %173 : vector<1x16x32xbf16> to vector<16x32xbf16>
    %cst_82 = arith.constant dense<0.000000e+00> : vector<4x32xf32>
    %175 = tpu.matmul %172, %174, %cst_82 {dimension_numbers = #tpu.dot_dimension_numbers<[1], [0], [0], [1], [0, 0, 1, 1], [], []>} : vector<4x16xbf16>, vector<16x32xbf16>, vector<4x32xf32> -> vector<4x32xf32>
    %176 = arith.addf %170, %175 : vector<4x32xf32>
    %177 = vector.extract_strided_slice %13 {offsets = [0, 1, 0], sizes = [1, 4, 16], strides = [1, 1, 1]} : vector<2x5x16xbf16> to vector<1x4x16xbf16>
    %178 = vector.shape_cast %177 : vector<1x4x16xbf16> to vector<4x16xbf16>
    %179 = vector.extract_strided_slice %0 {offsets = [5, 0, 0], sizes = [1, 16, 32], strides = [1, 1, 1]} : vector<9x16x32xbf16> to vector<1x16x32xbf16>
    %180 = vector.shape_cast %179 : vector<1x16x32xbf16> to vector<16x32xbf16>
    %cst_83 = arith.constant dense<0.000000e+00> : vector<4x32xf32>
    %181 = tpu.matmul %178, %180, %cst_83 {dimension_numbers = #tpu.dot_dimension_numbers<[1], [0], [0], [1], [0, 0, 1, 1], [], []>} : vector<4x16xbf16>, vector<16x32xbf16>, vector<4x32xf32> -> vector<4x32xf32>
    %182 = arith.addf %176, %181 : vector<4x32xf32>
    %183 = vector.extract_strided_slice %15 {offsets = [0, 0, 0], sizes = [1, 4, 16], strides = [1, 1, 1]} : vector<2x5x16xbf16> to vector<1x4x16xbf16>
    %184 = vector.shape_cast %183 : vector<1x4x16xbf16> to vector<4x16xbf16>
    %185 = vector.extract_strided_slice %0 {offsets = [6, 0, 0], sizes = [1, 16, 32], strides = [1, 1, 1]} : vector<9x16x32xbf16> to vector<1x16x32xbf16>
    %186 = vector.shape_cast %185 : vector<1x16x32xbf16> to vector<16x32xbf16>
    %cst_84 = arith.constant dense<0.000000e+00> : vector<4x32xf32>
    %187 = tpu.matmul %184, %186, %cst_84 {dimension_numbers = #tpu.dot_dimension_numbers<[1], [0], [0], [1], [0, 0, 1, 1], [], []>} : vector<4x16xbf16>, vector<16x32xbf16>, vector<4x32xf32> -> vector<4x32xf32>
    %188 = arith.addf %182, %187 : vector<4x32xf32>
    %189 = vector.extract_strided_slice %15 {offsets = [1, 0, 0], sizes = [1, 4, 16], strides = [1, 1, 1]} : vector<2x5x16xbf16> to vector<1x4x16xbf16>
    %190 = vector.shape_cast %189 : vector<1x4x16xbf16> to vector<4x16xbf16>
    %191 = vector.extract_strided_slice %0 {offsets = [7, 0, 0], sizes = [1, 16, 32], strides = [1, 1, 1]} : vector<9x16x32xbf16> to vector<1x16x32xbf16>
    %192 = vector.shape_cast %191 : vector<1x16x32xbf16> to vector<16x32xbf16>
    %cst_85 = arith.constant dense<0.000000e+00> : vector<4x32xf32>
    %193 = tpu.matmul %190, %192, %cst_85 {dimension_numbers = #tpu.dot_dimension_numbers<[1], [0], [0], [1], [0, 0, 1, 1], [], []>} : vector<4x16xbf16>, vector<16x32xbf16>, vector<4x32xf32> -> vector<4x32xf32>
    %194 = arith.addf %188, %193 : vector<4x32xf32>
    %195 = vector.extract_strided_slice %15 {offsets = [0, 1, 0], sizes = [1, 4, 16], strides = [1, 1, 1]} : vector<2x5x16xbf16> to vector<1x4x16xbf16>
    %196 = vector.shape_cast %195 : vector<1x4x16xbf16> to vector<4x16xbf16>
    %197 = vector.extract_strided_slice %0 {offsets = [8, 0, 0], sizes = [1, 16, 32], strides = [1, 1, 1]} : vector<9x16x32xbf16> to vector<1x16x32xbf16>
    %198 = vector.shape_cast %197 : vector<1x16x32xbf16> to vector<16x32xbf16>
    %cst_86 = arith.constant dense<0.000000e+00> : vector<4x32xf32>
    %199 = tpu.matmul %196, %198, %cst_86 {dimension_numbers = #tpu.dot_dimension_numbers<[1], [0], [0], [1], [0, 0, 1, 1], [], []>} : vector<4x16xbf16>, vector<16x32xbf16>, vector<4x32xf32> -> vector<4x32xf32>
    %200 = arith.addf %194, %199 : vector<4x32xf32>
    %201 = vector.broadcast %1 : vector<1x32xf32> to vector<4x32xf32>
    %202 = arith.addf %200, %201 : vector<4x32xf32>
    %cst_87 = arith.constant 0.000000e+00 : f32
    %203 = vector.broadcast %cst_87 : f32 to vector<4x32xf32>
    %204 = arith.maximumf %202, %203 : vector<4x32xf32>
    %205 = arith.truncf %204 : vector<4x32xf32> to vector<4x32xbf16>
    %c0_88 = arith.constant 0 : index
    %c2 = arith.constant 2 : index
    %c0_89 = arith.constant 0 : index
    %c0_90 = arith.constant 0 : index
    %206 = vector.load %arg13[%c0_88, %c2, %c0_89, %c0_90] : memref<1x4x4x32xbf16, #tpu.memory_space<vmem>>, vector<1x1x4x32xbf16>
    %207 = vector.shape_cast %206 : vector<1x1x4x32xbf16> to vector<4x32xbf16>
    %208 = vector.shape_cast %205 : vector<4x32xbf16> to vector<1x1x4x32xbf16>
    tpu.vector_store %arg13[%c0_88, %c2, %c0_89, %c0_90], %208 {strides = array<i32>} : memref<1x4x4x32xbf16, #tpu.memory_space<vmem>>, vector<1x1x4x32xbf16>,
    %cst_91 = arith.constant 0.000000e+00 : f32
    %209 = vector.broadcast %cst_91 : f32 to vector<4x32xf32>
    %210 = vector.extract_strided_slice %15 {offsets = [0, 0, 0], sizes = [1, 4, 16], strides = [1, 1, 1]} : vector<2x5x16xbf16> to vector<1x4x16xbf16>
    %211 = vector.shape_cast %210 : vector<1x4x16xbf16> to vector<4x16xbf16>
    %212 = vector.extract_strided_slice %0 {offsets = [0, 0, 0], sizes = [1, 16, 32], strides = [1, 1, 1]} : vector<9x16x32xbf16> to vector<1x16x32xbf16>
    %213 = vector.shape_cast %212 : vector<1x16x32xbf16> to vector<16x32xbf16>
    %cst_92 = arith.constant dense<0.000000e+00> : vector<4x32xf32>
    %214 = tpu.matmul %211, %213, %cst_92 {dimension_numbers = #tpu.dot_dimension_numbers<[1], [0], [0], [1], [0, 0, 1, 1], [], []>} : vector<4x16xbf16>, vector<16x32xbf16>, vector<4x32xf32> -> vector<4x32xf32>
    %215 = arith.addf %209, %214 : vector<4x32xf32>
    %216 = vector.extract_strided_slice %15 {offsets = [1, 0, 0], sizes = [1, 4, 16], strides = [1, 1, 1]} : vector<2x5x16xbf16> to vector<1x4x16xbf16>
    %217 = vector.shape_cast %216 : vector<1x4x16xbf16> to vector<4x16xbf16>
    %218 = vector.extract_strided_slice %0 {offsets = [1, 0, 0], sizes = [1, 16, 32], strides = [1, 1, 1]} : vector<9x16x32xbf16> to vector<1x16x32xbf16>
    %219 = vector.shape_cast %218 : vector<1x16x32xbf16> to vector<16x32xbf16>
    %cst_93 = arith.constant dense<0.000000e+00> : vector<4x32xf32>
    %220 = tpu.matmul %217, %219, %cst_93 {dimension_numbers = #tpu.dot_dimension_numbers<[1], [0], [0], [1], [0, 0, 1, 1], [], []>} : vector<4x16xbf16>, vector<16x32xbf16>, vector<4x32xf32> -> vector<4x32xf32>
    %221 = arith.addf %215, %220 : vector<4x32xf32>
    %222 = vector.extract_strided_slice %15 {offsets = [0, 1, 0], sizes = [1, 4, 16], strides = [1, 1, 1]} : vector<2x5x16xbf16> to vector<1x4x16xbf16>
    %223 = vector.shape_cast %222 : vector<1x4x16xbf16> to vector<4x16xbf16>
    %224 = vector.extract_strided_slice %0 {offsets = [2, 0, 0], sizes = [1, 16, 32], strides = [1, 1, 1]} : vector<9x16x32xbf16> to vector<1x16x32xbf16>
    %225 = vector.shape_cast %224 : vector<1x16x32xbf16> to vector<16x32xbf16>
    %cst_94 = arith.constant dense<0.000000e+00> : vector<4x32xf32>
    %226 = tpu.matmul %223, %225, %cst_94 {dimension_numbers = #tpu.dot_dimension_numbers<[1], [0], [0], [1], [0, 0, 1, 1], [], []>} : vector<4x16xbf16>, vector<16x32xbf16>, vector<4x32xf32> -> vector<4x32xf32>
    %227 = arith.addf %221, %226 : vector<4x32xf32>
    %228 = vector.extract_strided_slice %17 {offsets = [0, 0, 0], sizes = [1, 4, 16], strides = [1, 1, 1]} : vector<2x5x16xbf16> to vector<1x4x16xbf16>
    %229 = vector.shape_cast %228 : vector<1x4x16xbf16> to vector<4x16xbf16>
    %230 = vector.extract_strided_slice %0 {offsets = [3, 0, 0], sizes = [1, 16, 32], strides = [1, 1, 1]} : vector<9x16x32xbf16> to vector<1x16x32xbf16>
    %231 = vector.shape_cast %230 : vector<1x16x32xbf16> to vector<16x32xbf16>
    %cst_95 = arith.constant dense<0.000000e+00> : vector<4x32xf32>
    %232 = tpu.matmul %229, %231, %cst_95 {dimension_numbers = #tpu.dot_dimension_numbers<[1], [0], [0], [1], [0, 0, 1, 1], [], []>} : vector<4x16xbf16>, vector<16x32xbf16>, vector<4x32xf32> -> vector<4x32xf32>
    %233 = arith.addf %227, %232 : vector<4x32xf32>
    %234 = vector.extract_strided_slice %17 {offsets = [1, 0, 0], sizes = [1, 4, 16], strides = [1, 1, 1]} : vector<2x5x16xbf16> to vector<1x4x16xbf16>
    %235 = vector.shape_cast %234 : vector<1x4x16xbf16> to vector<4x16xbf16>
    %236 = vector.extract_strided_slice %0 {offsets = [4, 0, 0], sizes = [1, 16, 32], strides = [1, 1, 1]} : vector<9x16x32xbf16> to vector<1x16x32xbf16>
    %237 = vector.shape_cast %236 : vector<1x16x32xbf16> to vector<16x32xbf16>
    %cst_96 = arith.constant dense<0.000000e+00> : vector<4x32xf32>
    %238 = tpu.matmul %235, %237, %cst_96 {dimension_numbers = #tpu.dot_dimension_numbers<[1], [0], [0], [1], [0, 0, 1, 1], [], []>} : vector<4x16xbf16>, vector<16x32xbf16>, vector<4x32xf32> -> vector<4x32xf32>
    %239 = arith.addf %233, %238 : vector<4x32xf32>
    %240 = vector.extract_strided_slice %17 {offsets = [0, 1, 0], sizes = [1, 4, 16], strides = [1, 1, 1]} : vector<2x5x16xbf16> to vector<1x4x16xbf16>
    %241 = vector.shape_cast %240 : vector<1x4x16xbf16> to vector<4x16xbf16>
    %242 = vector.extract_strided_slice %0 {offsets = [5, 0, 0], sizes = [1, 16, 32], strides = [1, 1, 1]} : vector<9x16x32xbf16> to vector<1x16x32xbf16>
    %243 = vector.shape_cast %242 : vector<1x16x32xbf16> to vector<16x32xbf16>
    %cst_97 = arith.constant dense<0.000000e+00> : vector<4x32xf32>
    %244 = tpu.matmul %241, %243, %cst_97 {dimension_numbers = #tpu.dot_dimension_numbers<[1], [0], [0], [1], [0, 0, 1, 1], [], []>} : vector<4x16xbf16>, vector<16x32xbf16>, vector<4x32xf32> -> vector<4x32xf32>
    %245 = arith.addf %239, %244 : vector<4x32xf32>
    %246 = vector.extract_strided_slice %19 {offsets = [0, 0, 0], sizes = [1, 4, 16], strides = [1, 1, 1]} : vector<2x5x16xbf16> to vector<1x4x16xbf16>
    %247 = vector.shape_cast %246 : vector<1x4x16xbf16> to vector<4x16xbf16>
    %248 = vector.extract_strided_slice %0 {offsets = [6, 0, 0], sizes = [1, 16, 32], strides = [1, 1, 1]} : vector<9x16x32xbf16> to vector<1x16x32xbf16>
    %249 = vector.shape_cast %248 : vector<1x16x32xbf16> to vector<16x32xbf16>
    %cst_98 = arith.constant dense<0.000000e+00> : vector<4x32xf32>
    %250 = tpu.matmul %247, %249, %cst_98 {dimension_numbers = #tpu.dot_dimension_numbers<[1], [0], [0], [1], [0, 0, 1, 1], [], []>} : vector<4x16xbf16>, vector<16x32xbf16>, vector<4x32xf32> -> vector<4x32xf32>
    %251 = arith.addf %245, %250 : vector<4x32xf32>
    %252 = vector.extract_strided_slice %19 {offsets = [1, 0, 0], sizes = [1, 4, 16], strides = [1, 1, 1]} : vector<2x5x16xbf16> to vector<1x4x16xbf16>
    %253 = vector.shape_cast %252 : vector<1x4x16xbf16> to vector<4x16xbf16>
    %254 = vector.extract_strided_slice %0 {offsets = [7, 0, 0], sizes = [1, 16, 32], strides = [1, 1, 1]} : vector<9x16x32xbf16> to vector<1x16x32xbf16>
    %255 = vector.shape_cast %254 : vector<1x16x32xbf16> to vector<16x32xbf16>
    %cst_99 = arith.constant dense<0.000000e+00> : vector<4x32xf32>
    %256 = tpu.matmul %253, %255, %cst_99 {dimension_numbers = #tpu.dot_dimension_numbers<[1], [0], [0], [1], [0, 0, 1, 1], [], []>} : vector<4x16xbf16>, vector<16x32xbf16>, vector<4x32xf32> -> vector<4x32xf32>
    %257 = arith.addf %251, %256 : vector<4x32xf32>
    %258 = vector.extract_strided_slice %19 {offsets = [0, 1, 0], sizes = [1, 4, 16], strides = [1, 1, 1]} : vector<2x5x16xbf16> to vector<1x4x16xbf16>
    %259 = vector.shape_cast %258 : vector<1x4x16xbf16> to vector<4x16xbf16>
    %260 = vector.extract_strided_slice %0 {offsets = [8, 0, 0], sizes = [1, 16, 32], strides = [1, 1, 1]} : vector<9x16x32xbf16> to vector<1x16x32xbf16>
    %261 = vector.shape_cast %260 : vector<1x16x32xbf16> to vector<16x32xbf16>
    %cst_100 = arith.constant dense<0.000000e+00> : vector<4x32xf32>
    %262 = tpu.matmul %259, %261, %cst_100 {dimension_numbers = #tpu.dot_dimension_numbers<[1], [0], [0], [1], [0, 0, 1, 1], [], []>} : vector<4x16xbf16>, vector<16x32xbf16>, vector<4x32xf32> -> vector<4x32xf32>
    %263 = arith.addf %257, %262 : vector<4x32xf32>
    %264 = vector.broadcast %1 : vector<1x32xf32> to vector<4x32xf32>
    %265 = arith.addf %263, %264 : vector<4x32xf32>
    %cst_101 = arith.constant 0.000000e+00 : f32
    %266 = vector.broadcast %cst_101 : f32 to vector<4x32xf32>
    %267 = arith.maximumf %265, %266 : vector<4x32xf32>
    %268 = arith.truncf %267 : vector<4x32xf32> to vector<4x32xbf16>
    %c0_102 = arith.constant 0 : index
    %c3 = arith.constant 3 : index
    %c0_103 = arith.constant 0 : index
    %c0_104 = arith.constant 0 : index
    %269 = vector.load %arg13[%c0_102, %c3, %c0_103, %c0_104] : memref<1x4x4x32xbf16, #tpu.memory_space<vmem>>, vector<1x1x4x32xbf16>
    %270 = vector.shape_cast %269 : vector<1x1x4x32xbf16> to vector<4x32xbf16>
    %271 = vector.shape_cast %268 : vector<4x32xbf16> to vector<1x1x4x32xbf16>
    tpu.vector_store %arg13[%c0_102, %c3, %c0_103, %c0_104], %271 {strides = array<i32>} : memref<1x4x4x32xbf16, #tpu.memory_space<vmem>>, vector<1x1x4x32xbf16>,
    return
  }
  func.func @transform_0(%arg0: i32, %arg1: i32) -> (i32, i32, i32, i32, i32) {
    %c8_i32 = arith.constant 8 : i32
    %0 = arith.muli %c8_i32, %arg1 : i32
    %c0_i32 = arith.constant 0 : i32
    %1 = arith.addi %0, %c0_i32 : i32
    %c0_i32_0 = arith.constant 0 : i32
    %c0_i32_1 = arith.constant 0 : i32
    %c0_i32_2 = arith.constant 0 : i32
    %c0_i32_3 = arith.constant 0 : i32
    return %arg0, %1, %c0_i32_0, %c0_i32_1, %c0_i32_2 : i32, i32, i32, i32, i32
  }
  func.func @transform_1(%arg0: i32, %arg1: i32) -> (i32, i32, i32, i32, i32) {
    %c8_i32 = arith.constant 8 : i32
    %0 = arith.muli %c8_i32, %arg1 : i32
    %c1_i32 = arith.constant 1 : i32
    %1 = arith.addi %0, %c1_i32 : i32
    %c0_i32 = arith.constant 0 : i32
    %c0_i32_0 = arith.constant 0 : i32
    %c0_i32_1 = arith.constant 0 : i32
    %c0_i32_2 = arith.constant 0 : i32
    return %arg0, %1, %c0_i32, %c0_i32_0, %c0_i32_1 : i32, i32, i32, i32, i32
  }
  func.func @transform_2(%arg0: i32, %arg1: i32) -> (i32, i32, i32, i32, i32) {
    %c8_i32 = arith.constant 8 : i32
    %0 = arith.muli %c8_i32, %arg1 : i32
    %c2_i32 = arith.constant 2 : i32
    %1 = arith.addi %0, %c2_i32 : i32
    %c0_i32 = arith.constant 0 : i32
    %c0_i32_0 = arith.constant 0 : i32
    %c0_i32_1 = arith.constant 0 : i32
    %c0_i32_2 = arith.constant 0 : i32
    return %arg0, %1, %c0_i32, %c0_i32_0, %c0_i32_1 : i32, i32, i32, i32, i32
  }
  func.func @transform_3(%arg0: i32, %arg1: i32) -> (i32, i32, i32, i32, i32) {
    %c8_i32 = arith.constant 8 : i32
    %0 = arith.muli %c8_i32, %arg1 : i32
    %c3_i32 = arith.constant 3 : i32
    %1 = arith.addi %0, %c3_i32 : i32
    %c0_i32 = arith.constant 0 : i32
    %c0_i32_0 = arith.constant 0 : i32
    %c0_i32_1 = arith.constant 0 : i32
    %c0_i32_2 = arith.constant 0 : i32
    return %arg0, %1, %c0_i32, %c0_i32_0, %c0_i32_1 : i32, i32, i32, i32, i32
  }
  func.func @transform_4(%arg0: i32, %arg1: i32) -> (i32, i32, i32, i32, i32) {
    %c8_i32 = arith.constant 8 : i32
    %0 = arith.muli %c8_i32, %arg1 : i32
    %c4_i32 = arith.constant 4 : i32
    %1 = arith.addi %0, %c4_i32 : i32
    %c0_i32 = arith.constant 0 : i32
    %c0_i32_0 = arith.constant 0 : i32
    %c0_i32_1 = arith.constant 0 : i32
    %c0_i32_2 = arith.constant 0 : i32
    return %arg0, %1, %c0_i32, %c0_i32_0, %c0_i32_1 : i32, i32, i32, i32, i32
  }
  func.func @transform_5(%arg0: i32, %arg1: i32) -> (i32, i32, i32, i32, i32) {
    %c8_i32 = arith.constant 8 : i32
    %0 = arith.muli %c8_i32, %arg1 : i32
    %c5_i32 = arith.constant 5 : i32
    %1 = arith.addi %0, %c5_i32 : i32
    %c0_i32 = arith.constant 0 : i32
    %c0_i32_0 = arith.constant 0 : i32
    %c0_i32_1 = arith.constant 0 : i32
    %c0_i32_2 = arith.constant 0 : i32
    return %arg0, %1, %c0_i32, %c0_i32_0, %c0_i32_1 : i32, i32, i32, i32, i32
  }
  func.func @transform_6(%arg0: i32, %arg1: i32) -> (i32, i32, i32, i32, i32) {
    %c8_i32 = arith.constant 8 : i32
    %0 = arith.muli %c8_i32, %arg1 : i32
    %c6_i32 = arith.constant 6 : i32
    %1 = arith.addi %0, %c6_i32 : i32
    %c0_i32 = arith.constant 0 : i32
    %c0_i32_0 = arith.constant 0 : i32
    %c0_i32_1 = arith.constant 0 : i32
    %c0_i32_2 = arith.constant 0 : i32
    return %arg0, %1, %c0_i32, %c0_i32_0, %c0_i32_1 : i32, i32, i32, i32, i32
  }
  func.func @transform_7(%arg0: i32, %arg1: i32) -> (i32, i32, i32, i32, i32) {
    %c8_i32 = arith.constant 8 : i32
    %0 = arith.muli %c8_i32, %arg1 : i32
    %c7_i32 = arith.constant 7 : i32
    %1 = arith.addi %0, %c7_i32 : i32
    %c0_i32 = arith.constant 0 : i32
    %c0_i32_0 = arith.constant 0 : i32
    %c0_i32_1 = arith.constant 0 : i32
    %c0_i32_2 = arith.constant 0 : i32
    return %arg0, %1, %c0_i32, %c0_i32_0, %c0_i32_1 : i32, i32, i32, i32, i32
  }
  func.func @transform_8(%arg0: i32, %arg1: i32) -> (i32, i32, i32, i32, i32) {
    %c8_i32 = arith.constant 8 : i32
    %0 = arith.muli %c8_i32, %arg1 : i32
    %c8_i32_0 = arith.constant 8 : i32
    %1 = arith.addi %0, %c8_i32_0 : i32
    %c0_i32 = arith.constant 0 : i32
    %c0_i32_1 = arith.constant 0 : i32
    %c0_i32_2 = arith.constant 0 : i32
    %c0_i32_3 = arith.constant 0 : i32
    return %arg0, %1, %c0_i32, %c0_i32_1, %c0_i32_2 : i32, i32, i32, i32, i32
  }
  func.func @transform_9(%arg0: i32, %arg1: i32) -> (i32, i32, i32) {
    %c0_i32 = arith.constant 0 : i32
    %c0_i32_0 = arith.constant 0 : i32
    %c0_i32_1 = arith.constant 0 : i32
    %c0_i32_2 = arith.constant 0 : i32
    return %c0_i32, %c0_i32_0, %c0_i32_1 : i32, i32, i32
  }
  func.func @transform_10(%arg0: i32, %arg1: i32) -> (i32, i32) {
    %c0_i32 = arith.constant 0 : i32
    %c0_i32_0 = arith.constant 0 : i32
    %c0_i32_1 = arith.constant 0 : i32
    return %c0_i32, %c0_i32_0 : i32, i32
  }
  func.func @transform_11(%arg0: i32, %arg1: i32) -> (i32, i32, i32, i32) {
    %c0_i32 = arith.constant 0 : i32
    %c0_i32_0 = arith.constant 0 : i32
    %c0_i32_1 = arith.constant 0 : i32
    return %arg0, %arg1, %c0_i32, %c0_i32_0 : i32, i32, i32, i32
  }
}

module attributes {stable_mosaic.version = 11 : i64} {
  func.func @_decoder_fused_kernel(%arg0: i32, %arg1: i32, %arg2: memref<1x4x4x32xbf16, #tpu.memory_space<vmem>>, %arg3: memref<1x8x2x4x16xbf16, #tpu.memory_space<vmem>>, %arg4: memref<32x16xbf16, #tpu.memory_space<vmem>>, %arg5: memref<1x16xf32, #tpu.memory_space<vmem>>, %arg6: memref<1x16xf32, #tpu.memory_space<vmem>>, %arg7: memref<1x1xf32, #tpu.memory_space<vmem>>, %arg8: memref<1x4x2x2x4xf32, #tpu.memory_space<vmem>>) attributes {dimension_semantics = [#tpu.dimension_semantics<parallel>, #tpu.dimension_semantics<parallel>], iteration_bounds = array<i64: 2, 1>, scalar_prefetch = 0 : i64, scratch_operands = 0 : i64, tpu.core_type = #tpu.core_type<tc>, window_params = [{transform_indices = @transform_0, window_bounds = array<i64: 1, 4, 4, 32>}, {transform_indices = @transform_1, window_bounds = array<i64: 1, 8, 2, 4, 16>}, {pipeline_mode = #tpu.pipeline_mode<synchronous>, transform_indices = @transform_2, window_bounds = array<i64: 32, 16>}, {pipeline_mode = #tpu.pipeline_mode<synchronous>, transform_indices = @transform_3, window_bounds = array<i64: 1, 16>}, {pipeline_mode = #tpu.pipeline_mode<synchronous>, transform_indices = @transform_4, window_bounds = array<i64: 1, 16>}, {pipeline_mode = #tpu.pipeline_mode<synchronous>, transform_indices = @transform_5, window_bounds = array<i64: 1, 1>}, {transform_indices = @transform_6, window_bounds = array<i64: 1, 4, 2, 2, 4>}]} {
    %c0 = arith.constant 0 : index
    %c0_0 = arith.constant 0 : index
    %0 = vector.load %arg4[%c0, %c0_0] : memref<32x16xbf16, #tpu.memory_space<vmem>>, vector<32x16xbf16>
    %c0_1 = arith.constant 0 : index
    %c0_2 = arith.constant 0 : index
    %1 = vector.load %arg5[%c0_1, %c0_2] : memref<1x16xf32, #tpu.memory_space<vmem>>, vector<1x16xf32>
    %c0_3 = arith.constant 0 : index
    %c0_4 = arith.constant 0 : index
    %2 = vector.load %arg6[%c0_3, %c0_4] : memref<1x16xf32, #tpu.memory_space<vmem>>, vector<1x16xf32>
    %c0_5 = arith.constant 0 : index
    %c0_6 = arith.constant 0 : index
    %3 = vector.load %arg7[%c0_5, %c0_6] : memref<1x1xf32, #tpu.memory_space<vmem>>, vector<1x1xf32>
    %c0_7 = arith.constant 0 : index
    %c0_8 = arith.constant 0 : index
    %c0_9 = arith.constant 0 : index
    %c0_10 = arith.constant 0 : index
    %4 = vector.load %arg2[%c0_7, %c0_8, %c0_9, %c0_10] : memref<1x4x4x32xbf16, #tpu.memory_space<vmem>>, vector<1x1x4x32xbf16>
    %5 = vector.shape_cast %4 : vector<1x1x4x32xbf16> to vector<4x32xbf16>
    %cst = arith.constant dense<0.000000e+00> : vector<4x16xf32>
    %6 = tpu.matmul %5, %0, %cst {dimension_numbers = #tpu.dot_dimension_numbers<[1], [0], [0], [1], [0, 0, 1, 1], [], []>} : vector<4x32xbf16>, vector<32x16xbf16>, vector<4x16xf32> -> vector<4x16xf32>
    %7 = vector.broadcast %1 : vector<1x16xf32> to vector<4x16xf32>
    %8 = arith.addf %6, %7 : vector<4x16xf32>
    %c0_11 = arith.constant 0 : index
    %c0_12 = arith.constant 0 : index
    %c0_13 = arith.constant 0 : index
    %c0_14 = arith.constant 0 : index
    %c0_15 = arith.constant 0 : index
    %9 = vector.load %arg3[%c0_11, %c0_12, %c0_13, %c0_14, %c0_15] : memref<1x8x2x4x16xbf16, #tpu.memory_space<vmem>>, vector<1x1x2x4x16xbf16>
    %10 = vector.shape_cast %9 : vector<1x1x2x4x16xbf16> to vector<2x4x16xbf16>
    %11 = arith.extf %10 : vector<2x4x16xbf16> to vector<2x4x16xf32>
    %12 = vector.shape_cast %8 : vector<4x16xf32> to vector<1x4x16xf32>
    %13 = vector.broadcast %12 : vector<1x4x16xf32> to vector<2x4x16xf32>
    %14 = arith.addf %11, %13 : vector<2x4x16xf32>
    %cst_16 = arith.constant 0.000000e+00 : f32
    %15 = vector.broadcast %cst_16 : f32 to vector<2x4x16xf32>
    %16 = arith.maximumf %14, %15 : vector<2x4x16xf32>
    %17 = vector.shape_cast %2 : vector<1x16xf32> to vector<1x1x16xf32>
    %18 = vector.broadcast %17 : vector<1x1x16xf32> to vector<2x4x16xf32>
    %19 = arith.mulf %16, %18 : vector<2x4x16xf32>
    %cst_17 = arith.constant dense<0.000000e+00> : vector<2x4xf32>
    %20 = vector.multi_reduction <add>, %19, %cst_17 [2] : vector<2x4x16xf32> to vector<2x4xf32>
    %21 = vector.broadcast %3 : vector<1x1xf32> to vector<2x4xf32>
    %22 = arith.addf %20, %21 : vector<2x4xf32>
    %c0_18 = arith.constant 0 : index
    %c0_19 = arith.constant 0 : index
    %c0_20 = arith.constant 0 : index
    %c0_21 = arith.constant 0 : index
    %c0_22 = arith.constant 0 : index
    %23 = vector.load %arg8[%c0_18, %c0_19, %c0_20, %c0_21, %c0_22] : memref<1x4x2x2x4xf32, #tpu.memory_space<vmem>>, vector<1x1x1x2x4xf32>
    %24 = vector.shape_cast %23 : vector<1x1x1x2x4xf32> to vector<2x4xf32>
    %25 = vector.shape_cast %22 : vector<2x4xf32> to vector<1x1x1x2x4xf32>
    tpu.vector_store %arg8[%c0_18, %c0_19, %c0_20, %c0_21, %c0_22], %25 {strides = array<i32>} : memref<1x4x2x2x4xf32, #tpu.memory_space<vmem>>, vector<1x1x1x2x4xf32>,
    %c0_23 = arith.constant 0 : index
    %c1 = arith.constant 1 : index
    %c0_24 = arith.constant 0 : index
    %c0_25 = arith.constant 0 : index
    %c0_26 = arith.constant 0 : index
    %26 = vector.load %arg3[%c0_23, %c1, %c0_24, %c0_25, %c0_26] : memref<1x8x2x4x16xbf16, #tpu.memory_space<vmem>>, vector<1x1x2x4x16xbf16>
    %27 = vector.shape_cast %26 : vector<1x1x2x4x16xbf16> to vector<2x4x16xbf16>
    %28 = arith.extf %27 : vector<2x4x16xbf16> to vector<2x4x16xf32>
    %29 = vector.shape_cast %8 : vector<4x16xf32> to vector<1x4x16xf32>
    %30 = vector.broadcast %29 : vector<1x4x16xf32> to vector<2x4x16xf32>
    %31 = arith.addf %28, %30 : vector<2x4x16xf32>
    %cst_27 = arith.constant 0.000000e+00 : f32
    %32 = vector.broadcast %cst_27 : f32 to vector<2x4x16xf32>
    %33 = arith.maximumf %31, %32 : vector<2x4x16xf32>
    %34 = vector.shape_cast %2 : vector<1x16xf32> to vector<1x1x16xf32>
    %35 = vector.broadcast %34 : vector<1x1x16xf32> to vector<2x4x16xf32>
    %36 = arith.mulf %33, %35 : vector<2x4x16xf32>
    %cst_28 = arith.constant dense<0.000000e+00> : vector<2x4xf32>
    %37 = vector.multi_reduction <add>, %36, %cst_28 [2] : vector<2x4x16xf32> to vector<2x4xf32>
    %38 = vector.broadcast %3 : vector<1x1xf32> to vector<2x4xf32>
    %39 = arith.addf %37, %38 : vector<2x4xf32>
    %c0_29 = arith.constant 0 : index
    %c0_30 = arith.constant 0 : index
    %c1_31 = arith.constant 1 : index
    %c0_32 = arith.constant 0 : index
    %c0_33 = arith.constant 0 : index
    %40 = vector.load %arg8[%c0_29, %c0_30, %c1_31, %c0_32, %c0_33] : memref<1x4x2x2x4xf32, #tpu.memory_space<vmem>>, vector<1x1x1x2x4xf32>
    %41 = vector.shape_cast %40 : vector<1x1x1x2x4xf32> to vector<2x4xf32>
    %42 = vector.shape_cast %39 : vector<2x4xf32> to vector<1x1x1x2x4xf32>
    tpu.vector_store %arg8[%c0_29, %c0_30, %c1_31, %c0_32, %c0_33], %42 {strides = array<i32>} : memref<1x4x2x2x4xf32, #tpu.memory_space<vmem>>, vector<1x1x1x2x4xf32>,
    %c0_34 = arith.constant 0 : index
    %c1_35 = arith.constant 1 : index
    %c0_36 = arith.constant 0 : index
    %c0_37 = arith.constant 0 : index
    %43 = vector.load %arg2[%c0_34, %c1_35, %c0_36, %c0_37] : memref<1x4x4x32xbf16, #tpu.memory_space<vmem>>, vector<1x1x4x32xbf16>
    %44 = vector.shape_cast %43 : vector<1x1x4x32xbf16> to vector<4x32xbf16>
    %cst_38 = arith.constant dense<0.000000e+00> : vector<4x16xf32>
    %45 = tpu.matmul %44, %0, %cst_38 {dimension_numbers = #tpu.dot_dimension_numbers<[1], [0], [0], [1], [0, 0, 1, 1], [], []>} : vector<4x32xbf16>, vector<32x16xbf16>, vector<4x16xf32> -> vector<4x16xf32>
    %46 = vector.broadcast %1 : vector<1x16xf32> to vector<4x16xf32>
    %47 = arith.addf %45, %46 : vector<4x16xf32>
    %c0_39 = arith.constant 0 : index
    %c2 = arith.constant 2 : index
    %c0_40 = arith.constant 0 : index
    %c0_41 = arith.constant 0 : index
    %c0_42 = arith.constant 0 : index
    %48 = vector.load %arg3[%c0_39, %c2, %c0_40, %c0_41, %c0_42] : memref<1x8x2x4x16xbf16, #tpu.memory_space<vmem>>, vector<1x1x2x4x16xbf16>
    %49 = vector.shape_cast %48 : vector<1x1x2x4x16xbf16> to vector<2x4x16xbf16>
    %50 = arith.extf %49 : vector<2x4x16xbf16> to vector<2x4x16xf32>
    %51 = vector.shape_cast %47 : vector<4x16xf32> to vector<1x4x16xf32>
    %52 = vector.broadcast %51 : vector<1x4x16xf32> to vector<2x4x16xf32>
    %53 = arith.addf %50, %52 : vector<2x4x16xf32>
    %cst_43 = arith.constant 0.000000e+00 : f32
    %54 = vector.broadcast %cst_43 : f32 to vector<2x4x16xf32>
    %55 = arith.maximumf %53, %54 : vector<2x4x16xf32>
    %56 = vector.shape_cast %2 : vector<1x16xf32> to vector<1x1x16xf32>
    %57 = vector.broadcast %56 : vector<1x1x16xf32> to vector<2x4x16xf32>
    %58 = arith.mulf %55, %57 : vector<2x4x16xf32>
    %cst_44 = arith.constant dense<0.000000e+00> : vector<2x4xf32>
    %59 = vector.multi_reduction <add>, %58, %cst_44 [2] : vector<2x4x16xf32> to vector<2x4xf32>
    %60 = vector.broadcast %3 : vector<1x1xf32> to vector<2x4xf32>
    %61 = arith.addf %59, %60 : vector<2x4xf32>
    %c0_45 = arith.constant 0 : index
    %c1_46 = arith.constant 1 : index
    %c0_47 = arith.constant 0 : index
    %c0_48 = arith.constant 0 : index
    %c0_49 = arith.constant 0 : index
    %62 = vector.load %arg8[%c0_45, %c1_46, %c0_47, %c0_48, %c0_49] : memref<1x4x2x2x4xf32, #tpu.memory_space<vmem>>, vector<1x1x1x2x4xf32>
    %63 = vector.shape_cast %62 : vector<1x1x1x2x4xf32> to vector<2x4xf32>
    %64 = vector.shape_cast %61 : vector<2x4xf32> to vector<1x1x1x2x4xf32>
    tpu.vector_store %arg8[%c0_45, %c1_46, %c0_47, %c0_48, %c0_49], %64 {strides = array<i32>} : memref<1x4x2x2x4xf32, #tpu.memory_space<vmem>>, vector<1x1x1x2x4xf32>,
    %c0_50 = arith.constant 0 : index
    %c3 = arith.constant 3 : index
    %c0_51 = arith.constant 0 : index
    %c0_52 = arith.constant 0 : index
    %c0_53 = arith.constant 0 : index
    %65 = vector.load %arg3[%c0_50, %c3, %c0_51, %c0_52, %c0_53] : memref<1x8x2x4x16xbf16, #tpu.memory_space<vmem>>, vector<1x1x2x4x16xbf16>
    %66 = vector.shape_cast %65 : vector<1x1x2x4x16xbf16> to vector<2x4x16xbf16>
    %67 = arith.extf %66 : vector<2x4x16xbf16> to vector<2x4x16xf32>
    %68 = vector.shape_cast %47 : vector<4x16xf32> to vector<1x4x16xf32>
    %69 = vector.broadcast %68 : vector<1x4x16xf32> to vector<2x4x16xf32>
    %70 = arith.addf %67, %69 : vector<2x4x16xf32>
    %cst_54 = arith.constant 0.000000e+00 : f32
    %71 = vector.broadcast %cst_54 : f32 to vector<2x4x16xf32>
    %72 = arith.maximumf %70, %71 : vector<2x4x16xf32>
    %73 = vector.shape_cast %2 : vector<1x16xf32> to vector<1x1x16xf32>
    %74 = vector.broadcast %73 : vector<1x1x16xf32> to vector<2x4x16xf32>
    %75 = arith.mulf %72, %74 : vector<2x4x16xf32>
    %cst_55 = arith.constant dense<0.000000e+00> : vector<2x4xf32>
    %76 = vector.multi_reduction <add>, %75, %cst_55 [2] : vector<2x4x16xf32> to vector<2x4xf32>
    %77 = vector.broadcast %3 : vector<1x1xf32> to vector<2x4xf32>
    %78 = arith.addf %76, %77 : vector<2x4xf32>
    %c0_56 = arith.constant 0 : index
    %c1_57 = arith.constant 1 : index
    %c1_58 = arith.constant 1 : index
    %c0_59 = arith.constant 0 : index
    %c0_60 = arith.constant 0 : index
    %79 = vector.load %arg8[%c0_56, %c1_57, %c1_58, %c0_59, %c0_60] : memref<1x4x2x2x4xf32, #tpu.memory_space<vmem>>, vector<1x1x1x2x4xf32>
    %80 = vector.shape_cast %79 : vector<1x1x1x2x4xf32> to vector<2x4xf32>
    %81 = vector.shape_cast %78 : vector<2x4xf32> to vector<1x1x1x2x4xf32>
    tpu.vector_store %arg8[%c0_56, %c1_57, %c1_58, %c0_59, %c0_60], %81 {strides = array<i32>} : memref<1x4x2x2x4xf32, #tpu.memory_space<vmem>>, vector<1x1x1x2x4xf32>,
    %c0_61 = arith.constant 0 : index
    %c2_62 = arith.constant 2 : index
    %c0_63 = arith.constant 0 : index
    %c0_64 = arith.constant 0 : index
    %82 = vector.load %arg2[%c0_61, %c2_62, %c0_63, %c0_64] : memref<1x4x4x32xbf16, #tpu.memory_space<vmem>>, vector<1x1x4x32xbf16>
    %83 = vector.shape_cast %82 : vector<1x1x4x32xbf16> to vector<4x32xbf16>
    %cst_65 = arith.constant dense<0.000000e+00> : vector<4x16xf32>
    %84 = tpu.matmul %83, %0, %cst_65 {dimension_numbers = #tpu.dot_dimension_numbers<[1], [0], [0], [1], [0, 0, 1, 1], [], []>} : vector<4x32xbf16>, vector<32x16xbf16>, vector<4x16xf32> -> vector<4x16xf32>
    %85 = vector.broadcast %1 : vector<1x16xf32> to vector<4x16xf32>
    %86 = arith.addf %84, %85 : vector<4x16xf32>
    %c0_66 = arith.constant 0 : index
    %c4 = arith.constant 4 : index
    %c0_67 = arith.constant 0 : index
    %c0_68 = arith.constant 0 : index
    %c0_69 = arith.constant 0 : index
    %87 = vector.load %arg3[%c0_66, %c4, %c0_67, %c0_68, %c0_69] : memref<1x8x2x4x16xbf16, #tpu.memory_space<vmem>>, vector<1x1x2x4x16xbf16>
    %88 = vector.shape_cast %87 : vector<1x1x2x4x16xbf16> to vector<2x4x16xbf16>
    %89 = arith.extf %88 : vector<2x4x16xbf16> to vector<2x4x16xf32>
    %90 = vector.shape_cast %86 : vector<4x16xf32> to vector<1x4x16xf32>
    %91 = vector.broadcast %90 : vector<1x4x16xf32> to vector<2x4x16xf32>
    %92 = arith.addf %89, %91 : vector<2x4x16xf32>
    %cst_70 = arith.constant 0.000000e+00 : f32
    %93 = vector.broadcast %cst_70 : f32 to vector<2x4x16xf32>
    %94 = arith.maximumf %92, %93 : vector<2x4x16xf32>
    %95 = vector.shape_cast %2 : vector<1x16xf32> to vector<1x1x16xf32>
    %96 = vector.broadcast %95 : vector<1x1x16xf32> to vector<2x4x16xf32>
    %97 = arith.mulf %94, %96 : vector<2x4x16xf32>
    %cst_71 = arith.constant dense<0.000000e+00> : vector<2x4xf32>
    %98 = vector.multi_reduction <add>, %97, %cst_71 [2] : vector<2x4x16xf32> to vector<2x4xf32>
    %99 = vector.broadcast %3 : vector<1x1xf32> to vector<2x4xf32>
    %100 = arith.addf %98, %99 : vector<2x4xf32>
    %c0_72 = arith.constant 0 : index
    %c2_73 = arith.constant 2 : index
    %c0_74 = arith.constant 0 : index
    %c0_75 = arith.constant 0 : index
    %c0_76 = arith.constant 0 : index
    %101 = vector.load %arg8[%c0_72, %c2_73, %c0_74, %c0_75, %c0_76] : memref<1x4x2x2x4xf32, #tpu.memory_space<vmem>>, vector<1x1x1x2x4xf32>
    %102 = vector.shape_cast %101 : vector<1x1x1x2x4xf32> to vector<2x4xf32>
    %103 = vector.shape_cast %100 : vector<2x4xf32> to vector<1x1x1x2x4xf32>
    tpu.vector_store %arg8[%c0_72, %c2_73, %c0_74, %c0_75, %c0_76], %103 {strides = array<i32>} : memref<1x4x2x2x4xf32, #tpu.memory_space<vmem>>, vector<1x1x1x2x4xf32>,
    %c0_77 = arith.constant 0 : index
    %c5 = arith.constant 5 : index
    %c0_78 = arith.constant 0 : index
    %c0_79 = arith.constant 0 : index
    %c0_80 = arith.constant 0 : index
    %104 = vector.load %arg3[%c0_77, %c5, %c0_78, %c0_79, %c0_80] : memref<1x8x2x4x16xbf16, #tpu.memory_space<vmem>>, vector<1x1x2x4x16xbf16>
    %105 = vector.shape_cast %104 : vector<1x1x2x4x16xbf16> to vector<2x4x16xbf16>
    %106 = arith.extf %105 : vector<2x4x16xbf16> to vector<2x4x16xf32>
    %107 = vector.shape_cast %86 : vector<4x16xf32> to vector<1x4x16xf32>
    %108 = vector.broadcast %107 : vector<1x4x16xf32> to vector<2x4x16xf32>
    %109 = arith.addf %106, %108 : vector<2x4x16xf32>
    %cst_81 = arith.constant 0.000000e+00 : f32
    %110 = vector.broadcast %cst_81 : f32 to vector<2x4x16xf32>
    %111 = arith.maximumf %109, %110 : vector<2x4x16xf32>
    %112 = vector.shape_cast %2 : vector<1x16xf32> to vector<1x1x16xf32>
    %113 = vector.broadcast %112 : vector<1x1x16xf32> to vector<2x4x16xf32>
    %114 = arith.mulf %111, %113 : vector<2x4x16xf32>
    %cst_82 = arith.constant dense<0.000000e+00> : vector<2x4xf32>
    %115 = vector.multi_reduction <add>, %114, %cst_82 [2] : vector<2x4x16xf32> to vector<2x4xf32>
    %116 = vector.broadcast %3 : vector<1x1xf32> to vector<2x4xf32>
    %117 = arith.addf %115, %116 : vector<2x4xf32>
    %c0_83 = arith.constant 0 : index
    %c2_84 = arith.constant 2 : index
    %c1_85 = arith.constant 1 : index
    %c0_86 = arith.constant 0 : index
    %c0_87 = arith.constant 0 : index
    %118 = vector.load %arg8[%c0_83, %c2_84, %c1_85, %c0_86, %c0_87] : memref<1x4x2x2x4xf32, #tpu.memory_space<vmem>>, vector<1x1x1x2x4xf32>
    %119 = vector.shape_cast %118 : vector<1x1x1x2x4xf32> to vector<2x4xf32>
    %120 = vector.shape_cast %117 : vector<2x4xf32> to vector<1x1x1x2x4xf32>
    tpu.vector_store %arg8[%c0_83, %c2_84, %c1_85, %c0_86, %c0_87], %120 {strides = array<i32>} : memref<1x4x2x2x4xf32, #tpu.memory_space<vmem>>, vector<1x1x1x2x4xf32>,
    %c0_88 = arith.constant 0 : index
    %c3_89 = arith.constant 3 : index
    %c0_90 = arith.constant 0 : index
    %c0_91 = arith.constant 0 : index
    %121 = vector.load %arg2[%c0_88, %c3_89, %c0_90, %c0_91] : memref<1x4x4x32xbf16, #tpu.memory_space<vmem>>, vector<1x1x4x32xbf16>
    %122 = vector.shape_cast %121 : vector<1x1x4x32xbf16> to vector<4x32xbf16>
    %cst_92 = arith.constant dense<0.000000e+00> : vector<4x16xf32>
    %123 = tpu.matmul %122, %0, %cst_92 {dimension_numbers = #tpu.dot_dimension_numbers<[1], [0], [0], [1], [0, 0, 1, 1], [], []>} : vector<4x32xbf16>, vector<32x16xbf16>, vector<4x16xf32> -> vector<4x16xf32>
    %124 = vector.broadcast %1 : vector<1x16xf32> to vector<4x16xf32>
    %125 = arith.addf %123, %124 : vector<4x16xf32>
    %c0_93 = arith.constant 0 : index
    %c6 = arith.constant 6 : index
    %c0_94 = arith.constant 0 : index
    %c0_95 = arith.constant 0 : index
    %c0_96 = arith.constant 0 : index
    %126 = vector.load %arg3[%c0_93, %c6, %c0_94, %c0_95, %c0_96] : memref<1x8x2x4x16xbf16, #tpu.memory_space<vmem>>, vector<1x1x2x4x16xbf16>
    %127 = vector.shape_cast %126 : vector<1x1x2x4x16xbf16> to vector<2x4x16xbf16>
    %128 = arith.extf %127 : vector<2x4x16xbf16> to vector<2x4x16xf32>
    %129 = vector.shape_cast %125 : vector<4x16xf32> to vector<1x4x16xf32>
    %130 = vector.broadcast %129 : vector<1x4x16xf32> to vector<2x4x16xf32>
    %131 = arith.addf %128, %130 : vector<2x4x16xf32>
    %cst_97 = arith.constant 0.000000e+00 : f32
    %132 = vector.broadcast %cst_97 : f32 to vector<2x4x16xf32>
    %133 = arith.maximumf %131, %132 : vector<2x4x16xf32>
    %134 = vector.shape_cast %2 : vector<1x16xf32> to vector<1x1x16xf32>
    %135 = vector.broadcast %134 : vector<1x1x16xf32> to vector<2x4x16xf32>
    %136 = arith.mulf %133, %135 : vector<2x4x16xf32>
    %cst_98 = arith.constant dense<0.000000e+00> : vector<2x4xf32>
    %137 = vector.multi_reduction <add>, %136, %cst_98 [2] : vector<2x4x16xf32> to vector<2x4xf32>
    %138 = vector.broadcast %3 : vector<1x1xf32> to vector<2x4xf32>
    %139 = arith.addf %137, %138 : vector<2x4xf32>
    %c0_99 = arith.constant 0 : index
    %c3_100 = arith.constant 3 : index
    %c0_101 = arith.constant 0 : index
    %c0_102 = arith.constant 0 : index
    %c0_103 = arith.constant 0 : index
    %140 = vector.load %arg8[%c0_99, %c3_100, %c0_101, %c0_102, %c0_103] : memref<1x4x2x2x4xf32, #tpu.memory_space<vmem>>, vector<1x1x1x2x4xf32>
    %141 = vector.shape_cast %140 : vector<1x1x1x2x4xf32> to vector<2x4xf32>
    %142 = vector.shape_cast %139 : vector<2x4xf32> to vector<1x1x1x2x4xf32>
    tpu.vector_store %arg8[%c0_99, %c3_100, %c0_101, %c0_102, %c0_103], %142 {strides = array<i32>} : memref<1x4x2x2x4xf32, #tpu.memory_space<vmem>>, vector<1x1x1x2x4xf32>,
    %c0_104 = arith.constant 0 : index
    %c7 = arith.constant 7 : index
    %c0_105 = arith.constant 0 : index
    %c0_106 = arith.constant 0 : index
    %c0_107 = arith.constant 0 : index
    %143 = vector.load %arg3[%c0_104, %c7, %c0_105, %c0_106, %c0_107] : memref<1x8x2x4x16xbf16, #tpu.memory_space<vmem>>, vector<1x1x2x4x16xbf16>
    %144 = vector.shape_cast %143 : vector<1x1x2x4x16xbf16> to vector<2x4x16xbf16>
    %145 = arith.extf %144 : vector<2x4x16xbf16> to vector<2x4x16xf32>
    %146 = vector.shape_cast %125 : vector<4x16xf32> to vector<1x4x16xf32>
    %147 = vector.broadcast %146 : vector<1x4x16xf32> to vector<2x4x16xf32>
    %148 = arith.addf %145, %147 : vector<2x4x16xf32>
    %cst_108 = arith.constant 0.000000e+00 : f32
    %149 = vector.broadcast %cst_108 : f32 to vector<2x4x16xf32>
    %150 = arith.maximumf %148, %149 : vector<2x4x16xf32>
    %151 = vector.shape_cast %2 : vector<1x16xf32> to vector<1x1x16xf32>
    %152 = vector.broadcast %151 : vector<1x1x16xf32> to vector<2x4x16xf32>
    %153 = arith.mulf %150, %152 : vector<2x4x16xf32>
    %cst_109 = arith.constant dense<0.000000e+00> : vector<2x4xf32>
    %154 = vector.multi_reduction <add>, %153, %cst_109 [2] : vector<2x4x16xf32> to vector<2x4xf32>
    %155 = vector.broadcast %3 : vector<1x1xf32> to vector<2x4xf32>
    %156 = arith.addf %154, %155 : vector<2x4xf32>
    %c0_110 = arith.constant 0 : index
    %c3_111 = arith.constant 3 : index
    %c1_112 = arith.constant 1 : index
    %c0_113 = arith.constant 0 : index
    %c0_114 = arith.constant 0 : index
    %157 = vector.load %arg8[%c0_110, %c3_111, %c1_112, %c0_113, %c0_114] : memref<1x4x2x2x4xf32, #tpu.memory_space<vmem>>, vector<1x1x1x2x4xf32>
    %158 = vector.shape_cast %157 : vector<1x1x1x2x4xf32> to vector<2x4xf32>
    %159 = vector.shape_cast %156 : vector<2x4xf32> to vector<1x1x1x2x4xf32>
    tpu.vector_store %arg8[%c0_110, %c3_111, %c1_112, %c0_113, %c0_114], %159 {strides = array<i32>} : memref<1x4x2x2x4xf32, #tpu.memory_space<vmem>>, vector<1x1x1x2x4xf32>,
    return
  }
  func.func @transform_0(%arg0: i32, %arg1: i32) -> (i32, i32, i32, i32) {
    %c0_i32 = arith.constant 0 : i32
    %c0_i32_0 = arith.constant 0 : i32
    %c0_i32_1 = arith.constant 0 : i32
    return %arg0, %arg1, %c0_i32, %c0_i32_0 : i32, i32, i32, i32
  }
  func.func @transform_1(%arg0: i32, %arg1: i32) -> (i32, i32, i32, i32, i32) {
    %c0_i32 = arith.constant 0 : i32
    %c0_i32_0 = arith.constant 0 : i32
    %c0_i32_1 = arith.constant 0 : i32
    %c0_i32_2 = arith.constant 0 : i32
    return %arg0, %arg1, %c0_i32, %c0_i32_0, %c0_i32_1 : i32, i32, i32, i32, i32
  }
  func.func @transform_2(%arg0: i32, %arg1: i32) -> (i32, i32) {
    %c0_i32 = arith.constant 0 : i32
    %c0_i32_0 = arith.constant 0 : i32
    %c0_i32_1 = arith.constant 0 : i32
    return %c0_i32, %c0_i32_0 : i32, i32
  }
  func.func @transform_3(%arg0: i32, %arg1: i32) -> (i32, i32) {
    %c0_i32 = arith.constant 0 : i32
    %c0_i32_0 = arith.constant 0 : i32
    %c0_i32_1 = arith.constant 0 : i32
    return %c0_i32, %c0_i32_0 : i32, i32
  }
  func.func @transform_4(%arg0: i32, %arg1: i32) -> (i32, i32) {
    %c0_i32 = arith.constant 0 : i32
    %c0_i32_0 = arith.constant 0 : i32
    %c0_i32_1 = arith.constant 0 : i32
    return %c0_i32, %c0_i32_0 : i32, i32
  }
  func.func @transform_5(%arg0: i32, %arg1: i32) -> (i32, i32) {
    %c0_i32 = arith.constant 0 : i32
    %c0_i32_0 = arith.constant 0 : i32
    %c0_i32_1 = arith.constant 0 : i32
    return %c0_i32, %c0_i32_0 : i32, i32
  }
  func.func @transform_6(%arg0: i32, %arg1: i32) -> (i32, i32, i32, i32, i32) {
    %c0_i32 = arith.constant 0 : i32
    %c0_i32_0 = arith.constant 0 : i32
    %c0_i32_1 = arith.constant 0 : i32
    %c0_i32_2 = arith.constant 0 : i32
    return %arg0, %arg1, %c0_i32, %c0_i32_0, %c0_i32_1 : i32, i32, i32, i32, i32
  }
}

</mosaic_0001>

<llo_original>
// kernel: a_call__.5
$region0: #{a_call__.5}
  #allocation0 [shape = 'u32[]', space=smem, size = 0x4, offset = 0x4, fixed_abs, tag = 'smem constant byte address 0x4 - core index']
  #allocation1 [shape = 'u32[144,128]{1,0:T(1,128)}', space=vmem, size = 0x12000, scoped, tag = 'internal scratch']
  #allocation2 [shape = 'f32[1,1]{1,0:T(1,128)S(1)}', space=vmem, size = 0x200, scoped, tag = 'scoped memory for a_call__.5']
  %s0 = inlined_call_operand.vmem [shape: bf16[2,4,4,32], index: 0, kind: input, shape index: {}]
  %s1 = inlined_call_operand.vmem [shape: bf16[2,8,2,4,16], index: 1, kind: input, shape index: {}]
  %s2 = inlined_call_operand.vmem [shape: bf16[32,16], index: 2, kind: input, shape index: {}]
  %s3 = inlined_call_operand.vmem [shape: f32[1,16], index: 3, kind: input, shape index: {}]
  %s4 = inlined_call_operand.vmem [shape: f32[1,16], index: 4, kind: input, shape index: {}]
  %s5 = inlined_call_operand.<no memory space> [shape: f32[1,1], index: 5, kind: input, shape index: {}]
  %s6 = inlined_call_operand.vmem [shape: f32[2,4,2,2,4], index: 6, kind: output, shape index: {}]
  %s7 = sld [smem:[#allocation0]]
  $region57: #{a_call__.5} parent=0
    _
  %s9 = ssub.s32 1, %s7
  %s10 = scalar_select 0, %s9, %s7
  %v11 = vstv %s5
  %12 = vst [vmem:[#allocation2] sm:$0x1] %v11
  loop: start=0, step=1, limit=4
  $region2: #{a_call__.5} parent=0 // loop_pre_header
    _
  $region3: #{a_call__.5} parent=0 // loop_header
    %s14 = sphi 0, %s18
    %p15 = scmp.ge.s32.totalorder %s14, 4
    %s21 = sphi 0, %s33
    %s22 = sphi 0, %s29
    %s23 = sphi 0, %s21
    %s24 = sphi 0, %s22
    %s25 = sphi 0, %s23
    %s26 = sphi 0, %s24
    %s38 = sphi 0, %s40
    %s41 = sphi 0, %s38
    %s42 = sphi 0, %s41
    %s58 = sphi 0, %s42
    %s66 = sphi 0, %s68
    %s69 = sphi 0, %s66
    %s70 = sphi 0, %s69
    %s86 = sphi 0, %s70
    %s90 = sphi 0, %s90
    %s92 = sphi 0, %s90
    %s93 = sphi 0, %s92
    %s107 = sphi 0, %s93
    %s111 = sphi 0, %s111
    %s113 = sphi 0, %s111
    %s114 = sphi 0, %s113
    %s128 = sphi 0, %s114
    %s132 = sphi 0, %s132
    %s134 = sphi 0, %s132
    %s135 = sphi 0, %s134
    %s149 = sphi 0, %s135
    %s153 = sphi 0, %s153
    %s155 = sphi 0, %s153
    %s156 = sphi 0, %s155
    %s170 = sphi 0, %s156
    %s178 = sphi 0, %s180
    %s181 = sphi 0, %s178
    %s182 = sphi 0, %s181
    %s198 = sphi 0, %s182
  $region4: #{a_call__.5} parent=0 // loop_header_branch
    %17 = sbr.rel (%p15) target = $region8
  $region5: #{a_call__.5} parent=0 // loop_body
    %s19 = ssub.s32 %s14, 1
    %s20 = ssub.s32 %s14, 2
    %s27 = sadd.s32 1, %s22
    %p28 = scmp.ge.s32.totalorder %s27, 1
    %s29 = scalar_select %p28, 0, %s27
    %s30 = sadd.s32 1, %s21
    %s31 = scalar_select %p28, %s30, %s21
    %p32 = scmp.ge.s32.totalorder %s31, 2
    %s33 = scalar_select %p32, 0, %s31
    %s34 = ssub.s32 %s21, %s33
    %s35 = ssub.s32 %s22, %s29
    %s36 = sor.u32 %s34, %s35
    %p37 = scmp.eq.s32.totalorder %s36, 0
    %s39 = sadd.s32 %s38, 1
    %s40 = scalar_select %p37, %s38, %s39
    %p43 = pneg %p37
    %p44 = scmp.eq.s32.totalorder %s14, 1
    %p45 = por %p43, %p44
    %p46 = scmp.ne.s32.totalorder %s38, %s41
    %p47 = scmp.eq.s32.totalorder %s14, 0
    %p48 = por %p46, %p47
    %p49 = scmp.ne.s32.totalorder %s38, %s41
    %p50 = scmp.eq.s32.totalorder %s19, 1
    %p51 = por %p49, %p50
    %p52 = scmp.ne.s32.totalorder %s41, %s42
    %p53 = scmp.eq.s32.totalorder %s19, 0
    %p54 = por %p52, %p53
    %p55 = scmp.ne.s32.totalorder %s41, %s42
    %p56 = scmp.eq.s32.totalorder %s20, 1
    %p57 = por %p55, %p56
    %p59 = scmp.ne.s32.totalorder %s42, %s58
    %p60 = scmp.eq.s32.totalorder %s20, 0
    %p61 = por %p59, %p60
    %s62 = ssub.s32 %s21, %s33
    %s63 = ssub.s32 %s22, %s29
    %s64 = sor.u32 %s62, %s63
    %p65 = scmp.eq.s32.totalorder %s64, 0
    %s67 = sadd.s32 %s66, 1
    %s68 = scalar_select %p65, %s66, %s67
    %p71 = pneg %p65
    %p72 = scmp.eq.s32.totalorder %s14, 1
    %p73 = por %p71, %p72
    %p74 = scmp.ne.s32.totalorder %s66, %s69
    %p75 = scmp.eq.s32.totalorder %s14, 0
    %p76 = por %p74, %p75
    %p77 = scmp.ne.s32.totalorder %s66, %s69
    %p78 = scmp.eq.s32.totalorder %s19, 1
    %p79 = por %p77, %p78
    %p80 = scmp.ne.s32.totalorder %s69, %s70
    %p81 = scmp.eq.s32.totalorder %s19, 0
    %p82 = por %p80, %p81
    %p83 = scmp.ne.s32.totalorder %s69, %s70
    %p84 = scmp.eq.s32.totalorder %s20, 1
    %p85 = por %p83, %p84
    %p87 = scmp.ne.s32.totalorder %s70, %s86
    %p88 = scmp.eq.s32.totalorder %s20, 0
    %p89 = por %p87, %p88
    %s91 = sadd.s32 %s90, 1
    %p94 = scmp.eq.s32.totalorder %s14, 1
    %p95 = scmp.ne.s32.totalorder %s90, %s92
    %p96 = scmp.eq.s32.totalorder %s14, 0
    %p97 = por %p95, %p96
    %p98 = scmp.ne.s32.totalorder %s90, %s92
    %p99 = scmp.eq.s32.totalorder %s19, 1
    %p100 = por %p98, %p99
    %p101 = scmp.ne.s32.totalorder %s92, %s93
    %p102 = scmp.eq.s32.totalorder %s19, 0
    %p103 = por %p101, %p102
    %p104 = scmp.ne.s32.totalorder %s92, %s93
    %p105 = scmp.eq.s32.totalorder %s20, 1
    %p106 = por %p104, %p105
    %p108 = scmp.ne.s32.totalorder %s93, %s107
    %p109 = scmp.eq.s32.totalorder %s20, 0
    %p110 = por %p108, %p109
    %s112 = sadd.s32 %s111, 1
    %p115 = scmp.eq.s32.totalorder %s14, 1
    %p116 = scmp.ne.s32.totalorder %s111, %s113
    %p117 = scmp.eq.s32.totalorder %s14, 0
    %p118 = por %p116, %p117
    %p119 = scmp.ne.s32.totalorder %s111, %s113
    %p120 = scmp.eq.s32.totalorder %s19, 1
    %p121 = por %p119, %p120
    %p122 = scmp.ne.s32.totalorder %s113, %s114
    %p123 = scmp.eq.s32.totalorder %s19, 0
    %p124 = por %p122, %p123
    %p125 = scmp.ne.s32.totalorder %s113, %s114
    %p126 = scmp.eq.s32.totalorder %s20, 1
    %p127 = por %p125, %p126
    %p129 = scmp.ne.s32.totalorder %s114, %s128
    %p130 = scmp.eq.s32.totalorder %s20, 0
    %p131 = por %p129, %p130
    %s133 = sadd.s32 %s132, 1
    %p136 = scmp.eq.s32.totalorder %s14, 1
    %p137 = scmp.ne.s32.totalorder %s132, %s134
    %p138 = scmp.eq.s32.totalorder %s14, 0
    %p139 = por %p137, %p138
    %p140 = scmp.ne.s32.totalorder %s132, %s134
    %p141 = scmp.eq.s32.totalorder %s19, 1
    %p142 = por %p140, %p141
    %p143 = scmp.ne.s32.totalorder %s134, %s135
    %p144 = scmp.eq.s32.totalorder %s19, 0
    %p145 = por %p143, %p144
    %p146 = scmp.ne.s32.totalorder %s134, %s135
    %p147 = scmp.eq.s32.totalorder %s20, 1
    %p148 = por %p146, %p147
    %p150 = scmp.ne.s32.totalorder %s135, %s149
    %p151 = scmp.eq.s32.totalorder %s20, 0
    %p152 = por %p150, %p151
    %s154 = sadd.s32 %s153, 1
    %p157 = scmp.eq.s32.totalorder %s14, 1
    %p158 = scmp.ne.s32.totalorder %s153, %s155
    %p159 = scmp.eq.s32.totalorder %s14, 0
    %p160 = por %p158, %p159
    %p161 = scmp.ne.s32.totalorder %s153, %s155
    %p162 = scmp.eq.s32.totalorder %s19, 1
    %p163 = por %p161, %p162
    %p164 = scmp.ne.s32.totalorder %s155, %s156
    %p165 = scmp.eq.s32.totalorder %s19, 0
    %p166 = por %p164, %p165
    %p167 = scmp.ne.s32.totalorder %s155, %s156
    %p168 = scmp.eq.s32.totalorder %s20, 1
    %p169 = por %p167, %p168
    %p171 = scmp.ne.s32.totalorder %s156, %s170
    %p172 = scmp.eq.s32.totalorder %s20, 0
    %p173 = por %p171, %p172
    %s174 = ssub.s32 %s21, %s33
    %s175 = ssub.s32 %s22, %s29
    %s176 = sor.u32 %s174, %s175
    %p177 = scmp.eq.s32.totalorder %s176, 0
    %s179 = sadd.s32 %s178, 1
    %s180 = scalar_select %p177, %s178, %s179
    %p183 = pneg %p177
    %p184 = scmp.eq.s32.totalorder %s14, 1
    %p185 = por %p183, %p184
    %p186 = scmp.ne.s32.totalorder %s178, %s181
    %p187 = scmp.eq.s32.totalorder %s14, 0
    %p188 = por %p186, %p187
    %p189 = scmp.ne.s32.totalorder %s178, %s181
    %p190 = scmp.eq.s32.totalorder %s19, 1
    %p191 = por %p189, %p190
    %p192 = scmp.ne.s32.totalorder %s181, %s182
    %p193 = scmp.eq.s32.totalorder %s19, 0
    %p194 = por %p192, %p193
    %p195 = scmp.ne.s32.totalorder %s181, %s182
    %p196 = scmp.eq.s32.totalorder %s20, 1
    %p197 = por %p195, %p196
    %p199 = scmp.ne.s32.totalorder %s182, %s198
    %p200 = scmp.eq.s32.totalorder %s20, 0
    %p201 = por %p199, %p200
    %p202 = scmp.le.s32.totalorder 1, %s14
    %p203 = scmp.lt.s32.totalorder %s14, 3
    %p204 = pnand %p202, %p203
    %p205 = pneg %p204
    // Predicated region
    $region9: #{a_call__.5} parent=5 // pred_check
      _
    $region10: #{a_call__.5} parent=5 // pred_check_branch
      %207 = sbr.rel (%p204) target = $region12
    $region11: #{a_call__.5} parent=5 // pred_region
      %s208 = ssub.s32 %s14, 1
      // Predicated region
      $region13: #{a_call__.5} parent=11 // pred_check
        %p209 = pneg %p103
      $region14: #{a_call__.5} parent=11 // pred_check_branch
        %211 = sbr.rel (%p209) target = $region16
      $region15: #{a_call__.5} parent=11 // pred_region
        _
      $region16: #{a_call__.5} parent=11 // pred_fallthru
        _
      // Predicated region
      $region17: #{a_call__.5} parent=11 // pred_check
        %p212 = pneg %p124
      $region18: #{a_call__.5} parent=11 // pred_check_branch
        %214 = sbr.rel (%p212) target = $region20
      $region19: #{a_call__.5} parent=11 // pred_region
        _
      $region20: #{a_call__.5} parent=11 // pred_fallthru
        _
      // Predicated region
      $region21: #{a_call__.5} parent=11 // pred_check
        %p215 = pneg %p145
      $region22: #{a_call__.5} parent=11 // pred_check_branch
        %217 = sbr.rel (%p215) target = $region24
      $region23: #{a_call__.5} parent=11 // pred_region
        _
      $region24: #{a_call__.5} parent=11 // pred_fallthru
        _
      // Predicated region
      $region25: #{a_call__.5} parent=11 // pred_check
        %p218 = pneg %p166
      $region26: #{a_call__.5} parent=11 // pred_check_branch
        %220 = sbr.rel (%p218) target = $region28
      $region27: #{a_call__.5} parent=11 // pred_region
        _
      $region28: #{a_call__.5} parent=11 // pred_fallthru
        _
    $region12: #{a_call__.5} parent=5 // pred_fallthru
      _
    %p221 = scmp.lt.s32.totalorder %s14, 2
    // Predicated region
    $region29: #{a_call__.5} parent=5 // pred_check
      %p222 = pneg %p221
    $region30: #{a_call__.5} parent=5 // pred_check_branch
      %224 = sbr.rel (%p222) target = $region32
    $region31: #{a_call__.5} parent=5 // pred_region
      // Predicated region
      $region33: #{a_call__.5} parent=31 // pred_check
        %p225 = pneg %p48
      $region34: #{a_call__.5} parent=31 // pred_check_branch
        %227 = sbr.rel (%p225) target = $region36
      $region35: #{a_call__.5} parent=31 // pred_region
        %s228 = smul.u32 4, %s22
        %p229 = scmp.lt.s32.totalorder %s21, 1
        %s230 = scalar_select %p229, %s21, 1
        %p231 = scmp.lt.s32.totalorder %s228, 3
        %s232 = scalar_select %p231, %s228, 3
        %s233 = smul.addr %s230, 4
        %s234 = sadd.s32 %s232, %s233
        %s235 = smul.addr %s234, 2
        %s236 = scalar_lea.vmem %s0, %s235
        %s237 = smul.u32 4, %s22
      $region36: #{a_call__.5} parent=31 // pred_fallthru
        _
      // Predicated region
      $region37: #{a_call__.5} parent=31 // pred_check
        %p238 = pneg %p76
      $region38: #{a_call__.5} parent=31 // pred_check_branch
        %240 = sbr.rel (%p238) target = $region40
      $region39: #{a_call__.5} parent=31 // pred_region
        %s241 = smul.u32 8, %s22
        %p242 = scmp.lt.s32.totalorder %s21, 1
        %s243 = scalar_select %p242, %s21, 1
        %p244 = scmp.lt.s32.totalorder %s241, 7
        %s245 = scalar_select %p244, %s241, 7
        %s246 = smul.addr %s245, 2
        %s247 = smul.addr %s243, 16
        %s248 = sadd.s32 %s246, %s247
        %s249 = smul.addr %s248, 2
        %s250 = scalar_lea.vmem %s1, %s249
        %s251 = smul.u32 8, %s22
      $region40: #{a_call__.5} parent=31 // pred_fallthru
        _
    $region32: #{a_call__.5} parent=5 // pred_fallthru
      _
    %p252 = scmp.le.s32.totalorder 1, %s14
    %p253 = scmp.lt.s32.totalorder %s14, 3
    %p254 = pnand %p252, %p253
    %p255 = pneg %p254
    // Predicated region
    $region41: #{a_call__.5} parent=5 // pred_check
      _
    $region42: #{a_call__.5} parent=5 // pred_check_branch
      %257 = sbr.rel (%p254) target = $region44
    $region43: #{a_call__.5} parent=5 // pred_region
      %s258 = ssub.s32 %s14, 1
      %s259 = smul.u32 4, %s24
      %p260 = scmp.lt.s32.totalorder %s23, 1
      %s261 = scalar_select %p260, %s23, 1
      %p262 = scmp.lt.s32.totalorder %s259, 3
      %s263 = scalar_select %p262, %s259, 3
      %s264 = smul.addr %s261, 4
      %s265 = sadd.s32 %s263, %s264
      %s266 = smul.addr %s265, 2
      %s267 = scalar_lea.vmem %s0, %s266
      %p268 = pneg %p54
      %p269 = pneg %p51
      %s270 = smul.u32 8, %s24
      %p271 = scmp.lt.s32.totalorder %s23, 1
      %s272 = scalar_select %p271, %s23, 1
      %p273 = scmp.lt.s32.totalorder %s270, 7
      %s274 = scalar_select %p273, %s270, 7
      %s275 = smul.addr %s274, 2
      %s276 = smul.addr %s272, 16
      %s277 = sadd.s32 %s275, %s276
      %s278 = smul.addr %s277, 2
      %s279 = scalar_lea.vmem %s1, %s278
      %p280 = pneg %p82
      %p281 = pneg %p79
      %p282 = pneg %p103
      %p283 = pneg %p100
      %p284 = pneg %p124
      %p285 = pneg %p121
      %p286 = pneg %p145
      %p287 = pneg %p142
      %p288 = pneg %p166
      %p289 = pneg %p163
      %p290 = pneg %p194
      %p291 = pneg %p191
      %s292 = smul.u32 4, %s24
      %p293 = scmp.lt.s32.totalorder %s23, 1
      %s294 = scalar_select %p293, %s23, 1
      %p295 = scmp.lt.s32.totalorder %s292, 3
      %s296 = scalar_select %p295, %s292, 3
      %s297 = smul.addr %s296, 2
      %s298 = smul.addr %s294, 8
      %s299 = sadd.s32 %s297, %s298
      %s300 = smul.addr %s299, 2
      %s301 = scalar_lea.vmem %s6, %s300
      %s302 = smul.u32 4, %s24
      %p303 = scmp.lt.s32.totalorder %s23, 1
      %s304 = scalar_select %p303, %s23, 1
      %p305 = scmp.lt.s32.totalorder %s302, 3
      %s306 = scalar_select %p305, %s302, 3
      %s307 = smul.addr %s304, 4
      %s308 = sadd.s32 %s306, %s307
      %s309 = smul.addr %s308, 2
      %s310 = scalar_lea.vmem %s0, %s309
      %s311 = smul.u32 4, %s24
      %s312 = smul.u32 8, %s24
      %p313 = scmp.lt.s32.totalorder %s23, 1
      %s314 = scalar_select %p313, %s23, 1
      %p315 = scmp.lt.s32.totalorder %s312, 7
      %s316 = scalar_select %p315, %s312, 7
      %s317 = smul.addr %s316, 2
      %s318 = smul.addr %s314, 16
      %s319 = sadd.s32 %s317, %s318
      %s320 = smul.addr %s319, 2
      %s321 = scalar_lea.vmem %s1, %s320
      %s322 = smul.u32 8, %s24
      %s323 = smul.u32 4, %s24
      %p324 = scmp.lt.s32.totalorder %s23, 1
      %s325 = scalar_select %p324, %s23, 1
      %p326 = scmp.lt.s32.totalorder %s323, 3
      %s327 = scalar_select %p326, %s323, 3
      %s328 = smul.addr %s327, 2
      %s329 = smul.addr %s325, 8
      %s330 = sadd.s32 %s328, %s329
      %s331 = smul.addr %s330, 2
      %s332 = scalar_lea.vmem %s6, %s331
      %s333 = smul.u32 4, %s24
      %v335 = vld [vmem:[%s2] sm:$0xf]
      %v336 = vld [vmem:[%s2 + $0x4] sm:$0xf]
      %v337 = vld [vmem:[%s2 + $0x8] sm:$0xf]
      %v338 = vld [vmem:[%s2 + $0xc] sm:$0xf]
      %v339 = vld [vmem:[%s3] sm:$0x1]
      %v340 = vld [vmem:[%s4] sm:$0x1]
      %v341 = vld [vmem:[#allocation2] sm:$0x1]
      %v342 = vld [vmem:[%s310] sm:$0x3]
      %v344 = vlaneseq
      %v345 = vshrl.u32 %v344, 7
      %v346 = vsub.s32 0, %v345
      %v347 = vrot.slane %v339, %v346
      %v353 = vunpack.c.l.b16 %v335
      %v354 = vunpack.c.l.b16 %v336
      %v355 = vunpack.c.l.b16 %v337
      %v356 = vunpack.c.l.b16 %v338
      %v357 = vpack.c.b16 %v354, %v353
      %v358 = vpack.c.b16 %v356, %v355
      %vm361 = vcmask 261120
      %v363 = vsel %vm361, %v342, 0
      %365 = vmatprep.subr.bf16.mxu0 0
      %366 = vmatpush1.bf16.msra.mxu0 %v357
      %367 = vmatprep.subr.bf16.mxu0 0
      %368 = vmatpush1.bf16.msra.mxu0 %v358
      %369 = vmatprep.subr.bf16.mxu0 0
      %370 = vmatpush1.bf16.msra.mxu0 0
      %371 = vmatprep.subr.bf16.mxu0 0
      %372 = vmatpush1.bf16.msra.mxu0 0
      %373 = vmatprep.subr.bf16.mxu0 0
      %374 = vmatpush1.bf16.msra.mxu0 0
      %375 = vmatprep.subr.bf16.mxu0 0
      %376 = vmatpush1.bf16.msra.mxu0 0
      %377 = vmatprep.subr.bf16.mxu0 0
      %378 = vmatpush1.bf16.msra.mxu0 0
      %379 = vmatprep.subr.bf16.mxu0 0
      %380 = vmatpush1.bf16.msra.mxu0 0
      %381 = vmatprep.subr.bf16.mxu0 0
      %382 = vmatpush1.bf16.msra.mxu0 0
      %383 = vmatprep.subr.bf16.mxu0 0
      %384 = vmatpush1.bf16.msra.mxu0 0
      %385 = vmatprep.subr.bf16.mxu0 0
      %386 = vmatpush1.bf16.msra.mxu0 0
      %387 = vmatprep.subr.bf16.mxu0 0
      %388 = vmatpush1.bf16.msra.mxu0 0
      %389 = vmatprep.subr.bf16.mxu0 0
      %390 = vmatpush1.bf16.msra.mxu0 0
      %391 = vmatprep.subr.bf16.mxu0 0
      %392 = vmatpush1.bf16.msra.mxu0 0
      %393 = vmatprep.subr.bf16.mxu0 0
      %394 = vmatpush1.bf16.msra.mxu0 0
      %395 = vmatprep.subr.bf16.mxu0 0
      %396 = vmatpush1.bf16.msra.mxu0 0
      %397 = vmatprep.mubr.bf16.mxu0 0
      %398 = vmatmul.mubr.bf16.gmra.mrb[0].mxu0 %v363
      %v399 = vpop.f32.mrb[0].mxu0
      %v400 = vadd.f32 %v347, %v399
      %v401 = vpop.f32.mrb[0].mxu0
      %v402 = vpop.f32.mrb[0].mxu0
      %v403 = vpop.f32.mrb[0].mxu0
      %404 = vdwg.mxu0
      %v405 = vld [vmem:[%s321] sm:$0x3]
      %v406 = vld [vmem:[%s321 + $0x2] sm:$0x3]
      %v407 = vunpack.c.l.bf16 %v405
      %v408 = vunpack.c.l.bf16 %v406
      %v409 = vadd.f32 %v407, %v400
      %v410 = vadd.f32 %v408, %v400
      %v411 = vmax.f32 %v409, 0.0
      %v412 = vmax.f32 %v410, 0.0
      %v414 = vlaneseq
      %v415 = vshrl.u32 %v414, 7
      %v416 = vsub.s32 0, %v415
      %v417 = vrot.slane %v340, %v416
      %v419 = vmul.f32 %v411, %v417
      %v420 = vmul.f32 %v412, %v417
      %vm421 = vcmask 125952
      %v422 = vsel %vm421, %v419, 0.0
      %423 = vadd.xlane.f32.xlu0 %v422
      %v424 = vpop.xlane.xlu0 %423
      %v425 = vsel %vm421, %v420, 0.0
      %426 = vadd.xlane.f32.xlu0 %v425
      %v427 = vpop.xlane.xlu0 %426
      %v429 = vlaneseq
      %v430 = vshrl.u32 %v429, 7
      %v431 = vsub.s32 0, %v430
      %v432 = vrot.slane %v341, %v431
      %433 = vset.pattern.permute.xlu0 0
      %434 = vperm.xlu0 %433, %v432
      %v435 = vpop.permute.xlu0 %434
      %v437 = vadd.f32 %v424, %v435
      %v438 = vadd.f32 %v427, %v435
      %v441 = vlaneseq
      %v442 = vand.u32 %v441, 127
      %v443 = vlaneseq
      %v444 = vshrl.u32 %v443, 7
      %v445 = vsub.s32 %v442, %v444
      %v446 = vrot.slane %v437, %v445
      %v447 = vlaneseq
      %v448 = vshrl.u32 %v447, 7
      %v449 = vsub.s32 %v442, %v448
      %v450 = vrot.slane %v438, %v449
      %vm451 = vcmask 1041409
      %v452 = vsel %vm451, %v450, %v446
      %vm454 = vcmask 25600
      %455 = vst.msk [vmem:[%s332] sm:$0x3] %vm454, %v452
      %s456 = scalar_lea.vmem %s321, 4
      %v457 = vld [vmem:[%s456] sm:$0x3]
      %v458 = vld [vmem:[%s456 + $0x2] sm:$0x3]
      %v459 = vunpack.c.l.bf16 %v457
      %v460 = vunpack.c.l.bf16 %v458
      %v461 = vadd.f32 %v459, %v400
      %v462 = vadd.f32 %v460, %v400
      %v463 = vmax.f32 %v461, 0.0
      %v464 = vmax.f32 %v462, 0.0
      %v465 = vmul.f32 %v463, %v417
      %v466 = vmul.f32 %v464, %v417
      %v467 = vsel %vm421, %v465, 0.0
      %468 = vadd.xlane.f32.xlu0 %v467
      %v469 = vpop.xlane.xlu0 %468
      %v470 = vsel %vm421, %v466, 0.0
      %471 = vadd.xlane.f32.xlu0 %v470
      %v472 = vpop.xlane.xlu0 %471
      %v473 = vadd.f32 %v469, %v435
      %v474 = vadd.f32 %v472, %v435
      %v477 = vlaneseq
      %v478 = vshrl.u32 %v477, 7
      %v479 = vsub.s32 %v442, %v478
      %v480 = vrot.slane %v473, %v479
      %v481 = vlaneseq
      %v482 = vshrl.u32 %v481, 7
      %v483 = vsub.s32 %v442, %v482
      %v484 = vrot.slane %v474, %v483
      %v485 = vsel %vm451, %v484, %v480
      %s487 = scalar_lea.vmem %s332, 2
      %488 = vst.msk [vmem:[%s487] sm:$0x3] %vm454, %v485
      %s489 = scalar_lea.vmem %s310, 2
      %v490 = vld [vmem:[%s489] sm:$0x3]
      %v492 = vsel %vm361, %v490, 0
      %494 = vmatprep.subr.bf16.mxu0 0
      %495 = vmatpush1.bf16.msra.mxu0 %v357
      %496 = vmatprep.subr.bf16.mxu0 0
      %497 = vmatpush1.bf16.msra.mxu0 %v358
      %498 = vmatprep.subr.bf16.mxu0 0
      %499 = vmatpush1.bf16.msra.mxu0 0
      %500 = vmatprep.subr.bf16.mxu0 0
      %501 = vmatpush1.bf16.msra.mxu0 0
      %502 = vmatprep.subr.bf16.mxu0 0
      %503 = vmatpush1.bf16.msra.mxu0 0
      %504 = vmatprep.subr.bf16.mxu0 0
      %505 = vmatpush1.bf16.msra.mxu0 0
      %506 = vmatprep.subr.bf16.mxu0 0
      %507 = vmatpush1.bf16.msra.mxu0 0
      %508 = vmatprep.subr.bf16.mxu0 0
      %509 = vmatpush1.bf16.msra.mxu0 0
      %510 = vmatprep.subr.bf16.mxu0 0
      %511 = vmatpush1.bf16.msra.mxu0 0
      %512 = vmatprep.subr.bf16.mxu0 0
      %513 = vmatpush1.bf16.msra.mxu0 0
      %514 = vmatprep.subr.bf16.mxu0 0
      %515 = vmatpush1.bf16.msra.mxu0 0
      %516 = vmatprep.subr.bf16.mxu0 0
      %517 = vmatpush1.bf16.msra.mxu0 0
      %518 = vmatprep.subr.bf16.mxu0 0
      %519 = vmatpush1.bf16.msra.mxu0 0
      %520 = vmatprep.subr.bf16.mxu0 0
      %521 = vmatpush1.bf16.msra.mxu0 0
      %522 = vmatprep.subr.bf16.mxu0 0
      %523 = vmatpush1.bf16.msra.mxu0 0
      %524 = vmatprep.subr.bf16.mxu0 0
      %525 = vmatpush1.bf16.msra.mxu0 0
      %526 = vmatprep.mubr.bf16.mxu0 0
      %527 = vmatmul.mubr.bf16.gmra.mrb[0].mxu0 %v492
      %v528 = vpop.f32.mrb[0].mxu0
      %v529 = vadd.f32 %v347, %v528
      %v530 = vpop.f32.mrb[0].mxu0
      %v531 = vpop.f32.mrb[0].mxu0
      %v532 = vpop.f32.mrb[0].mxu0
      %533 = vdwg.mxu0
      %s534 = scalar_lea.vmem %s321, 8
      %v535 = vld [vmem:[%s534] sm:$0x3]
      %v536 = vld [vmem:[%s534 + $0x2] sm:$0x3]
      %v537 = vunpack.c.l.bf16 %v535
      %v538 = vunpack.c.l.bf16 %v536
      %v539 = vadd.f32 %v537, %v529
      %v540 = vadd.f32 %v538, %v529
      %v541 = vmax.f32 %v539, 0.0
      %v542 = vmax.f32 %v540, 0.0
      %v543 = vmul.f32 %v541, %v417
      %v544 = vmul.f32 %v542, %v417
      %v545 = vsel %vm421, %v543, 0.0
      %546 = vadd.xlane.f32.xlu0 %v545
      %v547 = vpop.xlane.xlu0 %546
      %v548 = vsel %vm421, %v544, 0.0
      %549 = vadd.xlane.f32.xlu0 %v548
      %v550 = vpop.xlane.xlu0 %549
      %v551 = vadd.f32 %v547, %v435
      %v552 = vadd.f32 %v550, %v435
      %v555 = vlaneseq
      %v556 = vshrl.u32 %v555, 7
      %v557 = vsub.s32 %v442, %v556
      %v558 = vrot.slane %v551, %v557
      %v559 = vlaneseq
      %v560 = vshrl.u32 %v559, 7
      %v561 = vsub.s32 %v442, %v560
      %v562 = vrot.slane %v552, %v561
      %v563 = vsel %vm451, %v562, %v558
      %s565 = scalar_lea.vmem %s332, 4
      %566 = vst.msk [vmem:[%s565] sm:$0x3] %vm454, %v563
      %s567 = scalar_lea.vmem %s321, 12
      %v568 = vld [vmem:[%s567] sm:$0x3]
      %v569 = vld [vmem:[%s567 + $0x2] sm:$0x3]
      %v570 = vunpack.c.l.bf16 %v568
      %v571 = vunpack.c.l.bf16 %v569
      %v572 = vadd.f32 %v570, %v529
      %v573 = vadd.f32 %v571, %v529
      %v574 = vmax.f32 %v572, 0.0
      %v575 = vmax.f32 %v573, 0.0
      %v576 = vmul.f32 %v574, %v417
      %v577 = vmul.f32 %v575, %v417
      %v578 = vsel %vm421, %v576, 0.0
      %579 = vadd.xlane.f32.xlu0 %v578
      %v580 = vpop.xlane.xlu0 %579
      %v581 = vsel %vm421, %v577, 0.0
      %582 = vadd.xlane.f32.xlu0 %v581
      %v583 = vpop.xlane.xlu0 %582
      %v584 = vadd.f32 %v580, %v435
      %v585 = vadd.f32 %v583, %v435
      %v588 = vlaneseq
      %v589 = vshrl.u32 %v588, 7
      %v590 = vsub.s32 %v442, %v589
      %v591 = vrot.slane %v584, %v590
      %v592 = vlaneseq
      %v593 = vshrl.u32 %v592, 7
      %v594 = vsub.s32 %v442, %v593
      %v595 = vrot.slane %v585, %v594
      %v596 = vsel %vm451, %v595, %v591
      %s598 = scalar_lea.vmem %s332, 6
      %599 = vst.msk [vmem:[%s598] sm:$0x3] %vm454, %v596
      %s600 = scalar_lea.vmem %s310, 4
      %v601 = vld [vmem:[%s600] sm:$0x3]
      %v603 = vsel %vm361, %v601, 0
      %605 = vmatprep.subr.bf16.mxu0 0
      %606 = vmatpush1.bf16.msra.mxu0 %v357
      %607 = vmatprep.subr.bf16.mxu0 0
      %608 = vmatpush1.bf16.msra.mxu0 %v358
      %609 = vmatprep.subr.bf16.mxu0 0
      %610 = vmatpush1.bf16.msra.mxu0 0
      %611 = vmatprep.subr.bf16.mxu0 0
      %612 = vmatpush1.bf16.msra.mxu0 0
      %613 = vmatprep.subr.bf16.mxu0 0
      %614 = vmatpush1.bf16.msra.mxu0 0
      %615 = vmatprep.subr.bf16.mxu0 0
      %616 = vmatpush1.bf16.msra.mxu0 0
      %617 = vmatprep.subr.bf16.mxu0 0
      %618 = vmatpush1.bf16.msra.mxu0 0
      %619 = vmatprep.subr.bf16.mxu0 0
      %620 = vmatpush1.bf16.msra.mxu0 0
      %621 = vmatprep.subr.bf16.mxu0 0
      %622 = vmatpush1.bf16.msra.mxu0 0
      %623 = vmatprep.subr.bf16.mxu0 0
      %624 = vmatpush1.bf16.msra.mxu0 0
      %625 = vmatprep.subr.bf16.mxu0 0
      %626 = vmatpush1.bf16.msra.mxu0 0
      %627 = vmatprep.subr.bf16.mxu0 0
      %628 = vmatpush1.bf16.msra.mxu0 0
      %629 = vmatprep.subr.bf16.mxu0 0
      %630 = vmatpush1.bf16.msra.mxu0 0
      %631 = vmatprep.subr.bf16.mxu0 0
      %632 = vmatpush1.bf16.msra.mxu0 0
      %633 = vmatprep.subr.bf16.mxu0 0
      %634 = vmatpush1.bf16.msra.mxu0 0
      %635 = vmatprep.subr.bf16.mxu0 0
      %636 = vmatpush1.bf16.msra.mxu0 0
      %637 = vmatprep.mubr.bf16.mxu0 0
      %638 = vmatmul.mubr.bf16.gmra.mrb[0].mxu0 %v603
      %v639 = vpop.f32.mrb[0].mxu0
      %v640 = vadd.f32 %v347, %v639
      %v641 = vpop.f32.mrb[0].mxu0
      %v642 = vpop.f32.mrb[0].mxu0
      %v643 = vpop.f32.mrb[0].mxu0
      %644 = vdwg.mxu0
      %s645 = scalar_lea.vmem %s321, 16
      %v646 = vld [vmem:[%s645] sm:$0x3]
      %v647 = vld [vmem:[%s645 + $0x2] sm:$0x3]
      %v648 = vunpack.c.l.bf16 %v646
      %v649 = vunpack.c.l.bf16 %v647
      %v650 = vadd.f32 %v648, %v640
      %v651 = vadd.f32 %v649, %v640
      %v652 = vmax.f32 %v650, 0.0
      %v653 = vmax.f32 %v651, 0.0
      %v654 = vmul.f32 %v652, %v417
      %v655 = vmul.f32 %v653, %v417
      %v656 = vsel %vm421, %v654, 0.0
      %657 = vadd.xlane.f32.xlu0 %v656
      %v658 = vpop.xlane.xlu0 %657
      %v659 = vsel %vm421, %v655, 0.0
      %660 = vadd.xlane.f32.xlu0 %v659
      %v661 = vpop.xlane.xlu0 %660
      %v662 = vadd.f32 %v658, %v435
      %v663 = vadd.f32 %v661, %v435
      %v666 = vlaneseq
      %v667 = vshrl.u32 %v666, 7
      %v668 = vsub.s32 %v442, %v667
      %v669 = vrot.slane %v662, %v668
      %v670 = vlaneseq
      %v671 = vshrl.u32 %v670, 7
      %v672 = vsub.s32 %v442, %v671
      %v673 = vrot.slane %v663, %v672
      %v674 = vsel %vm451, %v673, %v669
      %s676 = scalar_lea.vmem %s332, 8
      %677 = vst.msk [vmem:[%s676] sm:$0x3] %vm454, %v674
      %s678 = scalar_lea.vmem %s321, 20
      %v679 = vld [vmem:[%s678] sm:$0x3]
      %v680 = vld [vmem:[%s678 + $0x2] sm:$0x3]
      %v681 = vunpack.c.l.bf16 %v679
      %v682 = vunpack.c.l.bf16 %v680
      %v683 = vadd.f32 %v681, %v640
      %v684 = vadd.f32 %v682, %v640
      %v685 = vmax.f32 %v683, 0.0
      %v686 = vmax.f32 %v684, 0.0
      %v687 = vmul.f32 %v685, %v417
      %v688 = vmul.f32 %v686, %v417
      %v689 = vsel %vm421, %v687, 0.0
      %690 = vadd.xlane.f32.xlu0 %v689
      %v691 = vpop.xlane.xlu0 %690
      %v692 = vsel %vm421, %v688, 0.0
      %693 = vadd.xlane.f32.xlu0 %v692
      %v694 = vpop.xlane.xlu0 %693
      %v695 = vadd.f32 %v691, %v435
      %v696 = vadd.f32 %v694, %v435
      %v699 = vlaneseq
      %v700 = vshrl.u32 %v699, 7
      %v701 = vsub.s32 %v442, %v700
      %v702 = vrot.slane %v695, %v701
      %v703 = vlaneseq
      %v704 = vshrl.u32 %v703, 7
      %v705 = vsub.s32 %v442, %v704
      %v706 = vrot.slane %v696, %v705
      %v707 = vsel %vm451, %v706, %v702
      %s709 = scalar_lea.vmem %s332, 10
      %710 = vst.msk [vmem:[%s709] sm:$0x3] %vm454, %v707
      %s711 = scalar_lea.vmem %s310, 6
      %v712 = vld [vmem:[%s711] sm:$0x3]
      %v714 = vsel %vm361, %v712, 0
      %716 = vmatprep.subr.bf16.mxu0 0
      %717 = vmatpush1.bf16.msra.mxu0 %v357
      %718 = vmatprep.subr.bf16.mxu0 0
      %719 = vmatpush1.bf16.msra.mxu0 %v358
      %720 = vmatprep.subr.bf16.mxu0 0
      %721 = vmatpush1.bf16.msra.mxu0 0
      %722 = vmatprep.subr.bf16.mxu0 0
      %723 = vmatpush1.bf16.msra.mxu0 0
      %724 = vmatprep.subr.bf16.mxu0 0
      %725 = vmatpush1.bf16.msra.mxu0 0
      %726 = vmatprep.subr.bf16.mxu0 0
      %727 = vmatpush1.bf16.msra.mxu0 0
      %728 = vmatprep.subr.bf16.mxu0 0
      %729 = vmatpush1.bf16.msra.mxu0 0
      %730 = vmatprep.subr.bf16.mxu0 0
      %731 = vmatpush1.bf16.msra.mxu0 0
      %732 = vmatprep.subr.bf16.mxu0 0
      %733 = vmatpush1.bf16.msra.mxu0 0
      %734 = vmatprep.subr.bf16.mxu0 0
      %735 = vmatpush1.bf16.msra.mxu0 0
      %736 = vmatprep.subr.bf16.mxu0 0
      %737 = vmatpush1.bf16.msra.mxu0 0
      %738 = vmatprep.subr.bf16.mxu0 0
      %739 = vmatpush1.bf16.msra.mxu0 0
      %740 = vmatprep.subr.bf16.mxu0 0
      %741 = vmatpush1.bf16.msra.mxu0 0
      %742 = vmatprep.subr.bf16.mxu0 0
      %743 = vmatpush1.bf16.msra.mxu0 0
      %744 = vmatprep.subr.bf16.mxu0 0
      %745 = vmatpush1.bf16.msra.mxu0 0
      %746 = vmatprep.subr.bf16.mxu0 0
      %747 = vmatpush1.bf16.msra.mxu0 0
      %748 = vmatprep.mubr.bf16.mxu0 0
      %749 = vmatmul.mubr.bf16.gmra.mrb[0].mxu0 %v714
      %v750 = vpop.f32.mrb[0].mxu0
      %v751 = vadd.f32 %v347, %v750
      %v752 = vpop.f32.mrb[0].mxu0
      %v753 = vpop.f32.mrb[0].mxu0
      %v754 = vpop.f32.mrb[0].mxu0
      %755 = vdwg.mxu0
      %s756 = scalar_lea.vmem %s321, 24
      %v757 = vld [vmem:[%s756] sm:$0x3]
      %v758 = vld [vmem:[%s756 + $0x2] sm:$0x3]
      %v759 = vunpack.c.l.bf16 %v757
      %v760 = vunpack.c.l.bf16 %v758
      %v761 = vadd.f32 %v759, %v751
      %v762 = vadd.f32 %v760, %v751
      %v763 = vmax.f32 %v761, 0.0
      %v764 = vmax.f32 %v762, 0.0
      %v765 = vmul.f32 %v763, %v417
      %v766 = vmul.f32 %v764, %v417
      %v767 = vsel %vm421, %v765, 0.0
      %768 = vadd.xlane.f32.xlu0 %v767
      %v769 = vpop.xlane.xlu0 %768
      %v770 = vsel %vm421, %v766, 0.0
      %771 = vadd.xlane.f32.xlu0 %v770
      %v772 = vpop.xlane.xlu0 %771
      %v773 = vadd.f32 %v769, %v435
      %v774 = vadd.f32 %v772, %v435
      %v777 = vlaneseq
      %v778 = vshrl.u32 %v777, 7
      %v779 = vsub.s32 %v442, %v778
      %v780 = vrot.slane %v773, %v779
      %v781 = vlaneseq
      %v782 = vshrl.u32 %v781, 7
      %v783 = vsub.s32 %v442, %v782
      %v784 = vrot.slane %v774, %v783
      %v785 = vsel %vm451, %v784, %v780
      %s787 = scalar_lea.vmem %s332, 12
      %788 = vst.msk [vmem:[%s787] sm:$0x3] %vm454, %v785
      %s789 = scalar_lea.vmem %s321, 28
      %v790 = vld [vmem:[%s789] sm:$0x3]
      %v791 = vld [vmem:[%s789 + $0x2] sm:$0x3]
      %v792 = vunpack.c.l.bf16 %v790
      %v793 = vunpack.c.l.bf16 %v791
      %v794 = vadd.f32 %v792, %v751
      %v795 = vadd.f32 %v793, %v751
      %v796 = vmax.f32 %v794, 0.0
      %v797 = vmax.f32 %v795, 0.0
      %v798 = vmul.f32 %v796, %v417
      %v799 = vmul.f32 %v797, %v417
      %v800 = vsel %vm421, %v798, 0.0
      %801 = vadd.xlane.f32.xlu0 %v800
      %v802 = vpop.xlane.xlu0 %801
      %v803 = vsel %vm421, %v799, 0.0
      %804 = vadd.xlane.f32.xlu0 %v803
      %v805 = vpop.xlane.xlu0 %804
      %v806 = vadd.f32 %v802, %v435
      %v807 = vadd.f32 %v805, %v435
      %v810 = vlaneseq
      %v811 = vshrl.u32 %v810, 7
      %v812 = vsub.s32 %v442, %v811
      %v813 = vrot.slane %v806, %v812
      %v814 = vlaneseq
      %v815 = vshrl.u32 %v814, 7
      %v816 = vsub.s32 %v442, %v815
      %v817 = vrot.slane %v807, %v816
      %v818 = vsel %vm451, %v817, %v813
      %s820 = scalar_lea.vmem %s332, 14
      %821 = vst.msk [vmem:[%s820] sm:$0x3] %vm454, %v818
      %s822 = smul.u32 4, %s24
      %p823 = scmp.lt.s32.totalorder %s23, 1
      %s824 = scalar_select %p823, %s23, 1
      %p825 = scmp.lt.s32.totalorder %s822, 3
      %s826 = scalar_select %p825, %s822, 3
      %s827 = smul.addr %s826, 2
      %s828 = smul.addr %s824, 8
      %s829 = sadd.s32 %s827, %s828
      %s830 = smul.addr %s829, 2
      %s831 = scalar_lea.vmem %s6, %s830
      // Predicated region
      $region45: #{a_call__.5} parent=43 // pred_check
        %p832 = pneg %p191
      $region46: #{a_call__.5} parent=43 // pred_check_branch
        %834 = sbr.rel (%p832) target = $region48
      $region47: #{a_call__.5} parent=43 // pred_region
        %s835 = smul.u32 4, %s24
      $region48: #{a_call__.5} parent=43 // pred_fallthru
        _
    $region44: #{a_call__.5} parent=5 // pred_fallthru
      _
    %p836 = scmp.le.s32.totalorder 2, %s14
    // Predicated region
    $region49: #{a_call__.5} parent=5 // pred_check
      %p837 = pneg %p836
    $region50: #{a_call__.5} parent=5 // pred_check_branch
      %839 = sbr.rel (%p837) target = $region52
    $region51: #{a_call__.5} parent=5 // pred_region
      %s840 = ssub.s32 %s14, 2
      // Predicated region
      $region53: #{a_call__.5} parent=51 // pred_check
        %p841 = pneg %p197
      $region54: #{a_call__.5} parent=51 // pred_check_branch
        %843 = sbr.rel (%p841) target = $region56
      $region55: #{a_call__.5} parent=51 // pred_region
        %s844 = smul.u32 4, %s26
        %p845 = scmp.lt.s32.totalorder %s25, 1
        %s846 = scalar_select %p845, %s25, 1
        %p847 = scmp.lt.s32.totalorder %s844, 3
        %s848 = scalar_select %p847, %s844, 3
        %s849 = smul.addr %s848, 2
        %s850 = smul.addr %s846, 8
        %s851 = sadd.s32 %s849, %s850
        %s852 = smul.addr %s851, 2
        %s853 = scalar_lea.vmem %s6, %s852
      $region56: #{a_call__.5} parent=51 // pred_fallthru
        _
    $region52: #{a_call__.5} parent=5 // pred_fallthru
      _
  $region6: #{a_call__.5} parent=0 // loop_footer
    %s18 = sadd.s32 1, %s14
  $region7: #{a_call__.5} parent=0 // loop_footer_branch
    %13 = sbr.rel target = $region3
  $region8: #{a_call__.5} parent=0 // loop_exit
    _

// kernel: a_call__.3
$region0: #{a_call__.3}
  #allocation0 [shape = 'u32[]', space=smem, size = 0x4, offset = 0x4, fixed_abs, tag = 'smem constant byte address 0x4 - core index']
  #allocation1 [shape = 'u32[144,128]{1,0:T(1,128)}', space=vmem, size = 0x12000, scoped, tag = 'internal scratch']
  %s0 = inlined_call_operand.vmem [shape: bf16[2,17,2,9,3], index: 0, kind: input, shape index: {}, may-alias: {0,1,2,3,4,5,6,7,8}]
  %s1 = inlined_call_operand.vmem [shape: bf16[2,17,2,9,3], index: 1, kind: input, shape index: {}, may-alias: {0,1,2,3,4,5,6,7,8}]
  %s2 = inlined_call_operand.vmem [shape: bf16[2,17,2,9,3], index: 2, kind: input, shape index: {}, may-alias: {0,1,2,3,4,5,6,7,8}]
  %s3 = inlined_call_operand.vmem [shape: bf16[2,17,2,9,3], index: 3, kind: input, shape index: {}, may-alias: {0,1,2,3,4,5,6,7,8}]
  %s4 = inlined_call_operand.vmem [shape: bf16[2,17,2,9,3], index: 4, kind: input, shape index: {}, may-alias: {0,1,2,3,4,5,6,7,8}]
  %s5 = inlined_call_operand.vmem [shape: bf16[2,17,2,9,3], index: 5, kind: input, shape index: {}, may-alias: {0,1,2,3,4,5,6,7,8}]
  %s6 = inlined_call_operand.vmem [shape: bf16[2,17,2,9,3], index: 6, kind: input, shape index: {}, may-alias: {0,1,2,3,4,5,6,7,8}]
  %s7 = inlined_call_operand.vmem [shape: bf16[2,17,2,9,3], index: 7, kind: input, shape index: {}, may-alias: {0,1,2,3,4,5,6,7,8}]
  %s8 = inlined_call_operand.vmem [shape: bf16[2,17,2,9,3], index: 8, kind: input, shape index: {}, may-alias: {0,1,2,3,4,5,6,7,8}]
  %s9 = inlined_call_operand.vmem [shape: bf16[9,3,16], index: 9, kind: input, shape index: {}]
  %s10 = inlined_call_operand.vmem [shape: f32[1,16], index: 10, kind: input, shape index: {}]
  %s11 = inlined_call_operand.vmem [shape: bf16[2,8,8,16], index: 11, kind: output, shape index: {}]
  %s12 = sld [smem:[#allocation0]]
  $region77: #{a_call__.3} parent=0
    _
  %s14 = ssub.s32 1, %s12
  %s15 = scalar_select 0, %s14, %s12
  loop: start=0, step=1, limit=6
  $region2: #{a_call__.3} parent=0 // loop_pre_header
    _
  $region3: #{a_call__.3} parent=0 // loop_header
    %s17 = sphi 0, %s21
    %p18 = scmp.ge.s32.totalorder %s17, 6
    %s24 = sphi 0, %s36
    %s25 = sphi 0, %s32
    %s26 = sphi 0, %s24
    %s27 = sphi 0, %s25
    %s28 = sphi 0, %s26
    %s29 = sphi 0, %s27
    %s43 = sphi 0, %s45
    %s46 = sphi 0, %s43
    %s47 = sphi 0, %s46
    %s63 = sphi 0, %s47
    %s75 = sphi 0, %s77
    %s78 = sphi 0, %s75
    %s79 = sphi 0, %s78
    %s95 = sphi 0, %s79
    %s107 = sphi 0, %s109
    %s110 = sphi 0, %s107
    %s111 = sphi 0, %s110
    %s127 = sphi 0, %s111
    %s139 = sphi 0, %s141
    %s142 = sphi 0, %s139
    %s143 = sphi 0, %s142
    %s159 = sphi 0, %s143
    %s171 = sphi 0, %s173
    %s174 = sphi 0, %s171
    %s175 = sphi 0, %s174
    %s191 = sphi 0, %s175
    %s203 = sphi 0, %s205
    %s206 = sphi 0, %s203
    %s207 = sphi 0, %s206
    %s223 = sphi 0, %s207
    %s235 = sphi 0, %s237
    %s238 = sphi 0, %s235
    %s239 = sphi 0, %s238
    %s255 = sphi 0, %s239
    %s267 = sphi 0, %s269
    %s270 = sphi 0, %s267
    %s271 = sphi 0, %s270
    %s287 = sphi 0, %s271
    %s299 = sphi 0, %s301
    %s302 = sphi 0, %s299
    %s303 = sphi 0, %s302
    %s319 = sphi 0, %s303
    %s323 = sphi 0, %s323
    %s325 = sphi 0, %s323
    %s326 = sphi 0, %s325
    %s340 = sphi 0, %s326
    %s344 = sphi 0, %s344
    %s346 = sphi 0, %s344
    %s347 = sphi 0, %s346
    %s361 = sphi 0, %s347
    %s369 = sphi 0, %s371
    %s372 = sphi 0, %s369
    %s373 = sphi 0, %s372
    %s389 = sphi 0, %s373
  $region4: #{a_call__.3} parent=0 // loop_header_branch
    %20 = sbr.rel (%p18) target = $region8
  $region5: #{a_call__.3} parent=0 // loop_body
    %s22 = ssub.s32 %s17, 1
    %s23 = ssub.s32 %s17, 2
    %s30 = sadd.s32 1, %s25
    %p31 = scmp.ge.s32.totalorder %s30, 2
    %s32 = scalar_select %p31, 0, %s30
    %s33 = sadd.s32 1, %s24
    %s34 = scalar_select %p31, %s33, %s24
    %p35 = scmp.ge.s32.totalorder %s34, 2
    %s36 = scalar_select %p35, 0, %s34
    %s37 = smul.u32 %s25, 8
    %s38 = smul.u32 %s32, 8
    %s39 = ssub.s32 %s24, %s36
    %s40 = ssub.s32 %s37, %s38
    %s41 = sor.u32 %s39, %s40
    %p42 = scmp.eq.s32.totalorder %s41, 0
    %s44 = sadd.s32 %s43, 1
    %s45 = scalar_select %p42, %s43, %s44
    %p48 = pneg %p42
    %p49 = scmp.eq.s32.totalorder %s17, 3
    %p50 = por %p48, %p49
    %p51 = scmp.ne.s32.totalorder %s43, %s46
    %p52 = scmp.eq.s32.totalorder %s17, 0
    %p53 = por %p51, %p52
    %p54 = scmp.ne.s32.totalorder %s43, %s46
    %p55 = scmp.eq.s32.totalorder %s22, 3
    %p56 = por %p54, %p55
    %p57 = scmp.ne.s32.totalorder %s46, %s47
    %p58 = scmp.eq.s32.totalorder %s22, 0
    %p59 = por %p57, %p58
    %p60 = scmp.ne.s32.totalorder %s46, %s47
    %p61 = scmp.eq.s32.totalorder %s23, 3
    %p62 = por %p60, %p61
    %p64 = scmp.ne.s32.totalorder %s47, %s63
    %p65 = scmp.eq.s32.totalorder %s23, 0
    %p66 = por %p64, %p65
    %s67 = smul.u32 %s25, 8
    %s68 = sadd.s32 %s67, 1
    %s69 = smul.u32 %s32, 8
    %s70 = sadd.s32 %s69, 1
    %s71 = ssub.s32 %s24, %s36
    %s72 = ssub.s32 %s68, %s70
    %s73 = sor.u32 %s71, %s72
    %p74 = scmp.eq.s32.totalorder %s73, 0
    %s76 = sadd.s32 %s75, 1
    %s77 = scalar_select %p74, %s75, %s76
    %p80 = pneg %p74
    %p81 = scmp.eq.s32.totalorder %s17, 3
    %p82 = por %p80, %p81
    %p83 = scmp.ne.s32.totalorder %s75, %s78
    %p84 = scmp.eq.s32.totalorder %s17, 0
    %p85 = por %p83, %p84
    %p86 = scmp.ne.s32.totalorder %s75, %s78
    %p87 = scmp.eq.s32.totalorder %s22, 3
    %p88 = por %p86, %p87
    %p89 = scmp.ne.s32.totalorder %s78, %s79
    %p90 = scmp.eq.s32.totalorder %s22, 0
    %p91 = por %p89, %p90
    %p92 = scmp.ne.s32.totalorder %s78, %s79
    %p93 = scmp.eq.s32.totalorder %s23, 3
    %p94 = por %p92, %p93
    %p96 = scmp.ne.s32.totalorder %s79, %s95
    %p97 = scmp.eq.s32.totalorder %s23, 0
    %p98 = por %p96, %p97
    %s99 = smul.u32 %s25, 8
    %s100 = sadd.s32 %s99, 2
    %s101 = smul.u32 %s32, 8
    %s102 = sadd.s32 %s101, 2
    %s103 = ssub.s32 %s24, %s36
    %s104 = ssub.s32 %s100, %s102
    %s105 = sor.u32 %s103, %s104
    %p106 = scmp.eq.s32.totalorder %s105, 0
    %s108 = sadd.s32 %s107, 1
    %s109 = scalar_select %p106, %s107, %s108
    %p112 = pneg %p106
    %p113 = scmp.eq.s32.totalorder %s17, 3
    %p114 = por %p112, %p113
    %p115 = scmp.ne.s32.totalorder %s107, %s110
    %p116 = scmp.eq.s32.totalorder %s17, 0
    %p117 = por %p115, %p116
    %p118 = scmp.ne.s32.totalorder %s107, %s110
    %p119 = scmp.eq.s32.totalorder %s22, 3
    %p120 = por %p118, %p119
    %p121 = scmp.ne.s32.totalorder %s110, %s111
    %p122 = scmp.eq.s32.totalorder %s22, 0
    %p123 = por %p121, %p122
    %p124 = scmp.ne.s32.totalorder %s110, %s111
    %p125 = scmp.eq.s32.totalorder %s23, 3
    %p126 = por %p124, %p125
    %p128 = scmp.ne.s32.totalorder %s111, %s127
    %p129 = scmp.eq.s32.totalorder %s23, 0
    %p130 = por %p128, %p129
    %s131 = smul.u32 %s25, 8
    %s132 = sadd.s32 %s131, 3
    %s133 = smul.u32 %s32, 8
    %s134 = sadd.s32 %s133, 3
    %s135 = ssub.s32 %s24, %s36
    %s136 = ssub.s32 %s132, %s134
    %s137 = sor.u32 %s135, %s136
    %p138 = scmp.eq.s32.totalorder %s137, 0
    %s140 = sadd.s32 %s139, 1
    %s141 = scalar_select %p138, %s139, %s140
    %p144 = pneg %p138
    %p145 = scmp.eq.s32.totalorder %s17, 3
    %p146 = por %p144, %p145
    %p147 = scmp.ne.s32.totalorder %s139, %s142
    %p148 = scmp.eq.s32.totalorder %s17, 0
    %p149 = por %p147, %p148
    %p150 = scmp.ne.s32.totalorder %s139, %s142
    %p151 = scmp.eq.s32.totalorder %s22, 3
    %p152 = por %p150, %p151
    %p153 = scmp.ne.s32.totalorder %s142, %s143
    %p154 = scmp.eq.s32.totalorder %s22, 0
    %p155 = por %p153, %p154
    %p156 = scmp.ne.s32.totalorder %s142, %s143
    %p157 = scmp.eq.s32.totalorder %s23, 3
    %p158 = por %p156, %p157
    %p160 = scmp.ne.s32.totalorder %s143, %s159
    %p161 = scmp.eq.s32.totalorder %s23, 0
    %p162 = por %p160, %p161
    %s163 = smul.u32 %s25, 8
    %s164 = sadd.s32 %s163, 4
    %s165 = smul.u32 %s32, 8
    %s166 = sadd.s32 %s165, 4
    %s167 = ssub.s32 %s24, %s36
    %s168 = ssub.s32 %s164, %s166
    %s169 = sor.u32 %s167, %s168
    %p170 = scmp.eq.s32.totalorder %s169, 0
    %s172 = sadd.s32 %s171, 1
    %s173 = scalar_select %p170, %s171, %s172
    %p176 = pneg %p170
    %p177 = scmp.eq.s32.totalorder %s17, 3
    %p178 = por %p176, %p177
    %p179 = scmp.ne.s32.totalorder %s171, %s174
    %p180 = scmp.eq.s32.totalorder %s17, 0
    %p181 = por %p179, %p180
    %p182 = scmp.ne.s32.totalorder %s171, %s174
    %p183 = scmp.eq.s32.totalorder %s22, 3
    %p184 = por %p182, %p183
    %p185 = scmp.ne.s32.totalorder %s174, %s175
    %p186 = scmp.eq.s32.totalorder %s22, 0
    %p187 = por %p185, %p186
    %p188 = scmp.ne.s32.totalorder %s174, %s175
    %p189 = scmp.eq.s32.totalorder %s23, 3
    %p190 = por %p188, %p189
    %p192 = scmp.ne.s32.totalorder %s175, %s191
    %p193 = scmp.eq.s32.totalorder %s23, 0
    %p194 = por %p192, %p193
    %s195 = smul.u32 %s25, 8
    %s196 = sadd.s32 %s195, 5
    %s197 = smul.u32 %s32, 8
    %s198 = sadd.s32 %s197, 5
    %s199 = ssub.s32 %s24, %s36
    %s200 = ssub.s32 %s196, %s198
    %s201 = sor.u32 %s199, %s200
    %p202 = scmp.eq.s32.totalorder %s201, 0
    %s204 = sadd.s32 %s203, 1
    %s205 = scalar_select %p202, %s203, %s204
    %p208 = pneg %p202
    %p209 = scmp.eq.s32.totalorder %s17, 3
    %p210 = por %p208, %p209
    %p211 = scmp.ne.s32.totalorder %s203, %s206
    %p212 = scmp.eq.s32.totalorder %s17, 0
    %p213 = por %p211, %p212
    %p214 = scmp.ne.s32.totalorder %s203, %s206
    %p215 = scmp.eq.s32.totalorder %s22, 3
    %p216 = por %p214, %p215
    %p217 = scmp.ne.s32.totalorder %s206, %s207
    %p218 = scmp.eq.s32.totalorder %s22, 0
    %p219 = por %p217, %p218
    %p220 = scmp.ne.s32.totalorder %s206, %s207
    %p221 = scmp.eq.s32.totalorder %s23, 3
    %p222 = por %p220, %p221
    %p224 = scmp.ne.s32.totalorder %s207, %s223
    %p225 = scmp.eq.s32.totalorder %s23, 0
    %p226 = por %p224, %p225
    %s227 = smul.u32 %s25, 8
    %s228 = sadd.s32 %s227, 6
    %s229 = smul.u32 %s32, 8
    %s230 = sadd.s32 %s229, 6
    %s231 = ssub.s32 %s24, %s36
    %s232 = ssub.s32 %s228, %s230
    %s233 = sor.u32 %s231, %s232
    %p234 = scmp.eq.s32.totalorder %s233, 0
    %s236 = sadd.s32 %s235, 1
    %s237 = scalar_select %p234, %s235, %s236
    %p240 = pneg %p234
    %p241 = scmp.eq.s32.totalorder %s17, 3
    %p242 = por %p240, %p241
    %p243 = scmp.ne.s32.totalorder %s235, %s238
    %p244 = scmp.eq.s32.totalorder %s17, 0
    %p245 = por %p243, %p244
    %p246 = scmp.ne.s32.totalorder %s235, %s238
    %p247 = scmp.eq.s32.totalorder %s22, 3
    %p248 = por %p246, %p247
    %p249 = scmp.ne.s32.totalorder %s238, %s239
    %p250 = scmp.eq.s32.totalorder %s22, 0
    %p251 = por %p249, %p250
    %p252 = scmp.ne.s32.totalorder %s238, %s239
    %p253 = scmp.eq.s32.totalorder %s23, 3
    %p254 = por %p252, %p253
    %p256 = scmp.ne.s32.totalorder %s239, %s255
    %p257 = scmp.eq.s32.totalorder %s23, 0
    %p258 = por %p256, %p257
    %s259 = smul.u32 %s25, 8
    %s260 = sadd.s32 %s259, 7
    %s261 = smul.u32 %s32, 8
    %s262 = sadd.s32 %s261, 7
    %s263 = ssub.s32 %s24, %s36
    %s264 = ssub.s32 %s260, %s262
    %s265 = sor.u32 %s263, %s264
    %p266 = scmp.eq.s32.totalorder %s265, 0
    %s268 = sadd.s32 %s267, 1
    %s269 = scalar_select %p266, %s267, %s268
    %p272 = pneg %p266
    %p273 = scmp.eq.s32.totalorder %s17, 3
    %p274 = por %p272, %p273
    %p275 = scmp.ne.s32.totalorder %s267, %s270
    %p276 = scmp.eq.s32.totalorder %s17, 0
    %p277 = por %p275, %p276
    %p278 = scmp.ne.s32.totalorder %s267, %s270
    %p279 = scmp.eq.s32.totalorder %s22, 3
    %p280 = por %p278, %p279
    %p281 = scmp.ne.s32.totalorder %s270, %s271
    %p282 = scmp.eq.s32.totalorder %s22, 0
    %p283 = por %p281, %p282
    %p284 = scmp.ne.s32.totalorder %s270, %s271
    %p285 = scmp.eq.s32.totalorder %s23, 3
    %p286 = por %p284, %p285
    %p288 = scmp.ne.s32.totalorder %s271, %s287
    %p289 = scmp.eq.s32.totalorder %s23, 0
    %p290 = por %p288, %p289
    %s291 = smul.u32 %s25, 8
    %s292 = sadd.s32 %s291, 8
    %s293 = smul.u32 %s32, 8
    %s294 = sadd.s32 %s293, 8
    %s295 = ssub.s32 %s24, %s36
    %s296 = ssub.s32 %s292, %s294
    %s297 = sor.u32 %s295, %s296
    %p298 = scmp.eq.s32.totalorder %s297, 0
    %s300 = sadd.s32 %s299, 1
    %s301 = scalar_select %p298, %s299, %s300
    %p304 = pneg %p298
    %p305 = scmp.eq.s32.totalorder %s17, 3
    %p306 = por %p304, %p305
    %p307 = scmp.ne.s32.totalorder %s299, %s302
    %p308 = scmp.eq.s32.totalorder %s17, 0
    %p309 = por %p307, %p308
    %p310 = scmp.ne.s32.totalorder %s299, %s302
    %p311 = scmp.eq.s32.totalorder %s22, 3
    %p312 = por %p310, %p311
    %p313 = scmp.ne.s32.totalorder %s302, %s303
    %p314 = scmp.eq.s32.totalorder %s22, 0
    %p315 = por %p313, %p314
    %p316 = scmp.ne.s32.totalorder %s302, %s303
    %p317 = scmp.eq.s32.totalorder %s23, 3
    %p318 = por %p316, %p317
    %p320 = scmp.ne.s32.totalorder %s303, %s319
    %p321 = scmp.eq.s32.totalorder %s23, 0
    %p322 = por %p320, %p321
    %s324 = sadd.s32 %s323, 1
    %p327 = scmp.eq.s32.totalorder %s17, 3
    %p328 = scmp.ne.s32.totalorder %s323, %s325
    %p329 = scmp.eq.s32.totalorder %s17, 0
    %p330 = por %p328, %p329
    %p331 = scmp.ne.s32.totalorder %s323, %s325
    %p332 = scmp.eq.s32.totalorder %s22, 3
    %p333 = por %p331, %p332
    %p334 = scmp.ne.s32.totalorder %s325, %s326
    %p335 = scmp.eq.s32.totalorder %s22, 0
    %p336 = por %p334, %p335
    %p337 = scmp.ne.s32.totalorder %s325, %s326
    %p338 = scmp.eq.s32.totalorder %s23, 3
    %p339 = por %p337, %p338
    %p341 = scmp.ne.s32.totalorder %s326, %s340
    %p342 = scmp.eq.s32.totalorder %s23, 0
    %p343 = por %p341, %p342
    %s345 = sadd.s32 %s344, 1
    %p348 = scmp.eq.s32.totalorder %s17, 3
    %p349 = scmp.ne.s32.totalorder %s344, %s346
    %p350 = scmp.eq.s32.totalorder %s17, 0
    %p351 = por %p349, %p350
    %p352 = scmp.ne.s32.totalorder %s344, %s346
    %p353 = scmp.eq.s32.totalorder %s22, 3
    %p354 = por %p352, %p353
    %p355 = scmp.ne.s32.totalorder %s346, %s347
    %p356 = scmp.eq.s32.totalorder %s22, 0
    %p357 = por %p355, %p356
    %p358 = scmp.ne.s32.totalorder %s346, %s347
    %p359 = scmp.eq.s32.totalorder %s23, 3
    %p360 = por %p358, %p359
    %p362 = scmp.ne.s32.totalorder %s347, %s361
    %p363 = scmp.eq.s32.totalorder %s23, 0
    %p364 = por %p362, %p363
    %s365 = ssub.s32 %s24, %s36
    %s366 = ssub.s32 %s25, %s32
    %s367 = sor.u32 %s365, %s366
    %p368 = scmp.eq.s32.totalorder %s367, 0
    %s370 = sadd.s32 %s369, 1
    %s371 = scalar_select %p368, %s369, %s370
    %p374 = pneg %p368
    %p375 = scmp.eq.s32.totalorder %s17, 3
    %p376 = por %p374, %p375
    %p377 = scmp.ne.s32.totalorder %s369, %s372
    %p378 = scmp.eq.s32.totalorder %s17, 0
    %p379 = por %p377, %p378
    %p380 = scmp.ne.s32.totalorder %s369, %s372
    %p381 = scmp.eq.s32.totalorder %s22, 3
    %p382 = por %p380, %p381
    %p383 = scmp.ne.s32.totalorder %s372, %s373
    %p384 = scmp.eq.s32.totalorder %s22, 0
    %p385 = por %p383, %p384
    %p386 = scmp.ne.s32.totalorder %s372, %s373
    %p387 = scmp.eq.s32.totalorder %s23, 3
    %p388 = por %p386, %p387
    %p390 = scmp.ne.s32.totalorder %s373, %s389
    %p391 = scmp.eq.s32.totalorder %s23, 0
    %p392 = por %p390, %p391
    %p393 = scmp.le.s32.totalorder 1, %s17
    %p394 = scmp.lt.s32.totalorder %s17, 5
    %p395 = pnand %p393, %p394
    %p396 = pneg %p395
    // Predicated region
    $region9: #{a_call__.3} parent=5 // pred_check
      _
    $region10: #{a_call__.3} parent=5 // pred_check_branch
      %398 = sbr.rel (%p395) target = $region12
    $region11: #{a_call__.3} parent=5 // pred_region
      %s399 = ssub.s32 %s17, 1
      // Predicated region
      $region13: #{a_call__.3} parent=11 // pred_check
        %p400 = pneg %p336
      $region14: #{a_call__.3} parent=11 // pred_check_branch
        %402 = sbr.rel (%p400) target = $region16
      $region15: #{a_call__.3} parent=11 // pred_region
        _
      $region16: #{a_call__.3} parent=11 // pred_fallthru
        _
      // Predicated region
      $region17: #{a_call__.3} parent=11 // pred_check
        %p403 = pneg %p357
      $region18: #{a_call__.3} parent=11 // pred_check_branch
        %405 = sbr.rel (%p403) target = $region20
      $region19: #{a_call__.3} parent=11 // pred_region
        _
      $region20: #{a_call__.3} parent=11 // pred_fallthru
        _
    $region12: #{a_call__.3} parent=5 // pred_fallthru
      _
    %p406 = scmp.lt.s32.totalorder %s17, 4
    // Predicated region
    $region21: #{a_call__.3} parent=5 // pred_check
      %p407 = pneg %p406
    $region22: #{a_call__.3} parent=5 // pred_check_branch
      %409 = sbr.rel (%p407) target = $region24
    $region23: #{a_call__.3} parent=5 // pred_region
      // Predicated region
      $region25: #{a_call__.3} parent=23 // pred_check
        %p410 = pneg %p53
      $region26: #{a_call__.3} parent=23 // pred_check_branch
        %412 = sbr.rel (%p410) target = $region28
      $region27: #{a_call__.3} parent=23 // pred_region
        %s413 = smul.u32 %s25, 8
        %p414 = scmp.lt.s32.totalorder %s24, 1
        %s415 = scalar_select %p414, %s24, 1
        %p416 = scmp.lt.s32.totalorder %s413, 16
        %s417 = scalar_select %p416, %s413, 16
        %s418 = smul.addr %s417, 4
        %s419 = smul.addr %s415, 68
        %s420 = sadd.s32 %s418, %s419
        %s421 = smul.addr %s420, 4
        %s422 = scalar_lea.vmem %s0, %s421
        %s423 = smul.u32 %s25, 8
      $region28: #{a_call__.3} parent=23 // pred_fallthru
        _
      // Predicated region
      $region29: #{a_call__.3} parent=23 // pred_check
        %p424 = pneg %p85
      $region30: #{a_call__.3} parent=23 // pred_check_branch
        %426 = sbr.rel (%p424) target = $region32
      $region31: #{a_call__.3} parent=23 // pred_region
        %s427 = smul.u32 %s25, 8
        %s428 = sadd.s32 %s427, 1
        %p429 = scmp.lt.s32.totalorder %s24, 1
        %s430 = scalar_select %p429, %s24, 1
        %p431 = scmp.lt.s32.totalorder %s428, 16
        %s432 = scalar_select %p431, %s428, 16
        %s433 = smul.addr %s432, 4
        %s434 = smul.addr %s430, 68
        %s435 = sadd.s32 %s433, %s434
        %s436 = smul.addr %s435, 4
        %s437 = scalar_lea.vmem %s1, %s436
        %s438 = smul.u32 %s25, 8
        %s439 = sadd.s32 %s438, 1
      $region32: #{a_call__.3} parent=23 // pred_fallthru
        _
      // Predicated region
      $region33: #{a_call__.3} parent=23 // pred_check
        %p440 = pneg %p117
      $region34: #{a_call__.3} parent=23 // pred_check_branch
        %442 = sbr.rel (%p440) target = $region36
      $region35: #{a_call__.3} parent=23 // pred_region
        %s443 = smul.u32 %s25, 8
        %s444 = sadd.s32 %s443, 2
        %p445 = scmp.lt.s32.totalorder %s24, 1
        %s446 = scalar_select %p445, %s24, 1
        %p447 = scmp.lt.s32.totalorder %s444, 16
        %s448 = scalar_select %p447, %s444, 16
        %s449 = smul.addr %s448, 4
        %s450 = smul.addr %s446, 68
        %s451 = sadd.s32 %s449, %s450
        %s452 = smul.addr %s451, 4
        %s453 = scalar_lea.vmem %s2, %s452
        %s454 = smul.u32 %s25, 8
        %s455 = sadd.s32 %s454, 2
      $region36: #{a_call__.3} parent=23 // pred_fallthru
        _
      // Predicated region
      $region37: #{a_call__.3} parent=23 // pred_check
        %p456 = pneg %p149
      $region38: #{a_call__.3} parent=23 // pred_check_branch
        %458 = sbr.rel (%p456) target = $region40
      $region39: #{a_call__.3} parent=23 // pred_region
        %s459 = smul.u32 %s25, 8
        %s460 = sadd.s32 %s459, 3
        %p461 = scmp.lt.s32.totalorder %s24, 1
        %s462 = scalar_select %p461, %s24, 1
        %p463 = scmp.lt.s32.totalorder %s460, 16
        %s464 = scalar_select %p463, %s460, 16
        %s465 = smul.addr %s464, 4
        %s466 = smul.addr %s462, 68
        %s467 = sadd.s32 %s465, %s466
        %s468 = smul.addr %s467, 4
        %s469 = scalar_lea.vmem %s3, %s468
        %s470 = smul.u32 %s25, 8
        %s471 = sadd.s32 %s470, 3
      $region40: #{a_call__.3} parent=23 // pred_fallthru
        _
      // Predicated region
      $region41: #{a_call__.3} parent=23 // pred_check
        %p472 = pneg %p181
      $region42: #{a_call__.3} parent=23 // pred_check_branch
        %474 = sbr.rel (%p472) target = $region44
      $region43: #{a_call__.3} parent=23 // pred_region
        %s475 = smul.u32 %s25, 8
        %s476 = sadd.s32 %s475, 4
        %p477 = scmp.lt.s32.totalorder %s24, 1
        %s478 = scalar_select %p477, %s24, 1
        %p479 = scmp.lt.s32.totalorder %s476, 16
        %s480 = scalar_select %p479, %s476, 16
        %s481 = smul.addr %s480, 4
        %s482 = smul.addr %s478, 68
        %s483 = sadd.s32 %s481, %s482
        %s484 = smul.addr %s483, 4
        %s485 = scalar_lea.vmem %s4, %s484
        %s486 = smul.u32 %s25, 8
        %s487 = sadd.s32 %s486, 4
      $region44: #{a_call__.3} parent=23 // pred_fallthru
        _
      // Predicated region
      $region45: #{a_call__.3} parent=23 // pred_check
        %p488 = pneg %p213
      $region46: #{a_call__.3} parent=23 // pred_check_branch
        %490 = sbr.rel (%p488) target = $region48
      $region47: #{a_call__.3} parent=23 // pred_region
        %s491 = smul.u32 %s25, 8
        %s492 = sadd.s32 %s491, 5
        %p493 = scmp.lt.s32.totalorder %s24, 1
        %s494 = scalar_select %p493, %s24, 1
        %p495 = scmp.lt.s32.totalorder %s492, 16
        %s496 = scalar_select %p495, %s492, 16
        %s497 = smul.addr %s496, 4
        %s498 = smul.addr %s494, 68
        %s499 = sadd.s32 %s497, %s498
        %s500 = smul.addr %s499, 4
        %s501 = scalar_lea.vmem %s5, %s500
        %s502 = smul.u32 %s25, 8
        %s503 = sadd.s32 %s502, 5
      $region48: #{a_call__.3} parent=23 // pred_fallthru
        _
      // Predicated region
      $region49: #{a_call__.3} parent=23 // pred_check
        %p504 = pneg %p245
      $region50: #{a_call__.3} parent=23 // pred_check_branch
        %506 = sbr.rel (%p504) target = $region52
      $region51: #{a_call__.3} parent=23 // pred_region
        %s507 = smul.u32 %s25, 8
        %s508 = sadd.s32 %s507, 6
        %p509 = scmp.lt.s32.totalorder %s24, 1
        %s510 = scalar_select %p509, %s24, 1
        %p511 = scmp.lt.s32.totalorder %s508, 16
        %s512 = scalar_select %p511, %s508, 16
        %s513 = smul.addr %s512, 4
        %s514 = smul.addr %s510, 68
        %s515 = sadd.s32 %s513, %s514
        %s516 = smul.addr %s515, 4
        %s517 = scalar_lea.vmem %s6, %s516
        %s518 = smul.u32 %s25, 8
        %s519 = sadd.s32 %s518, 6
      $region52: #{a_call__.3} parent=23 // pred_fallthru
        _
      // Predicated region
      $region53: #{a_call__.3} parent=23 // pred_check
        %p520 = pneg %p277
      $region54: #{a_call__.3} parent=23 // pred_check_branch
        %522 = sbr.rel (%p520) target = $region56
      $region55: #{a_call__.3} parent=23 // pred_region
        %s523 = smul.u32 %s25, 8
        %s524 = sadd.s32 %s523, 7
        %p525 = scmp.lt.s32.totalorder %s24, 1
        %s526 = scalar_select %p525, %s24, 1
        %p527 = scmp.lt.s32.totalorder %s524, 16
        %s528 = scalar_select %p527, %s524, 16
        %s529 = smul.addr %s528, 4
        %s530 = smul.addr %s526, 68
        %s531 = sadd.s32 %s529, %s530
        %s532 = smul.addr %s531, 4
        %s533 = scalar_lea.vmem %s7, %s532
        %s534 = smul.u32 %s25, 8
        %s535 = sadd.s32 %s534, 7
      $region56: #{a_call__.3} parent=23 // pred_fallthru
        _
      // Predicated region
      $region57: #{a_call__.3} parent=23 // pred_check
        %p536 = pneg %p309
      $region58: #{a_call__.3} parent=23 // pred_check_branch
        %538 = sbr.rel (%p536) target = $region60
      $region59: #{a_call__.3} parent=23 // pred_region
        %s539 = smul.u32 %s25, 8
        %s540 = sadd.s32 %s539, 8
        %p541 = scmp.lt.s32.totalorder %s24, 1
        %s542 = scalar_select %p541, %s24, 1
        %p543 = scmp.lt.s32.totalorder %s540, 16
        %s544 = scalar_select %p543, %s540, 16
        %s545 = smul.addr %s544, 4
        %s546 = smul.addr %s542, 68
        %s547 = sadd.s32 %s545, %s546
        %s548 = smul.addr %s547, 4
        %s549 = scalar_lea.vmem %s8, %s548
        %s550 = smul.u32 %s25, 8
        %s551 = sadd.s32 %s550, 8
      $region60: #{a_call__.3} parent=23 // pred_fallthru
        _
    $region24: #{a_call__.3} parent=5 // pred_fallthru
      _
    %p552 = scmp.le.s32.totalorder 1, %s17
    %p553 = scmp.lt.s32.totalorder %s17, 5
    %p554 = pnand %p552, %p553
    %p555 = pneg %p554
    // Predicated region
    $region61: #{a_call__.3} parent=5 // pred_check
      _
    $region62: #{a_call__.3} parent=5 // pred_check_branch
      %557 = sbr.rel (%p554) target = $region64
    $region63: #{a_call__.3} parent=5 // pred_region
      %s558 = ssub.s32 %s17, 1
      %s559 = smul.u32 %s27, 8
      %p560 = scmp.lt.s32.totalorder %s26, 1
      %s561 = scalar_select %p560, %s26, 1
      %p562 = scmp.lt.s32.totalorder %s559, 16
      %s563 = scalar_select %p562, %s559, 16
      %s564 = smul.addr %s563, 4
      %s565 = smul.addr %s561, 68
      %s566 = sadd.s32 %s564, %s565
      %s567 = smul.addr %s566, 4
      %s568 = scalar_lea.vmem %s0, %s567
      %p569 = pneg %p59
      %p570 = pneg %p56
      %s571 = smul.u32 %s27, 8
      %s572 = sadd.s32 %s571, 1
      %p573 = scmp.lt.s32.totalorder %s26, 1
      %s574 = scalar_select %p573, %s26, 1
      %p575 = scmp.lt.s32.totalorder %s572, 16
      %s576 = scalar_select %p575, %s572, 16
      %s577 = smul.addr %s576, 4
      %s578 = smul.addr %s574, 68
      %s579 = sadd.s32 %s577, %s578
      %s580 = smul.addr %s579, 4
      %s581 = scalar_lea.vmem %s1, %s580
      %p582 = pneg %p91
      %p583 = pneg %p88
      %s584 = smul.u32 %s27, 8
      %s585 = sadd.s32 %s584, 2
      %p586 = scmp.lt.s32.totalorder %s26, 1
      %s587 = scalar_select %p586, %s26, 1
      %p588 = scmp.lt.s32.totalorder %s585, 16
      %s589 = scalar_select %p588, %s585, 16
      %s590 = smul.addr %s589, 4
      %s591 = smul.addr %s587, 68
      %s592 = sadd.s32 %s590, %s591
      %s593 = smul.addr %s592, 4
      %s594 = scalar_lea.vmem %s2, %s593
      %p595 = pneg %p123
      %p596 = pneg %p120
      %s597 = smul.u32 %s27, 8
      %s598 = sadd.s32 %s597, 3
      %p599 = scmp.lt.s32.totalorder %s26, 1
      %s600 = scalar_select %p599, %s26, 1
      %p601 = scmp.lt.s32.totalorder %s598, 16
      %s602 = scalar_select %p601, %s598, 16
      %s603 = smul.addr %s602, 4
      %s604 = smul.addr %s600, 68
      %s605 = sadd.s32 %s603, %s604
      %s606 = smul.addr %s605, 4
      %s607 = scalar_lea.vmem %s3, %s606
      %p608 = pneg %p155
      %p609 = pneg %p152
      %s610 = smul.u32 %s27, 8
      %s611 = sadd.s32 %s610, 4
      %p612 = scmp.lt.s32.totalorder %s26, 1
      %s613 = scalar_select %p612, %s26, 1
      %p614 = scmp.lt.s32.totalorder %s611, 16
      %s615 = scalar_select %p614, %s611, 16
      %s616 = smul.addr %s615, 4
      %s617 = smul.addr %s613, 68
      %s618 = sadd.s32 %s616, %s617
      %s619 = smul.addr %s618, 4
      %s620 = scalar_lea.vmem %s4, %s619
      %p621 = pneg %p187
      %p622 = pneg %p184
      %s623 = smul.u32 %s27, 8
      %s624 = sadd.s32 %s623, 5
      %p625 = scmp.lt.s32.totalorder %s26, 1
      %s626 = scalar_select %p625, %s26, 1
      %p627 = scmp.lt.s32.totalorder %s624, 16
      %s628 = scalar_select %p627, %s624, 16
      %s629 = smul.addr %s628, 4
      %s630 = smul.addr %s626, 68
      %s631 = sadd.s32 %s629, %s630
      %s632 = smul.addr %s631, 4
      %s633 = scalar_lea.vmem %s5, %s632
      %p634 = pneg %p219
      %p635 = pneg %p216
      %s636 = smul.u32 %s27, 8
      %s637 = sadd.s32 %s636, 6
      %p638 = scmp.lt.s32.totalorder %s26, 1
      %s639 = scalar_select %p638, %s26, 1
      %p640 = scmp.lt.s32.totalorder %s637, 16
      %s641 = scalar_select %p640, %s637, 16
      %s642 = smul.addr %s641, 4
      %s643 = smul.addr %s639, 68
      %s644 = sadd.s32 %s642, %s643
      %s645 = smul.addr %s644, 4
      %s646 = scalar_lea.vmem %s6, %s645
      %p647 = pneg %p251
      %p648 = pneg %p248
      %s649 = smul.u32 %s27, 8
      %s650 = sadd.s32 %s649, 7
      %p651 = scmp.lt.s32.totalorder %s26, 1
      %s652 = scalar_select %p651, %s26, 1
      %p653 = scmp.lt.s32.totalorder %s650, 16
      %s654 = scalar_select %p653, %s650, 16
      %s655 = smul.addr %s654, 4
      %s656 = smul.addr %s652, 68
      %s657 = sadd.s32 %s655, %s656
      %s658 = smul.addr %s657, 4
      %s659 = scalar_lea.vmem %s7, %s658
      %p660 = pneg %p283
      %p661 = pneg %p280
      %s662 = smul.u32 %s27, 8
      %s663 = sadd.s32 %s662, 8
      %p664 = scmp.lt.s32.totalorder %s26, 1
      %s665 = scalar_select %p664, %s26, 1
      %p666 = scmp.lt.s32.totalorder %s663, 16
      %s667 = scalar_select %p666, %s663, 16
      %s668 = smul.addr %s667, 4
      %s669 = smul.addr %s665, 68
      %s670 = sadd.s32 %s668, %s669
      %s671 = smul.addr %s670, 4
      %s672 = scalar_lea.vmem %s8, %s671
      %p673 = pneg %p315
      %p674 = pneg %p312
      %p675 = pneg %p336
      %p676 = pneg %p333
      %p677 = pneg %p357
      %p678 = pneg %p354
      %p679 = pneg %p385
      %p680 = pneg %p382
      %s681 = smul.u32 4, %s27
      %p682 = scmp.lt.s32.totalorder %s26, 1
      %s683 = scalar_select %p682, %s26, 1
      %p684 = scmp.lt.s32.totalorder %s681, 7
      %s685 = scalar_select %p684, %s681, 7
      %s686 = smul.addr %s683, 8
      %s687 = sadd.s32 %s685, %s686
      %s688 = smul.addr %s687, 4
      %s689 = scalar_lea.vmem %s11, %s688
      %s690 = smul.u32 %s27, 8
      %p691 = scmp.lt.s32.totalorder %s26, 1
      %s692 = scalar_select %p691, %s26, 1
      %p693 = scmp.lt.s32.totalorder %s690, 16
      %s694 = scalar_select %p693, %s690, 16
      %s695 = smul.addr %s694, 4
      %s696 = smul.addr %s692, 68
      %s697 = sadd.s32 %s695, %s696
      %s698 = smul.addr %s697, 4
      %s699 = scalar_lea.vmem %s0, %s698
      %s700 = smul.u32 %s27, 8
      %s701 = smul.u32 %s27, 8
      %s702 = sadd.s32 %s701, 1
      %p703 = scmp.lt.s32.totalorder %s26, 1
      %s704 = scalar_select %p703, %s26, 1
      %p705 = scmp.lt.s32.totalorder %s702, 16
      %s706 = scalar_select %p705, %s702, 16
      %s707 = smul.addr %s706, 4
      %s708 = smul.addr %s704, 68
      %s709 = sadd.s32 %s707, %s708
      %s710 = smul.addr %s709, 4
      %s711 = scalar_lea.vmem %s1, %s710
      %s712 = smul.u32 %s27, 8
      %s713 = sadd.s32 %s712, 1
      %s714 = smul.u32 %s27, 8
      %s715 = sadd.s32 %s714, 2
      %p716 = scmp.lt.s32.totalorder %s26, 1
      %s717 = scalar_select %p716, %s26, 1
      %p718 = scmp.lt.s32.totalorder %s715, 16
      %s719 = scalar_select %p718, %s715, 16
      %s720 = smul.addr %s719, 4
      %s721 = smul.addr %s717, 68
      %s722 = sadd.s32 %s720, %s721
      %s723 = smul.addr %s722, 4
      %s724 = scalar_lea.vmem %s2, %s723
      %s725 = smul.u32 %s27, 8
      %s726 = sadd.s32 %s725, 2
      %s727 = smul.u32 %s27, 8
      %s728 = sadd.s32 %s727, 3
      %p729 = scmp.lt.s32.totalorder %s26, 1
      %s730 = scalar_select %p729, %s26, 1
      %p731 = scmp.lt.s32.totalorder %s728, 16
      %s732 = scalar_select %p731, %s728, 16
      %s733 = smul.addr %s732, 4
      %s734 = smul.addr %s730, 68
      %s735 = sadd.s32 %s733, %s734
      %s736 = smul.addr %s735, 4
      %s737 = scalar_lea.vmem %s3, %s736
      %s738 = smul.u32 %s27, 8
      %s739 = sadd.s32 %s738, 3
      %s740 = smul.u32 %s27, 8
      %s741 = sadd.s32 %s740, 4
      %p742 = scmp.lt.s32.totalorder %s26, 1
      %s743 = scalar_select %p742, %s26, 1
      %p744 = scmp.lt.s32.totalorder %s741, 16
      %s745 = scalar_select %p744, %s741, 16
      %s746 = smul.addr %s745, 4
      %s747 = smul.addr %s743, 68
      %s748 = sadd.s32 %s746, %s747
      %s749 = smul.addr %s748, 4
      %s750 = scalar_lea.vmem %s4, %s749
      %s751 = smul.u32 %s27, 8
      %s752 = sadd.s32 %s751, 4
      %s753 = smul.u32 %s27, 8
      %s754 = sadd.s32 %s753, 5
      %p755 = scmp.lt.s32.totalorder %s26, 1
      %s756 = scalar_select %p755, %s26, 1
      %p757 = scmp.lt.s32.totalorder %s754, 16
      %s758 = scalar_select %p757, %s754, 16
      %s759 = smul.addr %s758, 4
      %s760 = smul.addr %s756, 68
      %s761 = sadd.s32 %s759, %s760
      %s762 = smul.addr %s761, 4
      %s763 = scalar_lea.vmem %s5, %s762
      %s764 = smul.u32 %s27, 8
      %s765 = sadd.s32 %s764, 5
      %s766 = smul.u32 %s27, 8
      %s767 = sadd.s32 %s766, 6
      %p768 = scmp.lt.s32.totalorder %s26, 1
      %s769 = scalar_select %p768, %s26, 1
      %p770 = scmp.lt.s32.totalorder %s767, 16
      %s771 = scalar_select %p770, %s767, 16
      %s772 = smul.addr %s771, 4
      %s773 = smul.addr %s769, 68
      %s774 = sadd.s32 %s772, %s773
      %s775 = smul.addr %s774, 4
      %s776 = scalar_lea.vmem %s6, %s775
      %s777 = smul.u32 %s27, 8
      %s778 = sadd.s32 %s777, 6
      %s779 = smul.u32 %s27, 8
      %s780 = sadd.s32 %s779, 7
      %p781 = scmp.lt.s32.totalorder %s26, 1
      %s782 = scalar_select %p781, %s26, 1
      %p783 = scmp.lt.s32.totalorder %s780, 16
      %s784 = scalar_select %p783, %s780, 16
      %s785 = smul.addr %s784, 4
      %s786 = smul.addr %s782, 68
      %s787 = sadd.s32 %s785, %s786
      %s788 = smul.addr %s787, 4
      %s789 = scalar_lea.vmem %s7, %s788
      %s790 = smul.u32 %s27, 8
      %s791 = sadd.s32 %s790, 7
      %s792 = smul.u32 %s27, 8
      %s793 = sadd.s32 %s792, 8
      %p794 = scmp.lt.s32.totalorder %s26, 1
      %s795 = scalar_select %p794, %s26, 1
      %p796 = scmp.lt.s32.totalorder %s793, 16
      %s797 = scalar_select %p796, %s793, 16
      %s798 = smul.addr %s797, 4
      %s799 = smul.addr %s795, 68
      %s800 = sadd.s32 %s798, %s799
      %s801 = smul.addr %s800, 4
      %s802 = scalar_lea.vmem %s8, %s801
      %s803 = smul.u32 %s27, 8
      %s804 = sadd.s32 %s803, 8
      %s805 = smul.u32 4, %s27
      %p806 = scmp.lt.s32.totalorder %s26, 1
      %s807 = scalar_select %p806, %s26, 1
      %p808 = scmp.lt.s32.totalorder %s805, 7
      %s809 = scalar_select %p808, %s805, 7
      %s810 = smul.addr %s807, 8
      %s811 = sadd.s32 %s809, %s810
      %s812 = smul.addr %s811, 4
      %s813 = scalar_lea.vmem %s11, %s812
      %s814 = smul.u32 4, %s27
      %v816 = vld [vmem:[%s9] sm:$0x3]
      %v817 = vld [vmem:[%s9 + $0x2] sm:$0x3]
      %v818 = vld [vmem:[%s9 + $0x4] sm:$0x3]
      %v819 = vld [vmem:[%s9 + $0x6] sm:$0x3]
      %v820 = vld [vmem:[%s9 + $0x8] sm:$0x3]
      %v821 = vld [vmem:[%s9 + $0xa] sm:$0x3]
      %v822 = vld [vmem:[%s9 + $0xc] sm:$0x3]
      %v823 = vld [vmem:[%s9 + $0xe] sm:$0x3]
      %v824 = vld [vmem:[%s9 + $0x10] sm:$0x3]
      %v825 = vld [vmem:[%s10] sm:$0x1]
      %v826 = vld [vmem:[%s699] sm:$0xf]
      %v827 = vld [vmem:[%s699 + $0x4] sm:$0x1]
      %v828 = vld [vmem:[%s699 + $0x8] sm:$0xf]
      %v829 = vld [vmem:[%s711] sm:$0xf]
      %v830 = vld [vmem:[%s711 + $0x4] sm:$0x1]
      %v831 = vld [vmem:[%s711 + $0x8] sm:$0xf]
      %v832 = vld [vmem:[%s724] sm:$0xf]
      %v833 = vld [vmem:[%s724 + $0x4] sm:$0x1]
      %v834 = vld [vmem:[%s724 + $0x8] sm:$0xf]
      %v835 = vld [vmem:[%s737] sm:$0xf]
      %v836 = vld [vmem:[%s737 + $0x4] sm:$0x1]
      %v837 = vld [vmem:[%s737 + $0x8] sm:$0xf]
      %v838 = vld [vmem:[%s750] sm:$0xf]
      %v839 = vld [vmem:[%s750 + $0x4] sm:$0x1]
      %v840 = vld [vmem:[%s750 + $0x8] sm:$0xf]
      %v841 = vld [vmem:[%s763] sm:$0xf]
      %v842 = vld [vmem:[%s763 + $0x4] sm:$0x1]
      %v843 = vld [vmem:[%s763 + $0x8] sm:$0xf]
      %v844 = vld [vmem:[%s776] sm:$0xf]
      %v845 = vld [vmem:[%s776 + $0x4] sm:$0x1]
      %v846 = vld [vmem:[%s776 + $0x8] sm:$0xf]
      %v847 = vld [vmem:[%s789] sm:$0xf]
      %v848 = vld [vmem:[%s789 + $0x4] sm:$0x1]
      %v849 = vld [vmem:[%s789 + $0x8] sm:$0xf]
      %v850 = vld [vmem:[%s802] sm:$0xf]
      %v851 = vld [vmem:[%s802 + $0x4] sm:$0x1]
      %v852 = vld [vmem:[%s802 + $0x8] sm:$0xf]
      %vm853 = vcmask 23552
      %v855 = vsel %vm853, %v828, 0
      %vm857 = vcmask 1040384
      %vm858 = vcmask 1041408
      %v859 = vsel %vm857, 4294967295, 65535
      %v860 = vsel %vm858, %v859, 0
      %v862 = vand.u32 %v817, %v860
      %864 = vmatprep.subr.bf16.mxu0 0
      %865 = vmatpush1.bf16.msra.mxu0 %v862
      %866 = vmatprep.subr.bf16.mxu0 0
      %867 = vmatpush1.bf16.msra.mxu0 0
      %868 = vmatprep.subr.bf16.mxu0 0
      %869 = vmatpush1.bf16.msra.mxu0 0
      %870 = vmatprep.subr.bf16.mxu0 0
      %871 = vmatpush1.bf16.msra.mxu0 0
      %872 = vmatprep.subr.bf16.mxu0 0
      %873 = vmatpush1.bf16.msra.mxu0 0
      %874 = vmatprep.subr.bf16.mxu0 0
      %875 = vmatpush1.bf16.msra.mxu0 0
      %876 = vmatprep.subr.bf16.mxu0 0
      %877 = vmatpush1.bf16.msra.mxu0 0
      %878 = vmatprep.subr.bf16.mxu0 0
      %879 = vmatpush1.bf16.msra.mxu0 0
      %880 = vmatprep.subr.bf16.mxu0 0
      %881 = vmatpush1.bf16.msra.mxu0 0
      %882 = vmatprep.subr.bf16.mxu0 0
      %883 = vmatpush1.bf16.msra.mxu0 0
      %884 = vmatprep.subr.bf16.mxu0 0
      %885 = vmatpush1.bf16.msra.mxu0 0
      %886 = vmatprep.subr.bf16.mxu0 0
      %887 = vmatpush1.bf16.msra.mxu0 0
      %888 = vmatprep.subr.bf16.mxu0 0
      %889 = vmatpush1.bf16.msra.mxu0 0
      %890 = vmatprep.subr.bf16.mxu0 0
      %891 = vmatpush1.bf16.msra.mxu0 0
      %892 = vmatprep.subr.bf16.mxu0 0
      %893 = vmatpush1.bf16.msra.mxu0 0
      %894 = vmatprep.subr.bf16.mxu0 0
      %895 = vmatpush1.bf16.msra.mxu0 0
      %896 = vmatprep.mubr.bf16.mxu0 0
      %897 = vmatmul.mubr.bf16.gmra.mrb[0].mxu0 %v855
      %v898 = vpop.f32.mrb[0].mxu0
      %v899 = vadd.f32 0.0, %v898
      %v900 = vpop.f32.mrb[0].mxu0
      %v901 = vpop.f32.mrb[0].mxu0
      %v902 = vpop.f32.mrb[0].mxu0
      %903 = vdwg.mxu0
      %v905 = vsel %vm853, %v826, 0
      %v908 = vand.u32 %v816, %v860
      %910 = vmatprep.subr.bf16.mxu0 0
      %911 = vmatpush1.bf16.msra.mxu0 %v908
      %912 = vmatprep.subr.bf16.mxu0 0
      %913 = vmatpush1.bf16.msra.mxu0 0
      %914 = vmatprep.subr.bf16.mxu0 0
      %915 = vmatpush1.bf16.msra.mxu0 0
      %916 = vmatprep.subr.bf16.mxu0 0
      %917 = vmatpush1.bf16.msra.mxu0 0
      %918 = vmatprep.subr.bf16.mxu0 0
      %919 = vmatpush1.bf16.msra.mxu0 0
      %920 = vmatprep.subr.bf16.mxu0 0
      %921 = vmatpush1.bf16.msra.mxu0 0
      %922 = vmatprep.subr.bf16.mxu0 0
      %923 = vmatpush1.bf16.msra.mxu0 0
      %924 = vmatprep.subr.bf16.mxu0 0
      %925 = vmatpush1.bf16.msra.mxu0 0
      %926 = vmatprep.subr.bf16.mxu0 0
      %927 = vmatpush1.bf16.msra.mxu0 0
      %928 = vmatprep.subr.bf16.mxu0 0
      %929 = vmatpush1.bf16.msra.mxu0 0
      %930 = vmatprep.subr.bf16.mxu0 0
      %931 = vmatpush1.bf16.msra.mxu0 0
      %932 = vmatprep.subr.bf16.mxu0 0
      %933 = vmatpush1.bf16.msra.mxu0 0
      %934 = vmatprep.subr.bf16.mxu0 0
      %935 = vmatpush1.bf16.msra.mxu0 0
      %936 = vmatprep.subr.bf16.mxu0 0
      %937 = vmatpush1.bf16.msra.mxu0 0
      %938 = vmatprep.subr.bf16.mxu0 0
      %939 = vmatpush1.bf16.msra.mxu0 0
      %940 = vmatprep.subr.bf16.mxu0 0
      %941 = vmatpush1.bf16.msra.mxu0 0
      %942 = vmatprep.mubr.bf16.mxu0 0
      %943 = vmatmul.mubr.bf16.gmra.mrb[0].mxu0 %v905
      %v944 = vpop.f32.mrb[0].mxu0
      %v945 = vadd.f32 %v899, %v944
      %v946 = vpop.f32.mrb[0].mxu0
      %v947 = vpop.f32.mrb[0].mxu0
      %v948 = vpop.f32.mrb[0].mxu0
      %949 = vdwg.mxu0
      %v952 = vunpack.c.l.b16 %v826
      %v953 = vunpack.c.l.b16 %v827
      %v954 = vpack.c.b16 %v953, %v952
      %v956 = vshrl.u32 %v954, 16
      %v958 = vshll.u32 %v954, 16
      %v960 = vrot.slane %v958, 1
      %v961 = vor.u32 %v956, %v960
      %v963 = vsel %vm853, %v961, 0
      %v966 = vand.u32 %v818, %v860
      %968 = vmatprep.subr.bf16.mxu0 0
      %969 = vmatpush1.bf16.msra.mxu0 %v966
      %970 = vmatprep.subr.bf16.mxu0 0
      %971 = vmatpush1.bf16.msra.mxu0 0
      %972 = vmatprep.subr.bf16.mxu0 0
      %973 = vmatpush1.bf16.msra.mxu0 0
      %974 = vmatprep.subr.bf16.mxu0 0
      %975 = vmatpush1.bf16.msra.mxu0 0
      %976 = vmatprep.subr.bf16.mxu0 0
      %977 = vmatpush1.bf16.msra.mxu0 0
      %978 = vmatprep.subr.bf16.mxu0 0
      %979 = vmatpush1.bf16.msra.mxu0 0
      %980 = vmatprep.subr.bf16.mxu0 0
      %981 = vmatpush1.bf16.msra.mxu0 0
      %982 = vmatprep.subr.bf16.mxu0 0
      %983 = vmatpush1.bf16.msra.mxu0 0
      %984 = vmatprep.subr.bf16.mxu0 0
      %985 = vmatpush1.bf16.msra.mxu0 0
      %986 = vmatprep.subr.bf16.mxu0 0
      %987 = vmatpush1.bf16.msra.mxu0 0
      %988 = vmatprep.subr.bf16.mxu0 0
      %989 = vmatpush1.bf16.msra.mxu0 0
      %990 = vmatprep.subr.bf16.mxu0 0
      %991 = vmatpush1.bf16.msra.mxu0 0
      %992 = vmatprep.subr.bf16.mxu0 0
      %993 = vmatpush1.bf16.msra.mxu0 0
      %994 = vmatprep.subr.bf16.mxu0 0
      %995 = vmatpush1.bf16.msra.mxu0 0
      %996 = vmatprep.subr.bf16.mxu0 0
      %997 = vmatpush1.bf16.msra.mxu0 0
      %998 = vmatprep.subr.bf16.mxu0 0
      %999 = vmatpush1.bf16.msra.mxu0 0
      %1000 = vmatprep.mubr.bf16.mxu0 0
      %1001 = vmatmul.mubr.bf16.gmra.mrb[0].mxu0 %v963
      %v1002 = vpop.f32.mrb[0].mxu0
      %v1003 = vadd.f32 0.0, %v1002
      %v1004 = vpop.f32.mrb[0].mxu0
      %v1005 = vpop.f32.mrb[0].mxu0
      %v1006 = vpop.f32.mrb[0].mxu0
      %1007 = vdwg.mxu0
      %v1008 = vadd.f32 %v945, %v1003
      %v1010 = vsel %vm853, %v829, 0
      %v1013 = vand.u32 %v819, %v860
      %1015 = vmatprep.subr.bf16.mxu0 0
      %1016 = vmatpush1.bf16.msra.mxu0 %v1013
      %1017 = vmatprep.subr.bf16.mxu0 0
      %1018 = vmatpush1.bf16.msra.mxu0 0
      %1019 = vmatprep.subr.bf16.mxu0 0
      %1020 = vmatpush1.bf16.msra.mxu0 0
      %1021 = vmatprep.subr.bf16.mxu0 0
      %1022 = vmatpush1.bf16.msra.mxu0 0
      %1023 = vmatprep.subr.bf16.mxu0 0
      %1024 = vmatpush1.bf16.msra.mxu0 0
      %1025 = vmatprep.subr.bf16.mxu0 0
      %1026 = vmatpush1.bf16.msra.mxu0 0
      %1027 = vmatprep.subr.bf16.mxu0 0
      %1028 = vmatpush1.bf16.msra.mxu0 0
      %1029 = vmatprep.subr.bf16.mxu0 0
      %1030 = vmatpush1.bf16.msra.mxu0 0
      %1031 = vmatprep.subr.bf16.mxu0 0
      %1032 = vmatpush1.bf16.msra.mxu0 0
      %1033 = vmatprep.subr.bf16.mxu0 0
      %1034 = vmatpush1.bf16.msra.mxu0 0
      %1035 = vmatprep.subr.bf16.mxu0 0
      %1036 = vmatpush1.bf16.msra.mxu0 0
      %1037 = vmatprep.subr.bf16.mxu0 0
      %1038 = vmatpush1.bf16.msra.mxu0 0
      %1039 = vmatprep.subr.bf16.mxu0 0
      %1040 = vmatpush1.bf16.msra.mxu0 0
      %1041 = vmatprep.subr.bf16.mxu0 0
      %1042 = vmatpush1.bf16.msra.mxu0 0
      %1043 = vmatprep.subr.bf16.mxu0 0
      %1044 = vmatpush1.bf16.msra.mxu0 0
      %1045 = vmatprep.subr.bf16.mxu0 0
      %1046 = vmatpush1.bf16.msra.mxu0 0
      %1047 = vmatprep.mubr.bf16.mxu0 0
      %1048 = vmatmul.mubr.bf16.gmra.mrb[0].mxu0 %v1010
      %v1049 = vpop.f32.mrb[0].mxu0
      %v1050 = vadd.f32 0.0, %v1049
      %v1051 = vpop.f32.mrb[0].mxu0
      %v1052 = vpop.f32.mrb[0].mxu0
      %v1053 = vpop.f32.mrb[0].mxu0
      %1054 = vdwg.mxu0
      %v1055 = vadd.f32 %v1008, %v1050
      %v1057 = vsel %vm853, %v831, 0
      %v1060 = vand.u32 %v820, %v860
      %1062 = vmatprep.subr.bf16.mxu0 0
      %1063 = vmatpush1.bf16.msra.mxu0 %v1060
      %1064 = vmatprep.subr.bf16.mxu0 0
      %1065 = vmatpush1.bf16.msra.mxu0 0
      %1066 = vmatprep.subr.bf16.mxu0 0
      %1067 = vmatpush1.bf16.msra.mxu0 0
      %1068 = vmatprep.subr.bf16.mxu0 0
      %1069 = vmatpush1.bf16.msra.mxu0 0
      %1070 = vmatprep.subr.bf16.mxu0 0
      %1071 = vmatpush1.bf16.msra.mxu0 0
      %1072 = vmatprep.subr.bf16.mxu0 0
      %1073 = vmatpush1.bf16.msra.mxu0 0
      %1074 = vmatprep.subr.bf16.mxu0 0
      %1075 = vmatpush1.bf16.msra.mxu0 0
      %1076 = vmatprep.subr.bf16.mxu0 0
      %1077 = vmatpush1.bf16.msra.mxu0 0
      %1078 = vmatprep.subr.bf16.mxu0 0
      %1079 = vmatpush1.bf16.msra.mxu0 0
      %1080 = vmatprep.subr.bf16.mxu0 0
      %1081 = vmatpush1.bf16.msra.mxu0 0
      %1082 = vmatprep.subr.bf16.mxu0 0
      %1083 = vmatpush1.bf16.msra.mxu0 0
      %1084 = vmatprep.subr.bf16.mxu0 0
      %1085 = vmatpush1.bf16.msra.mxu0 0
      %1086 = vmatprep.subr.bf16.mxu0 0
      %1087 = vmatpush1.bf16.msra.mxu0 0
      %1088 = vmatprep.subr.bf16.mxu0 0
      %1089 = vmatpush1.bf16.msra.mxu0 0
      %1090 = vmatprep.subr.bf16.mxu0 0
      %1091 = vmatpush1.bf16.msra.mxu0 0
      %1092 = vmatprep.subr.bf16.mxu0 0
      %1093 = vmatpush1.bf16.msra.mxu0 0
      %1094 = vmatprep.mubr.bf16.mxu0 0
      %1095 = vmatmul.mubr.bf16.gmra.mrb[0].mxu0 %v1057
      %v1096 = vpop.f32.mrb[0].mxu0
      %v1097 = vadd.f32 0.0, %v1096
      %v1098 = vpop.f32.mrb[0].mxu0
      %v1099 = vpop.f32.mrb[0].mxu0
      %v1100 = vpop.f32.mrb[0].mxu0
      %1101 = vdwg.mxu0
      %v1102 = vadd.f32 %v1055, %v1097
      %v1105 = vunpack.c.l.b16 %v829
      %v1106 = vunpack.c.l.b16 %v830
      %v1107 = vpack.c.b16 %v1106, %v1105
      %v1109 = vshrl.u32 %v1107, 16
      %v1111 = vshll.u32 %v1107, 16
      %v1113 = vrot.slane %v1111, 1
      %v1114 = vor.u32 %v1109, %v1113
      %v1116 = vsel %vm853, %v1114, 0
      %v1119 = vand.u32 %v821, %v860
      %1121 = vmatprep.subr.bf16.mxu0 0
      %1122 = vmatpush1.bf16.msra.mxu0 %v1119
      %1123 = vmatprep.subr.bf16.mxu0 0
      %1124 = vmatpush1.bf16.msra.mxu0 0
      %1125 = vmatprep.subr.bf16.mxu0 0
      %1126 = vmatpush1.bf16.msra.mxu0 0
      %1127 = vmatprep.subr.bf16.mxu0 0
      %1128 = vmatpush1.bf16.msra.mxu0 0
      %1129 = vmatprep.subr.bf16.mxu0 0
      %1130 = vmatpush1.bf16.msra.mxu0 0
      %1131 = vmatprep.subr.bf16.mxu0 0
      %1132 = vmatpush1.bf16.msra.mxu0 0
      %1133 = vmatprep.subr.bf16.mxu0 0
      %1134 = vmatpush1.bf16.msra.mxu0 0
      %1135 = vmatprep.subr.bf16.mxu0 0
      %1136 = vmatpush1.bf16.msra.mxu0 0
      %1137 = vmatprep.subr.bf16.mxu0 0
      %1138 = vmatpush1.bf16.msra.mxu0 0
      %1139 = vmatprep.subr.bf16.mxu0 0
      %1140 = vmatpush1.bf16.msra.mxu0 0
      %1141 = vmatprep.subr.bf16.mxu0 0
      %1142 = vmatpush1.bf16.msra.mxu0 0
      %1143 = vmatprep.subr.bf16.mxu0 0
      %1144 = vmatpush1.bf16.msra.mxu0 0
      %1145 = vmatprep.subr.bf16.mxu0 0
      %1146 = vmatpush1.bf16.msra.mxu0 0
      %1147 = vmatprep.subr.bf16.mxu0 0
      %1148 = vmatpush1.bf16.msra.mxu0 0
      %1149 = vmatprep.subr.bf16.mxu0 0
      %1150 = vmatpush1.bf16.msra.mxu0 0
      %1151 = vmatprep.subr.bf16.mxu0 0
      %1152 = vmatpush1.bf16.msra.mxu0 0
      %1153 = vmatprep.mubr.bf16.mxu0 0
      %1154 = vmatmul.mubr.bf16.gmra.mrb[0].mxu0 %v1116
      %v1155 = vpop.f32.mrb[0].mxu0
      %v1156 = vadd.f32 0.0, %v1155
      %v1157 = vpop.f32.mrb[0].mxu0
      %v1158 = vpop.f32.mrb[0].mxu0
      %v1159 = vpop.f32.mrb[0].mxu0
      %1160 = vdwg.mxu0
      %v1161 = vadd.f32 %v1102, %v1156
      %v1163 = vsel %vm853, %v832, 0
      %v1166 = vand.u32 %v822, %v860
      %1168 = vmatprep.subr.bf16.mxu0 0
      %1169 = vmatpush1.bf16.msra.mxu0 %v1166
      %1170 = vmatprep.subr.bf16.mxu0 0
      %1171 = vmatpush1.bf16.msra.mxu0 0
      %1172 = vmatprep.subr.bf16.mxu0 0
      %1173 = vmatpush1.bf16.msra.mxu0 0
      %1174 = vmatprep.subr.bf16.mxu0 0
      %1175 = vmatpush1.bf16.msra.mxu0 0
      %1176 = vmatprep.subr.bf16.mxu0 0
      %1177 = vmatpush1.bf16.msra.mxu0 0
      %1178 = vmatprep.subr.bf16.mxu0 0
      %1179 = vmatpush1.bf16.msra.mxu0 0
      %1180 = vmatprep.subr.bf16.mxu0 0
      %1181 = vmatpush1.bf16.msra.mxu0 0
      %1182 = vmatprep.subr.bf16.mxu0 0
      %1183 = vmatpush1.bf16.msra.mxu0 0
      %1184 = vmatprep.subr.bf16.mxu0 0
      %1185 = vmatpush1.bf16.msra.mxu0 0
      %1186 = vmatprep.subr.bf16.mxu0 0
      %1187 = vmatpush1.bf16.msra.mxu0 0
      %1188 = vmatprep.subr.bf16.mxu0 0
      %1189 = vmatpush1.bf16.msra.mxu0 0
      %1190 = vmatprep.subr.bf16.mxu0 0
      %1191 = vmatpush1.bf16.msra.mxu0 0
      %1192 = vmatprep.subr.bf16.mxu0 0
      %1193 = vmatpush1.bf16.msra.mxu0 0
      %1194 = vmatprep.subr.bf16.mxu0 0
      %1195 = vmatpush1.bf16.msra.mxu0 0
      %1196 = vmatprep.subr.bf16.mxu0 0
      %1197 = vmatpush1.bf16.msra.mxu0 0
      %1198 = vmatprep.subr.bf16.mxu0 0
      %1199 = vmatpush1.bf16.msra.mxu0 0
      %1200 = vmatprep.mubr.bf16.mxu0 0
      %1201 = vmatmul.mubr.bf16.gmra.mrb[0].mxu0 %v1163
      %v1202 = vpop.f32.mrb[0].mxu0
      %v1203 = vadd.f32 0.0, %v1202
      %v1204 = vpop.f32.mrb[0].mxu0
      %v1205 = vpop.f32.mrb[0].mxu0
      %v1206 = vpop.f32.mrb[0].mxu0
      %1207 = vdwg.mxu0
      %v1208 = vadd.f32 %v1161, %v1203
      %v1210 = vsel %vm853, %v834, 0
      %v1213 = vand.u32 %v823, %v860
      %1215 = vmatprep.subr.bf16.mxu0 0
      %1216 = vmatpush1.bf16.msra.mxu0 %v1213
      %1217 = vmatprep.subr.bf16.mxu0 0
      %1218 = vmatpush1.bf16.msra.mxu0 0
      %1219 = vmatprep.subr.bf16.mxu0 0
      %1220 = vmatpush1.bf16.msra.mxu0 0
      %1221 = vmatprep.subr.bf16.mxu0 0
      %1222 = vmatpush1.bf16.msra.mxu0 0
      %1223 = vmatprep.subr.bf16.mxu0 0
      %1224 = vmatpush1.bf16.msra.mxu0 0
      %1225 = vmatprep.subr.bf16.mxu0 0
      %1226 = vmatpush1.bf16.msra.mxu0 0
      %1227 = vmatprep.subr.bf16.mxu0 0
      %1228 = vmatpush1.bf16.msra.mxu0 0
      %1229 = vmatprep.subr.bf16.mxu0 0
      %1230 = vmatpush1.bf16.msra.mxu0 0
      %1231 = vmatprep.subr.bf16.mxu0 0
      %1232 = vmatpush1.bf16.msra.mxu0 0
      %1233 = vmatprep.subr.bf16.mxu0 0
      %1234 = vmatpush1.bf16.msra.mxu0 0
      %1235 = vmatprep.subr.bf16.mxu0 0
      %1236 = vmatpush1.bf16.msra.mxu0 0
      %1237 = vmatprep.subr.bf16.mxu0 0
      %1238 = vmatpush1.bf16.msra.mxu0 0
      %1239 = vmatprep.subr.bf16.mxu0 0
      %1240 = vmatpush1.bf16.msra.mxu0 0
      %1241 = vmatprep.subr.bf16.mxu0 0
      %1242 = vmatpush1.bf16.msra.mxu0 0
      %1243 = vmatprep.subr.bf16.mxu0 0
      %1244 = vmatpush1.bf16.msra.mxu0 0
      %1245 = vmatprep.subr.bf16.mxu0 0
      %1246 = vmatpush1.bf16.msra.mxu0 0
      %1247 = vmatprep.mubr.bf16.mxu0 0
      %1248 = vmatmul.mubr.bf16.gmra.mrb[0].mxu0 %v1210
      %v1249 = vpop.f32.mrb[0].mxu0
      %v1250 = vadd.f32 0.0, %v1249
      %v1251 = vpop.f32.mrb[0].mxu0
      %v1252 = vpop.f32.mrb[0].mxu0
      %v1253 = vpop.f32.mrb[0].mxu0
      %1254 = vdwg.mxu0
      %v1255 = vadd.f32 %v1208, %v1250
      %v1258 = vunpack.c.l.b16 %v832
      %v1259 = vunpack.c.l.b16 %v833
      %v1260 = vpack.c.b16 %v1259, %v1258
      %v1262 = vshrl.u32 %v1260, 16
      %v1264 = vshll.u32 %v1260, 16
      %v1266 = vrot.slane %v1264, 1
      %v1267 = vor.u32 %v1262, %v1266
      %v1269 = vsel %vm853, %v1267, 0
      %v1272 = vand.u32 %v824, %v860
      %1274 = vmatprep.subr.bf16.mxu0 0
      %1275 = vmatpush1.bf16.msra.mxu0 %v1272
      %1276 = vmatprep.subr.bf16.mxu0 0
      %1277 = vmatpush1.bf16.msra.mxu0 0
      %1278 = vmatprep.subr.bf16.mxu0 0
      %1279 = vmatpush1.bf16.msra.mxu0 0
      %1280 = vmatprep.subr.bf16.mxu0 0
      %1281 = vmatpush1.bf16.msra.mxu0 0
      %1282 = vmatprep.subr.bf16.mxu0 0
      %1283 = vmatpush1.bf16.msra.mxu0 0
      %1284 = vmatprep.subr.bf16.mxu0 0
      %1285 = vmatpush1.bf16.msra.mxu0 0
      %1286 = vmatprep.subr.bf16.mxu0 0
      %1287 = vmatpush1.bf16.msra.mxu0 0
      %1288 = vmatprep.subr.bf16.mxu0 0
      %1289 = vmatpush1.bf16.msra.mxu0 0
      %1290 = vmatprep.subr.bf16.mxu0 0
      %1291 = vmatpush1.bf16.msra.mxu0 0
      %1292 = vmatprep.subr.bf16.mxu0 0
      %1293 = vmatpush1.bf16.msra.mxu0 0
      %1294 = vmatprep.subr.bf16.mxu0 0
      %1295 = vmatpush1.bf16.msra.mxu0 0
      %1296 = vmatprep.subr.bf16.mxu0 0
      %1297 = vmatpush1.bf16.msra.mxu0 0
      %1298 = vmatprep.subr.bf16.mxu0 0
      %1299 = vmatpush1.bf16.msra.mxu0 0
      %1300 = vmatprep.subr.bf16.mxu0 0
      %1301 = vmatpush1.bf16.msra.mxu0 0
      %1302 = vmatprep.subr.bf16.mxu0 0
      %1303 = vmatpush1.bf16.msra.mxu0 0
      %1304 = vmatprep.subr.bf16.mxu0 0
      %1305 = vmatpush1.bf16.msra.mxu0 0
      %1306 = vmatprep.mubr.bf16.mxu0 0
      %1307 = vmatmul.mubr.bf16.gmra.mrb[0].mxu0 %v1269
      %v1308 = vpop.f32.mrb[0].mxu0
      %v1309 = vadd.f32 0.0, %v1308
      %v1310 = vpop.f32.mrb[0].mxu0
      %v1311 = vpop.f32.mrb[0].mxu0
      %v1312 = vpop.f32.mrb[0].mxu0
      %1313 = vdwg.mxu0
      %v1314 = vadd.f32 %v1255, %v1309
      %v1316 = vlaneseq
      %v1317 = vshrl.u32 %v1316, 7
      %v1318 = vsub.s32 0, %v1317
      %v1319 = vrot.slane %v825, %v1318
      %v1321 = vadd.f32 %v1314, %v1319
      %v1322 = vmax.f32 %v1321, 0.0
      %v1323 = vpack.c.bf16 %v1322, %v1322
      %vm1324 = vcmask 125952
      %1325 = vst.msk [vmem:[%s813] sm:$0xf] %vm1324, %v1323
      %1326 = vmatprep.subr.bf16.mxu0 0
      %1327 = vmatpush1.bf16.msra.mxu0 %v862
      %1328 = vmatprep.subr.bf16.mxu0 0
      %1329 = vmatpush1.bf16.msra.mxu0 0
      %1330 = vmatprep.subr.bf16.mxu0 0
      %1331 = vmatpush1.bf16.msra.mxu0 0
      %1332 = vmatprep.subr.bf16.mxu0 0
      %1333 = vmatpush1.bf16.msra.mxu0 0
      %1334 = vmatprep.subr.bf16.mxu0 0
      %1335 = vmatpush1.bf16.msra.mxu0 0
      %1336 = vmatprep.subr.bf16.mxu0 0
      %1337 = vmatpush1.bf16.msra.mxu0 0
      %1338 = vmatprep.subr.bf16.mxu0 0
      %1339 = vmatpush1.bf16.msra.mxu0 0
      %1340 = vmatprep.subr.bf16.mxu0 0
      %1341 = vmatpush1.bf16.msra.mxu0 0
      %1342 = vmatprep.subr.bf16.mxu0 0
      %1343 = vmatpush1.bf16.msra.mxu0 0
      %1344 = vmatprep.subr.bf16.mxu0 0
      %1345 = vmatpush1.bf16.msra.mxu0 0
      %1346 = vmatprep.subr.bf16.mxu0 0
      %1347 = vmatpush1.bf16.msra.mxu0 0
      %1348 = vmatprep.subr.bf16.mxu0 0
      %1349 = vmatpush1.bf16.msra.mxu0 0
      %1350 = vmatprep.subr.bf16.mxu0 0
      %1351 = vmatpush1.bf16.msra.mxu0 0
      %1352 = vmatprep.subr.bf16.mxu0 0
      %1353 = vmatpush1.bf16.msra.mxu0 0
      %1354 = vmatprep.subr.bf16.mxu0 0
      %1355 = vmatpush1.bf16.msra.mxu0 0
      %1356 = vmatprep.subr.bf16.mxu0 0
      %1357 = vmatpush1.bf16.msra.mxu0 0
      %1358 = vmatprep.mubr.bf16.mxu0 0
      %1359 = vmatmul.mubr.bf16.gmra.mrb[0].mxu0 %v1210
      %v1360 = vpop.f32.mrb[0].mxu0
      %v1361 = vadd.f32 0.0, %v1360
      %v1362 = vpop.f32.mrb[0].mxu0
      %v1363 = vpop.f32.mrb[0].mxu0
      %v1364 = vpop.f32.mrb[0].mxu0
      %1365 = vdwg.mxu0
      %1366 = vmatprep.subr.bf16.mxu0 0
      %1367 = vmatpush1.bf16.msra.mxu0 %v908
      %1368 = vmatprep.subr.bf16.mxu0 0
      %1369 = vmatpush1.bf16.msra.mxu0 0
      %1370 = vmatprep.subr.bf16.mxu0 0
      %1371 = vmatpush1.bf16.msra.mxu0 0
      %1372 = vmatprep.subr.bf16.mxu0 0
      %1373 = vmatpush1.bf16.msra.mxu0 0
      %1374 = vmatprep.subr.bf16.mxu0 0
      %1375 = vmatpush1.bf16.msra.mxu0 0
      %1376 = vmatprep.subr.bf16.mxu0 0
      %1377 = vmatpush1.bf16.msra.mxu0 0
      %1378 = vmatprep.subr.bf16.mxu0 0
      %1379 = vmatpush1.bf16.msra.mxu0 0
      %1380 = vmatprep.subr.bf16.mxu0 0
      %1381 = vmatpush1.bf16.msra.mxu0 0
      %1382 = vmatprep.subr.bf16.mxu0 0
      %1383 = vmatpush1.bf16.msra.mxu0 0
      %1384 = vmatprep.subr.bf16.mxu0 0
      %1385 = vmatpush1.bf16.msra.mxu0 0
      %1386 = vmatprep.subr.bf16.mxu0 0
      %1387 = vmatpush1.bf16.msra.mxu0 0
      %1388 = vmatprep.subr.bf16.mxu0 0
      %1389 = vmatpush1.bf16.msra.mxu0 0
      %1390 = vmatprep.subr.bf16.mxu0 0
      %1391 = vmatpush1.bf16.msra.mxu0 0
      %1392 = vmatprep.subr.bf16.mxu0 0
      %1393 = vmatpush1.bf16.msra.mxu0 0
      %1394 = vmatprep.subr.bf16.mxu0 0
      %1395 = vmatpush1.bf16.msra.mxu0 0
      %1396 = vmatprep.subr.bf16.mxu0 0
      %1397 = vmatpush1.bf16.msra.mxu0 0
      %1398 = vmatprep.mubr.bf16.mxu0 0
      %1399 = vmatmul.mubr.bf16.gmra.mrb[0].mxu0 %v1163
      %v1400 = vpop.f32.mrb[0].mxu0
      %v1401 = vadd.f32 %v1361, %v1400
      %v1402 = vpop.f32.mrb[0].mxu0
      %v1403 = vpop.f32.mrb[0].mxu0
      %v1404 = vpop.f32.mrb[0].mxu0
      %1405 = vdwg.mxu0
      %1406 = vmatprep.subr.bf16.mxu0 0
      %1407 = vmatpush1.bf16.msra.mxu0 %v966
      %1408 = vmatprep.subr.bf16.mxu0 0
      %1409 = vmatpush1.bf16.msra.mxu0 0
      %1410 = vmatprep.subr.bf16.mxu0 0
      %1411 = vmatpush1.bf16.msra.mxu0 0
      %1412 = vmatprep.subr.bf16.mxu0 0
      %1413 = vmatpush1.bf16.msra.mxu0 0
      %1414 = vmatprep.subr.bf16.mxu0 0
      %1415 = vmatpush1.bf16.msra.mxu0 0
      %1416 = vmatprep.subr.bf16.mxu0 0
      %1417 = vmatpush1.bf16.msra.mxu0 0
      %1418 = vmatprep.subr.bf16.mxu0 0
      %1419 = vmatpush1.bf16.msra.mxu0 0
      %1420 = vmatprep.subr.bf16.mxu0 0
      %1421 = vmatpush1.bf16.msra.mxu0 0
      %1422 = vmatprep.subr.bf16.mxu0 0
      %1423 = vmatpush1.bf16.msra.mxu0 0
      %1424 = vmatprep.subr.bf16.mxu0 0
      %1425 = vmatpush1.bf16.msra.mxu0 0
      %1426 = vmatprep.subr.bf16.mxu0 0
      %1427 = vmatpush1.bf16.msra.mxu0 0
      %1428 = vmatprep.subr.bf16.mxu0 0
      %1429 = vmatpush1.bf16.msra.mxu0 0
      %1430 = vmatprep.subr.bf16.mxu0 0
      %1431 = vmatpush1.bf16.msra.mxu0 0
      %1432 = vmatprep.subr.bf16.mxu0 0
      %1433 = vmatpush1.bf16.msra.mxu0 0
      %1434 = vmatprep.subr.bf16.mxu0 0
      %1435 = vmatpush1.bf16.msra.mxu0 0
      %1436 = vmatprep.subr.bf16.mxu0 0
      %1437 = vmatpush1.bf16.msra.mxu0 0
      %1438 = vmatprep.mubr.bf16.mxu0 0
      %1439 = vmatmul.mubr.bf16.gmra.mrb[0].mxu0 %v1269
      %v1440 = vpop.f32.mrb[0].mxu0
      %v1441 = vadd.f32 0.0, %v1440
      %v1442 = vpop.f32.mrb[0].mxu0
      %v1443 = vpop.f32.mrb[0].mxu0
      %v1444 = vpop.f32.mrb[0].mxu0
      %1445 = vdwg.mxu0
      %v1446 = vadd.f32 %v1401, %v1441
      %v1448 = vsel %vm853, %v835, 0
      %1450 = vmatprep.subr.bf16.mxu0 0
      %1451 = vmatpush1.bf16.msra.mxu0 %v1013
      %1452 = vmatprep.subr.bf16.mxu0 0
      %1453 = vmatpush1.bf16.msra.mxu0 0
      %1454 = vmatprep.subr.bf16.mxu0 0
      %1455 = vmatpush1.bf16.msra.mxu0 0
      %1456 = vmatprep.subr.bf16.mxu0 0
      %1457 = vmatpush1.bf16.msra.mxu0 0
      %1458 = vmatprep.subr.bf16.mxu0 0
      %1459 = vmatpush1.bf16.msra.mxu0 0
      %1460 = vmatprep.subr.bf16.mxu0 0
      %1461 = vmatpush1.bf16.msra.mxu0 0
      %1462 = vmatprep.subr.bf16.mxu0 0
      %1463 = vmatpush1.bf16.msra.mxu0 0
      %1464 = vmatprep.subr.bf16.mxu0 0
      %1465 = vmatpush1.bf16.msra.mxu0 0
      %1466 = vmatprep.subr.bf16.mxu0 0
      %1467 = vmatpush1.bf16.msra.mxu0 0
      %1468 = vmatprep.subr.bf16.mxu0 0
      %1469 = vmatpush1.bf16.msra.mxu0 0
      %1470 = vmatprep.subr.bf16.mxu0 0
      %1471 = vmatpush1.bf16.msra.mxu0 0
      %1472 = vmatprep.subr.bf16.mxu0 0
      %1473 = vmatpush1.bf16.msra.mxu0 0
      %1474 = vmatprep.subr.bf16.mxu0 0
      %1475 = vmatpush1.bf16.msra.mxu0 0
      %1476 = vmatprep.subr.bf16.mxu0 0
      %1477 = vmatpush1.bf16.msra.mxu0 0
      %1478 = vmatprep.subr.bf16.mxu0 0
      %1479 = vmatpush1.bf16.msra.mxu0 0
      %1480 = vmatprep.subr.bf16.mxu0 0
      %1481 = vmatpush1.bf16.msra.mxu0 0
      %1482 = vmatprep.mubr.bf16.mxu0 0
      %1483 = vmatmul.mubr.bf16.gmra.mrb[0].mxu0 %v1448
      %v1484 = vpop.f32.mrb[0].mxu0
      %v1485 = vadd.f32 0.0, %v1484
      %v1486 = vpop.f32.mrb[0].mxu0
      %v1487 = vpop.f32.mrb[0].mxu0
      %v1488 = vpop.f32.mrb[0].mxu0
      %1489 = vdwg.mxu0
      %v1490 = vadd.f32 %v1446, %v1485
      %v1492 = vsel %vm853, %v837, 0
      %1494 = vmatprep.subr.bf16.mxu0 0
      %1495 = vmatpush1.bf16.msra.mxu0 %v1060
      %1496 = vmatprep.subr.bf16.mxu0 0
      %1497 = vmatpush1.bf16.msra.mxu0 0
      %1498 = vmatprep.subr.bf16.mxu0 0
      %1499 = vmatpush1.bf16.msra.mxu0 0
      %1500 = vmatprep.subr.bf16.mxu0 0
      %1501 = vmatpush1.bf16.msra.mxu0 0
      %1502 = vmatprep.subr.bf16.mxu0 0
      %1503 = vmatpush1.bf16.msra.mxu0 0
      %1504 = vmatprep.subr.bf16.mxu0 0
      %1505 = vmatpush1.bf16.msra.mxu0 0
      %1506 = vmatprep.subr.bf16.mxu0 0
      %1507 = vmatpush1.bf16.msra.mxu0 0
      %1508 = vmatprep.subr.bf16.mxu0 0
      %1509 = vmatpush1.bf16.msra.mxu0 0
      %1510 = vmatprep.subr.bf16.mxu0 0
      %1511 = vmatpush1.bf16.msra.mxu0 0
      %1512 = vmatprep.subr.bf16.mxu0 0
      %1513 = vmatpush1.bf16.msra.mxu0 0
      %1514 = vmatprep.subr.bf16.mxu0 0
      %1515 = vmatpush1.bf16.msra.mxu0 0
      %1516 = vmatprep.subr.bf16.mxu0 0
      %1517 = vmatpush1.bf16.msra.mxu0 0
      %1518 = vmatprep.subr.bf16.mxu0 0
      %1519 = vmatpush1.bf16.msra.mxu0 0
      %1520 = vmatprep.subr.bf16.mxu0 0
      %1521 = vmatpush1.bf16.msra.mxu0 0
      %1522 = vmatprep.subr.bf16.mxu0 0
      %1523 = vmatpush1.bf16.msra.mxu0 0
      %1524 = vmatprep.subr.bf16.mxu0 0
      %1525 = vmatpush1.bf16.msra.mxu0 0
      %1526 = vmatprep.mubr.bf16.mxu0 0
      %1527 = vmatmul.mubr.bf16.gmra.mrb[0].mxu0 %v1492
      %v1528 = vpop.f32.mrb[0].mxu0
      %v1529 = vadd.f32 0.0, %v1528
      %v1530 = vpop.f32.mrb[0].mxu0
      %v1531 = vpop.f32.mrb[0].mxu0
      %v1532 = vpop.f32.mrb[0].mxu0
      %1533 = vdwg.mxu0
      %v1534 = vadd.f32 %v1490, %v1529
      %v1537 = vunpack.c.l.b16 %v835
      %v1538 = vunpack.c.l.b16 %v836
      %v1539 = vpack.c.b16 %v1538, %v1537
      %v1541 = vshrl.u32 %v1539, 16
      %v1543 = vshll.u32 %v1539, 16
      %v1545 = vrot.slane %v1543, 1
      %v1546 = vor.u32 %v1541, %v1545
      %v1548 = vsel %vm853, %v1546, 0
      %1550 = vmatprep.subr.bf16.mxu0 0
      %1551 = vmatpush1.bf16.msra.mxu0 %v1119
      %1552 = vmatprep.subr.bf16.mxu0 0
      %1553 = vmatpush1.bf16.msra.mxu0 0
      %1554 = vmatprep.subr.bf16.mxu0 0
      %1555 = vmatpush1.bf16.msra.mxu0 0
      %1556 = vmatprep.subr.bf16.mxu0 0
      %1557 = vmatpush1.bf16.msra.mxu0 0
      %1558 = vmatprep.subr.bf16.mxu0 0
      %1559 = vmatpush1.bf16.msra.mxu0 0
      %1560 = vmatprep.subr.bf16.mxu0 0
      %1561 = vmatpush1.bf16.msra.mxu0 0
      %1562 = vmatprep.subr.bf16.mxu0 0
      %1563 = vmatpush1.bf16.msra.mxu0 0
      %1564 = vmatprep.subr.bf16.mxu0 0
      %1565 = vmatpush1.bf16.msra.mxu0 0
      %1566 = vmatprep.subr.bf16.mxu0 0
      %1567 = vmatpush1.bf16.msra.mxu0 0
      %1568 = vmatprep.subr.bf16.mxu0 0
      %1569 = vmatpush1.bf16.msra.mxu0 0
      %1570 = vmatprep.subr.bf16.mxu0 0
      %1571 = vmatpush1.bf16.msra.mxu0 0
      %1572 = vmatprep.subr.bf16.mxu0 0
      %1573 = vmatpush1.bf16.msra.mxu0 0
      %1574 = vmatprep.subr.bf16.mxu0 0
      %1575 = vmatpush1.bf16.msra.mxu0 0
      %1576 = vmatprep.subr.bf16.mxu0 0
      %1577 = vmatpush1.bf16.msra.mxu0 0
      %1578 = vmatprep.subr.bf16.mxu0 0
      %1579 = vmatpush1.bf16.msra.mxu0 0
      %1580 = vmatprep.subr.bf16.mxu0 0
      %1581 = vmatpush1.bf16.msra.mxu0 0
      %1582 = vmatprep.mubr.bf16.mxu0 0
      %1583 = vmatmul.mubr.bf16.gmra.mrb[0].mxu0 %v1548
      %v1584 = vpop.f32.mrb[0].mxu0
      %v1585 = vadd.f32 0.0, %v1584
      %v1586 = vpop.f32.mrb[0].mxu0
      %v1587 = vpop.f32.mrb[0].mxu0
      %v1588 = vpop.f32.mrb[0].mxu0
      %1589 = vdwg.mxu0
      %v1590 = vadd.f32 %v1534, %v1585
      %v1592 = vsel %vm853, %v838, 0
      %1594 = vmatprep.subr.bf16.mxu0 0
      %1595 = vmatpush1.bf16.msra.mxu0 %v1166
      %1596 = vmatprep.subr.bf16.mxu0 0
      %1597 = vmatpush1.bf16.msra.mxu0 0
      %1598 = vmatprep.subr.bf16.mxu0 0
      %1599 = vmatpush1.bf16.msra.mxu0 0
      %1600 = vmatprep.subr.bf16.mxu0 0
      %1601 = vmatpush1.bf16.msra.mxu0 0
      %1602 = vmatprep.subr.bf16.mxu0 0
      %1603 = vmatpush1.bf16.msra.mxu0 0
      %1604 = vmatprep.subr.bf16.mxu0 0
      %1605 = vmatpush1.bf16.msra.mxu0 0
      %1606 = vmatprep.subr.bf16.mxu0 0
      %1607 = vmatpush1.bf16.msra.mxu0 0
      %1608 = vmatprep.subr.bf16.mxu0 0
      %1609 = vmatpush1.bf16.msra.mxu0 0
      %1610 = vmatprep.subr.bf16.mxu0 0
      %1611 = vmatpush1.bf16.msra.mxu0 0
      %1612 = vmatprep.subr.bf16.mxu0 0
      %1613 = vmatpush1.bf16.msra.mxu0 0
      %1614 = vmatprep.subr.bf16.mxu0 0
      %1615 = vmatpush1.bf16.msra.mxu0 0
      %1616 = vmatprep.subr.bf16.mxu0 0
      %1617 = vmatpush1.bf16.msra.mxu0 0
      %1618 = vmatprep.subr.bf16.mxu0 0
      %1619 = vmatpush1.bf16.msra.mxu0 0
      %1620 = vmatprep.subr.bf16.mxu0 0
      %1621 = vmatpush1.bf16.msra.mxu0 0
      %1622 = vmatprep.subr.bf16.mxu0 0
      %1623 = vmatpush1.bf16.msra.mxu0 0
      %1624 = vmatprep.subr.bf16.mxu0 0
      %1625 = vmatpush1.bf16.msra.mxu0 0
      %1626 = vmatprep.mubr.bf16.mxu0 0
      %1627 = vmatmul.mubr.bf16.gmra.mrb[0].mxu0 %v1592
      %v1628 = vpop.f32.mrb[0].mxu0
      %v1629 = vadd.f32 0.0, %v1628
      %v1630 = vpop.f32.mrb[0].mxu0
      %v1631 = vpop.f32.mrb[0].mxu0
      %v1632 = vpop.f32.mrb[0].mxu0
      %1633 = vdwg.mxu0
      %v1634 = vadd.f32 %v1590, %v1629
      %v1636 = vsel %vm853, %v840, 0
      %1638 = vmatprep.subr.bf16.mxu0 0
      %1639 = vmatpush1.bf16.msra.mxu0 %v1213
      %1640 = vmatprep.subr.bf16.mxu0 0
      %1641 = vmatpush1.bf16.msra.mxu0 0
      %1642 = vmatprep.subr.bf16.mxu0 0
      %1643 = vmatpush1.bf16.msra.mxu0 0
      %1644 = vmatprep.subr.bf16.mxu0 0
      %1645 = vmatpush1.bf16.msra.mxu0 0
      %1646 = vmatprep.subr.bf16.mxu0 0
      %1647 = vmatpush1.bf16.msra.mxu0 0
      %1648 = vmatprep.subr.bf16.mxu0 0
      %1649 = vmatpush1.bf16.msra.mxu0 0
      %1650 = vmatprep.subr.bf16.mxu0 0
      %1651 = vmatpush1.bf16.msra.mxu0 0
      %1652 = vmatprep.subr.bf16.mxu0 0
      %1653 = vmatpush1.bf16.msra.mxu0 0
      %1654 = vmatprep.subr.bf16.mxu0 0
      %1655 = vmatpush1.bf16.msra.mxu0 0
      %1656 = vmatprep.subr.bf16.mxu0 0
      %1657 = vmatpush1.bf16.msra.mxu0 0
      %1658 = vmatprep.subr.bf16.mxu0 0
      %1659 = vmatpush1.bf16.msra.mxu0 0
      %1660 = vmatprep.subr.bf16.mxu0 0
      %1661 = vmatpush1.bf16.msra.mxu0 0
      %1662 = vmatprep.subr.bf16.mxu0 0
      %1663 = vmatpush1.bf16.msra.mxu0 0
      %1664 = vmatprep.subr.bf16.mxu0 0
      %1665 = vmatpush1.bf16.msra.mxu0 0
      %1666 = vmatprep.subr.bf16.mxu0 0
      %1667 = vmatpush1.bf16.msra.mxu0 0
      %1668 = vmatprep.subr.bf16.mxu0 0
      %1669 = vmatpush1.bf16.msra.mxu0 0
      %1670 = vmatprep.mubr.bf16.mxu0 0
      %1671 = vmatmul.mubr.bf16.gmra.mrb[0].mxu0 %v1636
      %v1672 = vpop.f32.mrb[0].mxu0
      %v1673 = vadd.f32 0.0, %v1672
      %v1674 = vpop.f32.mrb[0].mxu0
      %v1675 = vpop.f32.mrb[0].mxu0
      %v1676 = vpop.f32.mrb[0].mxu0
      %1677 = vdwg.mxu0
      %v1678 = vadd.f32 %v1634, %v1673
      %v1681 = vunpack.c.l.b16 %v838
      %v1682 = vunpack.c.l.b16 %v839
      %v1683 = vpack.c.b16 %v1682, %v1681
      %v1685 = vshrl.u32 %v1683, 16
      %v1687 = vshll.u32 %v1683, 16
      %v1689 = vrot.slane %v1687, 1
      %v1690 = vor.u32 %v1685, %v1689
      %v1692 = vsel %vm853, %v1690, 0
      %1694 = vmatprep.subr.bf16.mxu0 0
      %1695 = vmatpush1.bf16.msra.mxu0 %v1272
      %1696 = vmatprep.subr.bf16.mxu0 0
      %1697 = vmatpush1.bf16.msra.mxu0 0
      %1698 = vmatprep.subr.bf16.mxu0 0
      %1699 = vmatpush1.bf16.msra.mxu0 0
      %1700 = vmatprep.subr.bf16.mxu0 0
      %1701 = vmatpush1.bf16.msra.mxu0 0
      %1702 = vmatprep.subr.bf16.mxu0 0
      %1703 = vmatpush1.bf16.msra.mxu0 0
      %1704 = vmatprep.subr.bf16.mxu0 0
      %1705 = vmatpush1.bf16.msra.mxu0 0
      %1706 = vmatprep.subr.bf16.mxu0 0
      %1707 = vmatpush1.bf16.msra.mxu0 0
      %1708 = vmatprep.subr.bf16.mxu0 0
      %1709 = vmatpush1.bf16.msra.mxu0 0
      %1710 = vmatprep.subr.bf16.mxu0 0
      %1711 = vmatpush1.bf16.msra.mxu0 0
      %1712 = vmatprep.subr.bf16.mxu0 0
      %1713 = vmatpush1.bf16.msra.mxu0 0
      %1714 = vmatprep.subr.bf16.mxu0 0
      %1715 = vmatpush1.bf16.msra.mxu0 0
      %1716 = vmatprep.subr.bf16.mxu0 0
      %1717 = vmatpush1.bf16.msra.mxu0 0
      %1718 = vmatprep.subr.bf16.mxu0 0
      %1719 = vmatpush1.bf16.msra.mxu0 0
      %1720 = vmatprep.subr.bf16.mxu0 0
      %1721 = vmatpush1.bf16.msra.mxu0 0
      %1722 = vmatprep.subr.bf16.mxu0 0
      %1723 = vmatpush1.bf16.msra.mxu0 0
      %1724 = vmatprep.subr.bf16.mxu0 0
      %1725 = vmatpush1.bf16.msra.mxu0 0
      %1726 = vmatprep.mubr.bf16.mxu0 0
      %1727 = vmatmul.mubr.bf16.gmra.mrb[0].mxu0 %v1692
      %v1728 = vpop.f32.mrb[0].mxu0
      %v1729 = vadd.f32 0.0, %v1728
      %v1730 = vpop.f32.mrb[0].mxu0
      %v1731 = vpop.f32.mrb[0].mxu0
      %v1732 = vpop.f32.mrb[0].mxu0
      %1733 = vdwg.mxu0
      %v1734 = vadd.f32 %v1678, %v1729
      %v1735 = vadd.f32 %v1734, %v1319
      %v1736 = vmax.f32 %v1735, 0.0
      %v1737 = vpack.c.bf16 %v1736, %v1736
      %s1738 = scalar_lea.vmem %s813, 4
      %1739 = vst.msk [vmem:[%s1738] sm:$0xf] %vm1324, %v1737
      %1740 = vmatprep.subr.bf16.mxu0 0
      %1741 = vmatpush1.bf16.msra.mxu0 %v862
      %1742 = vmatprep.subr.bf16.mxu0 0
      %1743 = vmatpush1.bf16.msra.mxu0 0
      %1744 = vmatprep.subr.bf16.mxu0 0
      %1745 = vmatpush1.bf16.msra.mxu0 0
      %1746 = vmatprep.subr.bf16.mxu0 0
      %1747 = vmatpush1.bf16.msra.mxu0 0
      %1748 = vmatprep.subr.bf16.mxu0 0
      %1749 = vmatpush1.bf16.msra.mxu0 0
      %1750 = vmatprep.subr.bf16.mxu0 0
      %1751 = vmatpush1.bf16.msra.mxu0 0
      %1752 = vmatprep.subr.bf16.mxu0 0
      %1753 = vmatpush1.bf16.msra.mxu0 0
      %1754 = vmatprep.subr.bf16.mxu0 0
      %1755 = vmatpush1.bf16.msra.mxu0 0
      %1756 = vmatprep.subr.bf16.mxu0 0
      %1757 = vmatpush1.bf16.msra.mxu0 0
      %1758 = vmatprep.subr.bf16.mxu0 0
      %1759 = vmatpush1.bf16.msra.mxu0 0
      %1760 = vmatprep.subr.bf16.mxu0 0
      %1761 = vmatpush1.bf16.msra.mxu0 0
      %1762 = vmatprep.subr.bf16.mxu0 0
      %1763 = vmatpush1.bf16.msra.mxu0 0
      %1764 = vmatprep.subr.bf16.mxu0 0
      %1765 = vmatpush1.bf16.msra.mxu0 0
      %1766 = vmatprep.subr.bf16.mxu0 0
      %1767 = vmatpush1.bf16.msra.mxu0 0
      %1768 = vmatprep.subr.bf16.mxu0 0
      %1769 = vmatpush1.bf16.msra.mxu0 0
      %1770 = vmatprep.subr.bf16.mxu0 0
      %1771 = vmatpush1.bf16.msra.mxu0 0
      %1772 = vmatprep.mubr.bf16.mxu0 0
      %1773 = vmatmul.mubr.bf16.gmra.mrb[0].mxu0 %v1636
      %v1774 = vpop.f32.mrb[0].mxu0
      %v1775 = vadd.f32 0.0, %v1774
      %v1776 = vpop.f32.mrb[0].mxu0
      %v1777 = vpop.f32.mrb[0].mxu0
      %v1778 = vpop.f32.mrb[0].mxu0
      %1779 = vdwg.mxu0
      %1780 = vmatprep.subr.bf16.mxu0 0
      %1781 = vmatpush1.bf16.msra.mxu0 %v908
      %1782 = vmatprep.subr.bf16.mxu0 0
      %1783 = vmatpush1.bf16.msra.mxu0 0
      %1784 = vmatprep.subr.bf16.mxu0 0
      %1785 = vmatpush1.bf16.msra.mxu0 0
      %1786 = vmatprep.subr.bf16.mxu0 0
      %1787 = vmatpush1.bf16.msra.mxu0 0
      %1788 = vmatprep.subr.bf16.mxu0 0
      %1789 = vmatpush1.bf16.msra.mxu0 0
      %1790 = vmatprep.subr.bf16.mxu0 0
      %1791 = vmatpush1.bf16.msra.mxu0 0
      %1792 = vmatprep.subr.bf16.mxu0 0
      %1793 = vmatpush1.bf16.msra.mxu0 0
      %1794 = vmatprep.subr.bf16.mxu0 0
      %1795 = vmatpush1.bf16.msra.mxu0 0
      %1796 = vmatprep.subr.bf16.mxu0 0
      %1797 = vmatpush1.bf16.msra.mxu0 0
      %1798 = vmatprep.subr.bf16.mxu0 0
      %1799 = vmatpush1.bf16.msra.mxu0 0
      %1800 = vmatprep.subr.bf16.mxu0 0
      %1801 = vmatpush1.bf16.msra.mxu0 0
      %1802 = vmatprep.subr.bf16.mxu0 0
      %1803 = vmatpush1.bf16.msra.mxu0 0
      %1804 = vmatprep.subr.bf16.mxu0 0
      %1805 = vmatpush1.bf16.msra.mxu0 0
      %1806 = vmatprep.subr.bf16.mxu0 0
      %1807 = vmatpush1.bf16.msra.mxu0 0
      %1808 = vmatprep.subr.bf16.mxu0 0
      %1809 = vmatpush1.bf16.msra.mxu0 0
      %1810 = vmatprep.subr.bf16.mxu0 0
      %1811 = vmatpush1.bf16.msra.mxu0 0
      %1812 = vmatprep.mubr.bf16.mxu0 0
      %1813 = vmatmul.mubr.bf16.gmra.mrb[0].mxu0 %v1592
      %v1814 = vpop.f32.mrb[0].mxu0
      %v1815 = vadd.f32 %v1775, %v1814
      %v1816 = vpop.f32.mrb[0].mxu0
      %v1817 = vpop.f32.mrb[0].mxu0
      %v1818 = vpop.f32.mrb[0].mxu0
      %1819 = vdwg.mxu0
      %1820 = vmatprep.subr.bf16.mxu0 0
      %1821 = vmatpush1.bf16.msra.mxu0 %v966
      %1822 = vmatprep.subr.bf16.mxu0 0
      %1823 = vmatpush1.bf16.msra.mxu0 0
      %1824 = vmatprep.subr.bf16.mxu0 0
      %1825 = vmatpush1.bf16.msra.mxu0 0
      %1826 = vmatprep.subr.bf16.mxu0 0
      %1827 = vmatpush1.bf16.msra.mxu0 0
      %1828 = vmatprep.subr.bf16.mxu0 0
      %1829 = vmatpush1.bf16.msra.mxu0 0
      %1830 = vmatprep.subr.bf16.mxu0 0
      %1831 = vmatpush1.bf16.msra.mxu0 0
      %1832 = vmatprep.subr.bf16.mxu0 0
      %1833 = vmatpush1.bf16.msra.mxu0 0
      %1834 = vmatprep.subr.bf16.mxu0 0
      %1835 = vmatpush1.bf16.msra.mxu0 0
      %1836 = vmatprep.subr.bf16.mxu0 0
      %1837 = vmatpush1.bf16.msra.mxu0 0
      %1838 = vmatprep.subr.bf16.mxu0 0
      %1839 = vmatpush1.bf16.msra.mxu0 0
      %1840 = vmatprep.subr.bf16.mxu0 0
      %1841 = vmatpush1.bf16.msra.mxu0 0
      %1842 = vmatprep.subr.bf16.mxu0 0
      %1843 = vmatpush1.bf16.msra.mxu0 0
      %1844 = vmatprep.subr.bf16.mxu0 0
      %1845 = vmatpush1.bf16.msra.mxu0 0
      %1846 = vmatprep.subr.bf16.mxu0 0
      %1847 = vmatpush1.bf16.msra.mxu0 0
      %1848 = vmatprep.subr.bf16.mxu0 0
      %1849 = vmatpush1.bf16.msra.mxu0 0
      %1850 = vmatprep.subr.bf16.mxu0 0
      %1851 = vmatpush1.bf16.msra.mxu0 0
      %1852 = vmatprep.mubr.bf16.mxu0 0
      %1853 = vmatmul.mubr.bf16.gmra.mrb[0].mxu0 %v1692
      %v1854 = vpop.f32.mrb[0].mxu0
      %v1855 = vadd.f32 0.0, %v1854
      %v1856 = vpop.f32.mrb[0].mxu0
      %v1857 = vpop.f32.mrb[0].mxu0
      %v1858 = vpop.f32.mrb[0].mxu0
      %1859 = vdwg.mxu0
      %v1860 = vadd.f32 %v1815, %v1855
      %v1862 = vsel %vm853, %v841, 0
      %1864 = vmatprep.subr.bf16.mxu0 0
      %1865 = vmatpush1.bf16.msra.mxu0 %v1013
      %1866 = vmatprep.subr.bf16.mxu0 0
      %1867 = vmatpush1.bf16.msra.mxu0 0
      %1868 = vmatprep.subr.bf16.mxu0 0
      %1869 = vmatpush1.bf16.msra.mxu0 0
      %1870 = vmatprep.subr.bf16.mxu0 0
      %1871 = vmatpush1.bf16.msra.mxu0 0
      %1872 = vmatprep.subr.bf16.mxu0 0
      %1873 = vmatpush1.bf16.msra.mxu0 0
      %1874 = vmatprep.subr.bf16.mxu0 0
      %1875 = vmatpush1.bf16.msra.mxu0 0
      %1876 = vmatprep.subr.bf16.mxu0 0
      %1877 = vmatpush1.bf16.msra.mxu0 0
      %1878 = vmatprep.subr.bf16.mxu0 0
      %1879 = vmatpush1.bf16.msra.mxu0 0
      %1880 = vmatprep.subr.bf16.mxu0 0
      %1881 = vmatpush1.bf16.msra.mxu0 0
      %1882 = vmatprep.subr.bf16.mxu0 0
      %1883 = vmatpush1.bf16.msra.mxu0 0
      %1884 = vmatprep.subr.bf16.mxu0 0
      %1885 = vmatpush1.bf16.msra.mxu0 0
      %1886 = vmatprep.subr.bf16.mxu0 0
      %1887 = vmatpush1.bf16.msra.mxu0 0
      %1888 = vmatprep.subr.bf16.mxu0 0
      %1889 = vmatpush1.bf16.msra.mxu0 0
      %1890 = vmatprep.subr.bf16.mxu0 0
      %1891 = vmatpush1.bf16.msra.mxu0 0
      %1892 = vmatprep.subr.bf16.mxu0 0
      %1893 = vmatpush1.bf16.msra.mxu0 0
      %1894 = vmatprep.subr.bf16.mxu0 0
      %1895 = vmatpush1.bf16.msra.mxu0 0
      %1896 = vmatprep.mubr.bf16.mxu0 0
      %1897 = vmatmul.mubr.bf16.gmra.mrb[0].mxu0 %v1862
      %v1898 = vpop.f32.mrb[0].mxu0
      %v1899 = vadd.f32 0.0, %v1898
      %v1900 = vpop.f32.mrb[0].mxu0
      %v1901 = vpop.f32.mrb[0].mxu0
      %v1902 = vpop.f32.mrb[0].mxu0
      %1903 = vdwg.mxu0
      %v1904 = vadd.f32 %v1860, %v1899
      %v1906 = vsel %vm853, %v843, 0
      %1908 = vmatprep.subr.bf16.mxu0 0
      %1909 = vmatpush1.bf16.msra.mxu0 %v1060
      %1910 = vmatprep.subr.bf16.mxu0 0
      %1911 = vmatpush1.bf16.msra.mxu0 0
      %1912 = vmatprep.subr.bf16.mxu0 0
      %1913 = vmatpush1.bf16.msra.mxu0 0
      %1914 = vmatprep.subr.bf16.mxu0 0
      %1915 = vmatpush1.bf16.msra.mxu0 0
      %1916 = vmatprep.subr.bf16.mxu0 0
      %1917 = vmatpush1.bf16.msra.mxu0 0
      %1918 = vmatprep.subr.bf16.mxu0 0
      %1919 = vmatpush1.bf16.msra.mxu0 0
      %1920 = vmatprep.subr.bf16.mxu0 0
      %1921 = vmatpush1.bf16.msra.mxu0 0
      %1922 = vmatprep.subr.bf16.mxu0 0
      %1923 = vmatpush1.bf16.msra.mxu0 0
      %1924 = vmatprep.subr.bf16.mxu0 0
      %1925 = vmatpush1.bf16.msra.mxu0 0
      %1926 = vmatprep.subr.bf16.mxu0 0
      %1927 = vmatpush1.bf16.msra.mxu0 0
      %1928 = vmatprep.subr.bf16.mxu0 0
      %1929 = vmatpush1.bf16.msra.mxu0 0
      %1930 = vmatprep.subr.bf16.mxu0 0
      %1931 = vmatpush1.bf16.msra.mxu0 0
      %1932 = vmatprep.subr.bf16.mxu0 0
      %1933 = vmatpush1.bf16.msra.mxu0 0
      %1934 = vmatprep.subr.bf16.mxu0 0
      %1935 = vmatpush1.bf16.msra.mxu0 0
      %1936 = vmatprep.subr.bf16.mxu0 0
      %1937 = vmatpush1.bf16.msra.mxu0 0
      %1938 = vmatprep.subr.bf16.mxu0 0
      %1939 = vmatpush1.bf16.msra.mxu0 0
      %1940 = vmatprep.mubr.bf16.mxu0 0
      %1941 = vmatmul.mubr.bf16.gmra.mrb[0].mxu0 %v1906
      %v1942 = vpop.f32.mrb[0].mxu0
      %v1943 = vadd.f32 0.0, %v1942
      %v1944 = vpop.f32.mrb[0].mxu0
      %v1945 = vpop.f32.mrb[0].mxu0
      %v1946 = vpop.f32.mrb[0].mxu0
      %1947 = vdwg.mxu0
      %v1948 = vadd.f32 %v1904, %v1943
      %v1951 = vunpack.c.l.b16 %v841
      %v1952 = vunpack.c.l.b16 %v842
      %v1953 = vpack.c.b16 %v1952, %v1951
      %v1955 = vshrl.u32 %v1953, 16
      %v1957 = vshll.u32 %v1953, 16
      %v1959 = vrot.slane %v1957, 1
      %v1960 = vor.u32 %v1955, %v1959
      %v1962 = vsel %vm853, %v1960, 0
      %1964 = vmatprep.subr.bf16.mxu0 0
      %1965 = vmatpush1.bf16.msra.mxu0 %v1119
      %1966 = vmatprep.subr.bf16.mxu0 0
      %1967 = vmatpush1.bf16.msra.mxu0 0
      %1968 = vmatprep.subr.bf16.mxu0 0
      %1969 = vmatpush1.bf16.msra.mxu0 0
      %1970 = vmatprep.subr.bf16.mxu0 0
      %1971 = vmatpush1.bf16.msra.mxu0 0
      %1972 = vmatprep.subr.bf16.mxu0 0
      %1973 = vmatpush1.bf16.msra.mxu0 0
      %1974 = vmatprep.subr.bf16.mxu0 0
      %1975 = vmatpush1.bf16.msra.mxu0 0
      %1976 = vmatprep.subr.bf16.mxu0 0
      %1977 = vmatpush1.bf16.msra.mxu0 0
      %1978 = vmatprep.subr.bf16.mxu0 0
      %1979 = vmatpush1.bf16.msra.mxu0 0
      %1980 = vmatprep.subr.bf16.mxu0 0
      %1981 = vmatpush1.bf16.msra.mxu0 0
      %1982 = vmatprep.subr.bf16.mxu0 0
      %1983 = vmatpush1.bf16.msra.mxu0 0
      %1984 = vmatprep.subr.bf16.mxu0 0
      %1985 = vmatpush1.bf16.msra.mxu0 0
      %1986 = vmatprep.subr.bf16.mxu0 0
      %1987 = vmatpush1.bf16.msra.mxu0 0
      %1988 = vmatprep.subr.bf16.mxu0 0
      %1989 = vmatpush1.bf16.msra.mxu0 0
      %1990 = vmatprep.subr.bf16.mxu0 0
      %1991 = vmatpush1.bf16.msra.mxu0 0
      %1992 = vmatprep.subr.bf16.mxu0 0
      %1993 = vmatpush1.bf16.msra.mxu0 0
      %1994 = vmatprep.subr.bf16.mxu0 0
      %1995 = vmatpush1.bf16.msra.mxu0 0
      %1996 = vmatprep.mubr.bf16.mxu0 0
      %1997 = vmatmul.mubr.bf16.gmra.mrb[0].mxu0 %v1962
      %v1998 = vpop.f32.mrb[0].mxu0
      %v1999 = vadd.f32 0.0, %v1998
      %v2000 = vpop.f32.mrb[0].mxu0
      %v2001 = vpop.f32.mrb[0].mxu0
      %v2002 = vpop.f32.mrb[0].mxu0
      %2003 = vdwg.mxu0
      %v2004 = vadd.f32 %v1948, %v1999
      %v2006 = vsel %vm853, %v844, 0
      %2008 = vmatprep.subr.bf16.mxu0 0
      %2009 = vmatpush1.bf16.msra.mxu0 %v1166
      %2010 = vmatprep.subr.bf16.mxu0 0
      %2011 = vmatpush1.bf16.msra.mxu0 0
      %2012 = vmatprep.subr.bf16.mxu0 0
      %2013 = vmatpush1.bf16.msra.mxu0 0
      %2014 = vmatprep.subr.bf16.mxu0 0
      %2015 = vmatpush1.bf16.msra.mxu0 0
      %2016 = vmatprep.subr.bf16.mxu0 0
      %2017 = vmatpush1.bf16.msra.mxu0 0
      %2018 = vmatprep.subr.bf16.mxu0 0
      %2019 = vmatpush1.bf16.msra.mxu0 0
      %2020 = vmatprep.subr.bf16.mxu0 0
      %2021 = vmatpush1.bf16.msra.mxu0 0
      %2022 = vmatprep.subr.bf16.mxu0 0
      %2023 = vmatpush1.bf16.msra.mxu0 0
      %2024 = vmatprep.subr.bf16.mxu0 0
      %2025 = vmatpush1.bf16.msra.mxu0 0
      %2026 = vmatprep.subr.bf16.mxu0 0
      %2027 = vmatpush1.bf16.msra.mxu0 0
      %2028 = vmatprep.subr.bf16.mxu0 0
      %2029 = vmatpush1.bf16.msra.mxu0 0
      %2030 = vmatprep.subr.bf16.mxu0 0
      %2031 = vmatpush1.bf16.msra.mxu0 0
      %2032 = vmatprep.subr.bf16.mxu0 0
      %2033 = vmatpush1.bf16.msra.mxu0 0
      %2034 = vmatprep.subr.bf16.mxu0 0
      %2035 = vmatpush1.bf16.msra.mxu0 0
      %2036 = vmatprep.subr.bf16.mxu0 0
      %2037 = vmatpush1.bf16.msra.mxu0 0
      %2038 = vmatprep.subr.bf16.mxu0 0
      %2039 = vmatpush1.bf16.msra.mxu0 0
      %2040 = vmatprep.mubr.bf16.mxu0 0
      %2041 = vmatmul.mubr.bf16.gmra.mrb[0].mxu0 %v2006
      %v2042 = vpop.f32.mrb[0].mxu0
      %v2043 = vadd.f32 0.0, %v2042
      %v2044 = vpop.f32.mrb[0].mxu0
      %v2045 = vpop.f32.mrb[0].mxu0
      %v2046 = vpop.f32.mrb[0].mxu0
      %2047 = vdwg.mxu0
      %v2048 = vadd.f32 %v2004, %v2043
      %v2050 = vsel %vm853, %v846, 0
      %2052 = vmatprep.subr.bf16.mxu0 0
      %2053 = vmatpush1.bf16.msra.mxu0 %v1213
      %2054 = vmatprep.subr.bf16.mxu0 0
      %2055 = vmatpush1.bf16.msra.mxu0 0
      %2056 = vmatprep.subr.bf16.mxu0 0
      %2057 = vmatpush1.bf16.msra.mxu0 0
      %2058 = vmatprep.subr.bf16.mxu0 0
      %2059 = vmatpush1.bf16.msra.mxu0 0
      %2060 = vmatprep.subr.bf16.mxu0 0
      %2061 = vmatpush1.bf16.msra.mxu0 0
      %2062 = vmatprep.subr.bf16.mxu0 0
      %2063 = vmatpush1.bf16.msra.mxu0 0
      %2064 = vmatprep.subr.bf16.mxu0 0
      %2065 = vmatpush1.bf16.msra.mxu0 0
      %2066 = vmatprep.subr.bf16.mxu0 0
      %2067 = vmatpush1.bf16.msra.mxu0 0
      %2068 = vmatprep.subr.bf16.mxu0 0
      %2069 = vmatpush1.bf16.msra.mxu0 0
      %2070 = vmatprep.subr.bf16.mxu0 0
      %2071 = vmatpush1.bf16.msra.mxu0 0
      %2072 = vmatprep.subr.bf16.mxu0 0
      %2073 = vmatpush1.bf16.msra.mxu0 0
      %2074 = vmatprep.subr.bf16.mxu0 0
      %2075 = vmatpush1.bf16.msra.mxu0 0
      %2076 = vmatprep.subr.bf16.mxu0 0
      %2077 = vmatpush1.bf16.msra.mxu0 0
      %2078 = vmatprep.subr.bf16.mxu0 0
      %2079 = vmatpush1.bf16.msra.mxu0 0
      %2080 = vmatprep.subr.bf16.mxu0 0
      %2081 = vmatpush1.bf16.msra.mxu0 0
      %2082 = vmatprep.subr.bf16.mxu0 0
      %2083 = vmatpush1.bf16.msra.mxu0 0
      %2084 = vmatprep.mubr.bf16.mxu0 0
      %2085 = vmatmul.mubr.bf16.gmra.mrb[0].mxu0 %v2050
      %v2086 = vpop.f32.mrb[0].mxu0
      %v2087 = vadd.f32 0.0, %v2086
      %v2088 = vpop.f32.mrb[0].mxu0
      %v2089 = vpop.f32.mrb[0].mxu0
      %v2090 = vpop.f32.mrb[0].mxu0
      %2091 = vdwg.mxu0
      %v2092 = vadd.f32 %v2048, %v2087
      %v2095 = vunpack.c.l.b16 %v844
      %v2096 = vunpack.c.l.b16 %v845
      %v2097 = vpack.c.b16 %v2096, %v2095
      %v2099 = vshrl.u32 %v2097, 16
      %v2101 = vshll.u32 %v2097, 16
      %v2103 = vrot.slane %v2101, 1
      %v2104 = vor.u32 %v2099, %v2103
      %v2106 = vsel %vm853, %v2104, 0
      %2108 = vmatprep.subr.bf16.mxu0 0
      %2109 = vmatpush1.bf16.msra.mxu0 %v1272
      %2110 = vmatprep.subr.bf16.mxu0 0
      %2111 = vmatpush1.bf16.msra.mxu0 0
      %2112 = vmatprep.subr.bf16.mxu0 0
      %2113 = vmatpush1.bf16.msra.mxu0 0
      %2114 = vmatprep.subr.bf16.mxu0 0
      %2115 = vmatpush1.bf16.msra.mxu0 0
      %2116 = vmatprep.subr.bf16.mxu0 0
      %2117 = vmatpush1.bf16.msra.mxu0 0
      %2118 = vmatprep.subr.bf16.mxu0 0
      %2119 = vmatpush1.bf16.msra.mxu0 0
      %2120 = vmatprep.subr.bf16.mxu0 0
      %2121 = vmatpush1.bf16.msra.mxu0 0
      %2122 = vmatprep.subr.bf16.mxu0 0
      %2123 = vmatpush1.bf16.msra.mxu0 0
      %2124 = vmatprep.subr.bf16.mxu0 0
      %2125 = vmatpush1.bf16.msra.mxu0 0
      %2126 = vmatprep.subr.bf16.mxu0 0
      %2127 = vmatpush1.bf16.msra.mxu0 0
      %2128 = vmatprep.subr.bf16.mxu0 0
      %2129 = vmatpush1.bf16.msra.mxu0 0
      %2130 = vmatprep.subr.bf16.mxu0 0
      %2131 = vmatpush1.bf16.msra.mxu0 0
      %2132 = vmatprep.subr.bf16.mxu0 0
      %2133 = vmatpush1.bf16.msra.mxu0 0
      %2134 = vmatprep.subr.bf16.mxu0 0
      %2135 = vmatpush1.bf16.msra.mxu0 0
      %2136 = vmatprep.subr.bf16.mxu0 0
      %2137 = vmatpush1.bf16.msra.mxu0 0
      %2138 = vmatprep.subr.bf16.mxu0 0
      %2139 = vmatpush1.bf16.msra.mxu0 0
      %2140 = vmatprep.mubr.bf16.mxu0 0
      %2141 = vmatmul.mubr.bf16.gmra.mrb[0].mxu0 %v2106
      %v2142 = vpop.f32.mrb[0].mxu0
      %v2143 = vadd.f32 0.0, %v2142
      %v2144 = vpop.f32.mrb[0].mxu0
      %v2145 = vpop.f32.mrb[0].mxu0
      %v2146 = vpop.f32.mrb[0].mxu0
      %2147 = vdwg.mxu0
      %v2148 = vadd.f32 %v2092, %v2143
      %v2149 = vadd.f32 %v2148, %v1319
      %v2150 = vmax.f32 %v2149, 0.0
      %v2151 = vpack.c.bf16 %v2150, %v2150
      %s2152 = scalar_lea.vmem %s813, 8
      %2153 = vst.msk [vmem:[%s2152] sm:$0xf] %vm1324, %v2151
      %2154 = vmatprep.subr.bf16.mxu0 0
      %2155 = vmatpush1.bf16.msra.mxu0 %v862
      %2156 = vmatprep.subr.bf16.mxu0 0
      %2157 = vmatpush1.bf16.msra.mxu0 0
      %2158 = vmatprep.subr.bf16.mxu0 0
      %2159 = vmatpush1.bf16.msra.mxu0 0
      %2160 = vmatprep.subr.bf16.mxu0 0
      %2161 = vmatpush1.bf16.msra.mxu0 0
      %2162 = vmatprep.subr.bf16.mxu0 0
      %2163 = vmatpush1.bf16.msra.mxu0 0
      %2164 = vmatprep.subr.bf16.mxu0 0
      %2165 = vmatpush1.bf16.msra.mxu0 0
      %2166 = vmatprep.subr.bf16.mxu0 0
      %2167 = vmatpush1.bf16.msra.mxu0 0
      %2168 = vmatprep.subr.bf16.mxu0 0
      %2169 = vmatpush1.bf16.msra.mxu0 0
      %2170 = vmatprep.subr.bf16.mxu0 0
      %2171 = vmatpush1.bf16.msra.mxu0 0
      %2172 = vmatprep.subr.bf16.mxu0 0
      %2173 = vmatpush1.bf16.msra.mxu0 0
      %2174 = vmatprep.subr.bf16.mxu0 0
      %2175 = vmatpush1.bf16.msra.mxu0 0
      %2176 = vmatprep.subr.bf16.mxu0 0
      %2177 = vmatpush1.bf16.msra.mxu0 0
      %2178 = vmatprep.subr.bf16.mxu0 0
      %2179 = vmatpush1.bf16.msra.mxu0 0
      %2180 = vmatprep.subr.bf16.mxu0 0
      %2181 = vmatpush1.bf16.msra.mxu0 0
      %2182 = vmatprep.subr.bf16.mxu0 0
      %2183 = vmatpush1.bf16.msra.mxu0 0
      %2184 = vmatprep.subr.bf16.mxu0 0
      %2185 = vmatpush1.bf16.msra.mxu0 0
      %2186 = vmatprep.mubr.bf16.mxu0 0
      %2187 = vmatmul.mubr.bf16.gmra.mrb[0].mxu0 %v2050
      %v2188 = vpop.f32.mrb[0].mxu0
      %v2189 = vadd.f32 0.0, %v2188
      %v2190 = vpop.f32.mrb[0].mxu0
      %v2191 = vpop.f32.mrb[0].mxu0
      %v2192 = vpop.f32.mrb[0].mxu0
      %2193 = vdwg.mxu0
      %2194 = vmatprep.subr.bf16.mxu0 0
      %2195 = vmatpush1.bf16.msra.mxu0 %v908
      %2196 = vmatprep.subr.bf16.mxu0 0
      %2197 = vmatpush1.bf16.msra.mxu0 0
      %2198 = vmatprep.subr.bf16.mxu0 0
      %2199 = vmatpush1.bf16.msra.mxu0 0
      %2200 = vmatprep.subr.bf16.mxu0 0
      %2201 = vmatpush1.bf16.msra.mxu0 0
      %2202 = vmatprep.subr.bf16.mxu0 0
      %2203 = vmatpush1.bf16.msra.mxu0 0
      %2204 = vmatprep.subr.bf16.mxu0 0
      %2205 = vmatpush1.bf16.msra.mxu0 0
      %2206 = vmatprep.subr.bf16.mxu0 0
      %2207 = vmatpush1.bf16.msra.mxu0 0
      %2208 = vmatprep.subr.bf16.mxu0 0
      %2209 = vmatpush1.bf16.msra.mxu0 0
      %2210 = vmatprep.subr.bf16.mxu0 0
      %2211 = vmatpush1.bf16.msra.mxu0 0
      %2212 = vmatprep.subr.bf16.mxu0 0
      %2213 = vmatpush1.bf16.msra.mxu0 0
      %2214 = vmatprep.subr.bf16.mxu0 0
      %2215 = vmatpush1.bf16.msra.mxu0 0
      %2216 = vmatprep.subr.bf16.mxu0 0
      %2217 = vmatpush1.bf16.msra.mxu0 0
      %2218 = vmatprep.subr.bf16.mxu0 0
      %2219 = vmatpush1.bf16.msra.mxu0 0
      %2220 = vmatprep.subr.bf16.mxu0 0
      %2221 = vmatpush1.bf16.msra.mxu0 0
      %2222 = vmatprep.subr.bf16.mxu0 0
      %2223 = vmatpush1.bf16.msra.mxu0 0
      %2224 = vmatprep.subr.bf16.mxu0 0
      %2225 = vmatpush1.bf16.msra.mxu0 0
      %2226 = vmatprep.mubr.bf16.mxu0 0
      %2227 = vmatmul.mubr.bf16.gmra.mrb[0].mxu0 %v2006
      %v2228 = vpop.f32.mrb[0].mxu0
      %v2229 = vadd.f32 %v2189, %v2228
      %v2230 = vpop.f32.mrb[0].mxu0
      %v2231 = vpop.f32.mrb[0].mxu0
      %v2232 = vpop.f32.mrb[0].mxu0
      %2233 = vdwg.mxu0
      %2234 = vmatprep.subr.bf16.mxu0 0
      %2235 = vmatpush1.bf16.msra.mxu0 %v966
      %2236 = vmatprep.subr.bf16.mxu0 0
      %2237 = vmatpush1.bf16.msra.mxu0 0
      %2238 = vmatprep.subr.bf16.mxu0 0
      %2239 = vmatpush1.bf16.msra.mxu0 0
      %2240 = vmatprep.subr.bf16.mxu0 0
      %2241 = vmatpush1.bf16.msra.mxu0 0
      %2242 = vmatprep.subr.bf16.mxu0 0
      %2243 = vmatpush1.bf16.msra.mxu0 0
      %2244 = vmatprep.subr.bf16.mxu0 0
      %2245 = vmatpush1.bf16.msra.mxu0 0
      %2246 = vmatprep.subr.bf16.mxu0 0
      %2247 = vmatpush1.bf16.msra.mxu0 0
      %2248 = vmatprep.subr.bf16.mxu0 0
      %2249 = vmatpush1.bf16.msra.mxu0 0
      %2250 = vmatprep.subr.bf16.mxu0 0
      %2251 = vmatpush1.bf16.msra.mxu0 0
      %2252 = vmatprep.subr.bf16.mxu0 0
      %2253 = vmatpush1.bf16.msra.mxu0 0
      %2254 = vmatprep.subr.bf16.mxu0 0
      %2255 = vmatpush1.bf16.msra.mxu0 0
      %2256 = vmatprep.subr.bf16.mxu0 0
      %2257 = vmatpush1.bf16.msra.mxu0 0
      %2258 = vmatprep.subr.bf16.mxu0 0
      %2259 = vmatpush1.bf16.msra.mxu0 0
      %2260 = vmatprep.subr.bf16.mxu0 0
      %2261 = vmatpush1.bf16.msra.mxu0 0
      %2262 = vmatprep.subr.bf16.mxu0 0
      %2263 = vmatpush1.bf16.msra.mxu0 0
      %2264 = vmatprep.subr.bf16.mxu0 0
      %2265 = vmatpush1.bf16.msra.mxu0 0
      %2266 = vmatprep.mubr.bf16.mxu0 0
      %2267 = vmatmul.mubr.bf16.gmra.mrb[0].mxu0 %v2106
      %v2268 = vpop.f32.mrb[0].mxu0
      %v2269 = vadd.f32 0.0, %v2268
      %v2270 = vpop.f32.mrb[0].mxu0
      %v2271 = vpop.f32.mrb[0].mxu0
      %v2272 = vpop.f32.mrb[0].mxu0
      %2273 = vdwg.mxu0
      %v2274 = vadd.f32 %v2229, %v2269
      %v2276 = vsel %vm853, %v847, 0
      %2278 = vmatprep.subr.bf16.mxu0 0
      %2279 = vmatpush1.bf16.msra.mxu0 %v1013
      %2280 = vmatprep.subr.bf16.mxu0 0
      %2281 = vmatpush1.bf16.msra.mxu0 0
      %2282 = vmatprep.subr.bf16.mxu0 0
      %2283 = vmatpush1.bf16.msra.mxu0 0
      %2284 = vmatprep.subr.bf16.mxu0 0
      %2285 = vmatpush1.bf16.msra.mxu0 0
      %2286 = vmatprep.subr.bf16.mxu0 0
      %2287 = vmatpush1.bf16.msra.mxu0 0
      %2288 = vmatprep.subr.bf16.mxu0 0
      %2289 = vmatpush1.bf16.msra.mxu0 0
      %2290 = vmatprep.subr.bf16.mxu0 0
      %2291 = vmatpush1.bf16.msra.mxu0 0
      %2292 = vmatprep.subr.bf16.mxu0 0
      %2293 = vmatpush1.bf16.msra.mxu0 0
      %2294 = vmatprep.subr.bf16.mxu0 0
      %2295 = vmatpush1.bf16.msra.mxu0 0
      %2296 = vmatprep.subr.bf16.mxu0 0
      %2297 = vmatpush1.bf16.msra.mxu0 0
      %2298 = vmatprep.subr.bf16.mxu0 0
      %2299 = vmatpush1.bf16.msra.mxu0 0
      %2300 = vmatprep.subr.bf16.mxu0 0
      %2301 = vmatpush1.bf16.msra.mxu0 0
      %2302 = vmatprep.subr.bf16.mxu0 0
      %2303 = vmatpush1.bf16.msra.mxu0 0
      %2304 = vmatprep.subr.bf16.mxu0 0
      %2305 = vmatpush1.bf16.msra.mxu0 0
      %2306 = vmatprep.subr.bf16.mxu0 0
      %2307 = vmatpush1.bf16.msra.mxu0 0
      %2308 = vmatprep.subr.bf16.mxu0 0
      %2309 = vmatpush1.bf16.msra.mxu0 0
      %2310 = vmatprep.mubr.bf16.mxu0 0
      %2311 = vmatmul.mubr.bf16.gmra.mrb[0].mxu0 %v2276
      %v2312 = vpop.f32.mrb[0].mxu0
      %v2313 = vadd.f32 0.0, %v2312
      %v2314 = vpop.f32.mrb[0].mxu0
      %v2315 = vpop.f32.mrb[0].mxu0
      %v2316 = vpop.f32.mrb[0].mxu0
      %2317 = vdwg.mxu0
      %v2318 = vadd.f32 %v2274, %v2313
      %v2320 = vsel %vm853, %v849, 0
      %2322 = vmatprep.subr.bf16.mxu0 0
      %2323 = vmatpush1.bf16.msra.mxu0 %v1060
      %2324 = vmatprep.subr.bf16.mxu0 0
      %2325 = vmatpush1.bf16.msra.mxu0 0
      %2326 = vmatprep.subr.bf16.mxu0 0
      %2327 = vmatpush1.bf16.msra.mxu0 0
      %2328 = vmatprep.subr.bf16.mxu0 0
      %2329 = vmatpush1.bf16.msra.mxu0 0
      %2330 = vmatprep.subr.bf16.mxu0 0
      %2331 = vmatpush1.bf16.msra.mxu0 0
      %2332 = vmatprep.subr.bf16.mxu0 0
      %2333 = vmatpush1.bf16.msra.mxu0 0
      %2334 = vmatprep.subr.bf16.mxu0 0
      %2335 = vmatpush1.bf16.msra.mxu0 0
      %2336 = vmatprep.subr.bf16.mxu0 0
      %2337 = vmatpush1.bf16.msra.mxu0 0
      %2338 = vmatprep.subr.bf16.mxu0 0
      %2339 = vmatpush1.bf16.msra.mxu0 0
      %2340 = vmatprep.subr.bf16.mxu0 0
      %2341 = vmatpush1.bf16.msra.mxu0 0
      %2342 = vmatprep.subr.bf16.mxu0 0
      %2343 = vmatpush1.bf16.msra.mxu0 0
      %2344 = vmatprep.subr.bf16.mxu0 0
      %2345 = vmatpush1.bf16.msra.mxu0 0
      %2346 = vmatprep.subr.bf16.mxu0 0
      %2347 = vmatpush1.bf16.msra.mxu0 0
      %2348 = vmatprep.subr.bf16.mxu0 0
      %2349 = vmatpush1.bf16.msra.mxu0 0
      %2350 = vmatprep.subr.bf16.mxu0 0
      %2351 = vmatpush1.bf16.msra.mxu0 0
      %2352 = vmatprep.subr.bf16.mxu0 0
      %2353 = vmatpush1.bf16.msra.mxu0 0
      %2354 = vmatprep.mubr.bf16.mxu0 0
      %2355 = vmatmul.mubr.bf16.gmra.mrb[0].mxu0 %v2320
      %v2356 = vpop.f32.mrb[0].mxu0
      %v2357 = vadd.f32 0.0, %v2356
      %v2358 = vpop.f32.mrb[0].mxu0
      %v2359 = vpop.f32.mrb[0].mxu0
      %v2360 = vpop.f32.mrb[0].mxu0
      %2361 = vdwg.mxu0
      %v2362 = vadd.f32 %v2318, %v2357
      %v2365 = vunpack.c.l.b16 %v847
      %v2366 = vunpack.c.l.b16 %v848
      %v2367 = vpack.c.b16 %v2366, %v2365
      %v2369 = vshrl.u32 %v2367, 16
      %v2371 = vshll.u32 %v2367, 16
      %v2373 = vrot.slane %v2371, 1
      %v2374 = vor.u32 %v2369, %v2373
      %v2376 = vsel %vm853, %v2374, 0
      %2378 = vmatprep.subr.bf16.mxu0 0
      %2379 = vmatpush1.bf16.msra.mxu0 %v1119
      %2380 = vmatprep.subr.bf16.mxu0 0
      %2381 = vmatpush1.bf16.msra.mxu0 0
      %2382 = vmatprep.subr.bf16.mxu0 0
      %2383 = vmatpush1.bf16.msra.mxu0 0
      %2384 = vmatprep.subr.bf16.mxu0 0
      %2385 = vmatpush1.bf16.msra.mxu0 0
      %2386 = vmatprep.subr.bf16.mxu0 0
      %2387 = vmatpush1.bf16.msra.mxu0 0
      %2388 = vmatprep.subr.bf16.mxu0 0
      %2389 = vmatpush1.bf16.msra.mxu0 0
      %2390 = vmatprep.subr.bf16.mxu0 0
      %2391 = vmatpush1.bf16.msra.mxu0 0
      %2392 = vmatprep.subr.bf16.mxu0 0
      %2393 = vmatpush1.bf16.msra.mxu0 0
      %2394 = vmatprep.subr.bf16.mxu0 0
      %2395 = vmatpush1.bf16.msra.mxu0 0
      %2396 = vmatprep.subr.bf16.mxu0 0
      %2397 = vmatpush1.bf16.msra.mxu0 0
      %2398 = vmatprep.subr.bf16.mxu0 0
      %2399 = vmatpush1.bf16.msra.mxu0 0
      %2400 = vmatprep.subr.bf16.mxu0 0
      %2401 = vmatpush1.bf16.msra.mxu0 0
      %2402 = vmatprep.subr.bf16.mxu0 0
      %2403 = vmatpush1.bf16.msra.mxu0 0
      %2404 = vmatprep.subr.bf16.mxu0 0
      %2405 = vmatpush1.bf16.msra.mxu0 0
      %2406 = vmatprep.subr.bf16.mxu0 0
      %2407 = vmatpush1.bf16.msra.mxu0 0
      %2408 = vmatprep.subr.bf16.mxu0 0
      %2409 = vmatpush1.bf16.msra.mxu0 0
      %2410 = vmatprep.mubr.bf16.mxu0 0
      %2411 = vmatmul.mubr.bf16.gmra.mrb[0].mxu0 %v2376
      %v2412 = vpop.f32.mrb[0].mxu0
      %v2413 = vadd.f32 0.0, %v2412
      %v2414 = vpop.f32.mrb[0].mxu0
      %v2415 = vpop.f32.mrb[0].mxu0
      %v2416 = vpop.f32.mrb[0].mxu0
      %2417 = vdwg.mxu0
      %v2418 = vadd.f32 %v2362, %v2413
      %v2420 = vsel %vm853, %v850, 0
      %2422 = vmatprep.subr.bf16.mxu0 0
      %2423 = vmatpush1.bf16.msra.mxu0 %v1166
      %2424 = vmatprep.subr.bf16.mxu0 0
      %2425 = vmatpush1.bf16.msra.mxu0 0
      %2426 = vmatprep.subr.bf16.mxu0 0
      %2427 = vmatpush1.bf16.msra.mxu0 0
      %2428 = vmatprep.subr.bf16.mxu0 0
      %2429 = vmatpush1.bf16.msra.mxu0 0
      %2430 = vmatprep.subr.bf16.mxu0 0
      %2431 = vmatpush1.bf16.msra.mxu0 0
      %2432 = vmatprep.subr.bf16.mxu0 0
      %2433 = vmatpush1.bf16.msra.mxu0 0
      %2434 = vmatprep.subr.bf16.mxu0 0
      %2435 = vmatpush1.bf16.msra.mxu0 0
      %2436 = vmatprep.subr.bf16.mxu0 0
      %2437 = vmatpush1.bf16.msra.mxu0 0
      %2438 = vmatprep.subr.bf16.mxu0 0
      %2439 = vmatpush1.bf16.msra.mxu0 0
      %2440 = vmatprep.subr.bf16.mxu0 0
      %2441 = vmatpush1.bf16.msra.mxu0 0
      %2442 = vmatprep.subr.bf16.mxu0 0
      %2443 = vmatpush1.bf16.msra.mxu0 0
      %2444 = vmatprep.subr.bf16.mxu0 0
      %2445 = vmatpush1.bf16.msra.mxu0 0
      %2446 = vmatprep.subr.bf16.mxu0 0
      %2447 = vmatpush1.bf16.msra.mxu0 0
      %2448 = vmatprep.subr.bf16.mxu0 0
      %2449 = vmatpush1.bf16.msra.mxu0 0
      %2450 = vmatprep.subr.bf16.mxu0 0
      %2451 = vmatpush1.bf16.msra.mxu0 0
      %2452 = vmatprep.subr.bf16.mxu0 0
      %2453 = vmatpush1.bf16.msra.mxu0 0
      %2454 = vmatprep.mubr.bf16.mxu0 0
      %2455 = vmatmul.mubr.bf16.gmra.mrb[0].mxu0 %v2420
      %v2456 = vpop.f32.mrb[0].mxu0
      %v2457 = vadd.f32 0.0, %v2456
      %v2458 = vpop.f32.mrb[0].mxu0
      %v2459 = vpop.f32.mrb[0].mxu0
      %v2460 = vpop.f32.mrb[0].mxu0
      %2461 = vdwg.mxu0
      %v2462 = vadd.f32 %v2418, %v2457
      %v2464 = vsel %vm853, %v852, 0
      %2466 = vmatprep.subr.bf16.mxu0 0
      %2467 = vmatpush1.bf16.msra.mxu0 %v1213
      %2468 = vmatprep.subr.bf16.mxu0 0
      %2469 = vmatpush1.bf16.msra.mxu0 0
      %2470 = vmatprep.subr.bf16.mxu0 0
      %2471 = vmatpush1.bf16.msra.mxu0 0
      %2472 = vmatprep.subr.bf16.mxu0 0
      %2473 = vmatpush1.bf16.msra.mxu0 0
      %2474 = vmatprep.subr.bf16.mxu0 0
      %2475 = vmatpush1.bf16.msra.mxu0 0
      %2476 = vmatprep.subr.bf16.mxu0 0
      %2477 = vmatpush1.bf16.msra.mxu0 0
      %2478 = vmatprep.subr.bf16.mxu0 0
      %2479 = vmatpush1.bf16.msra.mxu0 0
      %2480 = vmatprep.subr.bf16.mxu0 0
      %2481 = vmatpush1.bf16.msra.mxu0 0
      %2482 = vmatprep.subr.bf16.mxu0 0
      %2483 = vmatpush1.bf16.msra.mxu0 0
      %2484 = vmatprep.subr.bf16.mxu0 0
      %2485 = vmatpush1.bf16.msra.mxu0 0
      %2486 = vmatprep.subr.bf16.mxu0 0
      %2487 = vmatpush1.bf16.msra.mxu0 0
      %2488 = vmatprep.subr.bf16.mxu0 0
      %2489 = vmatpush1.bf16.msra.mxu0 0
      %2490 = vmatprep.subr.bf16.mxu0 0
      %2491 = vmatpush1.bf16.msra.mxu0 0
      %2492 = vmatprep.subr.bf16.mxu0 0
      %2493 = vmatpush1.bf16.msra.mxu0 0
      %2494 = vmatprep.subr.bf16.mxu0 0
      %2495 = vmatpush1.bf16.msra.mxu0 0
      %2496 = vmatprep.subr.bf16.mxu0 0
      %2497 = vmatpush1.bf16.msra.mxu0 0
      %2498 = vmatprep.mubr.bf16.mxu0 0
      %2499 = vmatmul.mubr.bf16.gmra.mrb[0].mxu0 %v2464
      %v2500 = vpop.f32.mrb[0].mxu0
      %v2501 = vadd.f32 0.0, %v2500
      %v2502 = vpop.f32.mrb[0].mxu0
      %v2503 = vpop.f32.mrb[0].mxu0
      %v2504 = vpop.f32.mrb[0].mxu0
      %2505 = vdwg.mxu0
      %v2506 = vadd.f32 %v2462, %v2501
      %v2509 = vunpack.c.l.b16 %v850
      %v2510 = vunpack.c.l.b16 %v851
      %v2511 = vpack.c.b16 %v2510, %v2509
      %v2513 = vshrl.u32 %v2511, 16
      %v2515 = vshll.u32 %v2511, 16
      %v2517 = vrot.slane %v2515, 1
      %v2518 = vor.u32 %v2513, %v2517
      %v2520 = vsel %vm853, %v2518, 0
      %2522 = vmatprep.subr.bf16.mxu0 0
      %2523 = vmatpush1.bf16.msra.mxu0 %v1272
      %2524 = vmatprep.subr.bf16.mxu0 0
      %2525 = vmatpush1.bf16.msra.mxu0 0
      %2526 = vmatprep.subr.bf16.mxu0 0
      %2527 = vmatpush1.bf16.msra.mxu0 0
      %2528 = vmatprep.subr.bf16.mxu0 0
      %2529 = vmatpush1.bf16.msra.mxu0 0
      %2530 = vmatprep.subr.bf16.mxu0 0
      %2531 = vmatpush1.bf16.msra.mxu0 0
      %2532 = vmatprep.subr.bf16.mxu0 0
      %2533 = vmatpush1.bf16.msra.mxu0 0
      %2534 = vmatprep.subr.bf16.mxu0 0
      %2535 = vmatpush1.bf16.msra.mxu0 0
      %2536 = vmatprep.subr.bf16.mxu0 0
      %2537 = vmatpush1.bf16.msra.mxu0 0
      %2538 = vmatprep.subr.bf16.mxu0 0
      %2539 = vmatpush1.bf16.msra.mxu0 0
      %2540 = vmatprep.subr.bf16.mxu0 0
      %2541 = vmatpush1.bf16.msra.mxu0 0
      %2542 = vmatprep.subr.bf16.mxu0 0
      %2543 = vmatpush1.bf16.msra.mxu0 0
      %2544 = vmatprep.subr.bf16.mxu0 0
      %2545 = vmatpush1.bf16.msra.mxu0 0
      %2546 = vmatprep.subr.bf16.mxu0 0
      %2547 = vmatpush1.bf16.msra.mxu0 0
      %2548 = vmatprep.subr.bf16.mxu0 0
      %2549 = vmatpush1.bf16.msra.mxu0 0
      %2550 = vmatprep.subr.bf16.mxu0 0
      %2551 = vmatpush1.bf16.msra.mxu0 0
      %2552 = vmatprep.subr.bf16.mxu0 0
      %2553 = vmatpush1.bf16.msra.mxu0 0
      %2554 = vmatprep.mubr.bf16.mxu0 0
      %2555 = vmatmul.mubr.bf16.gmra.mrb[0].mxu0 %v2520
      %v2556 = vpop.f32.mrb[0].mxu0
      %v2557 = vadd.f32 0.0, %v2556
      %v2558 = vpop.f32.mrb[0].mxu0
      %v2559 = vpop.f32.mrb[0].mxu0
      %v2560 = vpop.f32.mrb[0].mxu0
      %2561 = vdwg.mxu0
      %v2562 = vadd.f32 %v2506, %v2557
      %v2563 = vadd.f32 %v2562, %v1319
      %v2564 = vmax.f32 %v2563, 0.0
      %v2565 = vpack.c.bf16 %v2564, %v2564
      %s2566 = scalar_lea.vmem %s813, 12
      %2567 = vst.msk [vmem:[%s2566] sm:$0xf] %vm1324, %v2565
      %s2568 = smul.u32 4, %s27
      %p2569 = scmp.lt.s32.totalorder %s26, 1
      %s2570 = scalar_select %p2569, %s26, 1
      %p2571 = scmp.lt.s32.totalorder %s2568, 7
      %s2572 = scalar_select %p2571, %s2568, 7
      %s2573 = smul.addr %s2570, 8
      %s2574 = sadd.s32 %s2572, %s2573
      %s2575 = smul.addr %s2574, 4
      %s2576 = scalar_lea.vmem %s11, %s2575
      // Predicated region
      $region65: #{a_call__.3} parent=63 // pred_check
        %p2577 = pneg %p382
      $region66: #{a_call__.3} parent=63 // pred_check_branch
        %2579 = sbr.rel (%p2577) target = $region68
      $region67: #{a_call__.3} parent=63 // pred_region
        %s2580 = smul.u32 4, %s27
      $region68: #{a_call__.3} parent=63 // pred_fallthru
        _
    $region64: #{a_call__.3} parent=5 // pred_fallthru
      _
    %p2581 = scmp.le.s32.totalorder 2, %s17
    // Predicated region
    $region69: #{a_call__.3} parent=5 // pred_check
      %p2582 = pneg %p2581
    $region70: #{a_call__.3} parent=5 // pred_check_branch
      %2584 = sbr.rel (%p2582) target = $region72
    $region71: #{a_call__.3} parent=5 // pred_region
      %s2585 = ssub.s32 %s17, 2
      // Predicated region
      $region73: #{a_call__.3} parent=71 // pred_check
        %p2586 = pneg %p388
      $region74: #{a_call__.3} parent=71 // pred_check_branch
        %2588 = sbr.rel (%p2586) target = $region76
      $region75: #{a_call__.3} parent=71 // pred_region
        %s2589 = smul.u32 4, %s29
        %p2590 = scmp.lt.s32.totalorder %s28, 1
        %s2591 = scalar_select %p2590, %s28, 1
        %p2592 = scmp.lt.s32.totalorder %s2589, 7
        %s2593 = scalar_select %p2592, %s2589, 7
        %s2594 = smul.addr %s2591, 8
        %s2595 = sadd.s32 %s2593, %s2594
        %s2596 = smul.addr %s2595, 4
        %s2597 = scalar_lea.vmem %s11, %s2596
      $region76: #{a_call__.3} parent=71 // pred_fallthru
        _
    $region72: #{a_call__.3} parent=5 // pred_fallthru
      _
  $region6: #{a_call__.3} parent=0 // loop_footer
    %s21 = sadd.s32 1, %s17
  $region7: #{a_call__.3} parent=0 // loop_footer_branch
    %16 = sbr.rel target = $region3
  $region8: #{a_call__.3} parent=0 // loop_exit
    _

// kernel: a_call__.4
$region0: #{a_call__.4}
  #allocation0 [shape = 'u32[]', space=smem, size = 0x4, offset = 0x4, fixed_abs, tag = 'smem constant byte address 0x4 - core index']
  #allocation1 [shape = 'u32[144,128]{1,0:T(1,128)}', space=vmem, size = 0x12000, scoped, tag = 'internal scratch']
  %s0 = inlined_call_operand.vmem [shape: bf16[2,9,2,5,16], index: 0, kind: input, shape index: {}, may-alias: {0,1,2,3,4,5,6,7,8}]
  %s1 = inlined_call_operand.vmem [shape: bf16[2,9,2,5,16], index: 1, kind: input, shape index: {}, may-alias: {0,1,2,3,4,5,6,7,8}]
  %s2 = inlined_call_operand.vmem [shape: bf16[2,9,2,5,16], index: 2, kind: input, shape index: {}, may-alias: {0,1,2,3,4,5,6,7,8}]
  %s3 = inlined_call_operand.vmem [shape: bf16[2,9,2,5,16], index: 3, kind: input, shape index: {}, may-alias: {0,1,2,3,4,5,6,7,8}]
  %s4 = inlined_call_operand.vmem [shape: bf16[2,9,2,5,16], index: 4, kind: input, shape index: {}, may-alias: {0,1,2,3,4,5,6,7,8}]
  %s5 = inlined_call_operand.vmem [shape: bf16[2,9,2,5,16], index: 5, kind: input, shape index: {}, may-alias: {0,1,2,3,4,5,6,7,8}]
  %s6 = inlined_call_operand.vmem [shape: bf16[2,9,2,5,16], index: 6, kind: input, shape index: {}, may-alias: {0,1,2,3,4,5,6,7,8}]
  %s7 = inlined_call_operand.vmem [shape: bf16[2,9,2,5,16], index: 7, kind: input, shape index: {}, may-alias: {0,1,2,3,4,5,6,7,8}]
  %s8 = inlined_call_operand.vmem [shape: bf16[2,9,2,5,16], index: 8, kind: input, shape index: {}, may-alias: {0,1,2,3,4,5,6,7,8}]
  %s9 = inlined_call_operand.vmem [shape: bf16[9,16,32], index: 9, kind: input, shape index: {}]
  %s10 = inlined_call_operand.vmem [shape: f32[1,32], index: 10, kind: input, shape index: {}]
  %s11 = inlined_call_operand.vmem [shape: bf16[2,4,4,32], index: 11, kind: output, shape index: {}]
  %s12 = sld [smem:[#allocation0]]
  $region77: #{a_call__.4} parent=0
    _
  %s14 = ssub.s32 1, %s12
  %s15 = scalar_select 0, %s14, %s12
  loop: start=0, step=1, limit=4
  $region2: #{a_call__.4} parent=0 // loop_pre_header
    _
  $region3: #{a_call__.4} parent=0 // loop_header
    %s17 = sphi 0, %s21
    %p18 = scmp.ge.s32.totalorder %s17, 4
    %s24 = sphi 0, %s36
    %s25 = sphi 0, %s32
    %s26 = sphi 0, %s24
    %s27 = sphi 0, %s25
    %s28 = sphi 0, %s26
    %s29 = sphi 0, %s27
    %s43 = sphi 0, %s45
    %s46 = sphi 0, %s43
    %s47 = sphi 0, %s46
    %s63 = sphi 0, %s47
    %s75 = sphi 0, %s77
    %s78 = sphi 0, %s75
    %s79 = sphi 0, %s78
    %s95 = sphi 0, %s79
    %s107 = sphi 0, %s109
    %s110 = sphi 0, %s107
    %s111 = sphi 0, %s110
    %s127 = sphi 0, %s111
    %s139 = sphi 0, %s141
    %s142 = sphi 0, %s139
    %s143 = sphi 0, %s142
    %s159 = sphi 0, %s143
    %s171 = sphi 0, %s173
    %s174 = sphi 0, %s171
    %s175 = sphi 0, %s174
    %s191 = sphi 0, %s175
    %s203 = sphi 0, %s205
    %s206 = sphi 0, %s203
    %s207 = sphi 0, %s206
    %s223 = sphi 0, %s207
    %s235 = sphi 0, %s237
    %s238 = sphi 0, %s235
    %s239 = sphi 0, %s238
    %s255 = sphi 0, %s239
    %s267 = sphi 0, %s269
    %s270 = sphi 0, %s267
    %s271 = sphi 0, %s270
    %s287 = sphi 0, %s271
    %s299 = sphi 0, %s301
    %s302 = sphi 0, %s299
    %s303 = sphi 0, %s302
    %s319 = sphi 0, %s303
    %s323 = sphi 0, %s323
    %s325 = sphi 0, %s323
    %s326 = sphi 0, %s325
    %s340 = sphi 0, %s326
    %s344 = sphi 0, %s344
    %s346 = sphi 0, %s344
    %s347 = sphi 0, %s346
    %s361 = sphi 0, %s347
    %s369 = sphi 0, %s371
    %s372 = sphi 0, %s369
    %s373 = sphi 0, %s372
    %s389 = sphi 0, %s373
  $region4: #{a_call__.4} parent=0 // loop_header_branch
    %20 = sbr.rel (%p18) target = $region8
  $region5: #{a_call__.4} parent=0 // loop_body
    %s22 = ssub.s32 %s17, 1
    %s23 = ssub.s32 %s17, 2
    %s30 = sadd.s32 1, %s25
    %p31 = scmp.ge.s32.totalorder %s30, 1
    %s32 = scalar_select %p31, 0, %s30
    %s33 = sadd.s32 1, %s24
    %s34 = scalar_select %p31, %s33, %s24
    %p35 = scmp.ge.s32.totalorder %s34, 2
    %s36 = scalar_select %p35, 0, %s34
    %s37 = smul.u32 %s25, 8
    %s38 = smul.u32 %s32, 8
    %s39 = ssub.s32 %s24, %s36
    %s40 = ssub.s32 %s37, %s38
    %s41 = sor.u32 %s39, %s40
    %p42 = scmp.eq.s32.totalorder %s41, 0
    %s44 = sadd.s32 %s43, 1
    %s45 = scalar_select %p42, %s43, %s44
    %p48 = pneg %p42
    %p49 = scmp.eq.s32.totalorder %s17, 1
    %p50 = por %p48, %p49
    %p51 = scmp.ne.s32.totalorder %s43, %s46
    %p52 = scmp.eq.s32.totalorder %s17, 0
    %p53 = por %p51, %p52
    %p54 = scmp.ne.s32.totalorder %s43, %s46
    %p55 = scmp.eq.s32.totalorder %s22, 1
    %p56 = por %p54, %p55
    %p57 = scmp.ne.s32.totalorder %s46, %s47
    %p58 = scmp.eq.s32.totalorder %s22, 0
    %p59 = por %p57, %p58
    %p60 = scmp.ne.s32.totalorder %s46, %s47
    %p61 = scmp.eq.s32.totalorder %s23, 1
    %p62 = por %p60, %p61
    %p64 = scmp.ne.s32.totalorder %s47, %s63
    %p65 = scmp.eq.s32.totalorder %s23, 0
    %p66 = por %p64, %p65
    %s67 = smul.u32 %s25, 8
    %s68 = sadd.s32 %s67, 1
    %s69 = smul.u32 %s32, 8
    %s70 = sadd.s32 %s69, 1
    %s71 = ssub.s32 %s24, %s36
    %s72 = ssub.s32 %s68, %s70
    %s73 = sor.u32 %s71, %s72
    %p74 = scmp.eq.s32.totalorder %s73, 0
    %s76 = sadd.s32 %s75, 1
    %s77 = scalar_select %p74, %s75, %s76
    %p80 = pneg %p74
    %p81 = scmp.eq.s32.totalorder %s17, 1
    %p82 = por %p80, %p81
    %p83 = scmp.ne.s32.totalorder %s75, %s78
    %p84 = scmp.eq.s32.totalorder %s17, 0
    %p85 = por %p83, %p84
    %p86 = scmp.ne.s32.totalorder %s75, %s78
    %p87 = scmp.eq.s32.totalorder %s22, 1
    %p88 = por %p86, %p87
    %p89 = scmp.ne.s32.totalorder %s78, %s79
    %p90 = scmp.eq.s32.totalorder %s22, 0
    %p91 = por %p89, %p90
    %p92 = scmp.ne.s32.totalorder %s78, %s79
    %p93 = scmp.eq.s32.totalorder %s23, 1
    %p94 = por %p92, %p93
    %p96 = scmp.ne.s32.totalorder %s79, %s95
    %p97 = scmp.eq.s32.totalorder %s23, 0
    %p98 = por %p96, %p97
    %s99 = smul.u32 %s25, 8
    %s100 = sadd.s32 %s99, 2
    %s101 = smul.u32 %s32, 8
    %s102 = sadd.s32 %s101, 2
    %s103 = ssub.s32 %s24, %s36
    %s104 = ssub.s32 %s100, %s102
    %s105 = sor.u32 %s103, %s104
    %p106 = scmp.eq.s32.totalorder %s105, 0
    %s108 = sadd.s32 %s107, 1
    %s109 = scalar_select %p106, %s107, %s108
    %p112 = pneg %p106
    %p113 = scmp.eq.s32.totalorder %s17, 1
    %p114 = por %p112, %p113
    %p115 = scmp.ne.s32.totalorder %s107, %s110
    %p116 = scmp.eq.s32.totalorder %s17, 0
    %p117 = por %p115, %p116
    %p118 = scmp.ne.s32.totalorder %s107, %s110
    %p119 = scmp.eq.s32.totalorder %s22, 1
    %p120 = por %p118, %p119
    %p121 = scmp.ne.s32.totalorder %s110, %s111
    %p122 = scmp.eq.s32.totalorder %s22, 0
    %p123 = por %p121, %p122
    %p124 = scmp.ne.s32.totalorder %s110, %s111
    %p125 = scmp.eq.s32.totalorder %s23, 1
    %p126 = por %p124, %p125
    %p128 = scmp.ne.s32.totalorder %s111, %s127
    %p129 = scmp.eq.s32.totalorder %s23, 0
    %p130 = por %p128, %p129
    %s131 = smul.u32 %s25, 8
    %s132 = sadd.s32 %s131, 3
    %s133 = smul.u32 %s32, 8
    %s134 = sadd.s32 %s133, 3
    %s135 = ssub.s32 %s24, %s36
    %s136 = ssub.s32 %s132, %s134
    %s137 = sor.u32 %s135, %s136
    %p138 = scmp.eq.s32.totalorder %s137, 0
    %s140 = sadd.s32 %s139, 1
    %s141 = scalar_select %p138, %s139, %s140
    %p144 = pneg %p138
    %p145 = scmp.eq.s32.totalorder %s17, 1
    %p146 = por %p144, %p145
    %p147 = scmp.ne.s32.totalorder %s139, %s142
    %p148 = scmp.eq.s32.totalorder %s17, 0
    %p149 = por %p147, %p148
    %p150 = scmp.ne.s32.totalorder %s139, %s142
    %p151 = scmp.eq.s32.totalorder %s22, 1
    %p152 = por %p150, %p151
    %p153 = scmp.ne.s32.totalorder %s142, %s143
    %p154 = scmp.eq.s32.totalorder %s22, 0
    %p155 = por %p153, %p154
    %p156 = scmp.ne.s32.totalorder %s142, %s143
    %p157 = scmp.eq.s32.totalorder %s23, 1
    %p158 = por %p156, %p157
    %p160 = scmp.ne.s32.totalorder %s143, %s159
    %p161 = scmp.eq.s32.totalorder %s23, 0
    %p162 = por %p160, %p161
    %s163 = smul.u32 %s25, 8
    %s164 = sadd.s32 %s163, 4
    %s165 = smul.u32 %s32, 8
    %s166 = sadd.s32 %s165, 4
    %s167 = ssub.s32 %s24, %s36
    %s168 = ssub.s32 %s164, %s166
    %s169 = sor.u32 %s167, %s168
    %p170 = scmp.eq.s32.totalorder %s169, 0
    %s172 = sadd.s32 %s171, 1
    %s173 = scalar_select %p170, %s171, %s172
    %p176 = pneg %p170
    %p177 = scmp.eq.s32.totalorder %s17, 1
    %p178 = por %p176, %p177
    %p179 = scmp.ne.s32.totalorder %s171, %s174
    %p180 = scmp.eq.s32.totalorder %s17, 0
    %p181 = por %p179, %p180
    %p182 = scmp.ne.s32.totalorder %s171, %s174
    %p183 = scmp.eq.s32.totalorder %s22, 1
    %p184 = por %p182, %p183
    %p185 = scmp.ne.s32.totalorder %s174, %s175
    %p186 = scmp.eq.s32.totalorder %s22, 0
    %p187 = por %p185, %p186
    %p188 = scmp.ne.s32.totalorder %s174, %s175
    %p189 = scmp.eq.s32.totalorder %s23, 1
    %p190 = por %p188, %p189
    %p192 = scmp.ne.s32.totalorder %s175, %s191
    %p193 = scmp.eq.s32.totalorder %s23, 0
    %p194 = por %p192, %p193
    %s195 = smul.u32 %s25, 8
    %s196 = sadd.s32 %s195, 5
    %s197 = smul.u32 %s32, 8
    %s198 = sadd.s32 %s197, 5
    %s199 = ssub.s32 %s24, %s36
    %s200 = ssub.s32 %s196, %s198
    %s201 = sor.u32 %s199, %s200
    %p202 = scmp.eq.s32.totalorder %s201, 0
    %s204 = sadd.s32 %s203, 1
    %s205 = scalar_select %p202, %s203, %s204
    %p208 = pneg %p202
    %p209 = scmp.eq.s32.totalorder %s17, 1
    %p210 = por %p208, %p209
    %p211 = scmp.ne.s32.totalorder %s203, %s206
    %p212 = scmp.eq.s32.totalorder %s17, 0
    %p213 = por %p211, %p212
    %p214 = scmp.ne.s32.totalorder %s203, %s206
    %p215 = scmp.eq.s32.totalorder %s22, 1
    %p216 = por %p214, %p215
    %p217 = scmp.ne.s32.totalorder %s206, %s207
    %p218 = scmp.eq.s32.totalorder %s22, 0
    %p219 = por %p217, %p218
    %p220 = scmp.ne.s32.totalorder %s206, %s207
    %p221 = scmp.eq.s32.totalorder %s23, 1
    %p222 = por %p220, %p221
    %p224 = scmp.ne.s32.totalorder %s207, %s223
    %p225 = scmp.eq.s32.totalorder %s23, 0
    %p226 = por %p224, %p225
    %s227 = smul.u32 %s25, 8
    %s228 = sadd.s32 %s227, 6
    %s229 = smul.u32 %s32, 8
    %s230 = sadd.s32 %s229, 6
    %s231 = ssub.s32 %s24, %s36
    %s232 = ssub.s32 %s228, %s230
    %s233 = sor.u32 %s231, %s232
    %p234 = scmp.eq.s32.totalorder %s233, 0
    %s236 = sadd.s32 %s235, 1
    %s237 = scalar_select %p234, %s235, %s236
    %p240 = pneg %p234
    %p241 = scmp.eq.s32.totalorder %s17, 1
    %p242 = por %p240, %p241
    %p243 = scmp.ne.s32.totalorder %s235, %s238
    %p244 = scmp.eq.s32.totalorder %s17, 0
    %p245 = por %p243, %p244
    %p246 = scmp.ne.s32.totalorder %s235, %s238
    %p247 = scmp.eq.s32.totalorder %s22, 1
    %p248 = por %p246, %p247
    %p249 = scmp.ne.s32.totalorder %s238, %s239
    %p250 = scmp.eq.s32.totalorder %s22, 0
    %p251 = por %p249, %p250
    %p252 = scmp.ne.s32.totalorder %s238, %s239
    %p253 = scmp.eq.s32.totalorder %s23, 1
    %p254 = por %p252, %p253
    %p256 = scmp.ne.s32.totalorder %s239, %s255
    %p257 = scmp.eq.s32.totalorder %s23, 0
    %p258 = por %p256, %p257
    %s259 = smul.u32 %s25, 8
    %s260 = sadd.s32 %s259, 7
    %s261 = smul.u32 %s32, 8
    %s262 = sadd.s32 %s261, 7
    %s263 = ssub.s32 %s24, %s36
    %s264 = ssub.s32 %s260, %s262
    %s265 = sor.u32 %s263, %s264
    %p266 = scmp.eq.s32.totalorder %s265, 0
    %s268 = sadd.s32 %s267, 1
    %s269 = scalar_select %p266, %s267, %s268
    %p272 = pneg %p266
    %p273 = scmp.eq.s32.totalorder %s17, 1
    %p274 = por %p272, %p273
    %p275 = scmp.ne.s32.totalorder %s267, %s270
    %p276 = scmp.eq.s32.totalorder %s17, 0
    %p277 = por %p275, %p276
    %p278 = scmp.ne.s32.totalorder %s267, %s270
    %p279 = scmp.eq.s32.totalorder %s22, 1
    %p280 = por %p278, %p279
    %p281 = scmp.ne.s32.totalorder %s270, %s271
    %p282 = scmp.eq.s32.totalorder %s22, 0
    %p283 = por %p281, %p282
    %p284 = scmp.ne.s32.totalorder %s270, %s271
    %p285 = scmp.eq.s32.totalorder %s23, 1
    %p286 = por %p284, %p285
    %p288 = scmp.ne.s32.totalorder %s271, %s287
    %p289 = scmp.eq.s32.totalorder %s23, 0
    %p290 = por %p288, %p289
    %s291 = smul.u32 %s25, 8
    %s292 = sadd.s32 %s291, 8
    %s293 = smul.u32 %s32, 8
    %s294 = sadd.s32 %s293, 8
    %s295 = ssub.s32 %s24, %s36
    %s296 = ssub.s32 %s292, %s294
    %s297 = sor.u32 %s295, %s296
    %p298 = scmp.eq.s32.totalorder %s297, 0
    %s300 = sadd.s32 %s299, 1
    %s301 = scalar_select %p298, %s299, %s300
    %p304 = pneg %p298
    %p305 = scmp.eq.s32.totalorder %s17, 1
    %p306 = por %p304, %p305
    %p307 = scmp.ne.s32.totalorder %s299, %s302
    %p308 = scmp.eq.s32.totalorder %s17, 0
    %p309 = por %p307, %p308
    %p310 = scmp.ne.s32.totalorder %s299, %s302
    %p311 = scmp.eq.s32.totalorder %s22, 1
    %p312 = por %p310, %p311
    %p313 = scmp.ne.s32.totalorder %s302, %s303
    %p314 = scmp.eq.s32.totalorder %s22, 0
    %p315 = por %p313, %p314
    %p316 = scmp.ne.s32.totalorder %s302, %s303
    %p317 = scmp.eq.s32.totalorder %s23, 1
    %p318 = por %p316, %p317
    %p320 = scmp.ne.s32.totalorder %s303, %s319
    %p321 = scmp.eq.s32.totalorder %s23, 0
    %p322 = por %p320, %p321
    %s324 = sadd.s32 %s323, 1
    %p327 = scmp.eq.s32.totalorder %s17, 1
    %p328 = scmp.ne.s32.totalorder %s323, %s325
    %p329 = scmp.eq.s32.totalorder %s17, 0
    %p330 = por %p328, %p329
    %p331 = scmp.ne.s32.totalorder %s323, %s325
    %p332 = scmp.eq.s32.totalorder %s22, 1
    %p333 = por %p331, %p332
    %p334 = scmp.ne.s32.totalorder %s325, %s326
    %p335 = scmp.eq.s32.totalorder %s22, 0
    %p336 = por %p334, %p335
    %p337 = scmp.ne.s32.totalorder %s325, %s326
    %p338 = scmp.eq.s32.totalorder %s23, 1
    %p339 = por %p337, %p338
    %p341 = scmp.ne.s32.totalorder %s326, %s340
    %p342 = scmp.eq.s32.totalorder %s23, 0
    %p343 = por %p341, %p342
    %s345 = sadd.s32 %s344, 1
    %p348 = scmp.eq.s32.totalorder %s17, 1
    %p349 = scmp.ne.s32.totalorder %s344, %s346
    %p350 = scmp.eq.s32.totalorder %s17, 0
    %p351 = por %p349, %p350
    %p352 = scmp.ne.s32.totalorder %s344, %s346
    %p353 = scmp.eq.s32.totalorder %s22, 1
    %p354 = por %p352, %p353
    %p355 = scmp.ne.s32.totalorder %s346, %s347
    %p356 = scmp.eq.s32.totalorder %s22, 0
    %p357 = por %p355, %p356
    %p358 = scmp.ne.s32.totalorder %s346, %s347
    %p359 = scmp.eq.s32.totalorder %s23, 1
    %p360 = por %p358, %p359
    %p362 = scmp.ne.s32.totalorder %s347, %s361
    %p363 = scmp.eq.s32.totalorder %s23, 0
    %p364 = por %p362, %p363
    %s365 = ssub.s32 %s24, %s36
    %s366 = ssub.s32 %s25, %s32
    %s367 = sor.u32 %s365, %s366
    %p368 = scmp.eq.s32.totalorder %s367, 0
    %s370 = sadd.s32 %s369, 1
    %s371 = scalar_select %p368, %s369, %s370
    %p374 = pneg %p368
    %p375 = scmp.eq.s32.totalorder %s17, 1
    %p376 = por %p374, %p375
    %p377 = scmp.ne.s32.totalorder %s369, %s372
    %p378 = scmp.eq.s32.totalorder %s17, 0
    %p379 = por %p377, %p378
    %p380 = scmp.ne.s32.totalorder %s369, %s372
    %p381 = scmp.eq.s32.totalorder %s22, 1
    %p382 = por %p380, %p381
    %p383 = scmp.ne.s32.totalorder %s372, %s373
    %p384 = scmp.eq.s32.totalorder %s22, 0
    %p385 = por %p383, %p384
    %p386 = scmp.ne.s32.totalorder %s372, %s373
    %p387 = scmp.eq.s32.totalorder %s23, 1
    %p388 = por %p386, %p387
    %p390 = scmp.ne.s32.totalorder %s373, %s389
    %p391 = scmp.eq.s32.totalorder %s23, 0
    %p392 = por %p390, %p391
    %p393 = scmp.le.s32.totalorder 1, %s17
    %p394 = scmp.lt.s32.totalorder %s17, 3
    %p395 = pnand %p393, %p394
    %p396 = pneg %p395
    // Predicated region
    $region9: #{a_call__.4} parent=5 // pred_check
      _
    $region10: #{a_call__.4} parent=5 // pred_check_branch
      %398 = sbr.rel (%p395) target = $region12
    $region11: #{a_call__.4} parent=5 // pred_region
      %s399 = ssub.s32 %s17, 1
      // Predicated region
      $region13: #{a_call__.4} parent=11 // pred_check
        %p400 = pneg %p336
      $region14: #{a_call__.4} parent=11 // pred_check_branch
        %402 = sbr.rel (%p400) target = $region16
      $region15: #{a_call__.4} parent=11 // pred_region
        _
      $region16: #{a_call__.4} parent=11 // pred_fallthru
        _
      // Predicated region
      $region17: #{a_call__.4} parent=11 // pred_check
        %p403 = pneg %p357
      $region18: #{a_call__.4} parent=11 // pred_check_branch
        %405 = sbr.rel (%p403) target = $region20
      $region19: #{a_call__.4} parent=11 // pred_region
        _
      $region20: #{a_call__.4} parent=11 // pred_fallthru
        _
    $region12: #{a_call__.4} parent=5 // pred_fallthru
      _
    %p406 = scmp.lt.s32.totalorder %s17, 2
    // Predicated region
    $region21: #{a_call__.4} parent=5 // pred_check
      %p407 = pneg %p406
    $region22: #{a_call__.4} parent=5 // pred_check_branch
      %409 = sbr.rel (%p407) target = $region24
    $region23: #{a_call__.4} parent=5 // pred_region
      // Predicated region
      $region25: #{a_call__.4} parent=23 // pred_check
        %p410 = pneg %p53
      $region26: #{a_call__.4} parent=23 // pred_check_branch
        %412 = sbr.rel (%p410) target = $region28
      $region27: #{a_call__.4} parent=23 // pred_region
        %s413 = smul.u32 %s25, 8
        %p414 = scmp.lt.s32.totalorder %s24, 1
        %s415 = scalar_select %p414, %s24, 1
        %p416 = scmp.lt.s32.totalorder %s413, 8
        %s417 = scalar_select %p416, %s413, 8
        %s418 = smul.addr %s417, 2
        %s419 = smul.addr %s415, 18
        %s420 = sadd.s32 %s418, %s419
        %s421 = smul.addr %s420, 4
        %s422 = scalar_lea.vmem %s0, %s421
        %s423 = smul.u32 %s25, 8
      $region28: #{a_call__.4} parent=23 // pred_fallthru
        _
      // Predicated region
      $region29: #{a_call__.4} parent=23 // pred_check
        %p424 = pneg %p85
      $region30: #{a_call__.4} parent=23 // pred_check_branch
        %426 = sbr.rel (%p424) target = $region32
      $region31: #{a_call__.4} parent=23 // pred_region
        %s427 = smul.u32 %s25, 8
        %s428 = sadd.s32 %s427, 1
        %p429 = scmp.lt.s32.totalorder %s24, 1
        %s430 = scalar_select %p429, %s24, 1
        %p431 = scmp.lt.s32.totalorder %s428, 8
        %s432 = scalar_select %p431, %s428, 8
        %s433 = smul.addr %s432, 2
        %s434 = smul.addr %s430, 18
        %s435 = sadd.s32 %s433, %s434
        %s436 = smul.addr %s435, 4
        %s437 = scalar_lea.vmem %s1, %s436
        %s438 = smul.u32 %s25, 8
        %s439 = sadd.s32 %s438, 1
      $region32: #{a_call__.4} parent=23 // pred_fallthru
        _
      // Predicated region
      $region33: #{a_call__.4} parent=23 // pred_check
        %p440 = pneg %p117
      $region34: #{a_call__.4} parent=23 // pred_check_branch
        %442 = sbr.rel (%p440) target = $region36
      $region35: #{a_call__.4} parent=23 // pred_region
        %s443 = smul.u32 %s25, 8
        %s444 = sadd.s32 %s443, 2
        %p445 = scmp.lt.s32.totalorder %s24, 1
        %s446 = scalar_select %p445, %s24, 1
        %p447 = scmp.lt.s32.totalorder %s444, 8
        %s448 = scalar_select %p447, %s444, 8
        %s449 = smul.addr %s448, 2
        %s450 = smul.addr %s446, 18
        %s451 = sadd.s32 %s449, %s450
        %s452 = smul.addr %s451, 4
        %s453 = scalar_lea.vmem %s2, %s452
        %s454 = smul.u32 %s25, 8
        %s455 = sadd.s32 %s454, 2
      $region36: #{a_call__.4} parent=23 // pred_fallthru
        _
      // Predicated region
      $region37: #{a_call__.4} parent=23 // pred_check
        %p456 = pneg %p149
      $region38: #{a_call__.4} parent=23 // pred_check_branch
        %458 = sbr.rel (%p456) target = $region40
      $region39: #{a_call__.4} parent=23 // pred_region
        %s459 = smul.u32 %s25, 8
        %s460 = sadd.s32 %s459, 3
        %p461 = scmp.lt.s32.totalorder %s24, 1
        %s462 = scalar_select %p461, %s24, 1
        %p463 = scmp.lt.s32.totalorder %s460, 8
        %s464 = scalar_select %p463, %s460, 8
        %s465 = smul.addr %s464, 2
        %s466 = smul.addr %s462, 18
        %s467 = sadd.s32 %s465, %s466
        %s468 = smul.addr %s467, 4
        %s469 = scalar_lea.vmem %s3, %s468
        %s470 = smul.u32 %s25, 8
        %s471 = sadd.s32 %s470, 3
      $region40: #{a_call__.4} parent=23 // pred_fallthru
        _
      // Predicated region
      $region41: #{a_call__.4} parent=23 // pred_check
        %p472 = pneg %p181
      $region42: #{a_call__.4} parent=23 // pred_check_branch
        %474 = sbr.rel (%p472) target = $region44
      $region43: #{a_call__.4} parent=23 // pred_region
        %s475 = smul.u32 %s25, 8
        %s476 = sadd.s32 %s475, 4
        %p477 = scmp.lt.s32.totalorder %s24, 1
        %s478 = scalar_select %p477, %s24, 1
        %p479 = scmp.lt.s32.totalorder %s476, 8
        %s480 = scalar_select %p479, %s476, 8
        %s481 = smul.addr %s480, 2
        %s482 = smul.addr %s478, 18
        %s483 = sadd.s32 %s481, %s482
        %s484 = smul.addr %s483, 4
        %s485 = scalar_lea.vmem %s4, %s484
        %s486 = smul.u32 %s25, 8
        %s487 = sadd.s32 %s486, 4
      $region44: #{a_call__.4} parent=23 // pred_fallthru
        _
      // Predicated region
      $region45: #{a_call__.4} parent=23 // pred_check
        %p488 = pneg %p213
      $region46: #{a_call__.4} parent=23 // pred_check_branch
        %490 = sbr.rel (%p488) target = $region48
      $region47: #{a_call__.4} parent=23 // pred_region
        %s491 = smul.u32 %s25, 8
        %s492 = sadd.s32 %s491, 5
        %p493 = scmp.lt.s32.totalorder %s24, 1
        %s494 = scalar_select %p493, %s24, 1
        %p495 = scmp.lt.s32.totalorder %s492, 8
        %s496 = scalar_select %p495, %s492, 8
        %s497 = smul.addr %s496, 2
        %s498 = smul.addr %s494, 18
        %s499 = sadd.s32 %s497, %s498
        %s500 = smul.addr %s499, 4
        %s501 = scalar_lea.vmem %s5, %s500
        %s502 = smul.u32 %s25, 8
        %s503 = sadd.s32 %s502, 5
      $region48: #{a_call__.4} parent=23 // pred_fallthru
        _
      // Predicated region
      $region49: #{a_call__.4} parent=23 // pred_check
        %p504 = pneg %p245
      $region50: #{a_call__.4} parent=23 // pred_check_branch
        %506 = sbr.rel (%p504) target = $region52
      $region51: #{a_call__.4} parent=23 // pred_region
        %s507 = smul.u32 %s25, 8
        %s508 = sadd.s32 %s507, 6
        %p509 = scmp.lt.s32.totalorder %s24, 1
        %s510 = scalar_select %p509, %s24, 1
        %p511 = scmp.lt.s32.totalorder %s508, 8
        %s512 = scalar_select %p511, %s508, 8
        %s513 = smul.addr %s512, 2
        %s514 = smul.addr %s510, 18
        %s515 = sadd.s32 %s513, %s514
        %s516 = smul.addr %s515, 4
        %s517 = scalar_lea.vmem %s6, %s516
        %s518 = smul.u32 %s25, 8
        %s519 = sadd.s32 %s518, 6
      $region52: #{a_call__.4} parent=23 // pred_fallthru
        _
      // Predicated region
      $region53: #{a_call__.4} parent=23 // pred_check
        %p520 = pneg %p277
      $region54: #{a_call__.4} parent=23 // pred_check_branch
        %522 = sbr.rel (%p520) target = $region56
      $region55: #{a_call__.4} parent=23 // pred_region
        %s523 = smul.u32 %s25, 8
        %s524 = sadd.s32 %s523, 7
        %p525 = scmp.lt.s32.totalorder %s24, 1
        %s526 = scalar_select %p525, %s24, 1
        %p527 = scmp.lt.s32.totalorder %s524, 8
        %s528 = scalar_select %p527, %s524, 8
        %s529 = smul.addr %s528, 2
        %s530 = smul.addr %s526, 18
        %s531 = sadd.s32 %s529, %s530
        %s532 = smul.addr %s531, 4
        %s533 = scalar_lea.vmem %s7, %s532
        %s534 = smul.u32 %s25, 8
        %s535 = sadd.s32 %s534, 7
      $region56: #{a_call__.4} parent=23 // pred_fallthru
        _
      // Predicated region
      $region57: #{a_call__.4} parent=23 // pred_check
        %p536 = pneg %p309
      $region58: #{a_call__.4} parent=23 // pred_check_branch
        %538 = sbr.rel (%p536) target = $region60
      $region59: #{a_call__.4} parent=23 // pred_region
        %s539 = smul.u32 %s25, 8
        %s540 = sadd.s32 %s539, 8
        %p541 = scmp.lt.s32.totalorder %s24, 1
        %s542 = scalar_select %p541, %s24, 1
        %p543 = scmp.lt.s32.totalorder %s540, 8
        %s544 = scalar_select %p543, %s540, 8
        %s545 = smul.addr %s544, 2
        %s546 = smul.addr %s542, 18
        %s547 = sadd.s32 %s545, %s546
        %s548 = smul.addr %s547, 4
        %s549 = scalar_lea.vmem %s8, %s548
        %s550 = smul.u32 %s25, 8
        %s551 = sadd.s32 %s550, 8
      $region60: #{a_call__.4} parent=23 // pred_fallthru
        _
    $region24: #{a_call__.4} parent=5 // pred_fallthru
      _
    %p552 = scmp.le.s32.totalorder 1, %s17
    %p553 = scmp.lt.s32.totalorder %s17, 3
    %p554 = pnand %p552, %p553
    %p555 = pneg %p554
    // Predicated region
    $region61: #{a_call__.4} parent=5 // pred_check
      _
    $region62: #{a_call__.4} parent=5 // pred_check_branch
      %557 = sbr.rel (%p554) target = $region64
    $region63: #{a_call__.4} parent=5 // pred_region
      %s558 = ssub.s32 %s17, 1
      %s559 = smul.u32 %s27, 8
      %p560 = scmp.lt.s32.totalorder %s26, 1
      %s561 = scalar_select %p560, %s26, 1
      %p562 = scmp.lt.s32.totalorder %s559, 8
      %s563 = scalar_select %p562, %s559, 8
      %s564 = smul.addr %s563, 2
      %s565 = smul.addr %s561, 18
      %s566 = sadd.s32 %s564, %s565
      %s567 = smul.addr %s566, 4
      %s568 = scalar_lea.vmem %s0, %s567
      %p569 = pneg %p59
      %p570 = pneg %p56
      %s571 = smul.u32 %s27, 8
      %s572 = sadd.s32 %s571, 1
      %p573 = scmp.lt.s32.totalorder %s26, 1
      %s574 = scalar_select %p573, %s26, 1
      %p575 = scmp.lt.s32.totalorder %s572, 8
      %s576 = scalar_select %p575, %s572, 8
      %s577 = smul.addr %s576, 2
      %s578 = smul.addr %s574, 18
      %s579 = sadd.s32 %s577, %s578
      %s580 = smul.addr %s579, 4
      %s581 = scalar_lea.vmem %s1, %s580
      %p582 = pneg %p91
      %p583 = pneg %p88
      %s584 = smul.u32 %s27, 8
      %s585 = sadd.s32 %s584, 2
      %p586 = scmp.lt.s32.totalorder %s26, 1
      %s587 = scalar_select %p586, %s26, 1
      %p588 = scmp.lt.s32.totalorder %s585, 8
      %s589 = scalar_select %p588, %s585, 8
      %s590 = smul.addr %s589, 2
      %s591 = smul.addr %s587, 18
      %s592 = sadd.s32 %s590, %s591
      %s593 = smul.addr %s592, 4
      %s594 = scalar_lea.vmem %s2, %s593
      %p595 = pneg %p123
      %p596 = pneg %p120
      %s597 = smul.u32 %s27, 8
      %s598 = sadd.s32 %s597, 3
      %p599 = scmp.lt.s32.totalorder %s26, 1
      %s600 = scalar_select %p599, %s26, 1
      %p601 = scmp.lt.s32.totalorder %s598, 8
      %s602 = scalar_select %p601, %s598, 8
      %s603 = smul.addr %s602, 2
      %s604 = smul.addr %s600, 18
      %s605 = sadd.s32 %s603, %s604
      %s606 = smul.addr %s605, 4
      %s607 = scalar_lea.vmem %s3, %s606
      %p608 = pneg %p155
      %p609 = pneg %p152
      %s610 = smul.u32 %s27, 8
      %s611 = sadd.s32 %s610, 4
      %p612 = scmp.lt.s32.totalorder %s26, 1
      %s613 = scalar_select %p612, %s26, 1
      %p614 = scmp.lt.s32.totalorder %s611, 8
      %s615 = scalar_select %p614, %s611, 8
      %s616 = smul.addr %s615, 2
      %s617 = smul.addr %s613, 18
      %s618 = sadd.s32 %s616, %s617
      %s619 = smul.addr %s618, 4
      %s620 = scalar_lea.vmem %s4, %s619
      %p621 = pneg %p187
      %p622 = pneg %p184
      %s623 = smul.u32 %s27, 8
      %s624 = sadd.s32 %s623, 5
      %p625 = scmp.lt.s32.totalorder %s26, 1
      %s626 = scalar_select %p625, %s26, 1
      %p627 = scmp.lt.s32.totalorder %s624, 8
      %s628 = scalar_select %p627, %s624, 8
      %s629 = smul.addr %s628, 2
      %s630 = smul.addr %s626, 18
      %s631 = sadd.s32 %s629, %s630
      %s632 = smul.addr %s631, 4
      %s633 = scalar_lea.vmem %s5, %s632
      %p634 = pneg %p219
      %p635 = pneg %p216
      %s636 = smul.u32 %s27, 8
      %s637 = sadd.s32 %s636, 6
      %p638 = scmp.lt.s32.totalorder %s26, 1
      %s639 = scalar_select %p638, %s26, 1
      %p640 = scmp.lt.s32.totalorder %s637, 8
      %s641 = scalar_select %p640, %s637, 8
      %s642 = smul.addr %s641, 2
      %s643 = smul.addr %s639, 18
      %s644 = sadd.s32 %s642, %s643
      %s645 = smul.addr %s644, 4
      %s646 = scalar_lea.vmem %s6, %s645
      %p647 = pneg %p251
      %p648 = pneg %p248
      %s649 = smul.u32 %s27, 8
      %s650 = sadd.s32 %s649, 7
      %p651 = scmp.lt.s32.totalorder %s26, 1
      %s652 = scalar_select %p651, %s26, 1
      %p653 = scmp.lt.s32.totalorder %s650, 8
      %s654 = scalar_select %p653, %s650, 8
      %s655 = smul.addr %s654, 2
      %s656 = smul.addr %s652, 18
      %s657 = sadd.s32 %s655, %s656
      %s658 = smul.addr %s657, 4
      %s659 = scalar_lea.vmem %s7, %s658
      %p660 = pneg %p283
      %p661 = pneg %p280
      %s662 = smul.u32 %s27, 8
      %s663 = sadd.s32 %s662, 8
      %p664 = scmp.lt.s32.totalorder %s26, 1
      %s665 = scalar_select %p664, %s26, 1
      %p666 = scmp.lt.s32.totalorder %s663, 8
      %s667 = scalar_select %p666, %s663, 8
      %s668 = smul.addr %s667, 2
      %s669 = smul.addr %s665, 18
      %s670 = sadd.s32 %s668, %s669
      %s671 = smul.addr %s670, 4
      %s672 = scalar_lea.vmem %s8, %s671
      %p673 = pneg %p315
      %p674 = pneg %p312
      %p675 = pneg %p336
      %p676 = pneg %p333
      %p677 = pneg %p357
      %p678 = pneg %p354
      %p679 = pneg %p385
      %p680 = pneg %p382
      %s681 = smul.u32 4, %s27
      %p682 = scmp.lt.s32.totalorder %s26, 1
      %s683 = scalar_select %p682, %s26, 1
      %p684 = scmp.lt.s32.totalorder %s681, 3
      %s685 = scalar_select %p684, %s681, 3
      %s686 = smul.addr %s683, 4
      %s687 = sadd.s32 %s685, %s686
      %s688 = smul.addr %s687, 2
      %s689 = scalar_lea.vmem %s11, %s688
      %s690 = smul.u32 %s27, 8
      %p691 = scmp.lt.s32.totalorder %s26, 1
      %s692 = scalar_select %p691, %s26, 1
      %p693 = scmp.lt.s32.totalorder %s690, 8
      %s694 = scalar_select %p693, %s690, 8
      %s695 = smul.addr %s694, 2
      %s696 = smul.addr %s692, 18
      %s697 = sadd.s32 %s695, %s696
      %s698 = smul.addr %s697, 4
      %s699 = scalar_lea.vmem %s0, %s698
      %s700 = smul.u32 %s27, 8
      %s701 = smul.u32 %s27, 8
      %s702 = sadd.s32 %s701, 1
      %p703 = scmp.lt.s32.totalorder %s26, 1
      %s704 = scalar_select %p703, %s26, 1
      %p705 = scmp.lt.s32.totalorder %s702, 8
      %s706 = scalar_select %p705, %s702, 8
      %s707 = smul.addr %s706, 2
      %s708 = smul.addr %s704, 18
      %s709 = sadd.s32 %s707, %s708
      %s710 = smul.addr %s709, 4
      %s711 = scalar_lea.vmem %s1, %s710
      %s712 = smul.u32 %s27, 8
      %s713 = sadd.s32 %s712, 1
      %s714 = smul.u32 %s27, 8
      %s715 = sadd.s32 %s714, 2
      %p716 = scmp.lt.s32.totalorder %s26, 1
      %s717 = scalar_select %p716, %s26, 1
      %p718 = scmp.lt.s32.totalorder %s715, 8
      %s719 = scalar_select %p718, %s715, 8
      %s720 = smul.addr %s719, 2
      %s721 = smul.addr %s717, 18
      %s722 = sadd.s32 %s720, %s721
      %s723 = smul.addr %s722, 4
      %s724 = scalar_lea.vmem %s2, %s723
      %s725 = smul.u32 %s27, 8
      %s726 = sadd.s32 %s725, 2
      %s727 = smul.u32 %s27, 8
      %s728 = sadd.s32 %s727, 3
      %p729 = scmp.lt.s32.totalorder %s26, 1
      %s730 = scalar_select %p729, %s26, 1
      %p731 = scmp.lt.s32.totalorder %s728, 8
      %s732 = scalar_select %p731, %s728, 8
      %s733 = smul.addr %s732, 2
      %s734 = smul.addr %s730, 18
      %s735 = sadd.s32 %s733, %s734
      %s736 = smul.addr %s735, 4
      %s737 = scalar_lea.vmem %s3, %s736
      %s738 = smul.u32 %s27, 8
      %s739 = sadd.s32 %s738, 3
      %s740 = smul.u32 %s27, 8
      %s741 = sadd.s32 %s740, 4
      %p742 = scmp.lt.s32.totalorder %s26, 1
      %s743 = scalar_select %p742, %s26, 1
      %p744 = scmp.lt.s32.totalorder %s741, 8
      %s745 = scalar_select %p744, %s741, 8
      %s746 = smul.addr %s745, 2
      %s747 = smul.addr %s743, 18
      %s748 = sadd.s32 %s746, %s747
      %s749 = smul.addr %s748, 4
      %s750 = scalar_lea.vmem %s4, %s749
      %s751 = smul.u32 %s27, 8
      %s752 = sadd.s32 %s751, 4
      %s753 = smul.u32 %s27, 8
      %s754 = sadd.s32 %s753, 5
      %p755 = scmp.lt.s32.totalorder %s26, 1
      %s756 = scalar_select %p755, %s26, 1
      %p757 = scmp.lt.s32.totalorder %s754, 8
      %s758 = scalar_select %p757, %s754, 8
      %s759 = smul.addr %s758, 2
      %s760 = smul.addr %s756, 18
      %s761 = sadd.s32 %s759, %s760
      %s762 = smul.addr %s761, 4
      %s763 = scalar_lea.vmem %s5, %s762
      %s764 = smul.u32 %s27, 8
      %s765 = sadd.s32 %s764, 5
      %s766 = smul.u32 %s27, 8
      %s767 = sadd.s32 %s766, 6
      %p768 = scmp.lt.s32.totalorder %s26, 1
      %s769 = scalar_select %p768, %s26, 1
      %p770 = scmp.lt.s32.totalorder %s767, 8
      %s771 = scalar_select %p770, %s767, 8
      %s772 = smul.addr %s771, 2
      %s773 = smul.addr %s769, 18
      %s774 = sadd.s32 %s772, %s773
      %s775 = smul.addr %s774, 4
      %s776 = scalar_lea.vmem %s6, %s775
      %s777 = smul.u32 %s27, 8
      %s778 = sadd.s32 %s777, 6
      %s779 = smul.u32 %s27, 8
      %s780 = sadd.s32 %s779, 7
      %p781 = scmp.lt.s32.totalorder %s26, 1
      %s782 = scalar_select %p781, %s26, 1
      %p783 = scmp.lt.s32.totalorder %s780, 8
      %s784 = scalar_select %p783, %s780, 8
      %s785 = smul.addr %s784, 2
      %s786 = smul.addr %s782, 18
      %s787 = sadd.s32 %s785, %s786
      %s788 = smul.addr %s787, 4
      %s789 = scalar_lea.vmem %s7, %s788
      %s790 = smul.u32 %s27, 8
      %s791 = sadd.s32 %s790, 7
      %s792 = smul.u32 %s27, 8
      %s793 = sadd.s32 %s792, 8
      %p794 = scmp.lt.s32.totalorder %s26, 1
      %s795 = scalar_select %p794, %s26, 1
      %p796 = scmp.lt.s32.totalorder %s793, 8
      %s797 = scalar_select %p796, %s793, 8
      %s798 = smul.addr %s797, 2
      %s799 = smul.addr %s795, 18
      %s800 = sadd.s32 %s798, %s799
      %s801 = smul.addr %s800, 4
      %s802 = scalar_lea.vmem %s8, %s801
      %s803 = smul.u32 %s27, 8
      %s804 = sadd.s32 %s803, 8
      %s805 = smul.u32 4, %s27
      %p806 = scmp.lt.s32.totalorder %s26, 1
      %s807 = scalar_select %p806, %s26, 1
      %p808 = scmp.lt.s32.totalorder %s805, 3
      %s809 = scalar_select %p808, %s805, 3
      %s810 = smul.addr %s807, 4
      %s811 = sadd.s32 %s809, %s810
      %s812 = smul.addr %s811, 2
      %s813 = scalar_lea.vmem %s11, %s812
      %s814 = smul.u32 4, %s27
      %v816 = vld [vmem:[%s9] sm:$0xf]
      %v817 = vld [vmem:[%s9 + $0x4] sm:$0xf]
      %v818 = vld [vmem:[%s9 + $0x8] sm:$0xf]
      %v819 = vld [vmem:[%s9 + $0xc] sm:$0xf]
      %v820 = vld [vmem:[%s9 + $0x10] sm:$0xf]
      %v821 = vld [vmem:[%s9 + $0x14] sm:$0xf]
      %v822 = vld [vmem:[%s9 + $0x18] sm:$0xf]
      %v823 = vld [vmem:[%s9 + $0x1c] sm:$0xf]
      %v824 = vld [vmem:[%s9 + $0x20] sm:$0xf]
      %v825 = vld [vmem:[%s9 + $0x24] sm:$0xf]
      %v826 = vld [vmem:[%s9 + $0x28] sm:$0xf]
      %v827 = vld [vmem:[%s9 + $0x2c] sm:$0xf]
      %v828 = vld [vmem:[%s9 + $0x30] sm:$0xf]
      %v829 = vld [vmem:[%s9 + $0x34] sm:$0xf]
      %v830 = vld [vmem:[%s9 + $0x38] sm:$0xf]
      %v831 = vld [vmem:[%s9 + $0x3c] sm:$0xf]
      %v832 = vld [vmem:[%s9 + $0x40] sm:$0xf]
      %v833 = vld [vmem:[%s9 + $0x44] sm:$0xf]
      %v834 = vld [vmem:[%s10] sm:$0x1]
      %v835 = vld [vmem:[%s699] sm:$0x7]
      %v836 = vld [vmem:[%s699 + $0x4] sm:$0x7]
      %v837 = vld [vmem:[%s711] sm:$0x7]
      %v838 = vld [vmem:[%s711 + $0x4] sm:$0x7]
      %v839 = vld [vmem:[%s724] sm:$0x7]
      %v840 = vld [vmem:[%s724 + $0x4] sm:$0x7]
      %v841 = vld [vmem:[%s737] sm:$0x7]
      %v842 = vld [vmem:[%s737 + $0x4] sm:$0x7]
      %v843 = vld [vmem:[%s750] sm:$0x7]
      %v844 = vld [vmem:[%s750 + $0x4] sm:$0x7]
      %v845 = vld [vmem:[%s763] sm:$0x7]
      %v846 = vld [vmem:[%s763 + $0x4] sm:$0x7]
      %v847 = vld [vmem:[%s776] sm:$0x7]
      %v848 = vld [vmem:[%s776 + $0x4] sm:$0x7]
      %v849 = vld [vmem:[%s789] sm:$0x7]
      %v850 = vld [vmem:[%s789 + $0x4] sm:$0x7]
      %v851 = vld [vmem:[%s802] sm:$0x7]
      %v852 = vld [vmem:[%s802 + $0x4] sm:$0x7]
      %v855 = vunpack.c.l.b16 %v818
      %v856 = vunpack.c.l.b16 %v819
      %v857 = vpack.c.b16 %v856, %v855
      %vm859 = vcmask 130048
      %v861 = vsel %vm859, %v836, 0
      %863 = vmatprep.subr.bf16.mxu0 0
      %864 = vmatpush1.bf16.msra.mxu0 %v857
      %865 = vmatprep.subr.bf16.mxu0 0
      %866 = vmatpush1.bf16.msra.mxu0 0
      %867 = vmatprep.subr.bf16.mxu0 0
      %868 = vmatpush1.bf16.msra.mxu0 0
      %869 = vmatprep.subr.bf16.mxu0 0
      %870 = vmatpush1.bf16.msra.mxu0 0
      %871 = vmatprep.subr.bf16.mxu0 0
      %872 = vmatpush1.bf16.msra.mxu0 0
      %873 = vmatprep.subr.bf16.mxu0 0
      %874 = vmatpush1.bf16.msra.mxu0 0
      %875 = vmatprep.subr.bf16.mxu0 0
      %876 = vmatpush1.bf16.msra.mxu0 0
      %877 = vmatprep.subr.bf16.mxu0 0
      %878 = vmatpush1.bf16.msra.mxu0 0
      %879 = vmatprep.subr.bf16.mxu0 0
      %880 = vmatpush1.bf16.msra.mxu0 0
      %881 = vmatprep.subr.bf16.mxu0 0
      %882 = vmatpush1.bf16.msra.mxu0 0
      %883 = vmatprep.subr.bf16.mxu0 0
      %884 = vmatpush1.bf16.msra.mxu0 0
      %885 = vmatprep.subr.bf16.mxu0 0
      %886 = vmatpush1.bf16.msra.mxu0 0
      %887 = vmatprep.subr.bf16.mxu0 0
      %888 = vmatpush1.bf16.msra.mxu0 0
      %889 = vmatprep.subr.bf16.mxu0 0
      %890 = vmatpush1.bf16.msra.mxu0 0
      %891 = vmatprep.subr.bf16.mxu0 0
      %892 = vmatpush1.bf16.msra.mxu0 0
      %893 = vmatprep.subr.bf16.mxu0 0
      %894 = vmatpush1.bf16.msra.mxu0 0
      %895 = vmatprep.mubr.bf16.mxu0 0
      %896 = vmatmul.mubr.bf16.gmra.mrb[0].mxu0 %v861
      %v897 = vpop.f32.mrb[0].mxu0
      %v898 = vadd.f32 0.0, %v897
      %v899 = vpop.f32.mrb[0].mxu0
      %v900 = vpop.f32.mrb[0].mxu0
      %v901 = vpop.f32.mrb[0].mxu0
      %902 = vdwg.mxu0
      %v905 = vunpack.c.l.b16 %v816
      %v906 = vunpack.c.l.b16 %v817
      %v907 = vpack.c.b16 %v906, %v905
      %v910 = vsel %vm859, %v835, 0
      %912 = vmatprep.subr.bf16.mxu0 0
      %913 = vmatpush1.bf16.msra.mxu0 %v907
      %914 = vmatprep.subr.bf16.mxu0 0
      %915 = vmatpush1.bf16.msra.mxu0 0
      %916 = vmatprep.subr.bf16.mxu0 0
      %917 = vmatpush1.bf16.msra.mxu0 0
      %918 = vmatprep.subr.bf16.mxu0 0
      %919 = vmatpush1.bf16.msra.mxu0 0
      %920 = vmatprep.subr.bf16.mxu0 0
      %921 = vmatpush1.bf16.msra.mxu0 0
      %922 = vmatprep.subr.bf16.mxu0 0
      %923 = vmatpush1.bf16.msra.mxu0 0
      %924 = vmatprep.subr.bf16.mxu0 0
      %925 = vmatpush1.bf16.msra.mxu0 0
      %926 = vmatprep.subr.bf16.mxu0 0
      %927 = vmatpush1.bf16.msra.mxu0 0
      %928 = vmatprep.subr.bf16.mxu0 0
      %929 = vmatpush1.bf16.msra.mxu0 0
      %930 = vmatprep.subr.bf16.mxu0 0
      %931 = vmatpush1.bf16.msra.mxu0 0
      %932 = vmatprep.subr.bf16.mxu0 0
      %933 = vmatpush1.bf16.msra.mxu0 0
      %934 = vmatprep.subr.bf16.mxu0 0
      %935 = vmatpush1.bf16.msra.mxu0 0
      %936 = vmatprep.subr.bf16.mxu0 0
      %937 = vmatpush1.bf16.msra.mxu0 0
      %938 = vmatprep.subr.bf16.mxu0 0
      %939 = vmatpush1.bf16.msra.mxu0 0
      %940 = vmatprep.subr.bf16.mxu0 0
      %941 = vmatpush1.bf16.msra.mxu0 0
      %942 = vmatprep.subr.bf16.mxu0 0
      %943 = vmatpush1.bf16.msra.mxu0 0
      %944 = vmatprep.mubr.bf16.mxu0 0
      %945 = vmatmul.mubr.bf16.gmra.mrb[0].mxu0 %v910
      %v946 = vpop.f32.mrb[0].mxu0
      %v947 = vadd.f32 %v898, %v946
      %v948 = vpop.f32.mrb[0].mxu0
      %v949 = vpop.f32.mrb[0].mxu0
      %v950 = vpop.f32.mrb[0].mxu0
      %951 = vdwg.mxu0
      %v953 = vunpack.c.l.b16 %v835
      %v954 = vpack.c.b16 %v953, %v953
      %v956 = vshrl.u32 %v954, 16
      %v958 = vshll.u32 %v954, 16
      %v960 = vrot.slane %v958, 1
      %v961 = vor.u32 %v956, %v960
      %v964 = vunpack.c.l.b16 %v820
      %v965 = vunpack.c.l.b16 %v821
      %v966 = vpack.c.b16 %v965, %v964
      %v969 = vsel %vm859, %v961, 0
      %971 = vmatprep.subr.bf16.mxu0 0
      %972 = vmatpush1.bf16.msra.mxu0 %v966
      %973 = vmatprep.subr.bf16.mxu0 0
      %974 = vmatpush1.bf16.msra.mxu0 0
      %975 = vmatprep.subr.bf16.mxu0 0
      %976 = vmatpush1.bf16.msra.mxu0 0
      %977 = vmatprep.subr.bf16.mxu0 0
      %978 = vmatpush1.bf16.msra.mxu0 0
      %979 = vmatprep.subr.bf16.mxu0 0
      %980 = vmatpush1.bf16.msra.mxu0 0
      %981 = vmatprep.subr.bf16.mxu0 0
      %982 = vmatpush1.bf16.msra.mxu0 0
      %983 = vmatprep.subr.bf16.mxu0 0
      %984 = vmatpush1.bf16.msra.mxu0 0
      %985 = vmatprep.subr.bf16.mxu0 0
      %986 = vmatpush1.bf16.msra.mxu0 0
      %987 = vmatprep.subr.bf16.mxu0 0
      %988 = vmatpush1.bf16.msra.mxu0 0
      %989 = vmatprep.subr.bf16.mxu0 0
      %990 = vmatpush1.bf16.msra.mxu0 0
      %991 = vmatprep.subr.bf16.mxu0 0
      %992 = vmatpush1.bf16.msra.mxu0 0
      %993 = vmatprep.subr.bf16.mxu0 0
      %994 = vmatpush1.bf16.msra.mxu0 0
      %995 = vmatprep.subr.bf16.mxu0 0
      %996 = vmatpush1.bf16.msra.mxu0 0
      %997 = vmatprep.subr.bf16.mxu0 0
      %998 = vmatpush1.bf16.msra.mxu0 0
      %999 = vmatprep.subr.bf16.mxu0 0
      %1000 = vmatpush1.bf16.msra.mxu0 0
      %1001 = vmatprep.subr.bf16.mxu0 0
      %1002 = vmatpush1.bf16.msra.mxu0 0
      %1003 = vmatprep.mubr.bf16.mxu0 0
      %1004 = vmatmul.mubr.bf16.gmra.mrb[0].mxu0 %v969
      %v1005 = vpop.f32.mrb[0].mxu0
      %v1006 = vadd.f32 0.0, %v1005
      %v1007 = vpop.f32.mrb[0].mxu0
      %v1008 = vpop.f32.mrb[0].mxu0
      %v1009 = vpop.f32.mrb[0].mxu0
      %1010 = vdwg.mxu0
      %v1011 = vadd.f32 %v947, %v1006
      %v1014 = vunpack.c.l.b16 %v822
      %v1015 = vunpack.c.l.b16 %v823
      %v1016 = vpack.c.b16 %v1015, %v1014
      %v1019 = vsel %vm859, %v837, 0
      %1021 = vmatprep.subr.bf16.mxu0 0
      %1022 = vmatpush1.bf16.msra.mxu0 %v1016
      %1023 = vmatprep.subr.bf16.mxu0 0
      %1024 = vmatpush1.bf16.msra.mxu0 0
      %1025 = vmatprep.subr.bf16.mxu0 0
      %1026 = vmatpush1.bf16.msra.mxu0 0
      %1027 = vmatprep.subr.bf16.mxu0 0
      %1028 = vmatpush1.bf16.msra.mxu0 0
      %1029 = vmatprep.subr.bf16.mxu0 0
      %1030 = vmatpush1.bf16.msra.mxu0 0
      %1031 = vmatprep.subr.bf16.mxu0 0
      %1032 = vmatpush1.bf16.msra.mxu0 0
      %1033 = vmatprep.subr.bf16.mxu0 0
      %1034 = vmatpush1.bf16.msra.mxu0 0
      %1035 = vmatprep.subr.bf16.mxu0 0
      %1036 = vmatpush1.bf16.msra.mxu0 0
      %1037 = vmatprep.subr.bf16.mxu0 0
      %1038 = vmatpush1.bf16.msra.mxu0 0
      %1039 = vmatprep.subr.bf16.mxu0 0
      %1040 = vmatpush1.bf16.msra.mxu0 0
      %1041 = vmatprep.subr.bf16.mxu0 0
      %1042 = vmatpush1.bf16.msra.mxu0 0
      %1043 = vmatprep.subr.bf16.mxu0 0
      %1044 = vmatpush1.bf16.msra.mxu0 0
      %1045 = vmatprep.subr.bf16.mxu0 0
      %1046 = vmatpush1.bf16.msra.mxu0 0
      %1047 = vmatprep.subr.bf16.mxu0 0
      %1048 = vmatpush1.bf16.msra.mxu0 0
      %1049 = vmatprep.subr.bf16.mxu0 0
      %1050 = vmatpush1.bf16.msra.mxu0 0
      %1051 = vmatprep.subr.bf16.mxu0 0
      %1052 = vmatpush1.bf16.msra.mxu0 0
      %1053 = vmatprep.mubr.bf16.mxu0 0
      %1054 = vmatmul.mubr.bf16.gmra.mrb[0].mxu0 %v1019
      %v1055 = vpop.f32.mrb[0].mxu0
      %v1056 = vadd.f32 0.0, %v1055
      %v1057 = vpop.f32.mrb[0].mxu0
      %v1058 = vpop.f32.mrb[0].mxu0
      %v1059 = vpop.f32.mrb[0].mxu0
      %1060 = vdwg.mxu0
      %v1061 = vadd.f32 %v1011, %v1056
      %v1064 = vunpack.c.l.b16 %v824
      %v1065 = vunpack.c.l.b16 %v825
      %v1066 = vpack.c.b16 %v1065, %v1064
      %v1069 = vsel %vm859, %v838, 0
      %1071 = vmatprep.subr.bf16.mxu0 0
      %1072 = vmatpush1.bf16.msra.mxu0 %v1066
      %1073 = vmatprep.subr.bf16.mxu0 0
      %1074 = vmatpush1.bf16.msra.mxu0 0
      %1075 = vmatprep.subr.bf16.mxu0 0
      %1076 = vmatpush1.bf16.msra.mxu0 0
      %1077 = vmatprep.subr.bf16.mxu0 0
      %1078 = vmatpush1.bf16.msra.mxu0 0
      %1079 = vmatprep.subr.bf16.mxu0 0
      %1080 = vmatpush1.bf16.msra.mxu0 0
      %1081 = vmatprep.subr.bf16.mxu0 0
      %1082 = vmatpush1.bf16.msra.mxu0 0
      %1083 = vmatprep.subr.bf16.mxu0 0
      %1084 = vmatpush1.bf16.msra.mxu0 0
      %1085 = vmatprep.subr.bf16.mxu0 0
      %1086 = vmatpush1.bf16.msra.mxu0 0
      %1087 = vmatprep.subr.bf16.mxu0 0
      %1088 = vmatpush1.bf16.msra.mxu0 0
      %1089 = vmatprep.subr.bf16.mxu0 0
      %1090 = vmatpush1.bf16.msra.mxu0 0
      %1091 = vmatprep.subr.bf16.mxu0 0
      %1092 = vmatpush1.bf16.msra.mxu0 0
      %1093 = vmatprep.subr.bf16.mxu0 0
      %1094 = vmatpush1.bf16.msra.mxu0 0
      %1095 = vmatprep.subr.bf16.mxu0 0
      %1096 = vmatpush1.bf16.msra.mxu0 0
      %1097 = vmatprep.subr.bf16.mxu0 0
      %1098 = vmatpush1.bf16.msra.mxu0 0
      %1099 = vmatprep.subr.bf16.mxu0 0
      %1100 = vmatpush1.bf16.msra.mxu0 0
      %1101 = vmatprep.subr.bf16.mxu0 0
      %1102 = vmatpush1.bf16.msra.mxu0 0
      %1103 = vmatprep.mubr.bf16.mxu0 0
      %1104 = vmatmul.mubr.bf16.gmra.mrb[0].mxu0 %v1069
      %v1105 = vpop.f32.mrb[0].mxu0
      %v1106 = vadd.f32 0.0, %v1105
      %v1107 = vpop.f32.mrb[0].mxu0
      %v1108 = vpop.f32.mrb[0].mxu0
      %v1109 = vpop.f32.mrb[0].mxu0
      %1110 = vdwg.mxu0
      %v1111 = vadd.f32 %v1061, %v1106
      %v1113 = vunpack.c.l.b16 %v837
      %v1114 = vpack.c.b16 %v1113, %v1113
      %v1116 = vshrl.u32 %v1114, 16
      %v1118 = vshll.u32 %v1114, 16
      %v1120 = vrot.slane %v1118, 1
      %v1121 = vor.u32 %v1116, %v1120
      %v1124 = vunpack.c.l.b16 %v826
      %v1125 = vunpack.c.l.b16 %v827
      %v1126 = vpack.c.b16 %v1125, %v1124
      %v1129 = vsel %vm859, %v1121, 0
      %1131 = vmatprep.subr.bf16.mxu0 0
      %1132 = vmatpush1.bf16.msra.mxu0 %v1126
      %1133 = vmatprep.subr.bf16.mxu0 0
      %1134 = vmatpush1.bf16.msra.mxu0 0
      %1135 = vmatprep.subr.bf16.mxu0 0
      %1136 = vmatpush1.bf16.msra.mxu0 0
      %1137 = vmatprep.subr.bf16.mxu0 0
      %1138 = vmatpush1.bf16.msra.mxu0 0
      %1139 = vmatprep.subr.bf16.mxu0 0
      %1140 = vmatpush1.bf16.msra.mxu0 0
      %1141 = vmatprep.subr.bf16.mxu0 0
      %1142 = vmatpush1.bf16.msra.mxu0 0
      %1143 = vmatprep.subr.bf16.mxu0 0
      %1144 = vmatpush1.bf16.msra.mxu0 0
      %1145 = vmatprep.subr.bf16.mxu0 0
      %1146 = vmatpush1.bf16.msra.mxu0 0
      %1147 = vmatprep.subr.bf16.mxu0 0
      %1148 = vmatpush1.bf16.msra.mxu0 0
      %1149 = vmatprep.subr.bf16.mxu0 0
      %1150 = vmatpush1.bf16.msra.mxu0 0
      %1151 = vmatprep.subr.bf16.mxu0 0
      %1152 = vmatpush1.bf16.msra.mxu0 0
      %1153 = vmatprep.subr.bf16.mxu0 0
      %1154 = vmatpush1.bf16.msra.mxu0 0
      %1155 = vmatprep.subr.bf16.mxu0 0
      %1156 = vmatpush1.bf16.msra.mxu0 0
      %1157 = vmatprep.subr.bf16.mxu0 0
      %1158 = vmatpush1.bf16.msra.mxu0 0
      %1159 = vmatprep.subr.bf16.mxu0 0
      %1160 = vmatpush1.bf16.msra.mxu0 0
      %1161 = vmatprep.subr.bf16.mxu0 0
      %1162 = vmatpush1.bf16.msra.mxu0 0
      %1163 = vmatprep.mubr.bf16.mxu0 0
      %1164 = vmatmul.mubr.bf16.gmra.mrb[0].mxu0 %v1129
      %v1165 = vpop.f32.mrb[0].mxu0
      %v1166 = vadd.f32 0.0, %v1165
      %v1167 = vpop.f32.mrb[0].mxu0
      %v1168 = vpop.f32.mrb[0].mxu0
      %v1169 = vpop.f32.mrb[0].mxu0
      %1170 = vdwg.mxu0
      %v1171 = vadd.f32 %v1111, %v1166
      %v1174 = vunpack.c.l.b16 %v828
      %v1175 = vunpack.c.l.b16 %v829
      %v1176 = vpack.c.b16 %v1175, %v1174
      %v1179 = vsel %vm859, %v839, 0
      %1181 = vmatprep.subr.bf16.mxu0 0
      %1182 = vmatpush1.bf16.msra.mxu0 %v1176
      %1183 = vmatprep.subr.bf16.mxu0 0
      %1184 = vmatpush1.bf16.msra.mxu0 0
      %1185 = vmatprep.subr.bf16.mxu0 0
      %1186 = vmatpush1.bf16.msra.mxu0 0
      %1187 = vmatprep.subr.bf16.mxu0 0
      %1188 = vmatpush1.bf16.msra.mxu0 0
      %1189 = vmatprep.subr.bf16.mxu0 0
      %1190 = vmatpush1.bf16.msra.mxu0 0
      %1191 = vmatprep.subr.bf16.mxu0 0
      %1192 = vmatpush1.bf16.msra.mxu0 0
      %1193 = vmatprep.subr.bf16.mxu0 0
      %1194 = vmatpush1.bf16.msra.mxu0 0
      %1195 = vmatprep.subr.bf16.mxu0 0
      %1196 = vmatpush1.bf16.msra.mxu0 0
      %1197 = vmatprep.subr.bf16.mxu0 0
      %1198 = vmatpush1.bf16.msra.mxu0 0
      %1199 = vmatprep.subr.bf16.mxu0 0
      %1200 = vmatpush1.bf16.msra.mxu0 0
      %1201 = vmatprep.subr.bf16.mxu0 0
      %1202 = vmatpush1.bf16.msra.mxu0 0
      %1203 = vmatprep.subr.bf16.mxu0 0
      %1204 = vmatpush1.bf16.msra.mxu0 0
      %1205 = vmatprep.subr.bf16.mxu0 0
      %1206 = vmatpush1.bf16.msra.mxu0 0
      %1207 = vmatprep.subr.bf16.mxu0 0
      %1208 = vmatpush1.bf16.msra.mxu0 0
      %1209 = vmatprep.subr.bf16.mxu0 0
      %1210 = vmatpush1.bf16.msra.mxu0 0
      %1211 = vmatprep.subr.bf16.mxu0 0
      %1212 = vmatpush1.bf16.msra.mxu0 0
      %1213 = vmatprep.mubr.bf16.mxu0 0
      %1214 = vmatmul.mubr.bf16.gmra.mrb[0].mxu0 %v1179
      %v1215 = vpop.f32.mrb[0].mxu0
      %v1216 = vadd.f32 0.0, %v1215
      %v1217 = vpop.f32.mrb[0].mxu0
      %v1218 = vpop.f32.mrb[0].mxu0
      %v1219 = vpop.f32.mrb[0].mxu0
      %1220 = vdwg.mxu0
      %v1221 = vadd.f32 %v1171, %v1216
      %v1224 = vunpack.c.l.b16 %v830
      %v1225 = vunpack.c.l.b16 %v831
      %v1226 = vpack.c.b16 %v1225, %v1224
      %v1229 = vsel %vm859, %v840, 0
      %1231 = vmatprep.subr.bf16.mxu0 0
      %1232 = vmatpush1.bf16.msra.mxu0 %v1226
      %1233 = vmatprep.subr.bf16.mxu0 0
      %1234 = vmatpush1.bf16.msra.mxu0 0
      %1235 = vmatprep.subr.bf16.mxu0 0
      %1236 = vmatpush1.bf16.msra.mxu0 0
      %1237 = vmatprep.subr.bf16.mxu0 0
      %1238 = vmatpush1.bf16.msra.mxu0 0
      %1239 = vmatprep.subr.bf16.mxu0 0
      %1240 = vmatpush1.bf16.msra.mxu0 0
      %1241 = vmatprep.subr.bf16.mxu0 0
      %1242 = vmatpush1.bf16.msra.mxu0 0
      %1243 = vmatprep.subr.bf16.mxu0 0
      %1244 = vmatpush1.bf16.msra.mxu0 0
      %1245 = vmatprep.subr.bf16.mxu0 0
      %1246 = vmatpush1.bf16.msra.mxu0 0
      %1247 = vmatprep.subr.bf16.mxu0 0
      %1248 = vmatpush1.bf16.msra.mxu0 0
      %1249 = vmatprep.subr.bf16.mxu0 0
      %1250 = vmatpush1.bf16.msra.mxu0 0
      %1251 = vmatprep.subr.bf16.mxu0 0
      %1252 = vmatpush1.bf16.msra.mxu0 0
      %1253 = vmatprep.subr.bf16.mxu0 0
      %1254 = vmatpush1.bf16.msra.mxu0 0
      %1255 = vmatprep.subr.bf16.mxu0 0
      %1256 = vmatpush1.bf16.msra.mxu0 0
      %1257 = vmatprep.subr.bf16.mxu0 0
      %1258 = vmatpush1.bf16.msra.mxu0 0
      %1259 = vmatprep.subr.bf16.mxu0 0
      %1260 = vmatpush1.bf16.msra.mxu0 0
      %1261 = vmatprep.subr.bf16.mxu0 0
      %1262 = vmatpush1.bf16.msra.mxu0 0
      %1263 = vmatprep.mubr.bf16.mxu0 0
      %1264 = vmatmul.mubr.bf16.gmra.mrb[0].mxu0 %v1229
      %v1265 = vpop.f32.mrb[0].mxu0
      %v1266 = vadd.f32 0.0, %v1265
      %v1267 = vpop.f32.mrb[0].mxu0
      %v1268 = vpop.f32.mrb[0].mxu0
      %v1269 = vpop.f32.mrb[0].mxu0
      %1270 = vdwg.mxu0
      %v1271 = vadd.f32 %v1221, %v1266
      %v1273 = vunpack.c.l.b16 %v839
      %v1274 = vpack.c.b16 %v1273, %v1273
      %v1276 = vshrl.u32 %v1274, 16
      %v1278 = vshll.u32 %v1274, 16
      %v1280 = vrot.slane %v1278, 1
      %v1281 = vor.u32 %v1276, %v1280
      %v1284 = vunpack.c.l.b16 %v832
      %v1285 = vunpack.c.l.b16 %v833
      %v1286 = vpack.c.b16 %v1285, %v1284
      %v1289 = vsel %vm859, %v1281, 0
      %1291 = vmatprep.subr.bf16.mxu0 0
      %1292 = vmatpush1.bf16.msra.mxu0 %v1286
      %1293 = vmatprep.subr.bf16.mxu0 0
      %1294 = vmatpush1.bf16.msra.mxu0 0
      %1295 = vmatprep.subr.bf16.mxu0 0
      %1296 = vmatpush1.bf16.msra.mxu0 0
      %1297 = vmatprep.subr.bf16.mxu0 0
      %1298 = vmatpush1.bf16.msra.mxu0 0
      %1299 = vmatprep.subr.bf16.mxu0 0
      %1300 = vmatpush1.bf16.msra.mxu0 0
      %1301 = vmatprep.subr.bf16.mxu0 0
      %1302 = vmatpush1.bf16.msra.mxu0 0
      %1303 = vmatprep.subr.bf16.mxu0 0
      %1304 = vmatpush1.bf16.msra.mxu0 0
      %1305 = vmatprep.subr.bf16.mxu0 0
      %1306 = vmatpush1.bf16.msra.mxu0 0
      %1307 = vmatprep.subr.bf16.mxu0 0
      %1308 = vmatpush1.bf16.msra.mxu0 0
      %1309 = vmatprep.subr.bf16.mxu0 0
      %1310 = vmatpush1.bf16.msra.mxu0 0
      %1311 = vmatprep.subr.bf16.mxu0 0
      %1312 = vmatpush1.bf16.msra.mxu0 0
      %1313 = vmatprep.subr.bf16.mxu0 0
      %1314 = vmatpush1.bf16.msra.mxu0 0
      %1315 = vmatprep.subr.bf16.mxu0 0
      %1316 = vmatpush1.bf16.msra.mxu0 0
      %1317 = vmatprep.subr.bf16.mxu0 0
      %1318 = vmatpush1.bf16.msra.mxu0 0
      %1319 = vmatprep.subr.bf16.mxu0 0
      %1320 = vmatpush1.bf16.msra.mxu0 0
      %1321 = vmatprep.subr.bf16.mxu0 0
      %1322 = vmatpush1.bf16.msra.mxu0 0
      %1323 = vmatprep.mubr.bf16.mxu0 0
      %1324 = vmatmul.mubr.bf16.gmra.mrb[0].mxu0 %v1289
      %v1325 = vpop.f32.mrb[0].mxu0
      %v1326 = vadd.f32 0.0, %v1325
      %v1327 = vpop.f32.mrb[0].mxu0
      %v1328 = vpop.f32.mrb[0].mxu0
      %v1329 = vpop.f32.mrb[0].mxu0
      %1330 = vdwg.mxu0
      %v1331 = vadd.f32 %v1271, %v1326
      %v1333 = vlaneseq
      %v1334 = vshrl.u32 %v1333, 7
      %v1335 = vsub.s32 0, %v1334
      %v1336 = vrot.slane %v834, %v1335
      %v1338 = vadd.f32 %v1331, %v1336
      %v1339 = vmax.f32 %v1338, 0.0
      %v1340 = vpack.c.bf16 %v1339, %v1339
      %vm1341 = vcmask 254976
      %1342 = vst.msk [vmem:[%s813] sm:$0x3] %vm1341, %v1340
      %1343 = vmatprep.subr.bf16.mxu0 0
      %1344 = vmatpush1.bf16.msra.mxu0 %v857
      %1345 = vmatprep.subr.bf16.mxu0 0
      %1346 = vmatpush1.bf16.msra.mxu0 0
      %1347 = vmatprep.subr.bf16.mxu0 0
      %1348 = vmatpush1.bf16.msra.mxu0 0
      %1349 = vmatprep.subr.bf16.mxu0 0
      %1350 = vmatpush1.bf16.msra.mxu0 0
      %1351 = vmatprep.subr.bf16.mxu0 0
      %1352 = vmatpush1.bf16.msra.mxu0 0
      %1353 = vmatprep.subr.bf16.mxu0 0
      %1354 = vmatpush1.bf16.msra.mxu0 0
      %1355 = vmatprep.subr.bf16.mxu0 0
      %1356 = vmatpush1.bf16.msra.mxu0 0
      %1357 = vmatprep.subr.bf16.mxu0 0
      %1358 = vmatpush1.bf16.msra.mxu0 0
      %1359 = vmatprep.subr.bf16.mxu0 0
      %1360 = vmatpush1.bf16.msra.mxu0 0
      %1361 = vmatprep.subr.bf16.mxu0 0
      %1362 = vmatpush1.bf16.msra.mxu0 0
      %1363 = vmatprep.subr.bf16.mxu0 0
      %1364 = vmatpush1.bf16.msra.mxu0 0
      %1365 = vmatprep.subr.bf16.mxu0 0
      %1366 = vmatpush1.bf16.msra.mxu0 0
      %1367 = vmatprep.subr.bf16.mxu0 0
      %1368 = vmatpush1.bf16.msra.mxu0 0
      %1369 = vmatprep.subr.bf16.mxu0 0
      %1370 = vmatpush1.bf16.msra.mxu0 0
      %1371 = vmatprep.subr.bf16.mxu0 0
      %1372 = vmatpush1.bf16.msra.mxu0 0
      %1373 = vmatprep.subr.bf16.mxu0 0
      %1374 = vmatpush1.bf16.msra.mxu0 0
      %1375 = vmatprep.mubr.bf16.mxu0 0
      %1376 = vmatmul.mubr.bf16.gmra.mrb[0].mxu0 %v1229
      %v1377 = vpop.f32.mrb[0].mxu0
      %v1378 = vadd.f32 0.0, %v1377
      %v1379 = vpop.f32.mrb[0].mxu0
      %v1380 = vpop.f32.mrb[0].mxu0
      %v1381 = vpop.f32.mrb[0].mxu0
      %1382 = vdwg.mxu0
      %1383 = vmatprep.subr.bf16.mxu0 0
      %1384 = vmatpush1.bf16.msra.mxu0 %v907
      %1385 = vmatprep.subr.bf16.mxu0 0
      %1386 = vmatpush1.bf16.msra.mxu0 0
      %1387 = vmatprep.subr.bf16.mxu0 0
      %1388 = vmatpush1.bf16.msra.mxu0 0
      %1389 = vmatprep.subr.bf16.mxu0 0
      %1390 = vmatpush1.bf16.msra.mxu0 0
      %1391 = vmatprep.subr.bf16.mxu0 0
      %1392 = vmatpush1.bf16.msra.mxu0 0
      %1393 = vmatprep.subr.bf16.mxu0 0
      %1394 = vmatpush1.bf16.msra.mxu0 0
      %1395 = vmatprep.subr.bf16.mxu0 0
      %1396 = vmatpush1.bf16.msra.mxu0 0
      %1397 = vmatprep.subr.bf16.mxu0 0
      %1398 = vmatpush1.bf16.msra.mxu0 0
      %1399 = vmatprep.subr.bf16.mxu0 0
      %1400 = vmatpush1.bf16.msra.mxu0 0
      %1401 = vmatprep.subr.bf16.mxu0 0
      %1402 = vmatpush1.bf16.msra.mxu0 0
      %1403 = vmatprep.subr.bf16.mxu0 0
      %1404 = vmatpush1.bf16.msra.mxu0 0
      %1405 = vmatprep.subr.bf16.mxu0 0
      %1406 = vmatpush1.bf16.msra.mxu0 0
      %1407 = vmatprep.subr.bf16.mxu0 0
      %1408 = vmatpush1.bf16.msra.mxu0 0
      %1409 = vmatprep.subr.bf16.mxu0 0
      %1410 = vmatpush1.bf16.msra.mxu0 0
      %1411 = vmatprep.subr.bf16.mxu0 0
      %1412 = vmatpush1.bf16.msra.mxu0 0
      %1413 = vmatprep.subr.bf16.mxu0 0
      %1414 = vmatpush1.bf16.msra.mxu0 0
      %1415 = vmatprep.mubr.bf16.mxu0 0
      %1416 = vmatmul.mubr.bf16.gmra.mrb[0].mxu0 %v1179
      %v1417 = vpop.f32.mrb[0].mxu0
      %v1418 = vadd.f32 %v1378, %v1417
      %v1419 = vpop.f32.mrb[0].mxu0
      %v1420 = vpop.f32.mrb[0].mxu0
      %v1421 = vpop.f32.mrb[0].mxu0
      %1422 = vdwg.mxu0
      %1423 = vmatprep.subr.bf16.mxu0 0
      %1424 = vmatpush1.bf16.msra.mxu0 %v966
      %1425 = vmatprep.subr.bf16.mxu0 0
      %1426 = vmatpush1.bf16.msra.mxu0 0
      %1427 = vmatprep.subr.bf16.mxu0 0
      %1428 = vmatpush1.bf16.msra.mxu0 0
      %1429 = vmatprep.subr.bf16.mxu0 0
      %1430 = vmatpush1.bf16.msra.mxu0 0
      %1431 = vmatprep.subr.bf16.mxu0 0
      %1432 = vmatpush1.bf16.msra.mxu0 0
      %1433 = vmatprep.subr.bf16.mxu0 0
      %1434 = vmatpush1.bf16.msra.mxu0 0
      %1435 = vmatprep.subr.bf16.mxu0 0
      %1436 = vmatpush1.bf16.msra.mxu0 0
      %1437 = vmatprep.subr.bf16.mxu0 0
      %1438 = vmatpush1.bf16.msra.mxu0 0
      %1439 = vmatprep.subr.bf16.mxu0 0
      %1440 = vmatpush1.bf16.msra.mxu0 0
      %1441 = vmatprep.subr.bf16.mxu0 0
      %1442 = vmatpush1.bf16.msra.mxu0 0
      %1443 = vmatprep.subr.bf16.mxu0 0
      %1444 = vmatpush1.bf16.msra.mxu0 0
      %1445 = vmatprep.subr.bf16.mxu0 0
      %1446 = vmatpush1.bf16.msra.mxu0 0
      %1447 = vmatprep.subr.bf16.mxu0 0
      %1448 = vmatpush1.bf16.msra.mxu0 0
      %1449 = vmatprep.subr.bf16.mxu0 0
      %1450 = vmatpush1.bf16.msra.mxu0 0
      %1451 = vmatprep.subr.bf16.mxu0 0
      %1452 = vmatpush1.bf16.msra.mxu0 0
      %1453 = vmatprep.subr.bf16.mxu0 0
      %1454 = vmatpush1.bf16.msra.mxu0 0
      %1455 = vmatprep.mubr.bf16.mxu0 0
      %1456 = vmatmul.mubr.bf16.gmra.mrb[0].mxu0 %v1289
      %v1457 = vpop.f32.mrb[0].mxu0
      %v1458 = vadd.f32 0.0, %v1457
      %v1459 = vpop.f32.mrb[0].mxu0
      %v1460 = vpop.f32.mrb[0].mxu0
      %v1461 = vpop.f32.mrb[0].mxu0
      %1462 = vdwg.mxu0
      %v1463 = vadd.f32 %v1418, %v1458
      %v1465 = vsel %vm859, %v841, 0
      %1467 = vmatprep.subr.bf16.mxu0 0
      %1468 = vmatpush1.bf16.msra.mxu0 %v1016
      %1469 = vmatprep.subr.bf16.mxu0 0
      %1470 = vmatpush1.bf16.msra.mxu0 0
      %1471 = vmatprep.subr.bf16.mxu0 0
      %1472 = vmatpush1.bf16.msra.mxu0 0
      %1473 = vmatprep.subr.bf16.mxu0 0
      %1474 = vmatpush1.bf16.msra.mxu0 0
      %1475 = vmatprep.subr.bf16.mxu0 0
      %1476 = vmatpush1.bf16.msra.mxu0 0
      %1477 = vmatprep.subr.bf16.mxu0 0
      %1478 = vmatpush1.bf16.msra.mxu0 0
      %1479 = vmatprep.subr.bf16.mxu0 0
      %1480 = vmatpush1.bf16.msra.mxu0 0
      %1481 = vmatprep.subr.bf16.mxu0 0
      %1482 = vmatpush1.bf16.msra.mxu0 0
      %1483 = vmatprep.subr.bf16.mxu0 0
      %1484 = vmatpush1.bf16.msra.mxu0 0
      %1485 = vmatprep.subr.bf16.mxu0 0
      %1486 = vmatpush1.bf16.msra.mxu0 0
      %1487 = vmatprep.subr.bf16.mxu0 0
      %1488 = vmatpush1.bf16.msra.mxu0 0
      %1489 = vmatprep.subr.bf16.mxu0 0
      %1490 = vmatpush1.bf16.msra.mxu0 0
      %1491 = vmatprep.subr.bf16.mxu0 0
      %1492 = vmatpush1.bf16.msra.mxu0 0
      %1493 = vmatprep.subr.bf16.mxu0 0
      %1494 = vmatpush1.bf16.msra.mxu0 0
      %1495 = vmatprep.subr.bf16.mxu0 0
      %1496 = vmatpush1.bf16.msra.mxu0 0
      %1497 = vmatprep.subr.bf16.mxu0 0
      %1498 = vmatpush1.bf16.msra.mxu0 0
      %1499 = vmatprep.mubr.bf16.mxu0 0
      %1500 = vmatmul.mubr.bf16.gmra.mrb[0].mxu0 %v1465
      %v1501 = vpop.f32.mrb[0].mxu0
      %v1502 = vadd.f32 0.0, %v1501
      %v1503 = vpop.f32.mrb[0].mxu0
      %v1504 = vpop.f32.mrb[0].mxu0
      %v1505 = vpop.f32.mrb[0].mxu0
      %1506 = vdwg.mxu0
      %v1507 = vadd.f32 %v1463, %v1502
      %v1509 = vsel %vm859, %v842, 0
      %1511 = vmatprep.subr.bf16.mxu0 0
      %1512 = vmatpush1.bf16.msra.mxu0 %v1066
      %1513 = vmatprep.subr.bf16.mxu0 0
      %1514 = vmatpush1.bf16.msra.mxu0 0
      %1515 = vmatprep.subr.bf16.mxu0 0
      %1516 = vmatpush1.bf16.msra.mxu0 0
      %1517 = vmatprep.subr.bf16.mxu0 0
      %1518 = vmatpush1.bf16.msra.mxu0 0
      %1519 = vmatprep.subr.bf16.mxu0 0
      %1520 = vmatpush1.bf16.msra.mxu0 0
      %1521 = vmatprep.subr.bf16.mxu0 0
      %1522 = vmatpush1.bf16.msra.mxu0 0
      %1523 = vmatprep.subr.bf16.mxu0 0
      %1524 = vmatpush1.bf16.msra.mxu0 0
      %1525 = vmatprep.subr.bf16.mxu0 0
      %1526 = vmatpush1.bf16.msra.mxu0 0
      %1527 = vmatprep.subr.bf16.mxu0 0
      %1528 = vmatpush1.bf16.msra.mxu0 0
      %1529 = vmatprep.subr.bf16.mxu0 0
      %1530 = vmatpush1.bf16.msra.mxu0 0
      %1531 = vmatprep.subr.bf16.mxu0 0
      %1532 = vmatpush1.bf16.msra.mxu0 0
      %1533 = vmatprep.subr.bf16.mxu0 0
      %1534 = vmatpush1.bf16.msra.mxu0 0
      %1535 = vmatprep.subr.bf16.mxu0 0
      %1536 = vmatpush1.bf16.msra.mxu0 0
      %1537 = vmatprep.subr.bf16.mxu0 0
      %1538 = vmatpush1.bf16.msra.mxu0 0
      %1539 = vmatprep.subr.bf16.mxu0 0
      %1540 = vmatpush1.bf16.msra.mxu0 0
      %1541 = vmatprep.subr.bf16.mxu0 0
      %1542 = vmatpush1.bf16.msra.mxu0 0
      %1543 = vmatprep.mubr.bf16.mxu0 0
      %1544 = vmatmul.mubr.bf16.gmra.mrb[0].mxu0 %v1509
      %v1545 = vpop.f32.mrb[0].mxu0
      %v1546 = vadd.f32 0.0, %v1545
      %v1547 = vpop.f32.mrb[0].mxu0
      %v1548 = vpop.f32.mrb[0].mxu0
      %v1549 = vpop.f32.mrb[0].mxu0
      %1550 = vdwg.mxu0
      %v1551 = vadd.f32 %v1507, %v1546
      %v1553 = vunpack.c.l.b16 %v841
      %v1554 = vpack.c.b16 %v1553, %v1553
      %v1556 = vshrl.u32 %v1554, 16
      %v1558 = vshll.u32 %v1554, 16
      %v1560 = vrot.slane %v1558, 1
      %v1561 = vor.u32 %v1556, %v1560
      %v1563 = vsel %vm859, %v1561, 0
      %1565 = vmatprep.subr.bf16.mxu0 0
      %1566 = vmatpush1.bf16.msra.mxu0 %v1126
      %1567 = vmatprep.subr.bf16.mxu0 0
      %1568 = vmatpush1.bf16.msra.mxu0 0
      %1569 = vmatprep.subr.bf16.mxu0 0
      %1570 = vmatpush1.bf16.msra.mxu0 0
      %1571 = vmatprep.subr.bf16.mxu0 0
      %1572 = vmatpush1.bf16.msra.mxu0 0
      %1573 = vmatprep.subr.bf16.mxu0 0
      %1574 = vmatpush1.bf16.msra.mxu0 0
      %1575 = vmatprep.subr.bf16.mxu0 0
      %1576 = vmatpush1.bf16.msra.mxu0 0
      %1577 = vmatprep.subr.bf16.mxu0 0
      %1578 = vmatpush1.bf16.msra.mxu0 0
      %1579 = vmatprep.subr.bf16.mxu0 0
      %1580 = vmatpush1.bf16.msra.mxu0 0
      %1581 = vmatprep.subr.bf16.mxu0 0
      %1582 = vmatpush1.bf16.msra.mxu0 0
      %1583 = vmatprep.subr.bf16.mxu0 0
      %1584 = vmatpush1.bf16.msra.mxu0 0
      %1585 = vmatprep.subr.bf16.mxu0 0
      %1586 = vmatpush1.bf16.msra.mxu0 0
      %1587 = vmatprep.subr.bf16.mxu0 0
      %1588 = vmatpush1.bf16.msra.mxu0 0
      %1589 = vmatprep.subr.bf16.mxu0 0
      %1590 = vmatpush1.bf16.msra.mxu0 0
      %1591 = vmatprep.subr.bf16.mxu0 0
      %1592 = vmatpush1.bf16.msra.mxu0 0
      %1593 = vmatprep.subr.bf16.mxu0 0
      %1594 = vmatpush1.bf16.msra.mxu0 0
      %1595 = vmatprep.subr.bf16.mxu0 0
      %1596 = vmatpush1.bf16.msra.mxu0 0
      %1597 = vmatprep.mubr.bf16.mxu0 0
      %1598 = vmatmul.mubr.bf16.gmra.mrb[0].mxu0 %v1563
      %v1599 = vpop.f32.mrb[0].mxu0
      %v1600 = vadd.f32 0.0, %v1599
      %v1601 = vpop.f32.mrb[0].mxu0
      %v1602 = vpop.f32.mrb[0].mxu0
      %v1603 = vpop.f32.mrb[0].mxu0
      %1604 = vdwg.mxu0
      %v1605 = vadd.f32 %v1551, %v1600
      %v1607 = vsel %vm859, %v843, 0
      %1609 = vmatprep.subr.bf16.mxu0 0
      %1610 = vmatpush1.bf16.msra.mxu0 %v1176
      %1611 = vmatprep.subr.bf16.mxu0 0
      %1612 = vmatpush1.bf16.msra.mxu0 0
      %1613 = vmatprep.subr.bf16.mxu0 0
      %1614 = vmatpush1.bf16.msra.mxu0 0
      %1615 = vmatprep.subr.bf16.mxu0 0
      %1616 = vmatpush1.bf16.msra.mxu0 0
      %1617 = vmatprep.subr.bf16.mxu0 0
      %1618 = vmatpush1.bf16.msra.mxu0 0
      %1619 = vmatprep.subr.bf16.mxu0 0
      %1620 = vmatpush1.bf16.msra.mxu0 0
      %1621 = vmatprep.subr.bf16.mxu0 0
      %1622 = vmatpush1.bf16.msra.mxu0 0
      %1623 = vmatprep.subr.bf16.mxu0 0
      %1624 = vmatpush1.bf16.msra.mxu0 0
      %1625 = vmatprep.subr.bf16.mxu0 0
      %1626 = vmatpush1.bf16.msra.mxu0 0
      %1627 = vmatprep.subr.bf16.mxu0 0
      %1628 = vmatpush1.bf16.msra.mxu0 0
      %1629 = vmatprep.subr.bf16.mxu0 0
      %1630 = vmatpush1.bf16.msra.mxu0 0
      %1631 = vmatprep.subr.bf16.mxu0 0
      %1632 = vmatpush1.bf16.msra.mxu0 0
      %1633 = vmatprep.subr.bf16.mxu0 0
      %1634 = vmatpush1.bf16.msra.mxu0 0
      %1635 = vmatprep.subr.bf16.mxu0 0
      %1636 = vmatpush1.bf16.msra.mxu0 0
      %1637 = vmatprep.subr.bf16.mxu0 0
      %1638 = vmatpush1.bf16.msra.mxu0 0
      %1639 = vmatprep.subr.bf16.mxu0 0
      %1640 = vmatpush1.bf16.msra.mxu0 0
      %1641 = vmatprep.mubr.bf16.mxu0 0
      %1642 = vmatmul.mubr.bf16.gmra.mrb[0].mxu0 %v1607
      %v1643 = vpop.f32.mrb[0].mxu0
      %v1644 = vadd.f32 0.0, %v1643
      %v1645 = vpop.f32.mrb[0].mxu0
      %v1646 = vpop.f32.mrb[0].mxu0
      %v1647 = vpop.f32.mrb[0].mxu0
      %1648 = vdwg.mxu0
      %v1649 = vadd.f32 %v1605, %v1644
      %v1651 = vsel %vm859, %v844, 0
      %1653 = vmatprep.subr.bf16.mxu0 0
      %1654 = vmatpush1.bf16.msra.mxu0 %v1226
      %1655 = vmatprep.subr.bf16.mxu0 0
      %1656 = vmatpush1.bf16.msra.mxu0 0
      %1657 = vmatprep.subr.bf16.mxu0 0
      %1658 = vmatpush1.bf16.msra.mxu0 0
      %1659 = vmatprep.subr.bf16.mxu0 0
      %1660 = vmatpush1.bf16.msra.mxu0 0
      %1661 = vmatprep.subr.bf16.mxu0 0
      %1662 = vmatpush1.bf16.msra.mxu0 0
      %1663 = vmatprep.subr.bf16.mxu0 0
      %1664 = vmatpush1.bf16.msra.mxu0 0
      %1665 = vmatprep.subr.bf16.mxu0 0
      %1666 = vmatpush1.bf16.msra.mxu0 0
      %1667 = vmatprep.subr.bf16.mxu0 0
      %1668 = vmatpush1.bf16.msra.mxu0 0
      %1669 = vmatprep.subr.bf16.mxu0 0
      %1670 = vmatpush1.bf16.msra.mxu0 0
      %1671 = vmatprep.subr.bf16.mxu0 0
      %1672 = vmatpush1.bf16.msra.mxu0 0
      %1673 = vmatprep.subr.bf16.mxu0 0
      %1674 = vmatpush1.bf16.msra.mxu0 0
      %1675 = vmatprep.subr.bf16.mxu0 0
      %1676 = vmatpush1.bf16.msra.mxu0 0
      %1677 = vmatprep.subr.bf16.mxu0 0
      %1678 = vmatpush1.bf16.msra.mxu0 0
      %1679 = vmatprep.subr.bf16.mxu0 0
      %1680 = vmatpush1.bf16.msra.mxu0 0
      %1681 = vmatprep.subr.bf16.mxu0 0
      %1682 = vmatpush1.bf16.msra.mxu0 0
      %1683 = vmatprep.subr.bf16.mxu0 0
      %1684 = vmatpush1.bf16.msra.mxu0 0
      %1685 = vmatprep.mubr.bf16.mxu0 0
      %1686 = vmatmul.mubr.bf16.gmra.mrb[0].mxu0 %v1651
      %v1687 = vpop.f32.mrb[0].mxu0
      %v1688 = vadd.f32 0.0, %v1687
      %v1689 = vpop.f32.mrb[0].mxu0
      %v1690 = vpop.f32.mrb[0].mxu0
      %v1691 = vpop.f32.mrb[0].mxu0
      %1692 = vdwg.mxu0
      %v1693 = vadd.f32 %v1649, %v1688
      %v1695 = vunpack.c.l.b16 %v843
      %v1696 = vpack.c.b16 %v1695, %v1695
      %v1698 = vshrl.u32 %v1696, 16
      %v1700 = vshll.u32 %v1696, 16
      %v1702 = vrot.slane %v1700, 1
      %v1703 = vor.u32 %v1698, %v1702
      %v1705 = vsel %vm859, %v1703, 0
      %1707 = vmatprep.subr.bf16.mxu0 0
      %1708 = vmatpush1.bf16.msra.mxu0 %v1286
      %1709 = vmatprep.subr.bf16.mxu0 0
      %1710 = vmatpush1.bf16.msra.mxu0 0
      %1711 = vmatprep.subr.bf16.mxu0 0
      %1712 = vmatpush1.bf16.msra.mxu0 0
      %1713 = vmatprep.subr.bf16.mxu0 0
      %1714 = vmatpush1.bf16.msra.mxu0 0
      %1715 = vmatprep.subr.bf16.mxu0 0
      %1716 = vmatpush1.bf16.msra.mxu0 0
      %1717 = vmatprep.subr.bf16.mxu0 0
      %1718 = vmatpush1.bf16.msra.mxu0 0
      %1719 = vmatprep.subr.bf16.mxu0 0
      %1720 = vmatpush1.bf16.msra.mxu0 0
      %1721 = vmatprep.subr.bf16.mxu0 0
      %1722 = vmatpush1.bf16.msra.mxu0 0
      %1723 = vmatprep.subr.bf16.mxu0 0
      %1724 = vmatpush1.bf16.msra.mxu0 0
      %1725 = vmatprep.subr.bf16.mxu0 0
      %1726 = vmatpush1.bf16.msra.mxu0 0
      %1727 = vmatprep.subr.bf16.mxu0 0
      %1728 = vmatpush1.bf16.msra.mxu0 0
      %1729 = vmatprep.subr.bf16.mxu0 0
      %1730 = vmatpush1.bf16.msra.mxu0 0
      %1731 = vmatprep.subr.bf16.mxu0 0
      %1732 = vmatpush1.bf16.msra.mxu0 0
      %1733 = vmatprep.subr.bf16.mxu0 0
      %1734 = vmatpush1.bf16.msra.mxu0 0
      %1735 = vmatprep.subr.bf16.mxu0 0
      %1736 = vmatpush1.bf16.msra.mxu0 0
      %1737 = vmatprep.subr.bf16.mxu0 0
      %1738 = vmatpush1.bf16.msra.mxu0 0
      %1739 = vmatprep.mubr.bf16.mxu0 0
      %1740 = vmatmul.mubr.bf16.gmra.mrb[0].mxu0 %v1705
      %v1741 = vpop.f32.mrb[0].mxu0
      %v1742 = vadd.f32 0.0, %v1741
      %v1743 = vpop.f32.mrb[0].mxu0
      %v1744 = vpop.f32.mrb[0].mxu0
      %v1745 = vpop.f32.mrb[0].mxu0
      %1746 = vdwg.mxu0
      %v1747 = vadd.f32 %v1693, %v1742
      %v1748 = vadd.f32 %v1747, %v1336
      %v1749 = vmax.f32 %v1748, 0.0
      %v1750 = vpack.c.bf16 %v1749, %v1749
      %s1751 = scalar_lea.vmem %s813, 2
      %1752 = vst.msk [vmem:[%s1751] sm:$0x3] %vm1341, %v1750
      %1753 = vmatprep.subr.bf16.mxu0 0
      %1754 = vmatpush1.bf16.msra.mxu0 %v857
      %1755 = vmatprep.subr.bf16.mxu0 0
      %1756 = vmatpush1.bf16.msra.mxu0 0
      %1757 = vmatprep.subr.bf16.mxu0 0
      %1758 = vmatpush1.bf16.msra.mxu0 0
      %1759 = vmatprep.subr.bf16.mxu0 0
      %1760 = vmatpush1.bf16.msra.mxu0 0
      %1761 = vmatprep.subr.bf16.mxu0 0
      %1762 = vmatpush1.bf16.msra.mxu0 0
      %1763 = vmatprep.subr.bf16.mxu0 0
      %1764 = vmatpush1.bf16.msra.mxu0 0
      %1765 = vmatprep.subr.bf16.mxu0 0
      %1766 = vmatpush1.bf16.msra.mxu0 0
      %1767 = vmatprep.subr.bf16.mxu0 0
      %1768 = vmatpush1.bf16.msra.mxu0 0
      %1769 = vmatprep.subr.bf16.mxu0 0
      %1770 = vmatpush1.bf16.msra.mxu0 0
      %1771 = vmatprep.subr.bf16.mxu0 0
      %1772 = vmatpush1.bf16.msra.mxu0 0
      %1773 = vmatprep.subr.bf16.mxu0 0
      %1774 = vmatpush1.bf16.msra.mxu0 0
      %1775 = vmatprep.subr.bf16.mxu0 0
      %1776 = vmatpush1.bf16.msra.mxu0 0
      %1777 = vmatprep.subr.bf16.mxu0 0
      %1778 = vmatpush1.bf16.msra.mxu0 0
      %1779 = vmatprep.subr.bf16.mxu0 0
      %1780 = vmatpush1.bf16.msra.mxu0 0
      %1781 = vmatprep.subr.bf16.mxu0 0
      %1782 = vmatpush1.bf16.msra.mxu0 0
      %1783 = vmatprep.subr.bf16.mxu0 0
      %1784 = vmatpush1.bf16.msra.mxu0 0
      %1785 = vmatprep.mubr.bf16.mxu0 0
      %1786 = vmatmul.mubr.bf16.gmra.mrb[0].mxu0 %v1651
      %v1787 = vpop.f32.mrb[0].mxu0
      %v1788 = vadd.f32 0.0, %v1787
      %v1789 = vpop.f32.mrb[0].mxu0
      %v1790 = vpop.f32.mrb[0].mxu0
      %v1791 = vpop.f32.mrb[0].mxu0
      %1792 = vdwg.mxu0
      %1793 = vmatprep.subr.bf16.mxu0 0
      %1794 = vmatpush1.bf16.msra.mxu0 %v907
      %1795 = vmatprep.subr.bf16.mxu0 0
      %1796 = vmatpush1.bf16.msra.mxu0 0
      %1797 = vmatprep.subr.bf16.mxu0 0
      %1798 = vmatpush1.bf16.msra.mxu0 0
      %1799 = vmatprep.subr.bf16.mxu0 0
      %1800 = vmatpush1.bf16.msra.mxu0 0
      %1801 = vmatprep.subr.bf16.mxu0 0
      %1802 = vmatpush1.bf16.msra.mxu0 0
      %1803 = vmatprep.subr.bf16.mxu0 0
      %1804 = vmatpush1.bf16.msra.mxu0 0
      %1805 = vmatprep.subr.bf16.mxu0 0
      %1806 = vmatpush1.bf16.msra.mxu0 0
      %1807 = vmatprep.subr.bf16.mxu0 0
      %1808 = vmatpush1.bf16.msra.mxu0 0
      %1809 = vmatprep.subr.bf16.mxu0 0
      %1810 = vmatpush1.bf16.msra.mxu0 0
      %1811 = vmatprep.subr.bf16.mxu0 0
      %1812 = vmatpush1.bf16.msra.mxu0 0
      %1813 = vmatprep.subr.bf16.mxu0 0
      %1814 = vmatpush1.bf16.msra.mxu0 0
      %1815 = vmatprep.subr.bf16.mxu0 0
      %1816 = vmatpush1.bf16.msra.mxu0 0
      %1817 = vmatprep.subr.bf16.mxu0 0
      %1818 = vmatpush1.bf16.msra.mxu0 0
      %1819 = vmatprep.subr.bf16.mxu0 0
      %1820 = vmatpush1.bf16.msra.mxu0 0
      %1821 = vmatprep.subr.bf16.mxu0 0
      %1822 = vmatpush1.bf16.msra.mxu0 0
      %1823 = vmatprep.subr.bf16.mxu0 0
      %1824 = vmatpush1.bf16.msra.mxu0 0
      %1825 = vmatprep.mubr.bf16.mxu0 0
      %1826 = vmatmul.mubr.bf16.gmra.mrb[0].mxu0 %v1607
      %v1827 = vpop.f32.mrb[0].mxu0
      %v1828 = vadd.f32 %v1788, %v1827
      %v1829 = vpop.f32.mrb[0].mxu0
      %v1830 = vpop.f32.mrb[0].mxu0
      %v1831 = vpop.f32.mrb[0].mxu0
      %1832 = vdwg.mxu0
      %1833 = vmatprep.subr.bf16.mxu0 0
      %1834 = vmatpush1.bf16.msra.mxu0 %v966
      %1835 = vmatprep.subr.bf16.mxu0 0
      %1836 = vmatpush1.bf16.msra.mxu0 0
      %1837 = vmatprep.subr.bf16.mxu0 0
      %1838 = vmatpush1.bf16.msra.mxu0 0
      %1839 = vmatprep.subr.bf16.mxu0 0
      %1840 = vmatpush1.bf16.msra.mxu0 0
      %1841 = vmatprep.subr.bf16.mxu0 0
      %1842 = vmatpush1.bf16.msra.mxu0 0
      %1843 = vmatprep.subr.bf16.mxu0 0
      %1844 = vmatpush1.bf16.msra.mxu0 0
      %1845 = vmatprep.subr.bf16.mxu0 0
      %1846 = vmatpush1.bf16.msra.mxu0 0
      %1847 = vmatprep.subr.bf16.mxu0 0
      %1848 = vmatpush1.bf16.msra.mxu0 0
      %1849 = vmatprep.subr.bf16.mxu0 0
      %1850 = vmatpush1.bf16.msra.mxu0 0
      %1851 = vmatprep.subr.bf16.mxu0 0
      %1852 = vmatpush1.bf16.msra.mxu0 0
      %1853 = vmatprep.subr.bf16.mxu0 0
      %1854 = vmatpush1.bf16.msra.mxu0 0
      %1855 = vmatprep.subr.bf16.mxu0 0
      %1856 = vmatpush1.bf16.msra.mxu0 0
      %1857 = vmatprep.subr.bf16.mxu0 0
      %1858 = vmatpush1.bf16.msra.mxu0 0
      %1859 = vmatprep.subr.bf16.mxu0 0
      %1860 = vmatpush1.bf16.msra.mxu0 0
      %1861 = vmatprep.subr.bf16.mxu0 0
      %1862 = vmatpush1.bf16.msra.mxu0 0
      %1863 = vmatprep.subr.bf16.mxu0 0
      %1864 = vmatpush1.bf16.msra.mxu0 0
      %1865 = vmatprep.mubr.bf16.mxu0 0
      %1866 = vmatmul.mubr.bf16.gmra.mrb[0].mxu0 %v1705
      %v1867 = vpop.f32.mrb[0].mxu0
      %v1868 = vadd.f32 0.0, %v1867
      %v1869 = vpop.f32.mrb[0].mxu0
      %v1870 = vpop.f32.mrb[0].mxu0
      %v1871 = vpop.f32.mrb[0].mxu0
      %1872 = vdwg.mxu0
      %v1873 = vadd.f32 %v1828, %v1868
      %v1875 = vsel %vm859, %v845, 0
      %1877 = vmatprep.subr.bf16.mxu0 0
      %1878 = vmatpush1.bf16.msra.mxu0 %v1016
      %1879 = vmatprep.subr.bf16.mxu0 0
      %1880 = vmatpush1.bf16.msra.mxu0 0
      %1881 = vmatprep.subr.bf16.mxu0 0
      %1882 = vmatpush1.bf16.msra.mxu0 0
      %1883 = vmatprep.subr.bf16.mxu0 0
      %1884 = vmatpush1.bf16.msra.mxu0 0
      %1885 = vmatprep.subr.bf16.mxu0 0
      %1886 = vmatpush1.bf16.msra.mxu0 0
      %1887 = vmatprep.subr.bf16.mxu0 0
      %1888 = vmatpush1.bf16.msra.mxu0 0
      %1889 = vmatprep.subr.bf16.mxu0 0
      %1890 = vmatpush1.bf16.msra.mxu0 0
      %1891 = vmatprep.subr.bf16.mxu0 0
      %1892 = vmatpush1.bf16.msra.mxu0 0
      %1893 = vmatprep.subr.bf16.mxu0 0
      %1894 = vmatpush1.bf16.msra.mxu0 0
      %1895 = vmatprep.subr.bf16.mxu0 0
      %1896 = vmatpush1.bf16.msra.mxu0 0
      %1897 = vmatprep.subr.bf16.mxu0 0
      %1898 = vmatpush1.bf16.msra.mxu0 0
      %1899 = vmatprep.subr.bf16.mxu0 0
      %1900 = vmatpush1.bf16.msra.mxu0 0
      %1901 = vmatprep.subr.bf16.mxu0 0
      %1902 = vmatpush1.bf16.msra.mxu0 0
      %1903 = vmatprep.subr.bf16.mxu0 0
      %1904 = vmatpush1.bf16.msra.mxu0 0
      %1905 = vmatprep.subr.bf16.mxu0 0
      %1906 = vmatpush1.bf16.msra.mxu0 0
      %1907 = vmatprep.subr.bf16.mxu0 0
      %1908 = vmatpush1.bf16.msra.mxu0 0
      %1909 = vmatprep.mubr.bf16.mxu0 0
      %1910 = vmatmul.mubr.bf16.gmra.mrb[0].mxu0 %v1875
      %v1911 = vpop.f32.mrb[0].mxu0
      %v1912 = vadd.f32 0.0, %v1911
      %v1913 = vpop.f32.mrb[0].mxu0
      %v1914 = vpop.f32.mrb[0].mxu0
      %v1915 = vpop.f32.mrb[0].mxu0
      %1916 = vdwg.mxu0
      %v1917 = vadd.f32 %v1873, %v1912
      %v1919 = vsel %vm859, %v846, 0
      %1921 = vmatprep.subr.bf16.mxu0 0
      %1922 = vmatpush1.bf16.msra.mxu0 %v1066
      %1923 = vmatprep.subr.bf16.mxu0 0
      %1924 = vmatpush1.bf16.msra.mxu0 0
      %1925 = vmatprep.subr.bf16.mxu0 0
      %1926 = vmatpush1.bf16.msra.mxu0 0
      %1927 = vmatprep.subr.bf16.mxu0 0
      %1928 = vmatpush1.bf16.msra.mxu0 0
      %1929 = vmatprep.subr.bf16.mxu0 0
      %1930 = vmatpush1.bf16.msra.mxu0 0
      %1931 = vmatprep.subr.bf16.mxu0 0
      %1932 = vmatpush1.bf16.msra.mxu0 0
      %1933 = vmatprep.subr.bf16.mxu0 0
      %1934 = vmatpush1.bf16.msra.mxu0 0
      %1935 = vmatprep.subr.bf16.mxu0 0
      %1936 = vmatpush1.bf16.msra.mxu0 0
      %1937 = vmatprep.subr.bf16.mxu0 0
      %1938 = vmatpush1.bf16.msra.mxu0 0
      %1939 = vmatprep.subr.bf16.mxu0 0
      %1940 = vmatpush1.bf16.msra.mxu0 0
      %1941 = vmatprep.subr.bf16.mxu0 0
      %1942 = vmatpush1.bf16.msra.mxu0 0
      %1943 = vmatprep.subr.bf16.mxu0 0
      %1944 = vmatpush1.bf16.msra.mxu0 0
      %1945 = vmatprep.subr.bf16.mxu0 0
      %1946 = vmatpush1.bf16.msra.mxu0 0
      %1947 = vmatprep.subr.bf16.mxu0 0
      %1948 = vmatpush1.bf16.msra.mxu0 0
      %1949 = vmatprep.subr.bf16.mxu0 0
      %1950 = vmatpush1.bf16.msra.mxu0 0
      %1951 = vmatprep.subr.bf16.mxu0 0
      %1952 = vmatpush1.bf16.msra.mxu0 0
      %1953 = vmatprep.mubr.bf16.mxu0 0
      %1954 = vmatmul.mubr.bf16.gmra.mrb[0].mxu0 %v1919
      %v1955 = vpop.f32.mrb[0].mxu0
      %v1956 = vadd.f32 0.0, %v1955
      %v1957 = vpop.f32.mrb[0].mxu0
      %v1958 = vpop.f32.mrb[0].mxu0
      %v1959 = vpop.f32.mrb[0].mxu0
      %1960 = vdwg.mxu0
      %v1961 = vadd.f32 %v1917, %v1956
      %v1963 = vunpack.c.l.b16 %v845
      %v1964 = vpack.c.b16 %v1963, %v1963
      %v1966 = vshrl.u32 %v1964, 16
      %v1968 = vshll.u32 %v1964, 16
      %v1970 = vrot.slane %v1968, 1
      %v1971 = vor.u32 %v1966, %v1970
      %v1973 = vsel %vm859, %v1971, 0
      %1975 = vmatprep.subr.bf16.mxu0 0
      %1976 = vmatpush1.bf16.msra.mxu0 %v1126
      %1977 = vmatprep.subr.bf16.mxu0 0
      %1978 = vmatpush1.bf16.msra.mxu0 0
      %1979 = vmatprep.subr.bf16.mxu0 0
      %1980 = vmatpush1.bf16.msra.mxu0 0
      %1981 = vmatprep.subr.bf16.mxu0 0
      %1982 = vmatpush1.bf16.msra.mxu0 0
      %1983 = vmatprep.subr.bf16.mxu0 0
      %1984 = vmatpush1.bf16.msra.mxu0 0
      %1985 = vmatprep.subr.bf16.mxu0 0
      %1986 = vmatpush1.bf16.msra.mxu0 0
      %1987 = vmatprep.subr.bf16.mxu0 0
      %1988 = vmatpush1.bf16.msra.mxu0 0
      %1989 = vmatprep.subr.bf16.mxu0 0
      %1990 = vmatpush1.bf16.msra.mxu0 0
      %1991 = vmatprep.subr.bf16.mxu0 0
      %1992 = vmatpush1.bf16.msra.mxu0 0
      %1993 = vmatprep.subr.bf16.mxu0 0
      %1994 = vmatpush1.bf16.msra.mxu0 0
      %1995 = vmatprep.subr.bf16.mxu0 0
      %1996 = vmatpush1.bf16.msra.mxu0 0
      %1997 = vmatprep.subr.bf16.mxu0 0
      %1998 = vmatpush1.bf16.msra.mxu0 0
      %1999 = vmatprep.subr.bf16.mxu0 0
      %2000 = vmatpush1.bf16.msra.mxu0 0
      %2001 = vmatprep.subr.bf16.mxu0 0
      %2002 = vmatpush1.bf16.msra.mxu0 0
      %2003 = vmatprep.subr.bf16.mxu0 0
      %2004 = vmatpush1.bf16.msra.mxu0 0
      %2005 = vmatprep.subr.bf16.mxu0 0
      %2006 = vmatpush1.bf16.msra.mxu0 0
      %2007 = vmatprep.mubr.bf16.mxu0 0
      %2008 = vmatmul.mubr.bf16.gmra.mrb[0].mxu0 %v1973
      %v2009 = vpop.f32.mrb[0].mxu0
      %v2010 = vadd.f32 0.0, %v2009
      %v2011 = vpop.f32.mrb[0].mxu0
      %v2012 = vpop.f32.mrb[0].mxu0
      %v2013 = vpop.f32.mrb[0].mxu0
      %2014 = vdwg.mxu0
      %v2015 = vadd.f32 %v1961, %v2010
      %v2017 = vsel %vm859, %v847, 0
      %2019 = vmatprep.subr.bf16.mxu0 0
      %2020 = vmatpush1.bf16.msra.mxu0 %v1176
      %2021 = vmatprep.subr.bf16.mxu0 0
      %2022 = vmatpush1.bf16.msra.mxu0 0
      %2023 = vmatprep.subr.bf16.mxu0 0
      %2024 = vmatpush1.bf16.msra.mxu0 0
      %2025 = vmatprep.subr.bf16.mxu0 0
      %2026 = vmatpush1.bf16.msra.mxu0 0
      %2027 = vmatprep.subr.bf16.mxu0 0
      %2028 = vmatpush1.bf16.msra.mxu0 0
      %2029 = vmatprep.subr.bf16.mxu0 0
      %2030 = vmatpush1.bf16.msra.mxu0 0
      %2031 = vmatprep.subr.bf16.mxu0 0
      %2032 = vmatpush1.bf16.msra.mxu0 0
      %2033 = vmatprep.subr.bf16.mxu0 0
      %2034 = vmatpush1.bf16.msra.mxu0 0
      %2035 = vmatprep.subr.bf16.mxu0 0
      %2036 = vmatpush1.bf16.msra.mxu0 0
      %2037 = vmatprep.subr.bf16.mxu0 0
      %2038 = vmatpush1.bf16.msra.mxu0 0
      %2039 = vmatprep.subr.bf16.mxu0 0
      %2040 = vmatpush1.bf16.msra.mxu0 0
      %2041 = vmatprep.subr.bf16.mxu0 0
      %2042 = vmatpush1.bf16.msra.mxu0 0
      %2043 = vmatprep.subr.bf16.mxu0 0
      %2044 = vmatpush1.bf16.msra.mxu0 0
      %2045 = vmatprep.subr.bf16.mxu0 0
      %2046 = vmatpush1.bf16.msra.mxu0 0
      %2047 = vmatprep.subr.bf16.mxu0 0
      %2048 = vmatpush1.bf16.msra.mxu0 0
      %2049 = vmatprep.subr.bf16.mxu0 0
      %2050 = vmatpush1.bf16.msra.mxu0 0
      %2051 = vmatprep.mubr.bf16.mxu0 0
      %2052 = vmatmul.mubr.bf16.gmra.mrb[0].mxu0 %v2017
      %v2053 = vpop.f32.mrb[0].mxu0
      %v2054 = vadd.f32 0.0, %v2053
      %v2055 = vpop.f32.mrb[0].mxu0
      %v2056 = vpop.f32.mrb[0].mxu0
      %v2057 = vpop.f32.mrb[0].mxu0
      %2058 = vdwg.mxu0
      %v2059 = vadd.f32 %v2015, %v2054
      %v2061 = vsel %vm859, %v848, 0
      %2063 = vmatprep.subr.bf16.mxu0 0
      %2064 = vmatpush1.bf16.msra.mxu0 %v1226
      %2065 = vmatprep.subr.bf16.mxu0 0
      %2066 = vmatpush1.bf16.msra.mxu0 0
      %2067 = vmatprep.subr.bf16.mxu0 0
      %2068 = vmatpush1.bf16.msra.mxu0 0
      %2069 = vmatprep.subr.bf16.mxu0 0
      %2070 = vmatpush1.bf16.msra.mxu0 0
      %2071 = vmatprep.subr.bf16.mxu0 0
      %2072 = vmatpush1.bf16.msra.mxu0 0
      %2073 = vmatprep.subr.bf16.mxu0 0
      %2074 = vmatpush1.bf16.msra.mxu0 0
      %2075 = vmatprep.subr.bf16.mxu0 0
      %2076 = vmatpush1.bf16.msra.mxu0 0
      %2077 = vmatprep.subr.bf16.mxu0 0
      %2078 = vmatpush1.bf16.msra.mxu0 0
      %2079 = vmatprep.subr.bf16.mxu0 0
      %2080 = vmatpush1.bf16.msra.mxu0 0
      %2081 = vmatprep.subr.bf16.mxu0 0
      %2082 = vmatpush1.bf16.msra.mxu0 0
      %2083 = vmatprep.subr.bf16.mxu0 0
      %2084 = vmatpush1.bf16.msra.mxu0 0
      %2085 = vmatprep.subr.bf16.mxu0 0
      %2086 = vmatpush1.bf16.msra.mxu0 0
      %2087 = vmatprep.subr.bf16.mxu0 0
      %2088 = vmatpush1.bf16.msra.mxu0 0
      %2089 = vmatprep.subr.bf16.mxu0 0
      %2090 = vmatpush1.bf16.msra.mxu0 0
      %2091 = vmatprep.subr.bf16.mxu0 0
      %2092 = vmatpush1.bf16.msra.mxu0 0
      %2093 = vmatprep.subr.bf16.mxu0 0
      %2094 = vmatpush1.bf16.msra.mxu0 0
      %2095 = vmatprep.mubr.bf16.mxu0 0
      %2096 = vmatmul.mubr.bf16.gmra.mrb[0].mxu0 %v2061
      %v2097 = vpop.f32.mrb[0].mxu0
      %v2098 = vadd.f32 0.0, %v2097
      %v2099 = vpop.f32.mrb[0].mxu0
      %v2100 = vpop.f32.mrb[0].mxu0
      %v2101 = vpop.f32.mrb[0].mxu0
      %2102 = vdwg.mxu0
      %v2103 = vadd.f32 %v2059, %v2098
      %v2105 = vunpack.c.l.b16 %v847
      %v2106 = vpack.c.b16 %v2105, %v2105
      %v2108 = vshrl.u32 %v2106, 16
      %v2110 = vshll.u32 %v2106, 16
      %v2112 = vrot.slane %v2110, 1
      %v2113 = vor.u32 %v2108, %v2112
      %v2115 = vsel %vm859, %v2113, 0
      %2117 = vmatprep.subr.bf16.mxu0 0
      %2118 = vmatpush1.bf16.msra.mxu0 %v1286
      %2119 = vmatprep.subr.bf16.mxu0 0
      %2120 = vmatpush1.bf16.msra.mxu0 0
      %2121 = vmatprep.subr.bf16.mxu0 0
      %2122 = vmatpush1.bf16.msra.mxu0 0
      %2123 = vmatprep.subr.bf16.mxu0 0
      %2124 = vmatpush1.bf16.msra.mxu0 0
      %2125 = vmatprep.subr.bf16.mxu0 0
      %2126 = vmatpush1.bf16.msra.mxu0 0
      %2127 = vmatprep.subr.bf16.mxu0 0
      %2128 = vmatpush1.bf16.msra.mxu0 0
      %2129 = vmatprep.subr.bf16.mxu0 0
      %2130 = vmatpush1.bf16.msra.mxu0 0
      %2131 = vmatprep.subr.bf16.mxu0 0
      %2132 = vmatpush1.bf16.msra.mxu0 0
      %2133 = vmatprep.subr.bf16.mxu0 0
      %2134 = vmatpush1.bf16.msra.mxu0 0
      %2135 = vmatprep.subr.bf16.mxu0 0
      %2136 = vmatpush1.bf16.msra.mxu0 0
      %2137 = vmatprep.subr.bf16.mxu0 0
      %2138 = vmatpush1.bf16.msra.mxu0 0
      %2139 = vmatprep.subr.bf16.mxu0 0
      %2140 = vmatpush1.bf16.msra.mxu0 0
      %2141 = vmatprep.subr.bf16.mxu0 0
      %2142 = vmatpush1.bf16.msra.mxu0 0
      %2143 = vmatprep.subr.bf16.mxu0 0
      %2144 = vmatpush1.bf16.msra.mxu0 0
      %2145 = vmatprep.subr.bf16.mxu0 0
      %2146 = vmatpush1.bf16.msra.mxu0 0
      %2147 = vmatprep.subr.bf16.mxu0 0
      %2148 = vmatpush1.bf16.msra.mxu0 0
      %2149 = vmatprep.mubr.bf16.mxu0 0
      %2150 = vmatmul.mubr.bf16.gmra.mrb[0].mxu0 %v2115
      %v2151 = vpop.f32.mrb[0].mxu0
      %v2152 = vadd.f32 0.0, %v2151
      %v2153 = vpop.f32.mrb[0].mxu0
      %v2154 = vpop.f32.mrb[0].mxu0
      %v2155 = vpop.f32.mrb[0].mxu0
      %2156 = vdwg.mxu0
      %v2157 = vadd.f32 %v2103, %v2152
      %v2158 = vadd.f32 %v2157, %v1336
      %v2159 = vmax.f32 %v2158, 0.0
      %v2160 = vpack.c.bf16 %v2159, %v2159
      %s2161 = scalar_lea.vmem %s813, 4
      %2162 = vst.msk [vmem:[%s2161] sm:$0x3] %vm1341, %v2160
      %2163 = vmatprep.subr.bf16.mxu0 0
      %2164 = vmatpush1.bf16.msra.mxu0 %v857
      %2165 = vmatprep.subr.bf16.mxu0 0
      %2166 = vmatpush1.bf16.msra.mxu0 0
      %2167 = vmatprep.subr.bf16.mxu0 0
      %2168 = vmatpush1.bf16.msra.mxu0 0
      %2169 = vmatprep.subr.bf16.mxu0 0
      %2170 = vmatpush1.bf16.msra.mxu0 0
      %2171 = vmatprep.subr.bf16.mxu0 0
      %2172 = vmatpush1.bf16.msra.mxu0 0
      %2173 = vmatprep.subr.bf16.mxu0 0
      %2174 = vmatpush1.bf16.msra.mxu0 0
      %2175 = vmatprep.subr.bf16.mxu0 0
      %2176 = vmatpush1.bf16.msra.mxu0 0
      %2177 = vmatprep.subr.bf16.mxu0 0
      %2178 = vmatpush1.bf16.msra.mxu0 0
      %2179 = vmatprep.subr.bf16.mxu0 0
      %2180 = vmatpush1.bf16.msra.mxu0 0
      %2181 = vmatprep.subr.bf16.mxu0 0
      %2182 = vmatpush1.bf16.msra.mxu0 0
      %2183 = vmatprep.subr.bf16.mxu0 0
      %2184 = vmatpush1.bf16.msra.mxu0 0
      %2185 = vmatprep.subr.bf16.mxu0 0
      %2186 = vmatpush1.bf16.msra.mxu0 0
      %2187 = vmatprep.subr.bf16.mxu0 0
      %2188 = vmatpush1.bf16.msra.mxu0 0
      %2189 = vmatprep.subr.bf16.mxu0 0
      %2190 = vmatpush1.bf16.msra.mxu0 0
      %2191 = vmatprep.subr.bf16.mxu0 0
      %2192 = vmatpush1.bf16.msra.mxu0 0
      %2193 = vmatprep.subr.bf16.mxu0 0
      %2194 = vmatpush1.bf16.msra.mxu0 0
      %2195 = vmatprep.mubr.bf16.mxu0 0
      %2196 = vmatmul.mubr.bf16.gmra.mrb[0].mxu0 %v2061
      %v2197 = vpop.f32.mrb[0].mxu0
      %v2198 = vadd.f32 0.0, %v2197
      %v2199 = vpop.f32.mrb[0].mxu0
      %v2200 = vpop.f32.mrb[0].mxu0
      %v2201 = vpop.f32.mrb[0].mxu0
      %2202 = vdwg.mxu0
      %2203 = vmatprep.subr.bf16.mxu0 0
      %2204 = vmatpush1.bf16.msra.mxu0 %v907
      %2205 = vmatprep.subr.bf16.mxu0 0
      %2206 = vmatpush1.bf16.msra.mxu0 0
      %2207 = vmatprep.subr.bf16.mxu0 0
      %2208 = vmatpush1.bf16.msra.mxu0 0
      %2209 = vmatprep.subr.bf16.mxu0 0
      %2210 = vmatpush1.bf16.msra.mxu0 0
      %2211 = vmatprep.subr.bf16.mxu0 0
      %2212 = vmatpush1.bf16.msra.mxu0 0
      %2213 = vmatprep.subr.bf16.mxu0 0
      %2214 = vmatpush1.bf16.msra.mxu0 0
      %2215 = vmatprep.subr.bf16.mxu0 0
      %2216 = vmatpush1.bf16.msra.mxu0 0
      %2217 = vmatprep.subr.bf16.mxu0 0
      %2218 = vmatpush1.bf16.msra.mxu0 0
      %2219 = vmatprep.subr.bf16.mxu0 0
      %2220 = vmatpush1.bf16.msra.mxu0 0
      %2221 = vmatprep.subr.bf16.mxu0 0
      %2222 = vmatpush1.bf16.msra.mxu0 0
      %2223 = vmatprep.subr.bf16.mxu0 0
      %2224 = vmatpush1.bf16.msra.mxu0 0
      %2225 = vmatprep.subr.bf16.mxu0 0
      %2226 = vmatpush1.bf16.msra.mxu0 0
      %2227 = vmatprep.subr.bf16.mxu0 0
      %2228 = vmatpush1.bf16.msra.mxu0 0
      %2229 = vmatprep.subr.bf16.mxu0 0
      %2230 = vmatpush1.bf16.msra.mxu0 0
      %2231 = vmatprep.subr.bf16.mxu0 0
      %2232 = vmatpush1.bf16.msra.mxu0 0
      %2233 = vmatprep.subr.bf16.mxu0 0
      %2234 = vmatpush1.bf16.msra.mxu0 0
      %2235 = vmatprep.mubr.bf16.mxu0 0
      %2236 = vmatmul.mubr.bf16.gmra.mrb[0].mxu0 %v2017
      %v2237 = vpop.f32.mrb[0].mxu0
      %v2238 = vadd.f32 %v2198, %v2237
      %v2239 = vpop.f32.mrb[0].mxu0
      %v2240 = vpop.f32.mrb[0].mxu0
      %v2241 = vpop.f32.mrb[0].mxu0
      %2242 = vdwg.mxu0
      %2243 = vmatprep.subr.bf16.mxu0 0
      %2244 = vmatpush1.bf16.msra.mxu0 %v966
      %2245 = vmatprep.subr.bf16.mxu0 0
      %2246 = vmatpush1.bf16.msra.mxu0 0
      %2247 = vmatprep.subr.bf16.mxu0 0
      %2248 = vmatpush1.bf16.msra.mxu0 0
      %2249 = vmatprep.subr.bf16.mxu0 0
      %2250 = vmatpush1.bf16.msra.mxu0 0
      %2251 = vmatprep.subr.bf16.mxu0 0
      %2252 = vmatpush1.bf16.msra.mxu0 0
      %2253 = vmatprep.subr.bf16.mxu0 0
      %2254 = vmatpush1.bf16.msra.mxu0 0
      %2255 = vmatprep.subr.bf16.mxu0 0
      %2256 = vmatpush1.bf16.msra.mxu0 0
      %2257 = vmatprep.subr.bf16.mxu0 0
      %2258 = vmatpush1.bf16.msra.mxu0 0
      %2259 = vmatprep.subr.bf16.mxu0 0
      %2260 = vmatpush1.bf16.msra.mxu0 0
      %2261 = vmatprep.subr.bf16.mxu0 0
      %2262 = vmatpush1.bf16.msra.mxu0 0
      %2263 = vmatprep.subr.bf16.mxu0 0
      %2264 = vmatpush1.bf16.msra.mxu0 0
      %2265 = vmatprep.subr.bf16.mxu0 0
      %2266 = vmatpush1.bf16.msra.mxu0 0
      %2267 = vmatprep.subr.bf16.mxu0 0
      %2268 = vmatpush1.bf16.msra.mxu0 0
      %2269 = vmatprep.subr.bf16.mxu0 0
      %2270 = vmatpush1.bf16.msra.mxu0 0
      %2271 = vmatprep.subr.bf16.mxu0 0
      %2272 = vmatpush1.bf16.msra.mxu0 0
      %2273 = vmatprep.subr.bf16.mxu0 0
      %2274 = vmatpush1.bf16.msra.mxu0 0
      %2275 = vmatprep.mubr.bf16.mxu0 0
      %2276 = vmatmul.mubr.bf16.gmra.mrb[0].mxu0 %v2115
      %v2277 = vpop.f32.mrb[0].mxu0
      %v2278 = vadd.f32 0.0, %v2277
      %v2279 = vpop.f32.mrb[0].mxu0
      %v2280 = vpop.f32.mrb[0].mxu0
      %v2281 = vpop.f32.mrb[0].mxu0
      %2282 = vdwg.mxu0
      %v2283 = vadd.f32 %v2238, %v2278
      %v2285 = vsel %vm859, %v849, 0
      %2287 = vmatprep.subr.bf16.mxu0 0
      %2288 = vmatpush1.bf16.msra.mxu0 %v1016
      %2289 = vmatprep.subr.bf16.mxu0 0
      %2290 = vmatpush1.bf16.msra.mxu0 0
      %2291 = vmatprep.subr.bf16.mxu0 0
      %2292 = vmatpush1.bf16.msra.mxu0 0
      %2293 = vmatprep.subr.bf16.mxu0 0
      %2294 = vmatpush1.bf16.msra.mxu0 0
      %2295 = vmatprep.subr.bf16.mxu0 0
      %2296 = vmatpush1.bf16.msra.mxu0 0
      %2297 = vmatprep.subr.bf16.mxu0 0
      %2298 = vmatpush1.bf16.msra.mxu0 0
      %2299 = vmatprep.subr.bf16.mxu0 0
      %2300 = vmatpush1.bf16.msra.mxu0 0
      %2301 = vmatprep.subr.bf16.mxu0 0
      %2302 = vmatpush1.bf16.msra.mxu0 0
      %2303 = vmatprep.subr.bf16.mxu0 0
      %2304 = vmatpush1.bf16.msra.mxu0 0
      %2305 = vmatprep.subr.bf16.mxu0 0
      %2306 = vmatpush1.bf16.msra.mxu0 0
      %2307 = vmatprep.subr.bf16.mxu0 0
      %2308 = vmatpush1.bf16.msra.mxu0 0
      %2309 = vmatprep.subr.bf16.mxu0 0
      %2310 = vmatpush1.bf16.msra.mxu0 0
      %2311 = vmatprep.subr.bf16.mxu0 0
      %2312 = vmatpush1.bf16.msra.mxu0 0
      %2313 = vmatprep.subr.bf16.mxu0 0
      %2314 = vmatpush1.bf16.msra.mxu0 0
      %2315 = vmatprep.subr.bf16.mxu0 0
      %2316 = vmatpush1.bf16.msra.mxu0 0
      %2317 = vmatprep.subr.bf16.mxu0 0
      %2318 = vmatpush1.bf16.msra.mxu0 0
      %2319 = vmatprep.mubr.bf16.mxu0 0
      %2320 = vmatmul.mubr.bf16.gmra.mrb[0].mxu0 %v2285
      %v2321 = vpop.f32.mrb[0].mxu0
      %v2322 = vadd.f32 0.0, %v2321
      %v2323 = vpop.f32.mrb[0].mxu0
      %v2324 = vpop.f32.mrb[0].mxu0
      %v2325 = vpop.f32.mrb[0].mxu0
      %2326 = vdwg.mxu0
      %v2327 = vadd.f32 %v2283, %v2322
      %v2329 = vsel %vm859, %v850, 0
      %2331 = vmatprep.subr.bf16.mxu0 0
      %2332 = vmatpush1.bf16.msra.mxu0 %v1066
      %2333 = vmatprep.subr.bf16.mxu0 0
      %2334 = vmatpush1.bf16.msra.mxu0 0
      %2335 = vmatprep.subr.bf16.mxu0 0
      %2336 = vmatpush1.bf16.msra.mxu0 0
      %2337 = vmatprep.subr.bf16.mxu0 0
      %2338 = vmatpush1.bf16.msra.mxu0 0
      %2339 = vmatprep.subr.bf16.mxu0 0
      %2340 = vmatpush1.bf16.msra.mxu0 0
      %2341 = vmatprep.subr.bf16.mxu0 0
      %2342 = vmatpush1.bf16.msra.mxu0 0
      %2343 = vmatprep.subr.bf16.mxu0 0
      %2344 = vmatpush1.bf16.msra.mxu0 0
      %2345 = vmatprep.subr.bf16.mxu0 0
      %2346 = vmatpush1.bf16.msra.mxu0 0
      %2347 = vmatprep.subr.bf16.mxu0 0
      %2348 = vmatpush1.bf16.msra.mxu0 0
      %2349 = vmatprep.subr.bf16.mxu0 0
      %2350 = vmatpush1.bf16.msra.mxu0 0
      %2351 = vmatprep.subr.bf16.mxu0 0
      %2352 = vmatpush1.bf16.msra.mxu0 0
      %2353 = vmatprep.subr.bf16.mxu0 0
      %2354 = vmatpush1.bf16.msra.mxu0 0
      %2355 = vmatprep.subr.bf16.mxu0 0
      %2356 = vmatpush1.bf16.msra.mxu0 0
      %2357 = vmatprep.subr.bf16.mxu0 0
      %2358 = vmatpush1.bf16.msra.mxu0 0
      %2359 = vmatprep.subr.bf16.mxu0 0
      %2360 = vmatpush1.bf16.msra.mxu0 0
      %2361 = vmatprep.subr.bf16.mxu0 0
      %2362 = vmatpush1.bf16.msra.mxu0 0
      %2363 = vmatprep.mubr.bf16.mxu0 0
      %2364 = vmatmul.mubr.bf16.gmra.mrb[0].mxu0 %v2329
      %v2365 = vpop.f32.mrb[0].mxu0
      %v2366 = vadd.f32 0.0, %v2365
      %v2367 = vpop.f32.mrb[0].mxu0
      %v2368 = vpop.f32.mrb[0].mxu0
      %v2369 = vpop.f32.mrb[0].mxu0
      %2370 = vdwg.mxu0
      %v2371 = vadd.f32 %v2327, %v2366
      %v2373 = vunpack.c.l.b16 %v849
      %v2374 = vpack.c.b16 %v2373, %v2373
      %v2376 = vshrl.u32 %v2374, 16
      %v2378 = vshll.u32 %v2374, 16
      %v2380 = vrot.slane %v2378, 1
      %v2381 = vor.u32 %v2376, %v2380
      %v2383 = vsel %vm859, %v2381, 0
      %2385 = vmatprep.subr.bf16.mxu0 0
      %2386 = vmatpush1.bf16.msra.mxu0 %v1126
      %2387 = vmatprep.subr.bf16.mxu0 0
      %2388 = vmatpush1.bf16.msra.mxu0 0
      %2389 = vmatprep.subr.bf16.mxu0 0
      %2390 = vmatpush1.bf16.msra.mxu0 0
      %2391 = vmatprep.subr.bf16.mxu0 0
      %2392 = vmatpush1.bf16.msra.mxu0 0
      %2393 = vmatprep.subr.bf16.mxu0 0
      %2394 = vmatpush1.bf16.msra.mxu0 0
      %2395 = vmatprep.subr.bf16.mxu0 0
      %2396 = vmatpush1.bf16.msra.mxu0 0
      %2397 = vmatprep.subr.bf16.mxu0 0
      %2398 = vmatpush1.bf16.msra.mxu0 0
      %2399 = vmatprep.subr.bf16.mxu0 0
      %2400 = vmatpush1.bf16.msra.mxu0 0
      %2401 = vmatprep.subr.bf16.mxu0 0
      %2402 = vmatpush1.bf16.msra.mxu0 0
      %2403 = vmatprep.subr.bf16.mxu0 0
      %2404 = vmatpush1.bf16.msra.mxu0 0
      %2405 = vmatprep.subr.bf16.mxu0 0
      %2406 = vmatpush1.bf16.msra.mxu0 0
      %2407 = vmatprep.subr.bf16.mxu0 0
      %2408 = vmatpush1.bf16.msra.mxu0 0
      %2409 = vmatprep.subr.bf16.mxu0 0
      %2410 = vmatpush1.bf16.msra.mxu0 0
      %2411 = vmatprep.subr.bf16.mxu0 0
      %2412 = vmatpush1.bf16.msra.mxu0 0
      %2413 = vmatprep.subr.bf16.mxu0 0
      %2414 = vmatpush1.bf16.msra.mxu0 0
      %2415 = vmatprep.subr.bf16.mxu0 0
      %2416 = vmatpush1.bf16.msra.mxu0 0
      %2417 = vmatprep.mubr.bf16.mxu0 0
      %2418 = vmatmul.mubr.bf16.gmra.mrb[0].mxu0 %v2383
      %v2419 = vpop.f32.mrb[0].mxu0
      %v2420 = vadd.f32 0.0, %v2419
      %v2421 = vpop.f32.mrb[0].mxu0
      %v2422 = vpop.f32.mrb[0].mxu0
      %v2423 = vpop.f32.mrb[0].mxu0
      %2424 = vdwg.mxu0
      %v2425 = vadd.f32 %v2371, %v2420
      %v2427 = vsel %vm859, %v851, 0
      %2429 = vmatprep.subr.bf16.mxu0 0
      %2430 = vmatpush1.bf16.msra.mxu0 %v1176
      %2431 = vmatprep.subr.bf16.mxu0 0
      %2432 = vmatpush1.bf16.msra.mxu0 0
      %2433 = vmatprep.subr.bf16.mxu0 0
      %2434 = vmatpush1.bf16.msra.mxu0 0
      %2435 = vmatprep.subr.bf16.mxu0 0
      %2436 = vmatpush1.bf16.msra.mxu0 0
      %2437 = vmatprep.subr.bf16.mxu0 0
      %2438 = vmatpush1.bf16.msra.mxu0 0
      %2439 = vmatprep.subr.bf16.mxu0 0
      %2440 = vmatpush1.bf16.msra.mxu0 0
      %2441 = vmatprep.subr.bf16.mxu0 0
      %2442 = vmatpush1.bf16.msra.mxu0 0
      %2443 = vmatprep.subr.bf16.mxu0 0
      %2444 = vmatpush1.bf16.msra.mxu0 0
      %2445 = vmatprep.subr.bf16.mxu0 0
      %2446 = vmatpush1.bf16.msra.mxu0 0
      %2447 = vmatprep.subr.bf16.mxu0 0
      %2448 = vmatpush1.bf16.msra.mxu0 0
      %2449 = vmatprep.subr.bf16.mxu0 0
      %2450 = vmatpush1.bf16.msra.mxu0 0
      %2451 = vmatprep.subr.bf16.mxu0 0
      %2452 = vmatpush1.bf16.msra.mxu0 0
      %2453 = vmatprep.subr.bf16.mxu0 0
      %2454 = vmatpush1.bf16.msra.mxu0 0
      %2455 = vmatprep.subr.bf16.mxu0 0
      %2456 = vmatpush1.bf16.msra.mxu0 0
      %2457 = vmatprep.subr.bf16.mxu0 0
      %2458 = vmatpush1.bf16.msra.mxu0 0
      %2459 = vmatprep.subr.bf16.mxu0 0
      %2460 = vmatpush1.bf16.msra.mxu0 0
      %2461 = vmatprep.mubr.bf16.mxu0 0
      %2462 = vmatmul.mubr.bf16.gmra.mrb[0].mxu0 %v2427
      %v2463 = vpop.f32.mrb[0].mxu0
      %v2464 = vadd.f32 0.0, %v2463
      %v2465 = vpop.f32.mrb[0].mxu0
      %v2466 = vpop.f32.mrb[0].mxu0
      %v2467 = vpop.f32.mrb[0].mxu0
      %2468 = vdwg.mxu0
      %v2469 = vadd.f32 %v2425, %v2464
      %v2471 = vsel %vm859, %v852, 0
      %2473 = vmatprep.subr.bf16.mxu0 0
      %2474 = vmatpush1.bf16.msra.mxu0 %v1226
      %2475 = vmatprep.subr.bf16.mxu0 0
      %2476 = vmatpush1.bf16.msra.mxu0 0
      %2477 = vmatprep.subr.bf16.mxu0 0
      %2478 = vmatpush1.bf16.msra.mxu0 0
      %2479 = vmatprep.subr.bf16.mxu0 0
      %2480 = vmatpush1.bf16.msra.mxu0 0
      %2481 = vmatprep.subr.bf16.mxu0 0
      %2482 = vmatpush1.bf16.msra.mxu0 0
      %2483 = vmatprep.subr.bf16.mxu0 0
      %2484 = vmatpush1.bf16.msra.mxu0 0
      %2485 = vmatprep.subr.bf16.mxu0 0
      %2486 = vmatpush1.bf16.msra.mxu0 0
      %2487 = vmatprep.subr.bf16.mxu0 0
      %2488 = vmatpush1.bf16.msra.mxu0 0
      %2489 = vmatprep.subr.bf16.mxu0 0
      %2490 = vmatpush1.bf16.msra.mxu0 0
      %2491 = vmatprep.subr.bf16.mxu0 0
      %2492 = vmatpush1.bf16.msra.mxu0 0
      %2493 = vmatprep.subr.bf16.mxu0 0
      %2494 = vmatpush1.bf16.msra.mxu0 0
      %2495 = vmatprep.subr.bf16.mxu0 0
      %2496 = vmatpush1.bf16.msra.mxu0 0
      %2497 = vmatprep.subr.bf16.mxu0 0
      %2498 = vmatpush1.bf16.msra.mxu0 0
      %2499 = vmatprep.subr.bf16.mxu0 0
      %2500 = vmatpush1.bf16.msra.mxu0 0
      %2501 = vmatprep.subr.bf16.mxu0 0
      %2502 = vmatpush1.bf16.msra.mxu0 0
      %2503 = vmatprep.subr.bf16.mxu0 0
      %2504 = vmatpush1.bf16.msra.mxu0 0
      %2505 = vmatprep.mubr.bf16.mxu0 0
      %2506 = vmatmul.mubr.bf16.gmra.mrb[0].mxu0 %v2471
      %v2507 = vpop.f32.mrb[0].mxu0
      %v2508 = vadd.f32 0.0, %v2507
      %v2509 = vpop.f32.mrb[0].mxu0
      %v2510 = vpop.f32.mrb[0].mxu0
      %v2511 = vpop.f32.mrb[0].mxu0
      %2512 = vdwg.mxu0
      %v2513 = vadd.f32 %v2469, %v2508
      %v2515 = vunpack.c.l.b16 %v851
      %v2516 = vpack.c.b16 %v2515, %v2515
      %v2518 = vshrl.u32 %v2516, 16
      %v2520 = vshll.u32 %v2516, 16
      %v2522 = vrot.slane %v2520, 1
      %v2523 = vor.u32 %v2518, %v2522
      %v2525 = vsel %vm859, %v2523, 0
      %2527 = vmatprep.subr.bf16.mxu0 0
      %2528 = vmatpush1.bf16.msra.mxu0 %v1286
      %2529 = vmatprep.subr.bf16.mxu0 0
      %2530 = vmatpush1.bf16.msra.mxu0 0
      %2531 = vmatprep.subr.bf16.mxu0 0
      %2532 = vmatpush1.bf16.msra.mxu0 0
      %2533 = vmatprep.subr.bf16.mxu0 0
      %2534 = vmatpush1.bf16.msra.mxu0 0
      %2535 = vmatprep.subr.bf16.mxu0 0
      %2536 = vmatpush1.bf16.msra.mxu0 0
      %2537 = vmatprep.subr.bf16.mxu0 0
      %2538 = vmatpush1.bf16.msra.mxu0 0
      %2539 = vmatprep.subr.bf16.mxu0 0
      %2540 = vmatpush1.bf16.msra.mxu0 0
      %2541 = vmatprep.subr.bf16.mxu0 0
      %2542 = vmatpush1.bf16.msra.mxu0 0
      %2543 = vmatprep.subr.bf16.mxu0 0
      %2544 = vmatpush1.bf16.msra.mxu0 0
      %2545 = vmatprep.subr.bf16.mxu0 0
      %2546 = vmatpush1.bf16.msra.mxu0 0
      %2547 = vmatprep.subr.bf16.mxu0 0
      %2548 = vmatpush1.bf16.msra.mxu0 0
      %2549 = vmatprep.subr.bf16.mxu0 0
      %2550 = vmatpush1.bf16.msra.mxu0 0
      %2551 = vmatprep.subr.bf16.mxu0 0
      %2552 = vmatpush1.bf16.msra.mxu0 0
      %2553 = vmatprep.subr.bf16.mxu0 0
      %2554 = vmatpush1.bf16.msra.mxu0 0
      %2555 = vmatprep.subr.bf16.mxu0 0
      %2556 = vmatpush1.bf16.msra.mxu0 0
      %2557 = vmatprep.subr.bf16.mxu0 0
      %2558 = vmatpush1.bf16.msra.mxu0 0
      %2559 = vmatprep.mubr.bf16.mxu0 0
      %2560 = vmatmul.mubr.bf16.gmra.mrb[0].mxu0 %v2525
      %v2561 = vpop.f32.mrb[0].mxu0
      %v2562 = vadd.f32 0.0, %v2561
      %v2563 = vpop.f32.mrb[0].mxu0
      %v2564 = vpop.f32.mrb[0].mxu0
      %v2565 = vpop.f32.mrb[0].mxu0
      %2566 = vdwg.mxu0
      %v2567 = vadd.f32 %v2513, %v2562
      %v2568 = vadd.f32 %v2567, %v1336
      %v2569 = vmax.f32 %v2568, 0.0
      %v2570 = vpack.c.bf16 %v2569, %v2569
      %s2571 = scalar_lea.vmem %s813, 6
      %2572 = vst.msk [vmem:[%s2571] sm:$0x3] %vm1341, %v2570
      %s2573 = smul.u32 4, %s27
      %p2574 = scmp.lt.s32.totalorder %s26, 1
      %s2575 = scalar_select %p2574, %s26, 1
      %p2576 = scmp.lt.s32.totalorder %s2573, 3
      %s2577 = scalar_select %p2576, %s2573, 3
      %s2578 = smul.addr %s2575, 4
      %s2579 = sadd.s32 %s2577, %s2578
      %s2580 = smul.addr %s2579, 2
      %s2581 = scalar_lea.vmem %s11, %s2580
      // Predicated region
      $region65: #{a_call__.4} parent=63 // pred_check
        %p2582 = pneg %p382
      $region66: #{a_call__.4} parent=63 // pred_check_branch
        %2584 = sbr.rel (%p2582) target = $region68
      $region67: #{a_call__.4} parent=63 // pred_region
        %s2585 = smul.u32 4, %s27
      $region68: #{a_call__.4} parent=63 // pred_fallthru
        _
    $region64: #{a_call__.4} parent=5 // pred_fallthru
      _
    %p2586 = scmp.le.s32.totalorder 2, %s17
    // Predicated region
    $region69: #{a_call__.4} parent=5 // pred_check
      %p2587 = pneg %p2586
    $region70: #{a_call__.4} parent=5 // pred_check_branch
      %2589 = sbr.rel (%p2587) target = $region72
    $region71: #{a_call__.4} parent=5 // pred_region
      %s2590 = ssub.s32 %s17, 2
      // Predicated region
      $region73: #{a_call__.4} parent=71 // pred_check
        %p2591 = pneg %p388
      $region74: #{a_call__.4} parent=71 // pred_check_branch
        %2593 = sbr.rel (%p2591) target = $region76
      $region75: #{a_call__.4} parent=71 // pred_region
        %s2594 = smul.u32 4, %s29
        %p2595 = scmp.lt.s32.totalorder %s28, 1
        %s2596 = scalar_select %p2595, %s28, 1
        %p2597 = scmp.lt.s32.totalorder %s2594, 3
        %s2598 = scalar_select %p2597, %s2594, 3
        %s2599 = smul.addr %s2596, 4
        %s2600 = sadd.s32 %s2598, %s2599
        %s2601 = smul.addr %s2600, 2
        %s2602 = scalar_lea.vmem %s11, %s2601
      $region76: #{a_call__.4} parent=71 // pred_fallthru
        _
    $region72: #{a_call__.4} parent=5 // pred_fallthru
      _
  $region6: #{a_call__.4} parent=0 // loop_footer
    %s21 = sadd.s32 1, %s17
  $region7: #{a_call__.4} parent=0 // loop_footer_branch
    %16 = sbr.rel target = $region3
  $region8: #{a_call__.4} parent=0 // loop_exit
    _

</llo_original>
